<compile_context>
chip_gen: v5e
topology: v5e:2x2
jax: 0.10.0
libtpu: 0.0.40
codegen_flags: <defaults>
</compile_context>

<pallas_src>
import functools

import jax
import jax.numpy as jnp
from jax import lax
from jax.experimental import pallas as pl
from jax.experimental.pallas import tpu as pltpu


# ----------------------------- kernel ---------------------------------------


def _seq2seq_kernel(num_layers, P, seq_len, batch, state_num, x_ref, *refs):
    f32 = jnp.float32
    bf16 = jnp.bfloat16

    n_enc = num_layers * 4          # per encoder layer: W_ih^T, W_hh^T, b_ih, b_hh
    n_dec = num_layers * 4          # per decoder layer: same
    enc_refs = refs[:n_enc]
    dec_refs = refs[n_enc:n_enc + n_dec]
    w1_ref, b1_ref, w2_ref, b2_ref = refs[n_enc + n_dec:n_enc + n_dec + 4]
    out_ref = refs[n_enc + n_dec + 4]

    def mm(a, w_ref):
        # bf16 MXU operands (single pass), f32 accumulate; elementwise stays f32.
        return jnp.dot(a.astype(bf16), w_ref[...], preferred_element_type=f32)

    def gru_cell(gi, gh, h_prev):
        # Gate blocks [r|z|n] are lane-aligned at multiples of P -> whole-vreg
        # slices (no XLU rotates).  Fused r/z sigmoid = one EUP push.
        rz = jax.nn.sigmoid(gi[:, :2 * P] + gh[:, :2 * P])
        r = rz[:, :P]
        z = rz[:, P:2 * P]
        n = jnp.tanh(gi[:, 2 * P:] + r * gh[:, 2 * P:])
        return (1.0 - z) * n + z * h_prev

    # Hoisted bias broadcasts (JAX does not CSE broadcast_in_dim in unrolled loops).
    def bias(ref):
        return jnp.broadcast_to(ref[...], (batch, 3 * P))

    enc_b_ih = [None] + [bias(enc_refs[4 * l + 2]) for l in range(1, num_layers)]
    enc_b_hh = [bias(enc_refs[4 * l + 3]) for l in range(num_layers)]
    dec_b_ih = [bias(dec_refs[4 * l + 2]) for l in range(num_layers)]
    dec_b_hh = [bias(dec_refs[4 * l + 3]) for l in range(num_layers)]

    # -------------------- encoder: (time, layer) wavefront --------------------
    # Layer-0 input projection for every timestep in one matmul, bias folded in.
    gi0_all = (jnp.dot(x_ref[...], enc_refs[0][...], preferred_element_type=f32)
               + enc_refs[2][...])                              # (T*B, 3P)

    h_enc = [jnp.zeros((batch, P), f32) for _ in range(num_layers)]
    # cell(l, t) runs at wavefront step w = t + l; cells within one step are
    # independent, so their matmuls pipeline back-to-back on the MXU.
    for w in range(seq_len + num_layers - 1):
        for l in range(num_layers - 1, -1, -1):   # top-down: read h[l-1] of step w-1
            t = w - l
            if t < 0 or t >= seq_len:
                continue
            if l == 0:
                gi = gi0_all[t * batch:(t + 1) * batch, :]      # 8-row aligned slice
            else:
                gi = mm(h_enc[l - 1], enc_refs[4 * l]) + enc_b_ih[l]
            gh = mm(h_enc[l], enc_refs[4 * l + 1]) + enc_b_hh[l]
            h_enc[l] = gru_cell(gi, gh, h_enc[l])

    # -------------------- decoder (autoregressive, not wavefrontable) ---------
    # Layer 0's input at step t is the TOP layer's output at t-1, so the chain is
    # inherently num_layers cells per step.  gi/gh are independent matmuls per cell.
    h_dec = list(h_enc)                               # decoder initial hidden
    inp = jnp.tanh(h_enc[-1])                         # tanh(encoded[:, -1, :])
    outs = []
    for _ in range(seq_len):                          # fully unrolled
        for l in range(num_layers):
            gi = mm(inp, dec_refs[4 * l]) + dec_b_ih[l]
            gh = mm(h_dec[l], dec_refs[4 * l + 1]) + dec_b_hh[l]
            h_new = gru_cell(gi, gh, h_dec[l])
            h_dec[l] = h_new
            inp = h_new
        outs.append(h_dec[-1])                        # stays in vregs (no scratch)
    decoded = jnp.concatenate(outs, axis=0)           # (T*B, P), B sublane-aligned

    # -------------------- fc_output head --------------------------------------
    hmid = (jnp.dot(decoded.astype(bf16), w1_ref[...], preferred_element_type=f32)
            + b1_ref[...])
    hmid = jnp.where(hmid >= 0.0, hmid, 0.01 * hmid)            # LeakyReLU(0.01)
    out = (jnp.dot(hmid.astype(bf16), w2_ref[...], preferred_element_type=f32)
           + b2_ref[...])

    if state_num == 2:
        col = lax.broadcasted_iota(jnp.int32, out.shape, 1)
        norm = jnp.where(col == 0, jnp.tanh(out), jax.nn.sigmoid(out))
    else:
        norm = jnp.tanh(out)

    out_ref[...] = norm                                         # (T*B, state_num)


# ----------------------------- wrapper ---------------------------------------


def _pad_gate_lanes(w, H, P):
    """(rows, 3H) -> (rows, 3P): each [r|z|n] gate block zero-padded to P lanes."""
    if H == P:
        return w
    return jnp.concatenate(
        [jnp.pad(w[:, g * H:(g + 1) * H], ((0, 0), (0, P - H))) for g in range(3)],
        axis=1)


def _prep_gru_layer(w_ih, w_hh, b_ih, b_hh, H, P, in_rows):
    """Lane-pad gates H->P, row-pad MXU weights, cast weights bf16, biases f32."""
    def pad_rows(w, rows):
        if w.shape[0] == rows:
            return w
        return jnp.pad(w, ((0, rows - w.shape[0]), (0, 0)))
    return [pad_rows(_pad_gate_lanes(w_ih, H, P), in_rows).astype(jnp.bfloat16),
            pad_rows(_pad_gate_lanes(w_hh, H, P), P).astype(jnp.bfloat16),
            _pad_gate_lanes(b_ih, H, P).astype(jnp.float32),
            _pad_gate_lanes(b_hh, H, P).astype(jnp.float32)]


def seq2seq_forward(x, params, *, num_layers, hidden, state_num):
    batch, seq_len, _ = x.shape
    H = hidden
    P = ((H + 127) // 128) * 128              # lane-align each gate / hidden block
    Bp = ((batch + 7) // 8) * 8               # sublane-align per-step row blocks
    Sp = ((state_num + 7) // 8) * 8           # pad the tiny input-feature K dim

    # --- host-side parameter prep: pad / transpose-free / bf16 cast -----------
    idx = 0
    enc, dec = [], []
    for l in range(num_layers):
        in_rows = Sp if l == 0 else P
        enc += _prep_gru_layer(*params[idx:idx + 4], H=H, P=P, in_rows=in_rows)
        idx += 4
    for _ in range(num_layers):
        dec += _prep_gru_layer(*params[idx:idx + 4], H=H, P=P, in_rows=P)
        idx += 4
    w1, b1, w2, b2 = params[idx:idx + 4]
    w1p = jnp.pad(w1, ((0, P - H), (0, 0))).astype(jnp.bfloat16)
    fc = [w1p, b1.astype(jnp.float32), w2.astype(jnp.bfloat16), b2.astype(jnp.float32)]

    # time-major, batch- and feature-padded input: row index = t*Bp + b
    xp = jnp.pad(x, ((0, Bp - batch), (0, 0), (0, Sp - state_num)))
    x_flat = jnp.transpose(xp, (1, 0, 2)).reshape(seq_len * Bp, Sp).astype(jnp.bfloat16)

    kernel = functools.partial(_seq2seq_kernel, num_layers, P, seq_len, Bp, state_num)
    vmem = pl.BlockSpec(memory_space=pltpu.MemorySpace.VMEM)
    flat_inputs = [x_flat] + enc + dec + fc

    raw = pl.pallas_call(
        kernel,
        out_shape=jax.ShapeDtypeStruct((seq_len * Bp, state_num), jnp.float32),
        in_specs=[vmem] * len(flat_inputs),
        out_specs=vmem,
    )(*flat_inputs)

    # drop batch padding, back to batch_first (B, T, S)
    return raw.reshape(seq_len, Bp, state_num)[:, :batch, :].transpose(1, 0, 2)


# ------------------------- parameter construction ----------------------------


def init_params(key, state_num, num_layers, hidden):
    """Deterministic synthetic init, PyTorch-like uniform(-1/sqrt(fan), 1/sqrt(fan))."""
    params = []

    def nxt():
        nonlocal key
        key, sub = jax.random.split(key)
        return sub

    def unif(shape, k):
        return jax.random.uniform(nxt(), shape, jnp.float32, -k, k)

    k_h = 1.0 / float(hidden) ** 0.5
    # encoder GRU layers: W_ih^T (in,3H), W_hh^T (H,3H), b_ih (1,3H), b_hh (1,3H)
    for l in range(num_layers):
        in_dim = state_num if l == 0 else hidden
        params += [unif((in_dim, 3 * hidden), k_h),
                   unif((hidden, 3 * hidden), k_h),
                   unif((1, 3 * hidden), k_h),
                   unif((1, 3 * hidden), k_h)]
    # decoder GRU layers (input size is always hidden)
    for _ in range(num_layers):
        params += [unif((hidden, 3 * hidden), k_h),
                   unif((hidden, 3 * hidden), k_h),
                   unif((1, 3 * hidden), k_h),
                   unif((1, 3 * hidden), k_h)]
    # fc_output: Linear(H, H//2) -> LeakyReLU -> Linear(H//2, state_num)
    half = hidden // 2
    k1 = 1.0 / float(hidden) ** 0.5
    k2 = 1.0 / float(half) ** 0.5
    params += [unif((hidden, half), k1), unif((1, half), k1),
               unif((half, state_num), k2), unif((1, state_num), k2)]
    return params


# ------------------------- pure-JAX reference ---------------------------------


def reference_forward(x, params, *, num_layers, hidden, state_num):
    batch, seq_len, _ = x.shape
    idx = 0
    enc = []
    for _ in range(num_layers):
        enc.append(params[idx:idx + 4]); idx += 4
    dec = []
    for _ in range(num_layers):
        dec.append(params[idx:idx + 4]); idx += 4
    w1, b1, w2, b2 = params[idx:idx + 4]

    def cell(xv, h, w_ih, w_hh, b_ih, b_hh):
        gi = xv @ w_ih + b_ih
        gh = h @ w_hh + b_hh
        i_r, i_z, i_n = jnp.split(gi, 3, axis=1)
        h_r, h_z, h_n = jnp.split(gh, 3, axis=1)
        r = jax.nn.sigmoid(i_r + h_r)
        z = jax.nn.sigmoid(i_z + h_z)
        n = jnp.tanh(i_n + r * h_n)
        return (1.0 - z) * n + z * h

    hs = [jnp.zeros((batch, hidden), jnp.float32) for _ in range(num_layers)]
    for t in range(seq_len):
        inp = x[:, t, :]
        for l in range(num_layers):
            hs[l] = cell(inp, hs[l], *enc[l])
            inp = hs[l]
    last = jnp.tanh(hs[-1])
    outs = []
    for _ in range(seq_len):
        inp = last
        for l in range(num_layers):
            hs[l] = cell(inp, hs[l], *dec[l])
            inp = hs[l]
        last = hs[-1]
        outs.append(last)
    decoded = jnp.stack(outs, axis=1)
    hmid = decoded @ w1 + b1
    hmid = jnp.where(hmid >= 0.0, hmid, 0.01 * hmid)
    out = hmid @ w2 + b2
    if state_num == 2:
        s = jnp.tanh(out[:, :, 0])
        t_ = jax.nn.sigmoid(out[:, :, 1])
        return jnp.stack([s, t_], axis=2)
    return jnp.tanh(out)


# ------------------------------- main -----------------------------------------


if __name__ == "__main__":
    state_num = 2
    num_layers = 2
    hidden_size = 32
    batch = 2
    seq_len = 8

    key = jax.random.PRNGKey(0)
    kx, kp = jax.random.split(key)
    x = jax.random.normal(kx, (batch, seq_len, state_num), jnp.float32)
    params = init_params(kp, state_num, num_layers, hidden_size)

    out = seq2seq_forward(x, params, num_layers=num_layers,
                          hidden=hidden_size, state_num=state_num)
    out = jax.block_until_ready(out)

    ref = reference_forward(x, params, num_layers=num_layers,
                            hidden=hidden_size, state_num=state_num)
    ref = jax.block_until_ready(ref)

    assert out.shape == (batch, seq_len, state_num)
    assert bool(jnp.all(jnp.isfinite(out)))
    # Loose tolerance: MXU operands are bf16 (f32 accumulate); recurrence compounds
    # rounding over 16 decoder cells.  Observed error is O(1e-3).
    err = float(jnp.max(jnp.abs(out - ref)))
    assert err < 2e-2, f"mismatch vs reference: max |err| = {err:.3e}"

    print("KERNEL_OK")
</pallas_src>

<mosaic_0001>
module attributes {stable_mosaic.version = 11 : i64} {
  func.func @_seq2seq_kernel(%arg0: memref<64x8xbf16, #tpu.memory_space<vmem>>, %arg1: memref<8x384xbf16, #tpu.memory_space<vmem>>, %arg2: memref<128x384xbf16, #tpu.memory_space<vmem>>, %arg3: memref<1x384xf32, #tpu.memory_space<vmem>>, %arg4: memref<1x384xf32, #tpu.memory_space<vmem>>, %arg5: memref<128x384xbf16, #tpu.memory_space<vmem>>, %arg6: memref<128x384xbf16, #tpu.memory_space<vmem>>, %arg7: memref<1x384xf32, #tpu.memory_space<vmem>>, %arg8: memref<1x384xf32, #tpu.memory_space<vmem>>, %arg9: memref<128x384xbf16, #tpu.memory_space<vmem>>, %arg10: memref<128x384xbf16, #tpu.memory_space<vmem>>, %arg11: memref<1x384xf32, #tpu.memory_space<vmem>>, %arg12: memref<1x384xf32, #tpu.memory_space<vmem>>, %arg13: memref<128x384xbf16, #tpu.memory_space<vmem>>, %arg14: memref<128x384xbf16, #tpu.memory_space<vmem>>, %arg15: memref<1x384xf32, #tpu.memory_space<vmem>>, %arg16: memref<1x384xf32, #tpu.memory_space<vmem>>, %arg17: memref<128x16xbf16, #tpu.memory_space<vmem>>, %arg18: memref<1x16xf32, #tpu.memory_space<vmem>>, %arg19: memref<16x2xbf16, #tpu.memory_space<vmem>>, %arg20: memref<1x2xf32, #tpu.memory_space<vmem>>, %arg21: memref<64x2xf32, #tpu.memory_space<vmem>>) attributes {dimension_semantics = [], scalar_prefetch = 0 : i64, scratch_operands = 0 : i64, tpu.core_type = #tpu.core_type<tc>} {
    %c0 = arith.constant 0 : index
    %c0_0 = arith.constant 0 : index
    %0 = vector.load %arg7[%c0, %c0_0] : memref<1x384xf32, #tpu.memory_space<vmem>>, vector<1x384xf32>
    %1 = vector.shape_cast %0 : vector<1x384xf32> to vector<1x384xf32>
    %2 = vector.broadcast %1 : vector<1x384xf32> to vector<8x384xf32>
    %c0_1 = arith.constant 0 : index
    %c0_2 = arith.constant 0 : index
    %3 = vector.load %arg4[%c0_1, %c0_2] : memref<1x384xf32, #tpu.memory_space<vmem>>, vector<1x384xf32>
    %4 = vector.shape_cast %3 : vector<1x384xf32> to vector<1x384xf32>
    %5 = vector.broadcast %4 : vector<1x384xf32> to vector<8x384xf32>
    %c0_3 = arith.constant 0 : index
    %c0_4 = arith.constant 0 : index
    %6 = vector.load %arg8[%c0_3, %c0_4] : memref<1x384xf32, #tpu.memory_space<vmem>>, vector<1x384xf32>
    %7 = vector.shape_cast %6 : vector<1x384xf32> to vector<1x384xf32>
    %8 = vector.broadcast %7 : vector<1x384xf32> to vector<8x384xf32>
    %c0_5 = arith.constant 0 : index
    %c0_6 = arith.constant 0 : index
    %9 = vector.load %arg11[%c0_5, %c0_6] : memref<1x384xf32, #tpu.memory_space<vmem>>, vector<1x384xf32>
    %10 = vector.shape_cast %9 : vector<1x384xf32> to vector<1x384xf32>
    %11 = vector.broadcast %10 : vector<1x384xf32> to vector<8x384xf32>
    %c0_7 = arith.constant 0 : index
    %c0_8 = arith.constant 0 : index
    %12 = vector.load %arg15[%c0_7, %c0_8] : memref<1x384xf32, #tpu.memory_space<vmem>>, vector<1x384xf32>
    %13 = vector.shape_cast %12 : vector<1x384xf32> to vector<1x384xf32>
    %14 = vector.broadcast %13 : vector<1x384xf32> to vector<8x384xf32>
    %c0_9 = arith.constant 0 : index
    %c0_10 = arith.constant 0 : index
    %15 = vector.load %arg12[%c0_9, %c0_10] : memref<1x384xf32, #tpu.memory_space<vmem>>, vector<1x384xf32>
    %16 = vector.shape_cast %15 : vector<1x384xf32> to vector<1x384xf32>
    %17 = vector.broadcast %16 : vector<1x384xf32> to vector<8x384xf32>
    %c0_11 = arith.constant 0 : index
    %c0_12 = arith.constant 0 : index
    %18 = vector.load %arg16[%c0_11, %c0_12] : memref<1x384xf32, #tpu.memory_space<vmem>>, vector<1x384xf32>
    %19 = vector.shape_cast %18 : vector<1x384xf32> to vector<1x384xf32>
    %20 = vector.broadcast %19 : vector<1x384xf32> to vector<8x384xf32>
    %c0_13 = arith.constant 0 : index
    %c0_14 = arith.constant 0 : index
    %21 = vector.load %arg0[%c0_13, %c0_14] : memref<64x8xbf16, #tpu.memory_space<vmem>>, vector<64x8xbf16>
    %c0_15 = arith.constant 0 : index
    %c0_16 = arith.constant 0 : index
    %22 = vector.load %arg1[%c0_15, %c0_16] : memref<8x384xbf16, #tpu.memory_space<vmem>>, vector<8x384xbf16>
    %cst = arith.constant dense<0.000000e+00> : vector<64x384xf32>
    %23 = tpu.matmul %21, %22, %cst {dimension_numbers = #tpu.dot_dimension_numbers<[1], [0], [0], [1], [0, 0, 1, 1], [], []>} : vector<64x8xbf16>, vector<8x384xbf16>, vector<64x384xf32> -> vector<64x384xf32>
    %c0_17 = arith.constant 0 : index
    %c0_18 = arith.constant 0 : index
    %24 = vector.load %arg3[%c0_17, %c0_18] : memref<1x384xf32, #tpu.memory_space<vmem>>, vector<1x384xf32>
    %25 = vector.broadcast %24 : vector<1x384xf32> to vector<64x384xf32>
    %26 = arith.addf %23, %25 : vector<64x384xf32>
    %cst_19 = arith.constant 0.000000e+00 : f32
    %27 = vector.broadcast %cst_19 : f32 to vector<8x128xf32>
    %cst_20 = arith.constant 0.000000e+00 : f32
    %28 = vector.broadcast %cst_20 : f32 to vector<8x128xf32>
    %29 = vector.extract_strided_slice %26 {offsets = [0, 0], sizes = [8, 384], strides = [1, 1]} : vector<64x384xf32> to vector<8x384xf32>
    %30 = arith.truncf %27 : vector<8x128xf32> to vector<8x128xbf16>
    %c0_21 = arith.constant 0 : index
    %c0_22 = arith.constant 0 : index
    %31 = vector.load %arg2[%c0_21, %c0_22] : memref<128x384xbf16, #tpu.memory_space<vmem>>, vector<128x384xbf16>
    %cst_23 = arith.constant dense<0.000000e+00> : vector<8x384xf32>
    %32 = tpu.matmul %30, %31, %cst_23 {dimension_numbers = #tpu.dot_dimension_numbers<[1], [0], [0], [1], [0, 0, 1, 1], [], []>} : vector<8x128xbf16>, vector<128x384xbf16>, vector<8x384xf32> -> vector<8x384xf32>
    %33 = arith.addf %32, %5 : vector<8x384xf32>
    %34 = vector.extract_strided_slice %29 {offsets = [0, 0], sizes = [8, 256], strides = [1, 1]} : vector<8x384xf32> to vector<8x256xf32>
    %35 = vector.extract_strided_slice %33 {offsets = [0, 0], sizes = [8, 256], strides = [1, 1]} : vector<8x384xf32> to vector<8x256xf32>
    %36 = arith.addf %34, %35 : vector<8x256xf32>
    %37 = arith.negf %36 : vector<8x256xf32>
    %38 = math.exp %37 : vector<8x256xf32>
    %cst_24 = arith.constant 1.000000e+00 : f32
    %39 = vector.broadcast %cst_24 : f32 to vector<8x256xf32>
    %40 = arith.addf %39, %38 : vector<8x256xf32>
    %41 = arith.divf %39, %40 : vector<8x256xf32>
    %42 = vector.extract_strided_slice %41 {offsets = [0, 0], sizes = [8, 128], strides = [1, 1]} : vector<8x256xf32> to vector<8x128xf32>
    %43 = vector.extract_strided_slice %41 {offsets = [0, 128], sizes = [8, 128], strides = [1, 1]} : vector<8x256xf32> to vector<8x128xf32>
    %44 = vector.extract_strided_slice %29 {offsets = [0, 256], sizes = [8, 128], strides = [1, 1]} : vector<8x384xf32> to vector<8x128xf32>
    %45 = vector.extract_strided_slice %33 {offsets = [0, 256], sizes = [8, 128], strides = [1, 1]} : vector<8x384xf32> to vector<8x128xf32>
    %46 = arith.mulf %42, %45 : vector<8x128xf32>
    %47 = arith.addf %44, %46 : vector<8x128xf32>
    %48 = math.tanh %47 : vector<8x128xf32>
    %cst_25 = arith.constant 1.000000e+00 : f32
    %49 = vector.broadcast %cst_25 : f32 to vector<8x128xf32>
    %50 = arith.subf %49, %43 : vector<8x128xf32>
    %51 = arith.mulf %50, %48 : vector<8x128xf32>
    %52 = arith.mulf %43, %27 : vector<8x128xf32>
    %53 = arith.addf %51, %52 : vector<8x128xf32>
    %54 = arith.truncf %53 : vector<8x128xf32> to vector<8x128xbf16>
    %c0_26 = arith.constant 0 : index
    %c0_27 = arith.constant 0 : index
    %55 = vector.load %arg5[%c0_26, %c0_27] : memref<128x384xbf16, #tpu.memory_space<vmem>>, vector<128x384xbf16>
    %cst_28 = arith.constant dense<0.000000e+00> : vector<8x384xf32>
    %56 = tpu.matmul %54, %55, %cst_28 {dimension_numbers = #tpu.dot_dimension_numbers<[1], [0], [0], [1], [0, 0, 1, 1], [], []>} : vector<8x128xbf16>, vector<128x384xbf16>, vector<8x384xf32> -> vector<8x384xf32>
    %57 = arith.addf %56, %2 : vector<8x384xf32>
    %58 = arith.truncf %28 : vector<8x128xf32> to vector<8x128xbf16>
    %c0_29 = arith.constant 0 : index
    %c0_30 = arith.constant 0 : index
    %59 = vector.load %arg6[%c0_29, %c0_30] : memref<128x384xbf16, #tpu.memory_space<vmem>>, vector<128x384xbf16>
    %cst_31 = arith.constant dense<0.000000e+00> : vector<8x384xf32>
    %60 = tpu.matmul %58, %59, %cst_31 {dimension_numbers = #tpu.dot_dimension_numbers<[1], [0], [0], [1], [0, 0, 1, 1], [], []>} : vector<8x128xbf16>, vector<128x384xbf16>, vector<8x384xf32> -> vector<8x384xf32>
    %61 = arith.addf %60, %8 : vector<8x384xf32>
    %62 = vector.extract_strided_slice %57 {offsets = [0, 0], sizes = [8, 256], strides = [1, 1]} : vector<8x384xf32> to vector<8x256xf32>
    %63 = vector.extract_strided_slice %61 {offsets = [0, 0], sizes = [8, 256], strides = [1, 1]} : vector<8x384xf32> to vector<8x256xf32>
    %64 = arith.addf %62, %63 : vector<8x256xf32>
    %65 = arith.negf %64 : vector<8x256xf32>
    %66 = math.exp %65 : vector<8x256xf32>
    %cst_32 = arith.constant 1.000000e+00 : f32
    %67 = vector.broadcast %cst_32 : f32 to vector<8x256xf32>
    %68 = arith.addf %67, %66 : vector<8x256xf32>
    %69 = arith.divf %67, %68 : vector<8x256xf32>
    %70 = vector.extract_strided_slice %69 {offsets = [0, 0], sizes = [8, 128], strides = [1, 1]} : vector<8x256xf32> to vector<8x128xf32>
    %71 = vector.extract_strided_slice %69 {offsets = [0, 128], sizes = [8, 128], strides = [1, 1]} : vector<8x256xf32> to vector<8x128xf32>
    %72 = vector.extract_strided_slice %57 {offsets = [0, 256], sizes = [8, 128], strides = [1, 1]} : vector<8x384xf32> to vector<8x128xf32>
    %73 = vector.extract_strided_slice %61 {offsets = [0, 256], sizes = [8, 128], strides = [1, 1]} : vector<8x384xf32> to vector<8x128xf32>
    %74 = arith.mulf %70, %73 : vector<8x128xf32>
    %75 = arith.addf %72, %74 : vector<8x128xf32>
    %76 = math.tanh %75 : vector<8x128xf32>
    %cst_33 = arith.constant 1.000000e+00 : f32
    %77 = vector.broadcast %cst_33 : f32 to vector<8x128xf32>
    %78 = arith.subf %77, %71 : vector<8x128xf32>
    %79 = arith.mulf %78, %76 : vector<8x128xf32>
    %80 = arith.mulf %71, %28 : vector<8x128xf32>
    %81 = arith.addf %79, %80 : vector<8x128xf32>
    %82 = vector.extract_strided_slice %26 {offsets = [8, 0], sizes = [8, 384], strides = [1, 1]} : vector<64x384xf32> to vector<8x384xf32>
    %83 = arith.truncf %53 : vector<8x128xf32> to vector<8x128xbf16>
    %c0_34 = arith.constant 0 : index
    %c0_35 = arith.constant 0 : index
    %84 = vector.load %arg2[%c0_34, %c0_35] : memref<128x384xbf16, #tpu.memory_space<vmem>>, vector<128x384xbf16>
    %cst_36 = arith.constant dense<0.000000e+00> : vector<8x384xf32>
    %85 = tpu.matmul %83, %84, %cst_36 {dimension_numbers = #tpu.dot_dimension_numbers<[1], [0], [0], [1], [0, 0, 1, 1], [], []>} : vector<8x128xbf16>, vector<128x384xbf16>, vector<8x384xf32> -> vector<8x384xf32>
    %86 = arith.addf %85, %5 : vector<8x384xf32>
    %87 = vector.extract_strided_slice %82 {offsets = [0, 0], sizes = [8, 256], strides = [1, 1]} : vector<8x384xf32> to vector<8x256xf32>
    %88 = vector.extract_strided_slice %86 {offsets = [0, 0], sizes = [8, 256], strides = [1, 1]} : vector<8x384xf32> to vector<8x256xf32>
    %89 = arith.addf %87, %88 : vector<8x256xf32>
    %90 = arith.negf %89 : vector<8x256xf32>
    %91 = math.exp %90 : vector<8x256xf32>
    %cst_37 = arith.constant 1.000000e+00 : f32
    %92 = vector.broadcast %cst_37 : f32 to vector<8x256xf32>
    %93 = arith.addf %92, %91 : vector<8x256xf32>
    %94 = arith.divf %92, %93 : vector<8x256xf32>
    %95 = vector.extract_strided_slice %94 {offsets = [0, 0], sizes = [8, 128], strides = [1, 1]} : vector<8x256xf32> to vector<8x128xf32>
    %96 = vector.extract_strided_slice %94 {offsets = [0, 128], sizes = [8, 128], strides = [1, 1]} : vector<8x256xf32> to vector<8x128xf32>
    %97 = vector.extract_strided_slice %82 {offsets = [0, 256], sizes = [8, 128], strides = [1, 1]} : vector<8x384xf32> to vector<8x128xf32>
    %98 = vector.extract_strided_slice %86 {offsets = [0, 256], sizes = [8, 128], strides = [1, 1]} : vector<8x384xf32> to vector<8x128xf32>
    %99 = arith.mulf %95, %98 : vector<8x128xf32>
    %100 = arith.addf %97, %99 : vector<8x128xf32>
    %101 = math.tanh %100 : vector<8x128xf32>
    %cst_38 = arith.constant 1.000000e+00 : f32
    %102 = vector.broadcast %cst_38 : f32 to vector<8x128xf32>
    %103 = arith.subf %102, %96 : vector<8x128xf32>
    %104 = arith.mulf %103, %101 : vector<8x128xf32>
    %105 = arith.mulf %96, %53 : vector<8x128xf32>
    %106 = arith.addf %104, %105 : vector<8x128xf32>
    %107 = arith.truncf %106 : vector<8x128xf32> to vector<8x128xbf16>
    %c0_39 = arith.constant 0 : index
    %c0_40 = arith.constant 0 : index
    %108 = vector.load %arg5[%c0_39, %c0_40] : memref<128x384xbf16, #tpu.memory_space<vmem>>, vector<128x384xbf16>
    %cst_41 = arith.constant dense<0.000000e+00> : vector<8x384xf32>
    %109 = tpu.matmul %107, %108, %cst_41 {dimension_numbers = #tpu.dot_dimension_numbers<[1], [0], [0], [1], [0, 0, 1, 1], [], []>} : vector<8x128xbf16>, vector<128x384xbf16>, vector<8x384xf32> -> vector<8x384xf32>
    %110 = arith.addf %109, %2 : vector<8x384xf32>
    %111 = arith.truncf %81 : vector<8x128xf32> to vector<8x128xbf16>
    %c0_42 = arith.constant 0 : index
    %c0_43 = arith.constant 0 : index
    %112 = vector.load %arg6[%c0_42, %c0_43] : memref<128x384xbf16, #tpu.memory_space<vmem>>, vector<128x384xbf16>
    %cst_44 = arith.constant dense<0.000000e+00> : vector<8x384xf32>
    %113 = tpu.matmul %111, %112, %cst_44 {dimension_numbers = #tpu.dot_dimension_numbers<[1], [0], [0], [1], [0, 0, 1, 1], [], []>} : vector<8x128xbf16>, vector<128x384xbf16>, vector<8x384xf32> -> vector<8x384xf32>
    %114 = arith.addf %113, %8 : vector<8x384xf32>
    %115 = vector.extract_strided_slice %110 {offsets = [0, 0], sizes = [8, 256], strides = [1, 1]} : vector<8x384xf32> to vector<8x256xf32>
    %116 = vector.extract_strided_slice %114 {offsets = [0, 0], sizes = [8, 256], strides = [1, 1]} : vector<8x384xf32> to vector<8x256xf32>
    %117 = arith.addf %115, %116 : vector<8x256xf32>
    %118 = arith.negf %117 : vector<8x256xf32>
    %119 = math.exp %118 : vector<8x256xf32>
    %cst_45 = arith.constant 1.000000e+00 : f32
    %120 = vector.broadcast %cst_45 : f32 to vector<8x256xf32>
    %121 = arith.addf %120, %119 : vector<8x256xf32>
    %122 = arith.divf %120, %121 : vector<8x256xf32>
    %123 = vector.extract_strided_slice %122 {offsets = [0, 0], sizes = [8, 128], strides = [1, 1]} : vector<8x256xf32> to vector<8x128xf32>
    %124 = vector.extract_strided_slice %122 {offsets = [0, 128], sizes = [8, 128], strides = [1, 1]} : vector<8x256xf32> to vector<8x128xf32>
    %125 = vector.extract_strided_slice %110 {offsets = [0, 256], sizes = [8, 128], strides = [1, 1]} : vector<8x384xf32> to vector<8x128xf32>
    %126 = vector.extract_strided_slice %114 {offsets = [0, 256], sizes = [8, 128], strides = [1, 1]} : vector<8x384xf32> to vector<8x128xf32>
    %127 = arith.mulf %123, %126 : vector<8x128xf32>
    %128 = arith.addf %125, %127 : vector<8x128xf32>
    %129 = math.tanh %128 : vector<8x128xf32>
    %cst_46 = arith.constant 1.000000e+00 : f32
    %130 = vector.broadcast %cst_46 : f32 to vector<8x128xf32>
    %131 = arith.subf %130, %124 : vector<8x128xf32>
    %132 = arith.mulf %131, %129 : vector<8x128xf32>
    %133 = arith.mulf %124, %81 : vector<8x128xf32>
    %134 = arith.addf %132, %133 : vector<8x128xf32>
    %135 = vector.extract_strided_slice %26 {offsets = [16, 0], sizes = [8, 384], strides = [1, 1]} : vector<64x384xf32> to vector<8x384xf32>
    %136 = arith.truncf %106 : vector<8x128xf32> to vector<8x128xbf16>
    %c0_47 = arith.constant 0 : index
    %c0_48 = arith.constant 0 : index
    %137 = vector.load %arg2[%c0_47, %c0_48] : memref<128x384xbf16, #tpu.memory_space<vmem>>, vector<128x384xbf16>
    %cst_49 = arith.constant dense<0.000000e+00> : vector<8x384xf32>
    %138 = tpu.matmul %136, %137, %cst_49 {dimension_numbers = #tpu.dot_dimension_numbers<[1], [0], [0], [1], [0, 0, 1, 1], [], []>} : vector<8x128xbf16>, vector<128x384xbf16>, vector<8x384xf32> -> vector<8x384xf32>
    %139 = arith.addf %138, %5 : vector<8x384xf32>
    %140 = vector.extract_strided_slice %135 {offsets = [0, 0], sizes = [8, 256], strides = [1, 1]} : vector<8x384xf32> to vector<8x256xf32>
    %141 = vector.extract_strided_slice %139 {offsets = [0, 0], sizes = [8, 256], strides = [1, 1]} : vector<8x384xf32> to vector<8x256xf32>
    %142 = arith.addf %140, %141 : vector<8x256xf32>
    %143 = arith.negf %142 : vector<8x256xf32>
    %144 = math.exp %143 : vector<8x256xf32>
    %cst_50 = arith.constant 1.000000e+00 : f32
    %145 = vector.broadcast %cst_50 : f32 to vector<8x256xf32>
    %146 = arith.addf %145, %144 : vector<8x256xf32>
    %147 = arith.divf %145, %146 : vector<8x256xf32>
    %148 = vector.extract_strided_slice %147 {offsets = [0, 0], sizes = [8, 128], strides = [1, 1]} : vector<8x256xf32> to vector<8x128xf32>
    %149 = vector.extract_strided_slice %147 {offsets = [0, 128], sizes = [8, 128], strides = [1, 1]} : vector<8x256xf32> to vector<8x128xf32>
    %150 = vector.extract_strided_slice %135 {offsets = [0, 256], sizes = [8, 128], strides = [1, 1]} : vector<8x384xf32> to vector<8x128xf32>
    %151 = vector.extract_strided_slice %139 {offsets = [0, 256], sizes = [8, 128], strides = [1, 1]} : vector<8x384xf32> to vector<8x128xf32>
    %152 = arith.mulf %148, %151 : vector<8x128xf32>
    %153 = arith.addf %150, %152 : vector<8x128xf32>
    %154 = math.tanh %153 : vector<8x128xf32>
    %cst_51 = arith.constant 1.000000e+00 : f32
    %155 = vector.broadcast %cst_51 : f32 to vector<8x128xf32>
    %156 = arith.subf %155, %149 : vector<8x128xf32>
    %157 = arith.mulf %156, %154 : vector<8x128xf32>
    %158 = arith.mulf %149, %106 : vector<8x128xf32>
    %159 = arith.addf %157, %158 : vector<8x128xf32>
    %160 = arith.truncf %159 : vector<8x128xf32> to vector<8x128xbf16>
    %c0_52 = arith.constant 0 : index
    %c0_53 = arith.constant 0 : index
    %161 = vector.load %arg5[%c0_52, %c0_53] : memref<128x384xbf16, #tpu.memory_space<vmem>>, vector<128x384xbf16>
    %cst_54 = arith.constant dense<0.000000e+00> : vector<8x384xf32>
    %162 = tpu.matmul %160, %161, %cst_54 {dimension_numbers = #tpu.dot_dimension_numbers<[1], [0], [0], [1], [0, 0, 1, 1], [], []>} : vector<8x128xbf16>, vector<128x384xbf16>, vector<8x384xf32> -> vector<8x384xf32>
    %163 = arith.addf %162, %2 : vector<8x384xf32>
    %164 = arith.truncf %134 : vector<8x128xf32> to vector<8x128xbf16>
    %c0_55 = arith.constant 0 : index
    %c0_56 = arith.constant 0 : index
    %165 = vector.load %arg6[%c0_55, %c0_56] : memref<128x384xbf16, #tpu.memory_space<vmem>>, vector<128x384xbf16>
    %cst_57 = arith.constant dense<0.000000e+00> : vector<8x384xf32>
    %166 = tpu.matmul %164, %165, %cst_57 {dimension_numbers = #tpu.dot_dimension_numbers<[1], [0], [0], [1], [0, 0, 1, 1], [], []>} : vector<8x128xbf16>, vector<128x384xbf16>, vector<8x384xf32> -> vector<8x384xf32>
    %167 = arith.addf %166, %8 : vector<8x384xf32>
    %168 = vector.extract_strided_slice %163 {offsets = [0, 0], sizes = [8, 256], strides = [1, 1]} : vector<8x384xf32> to vector<8x256xf32>
    %169 = vector.extract_strided_slice %167 {offsets = [0, 0], sizes = [8, 256], strides = [1, 1]} : vector<8x384xf32> to vector<8x256xf32>
    %170 = arith.addf %168, %169 : vector<8x256xf32>
    %171 = arith.negf %170 : vector<8x256xf32>
    %172 = math.exp %171 : vector<8x256xf32>
    %cst_58 = arith.constant 1.000000e+00 : f32
    %173 = vector.broadcast %cst_58 : f32 to vector<8x256xf32>
    %174 = arith.addf %173, %172 : vector<8x256xf32>
    %175 = arith.divf %173, %174 : vector<8x256xf32>
    %176 = vector.extract_strided_slice %175 {offsets = [0, 0], sizes = [8, 128], strides = [1, 1]} : vector<8x256xf32> to vector<8x128xf32>
    %177 = vector.extract_strided_slice %175 {offsets = [0, 128], sizes = [8, 128], strides = [1, 1]} : vector<8x256xf32> to vector<8x128xf32>
    %178 = vector.extract_strided_slice %163 {offsets = [0, 256], sizes = [8, 128], strides = [1, 1]} : vector<8x384xf32> to vector<8x128xf32>
    %179 = vector.extract_strided_slice %167 {offsets = [0, 256], sizes = [8, 128], strides = [1, 1]} : vector<8x384xf32> to vector<8x128xf32>
    %180 = arith.mulf %176, %179 : vector<8x128xf32>
    %181 = arith.addf %178, %180 : vector<8x128xf32>
    %182 = math.tanh %181 : vector<8x128xf32>
    %cst_59 = arith.constant 1.000000e+00 : f32
    %183 = vector.broadcast %cst_59 : f32 to vector<8x128xf32>
    %184 = arith.subf %183, %177 : vector<8x128xf32>
    %185 = arith.mulf %184, %182 : vector<8x128xf32>
    %186 = arith.mulf %177, %134 : vector<8x128xf32>
    %187 = arith.addf %185, %186 : vector<8x128xf32>
    %188 = vector.extract_strided_slice %26 {offsets = [24, 0], sizes = [8, 384], strides = [1, 1]} : vector<64x384xf32> to vector<8x384xf32>
    %189 = arith.truncf %159 : vector<8x128xf32> to vector<8x128xbf16>
    %c0_60 = arith.constant 0 : index
    %c0_61 = arith.constant 0 : index
    %190 = vector.load %arg2[%c0_60, %c0_61] : memref<128x384xbf16, #tpu.memory_space<vmem>>, vector<128x384xbf16>
    %cst_62 = arith.constant dense<0.000000e+00> : vector<8x384xf32>
    %191 = tpu.matmul %189, %190, %cst_62 {dimension_numbers = #tpu.dot_dimension_numbers<[1], [0], [0], [1], [0, 0, 1, 1], [], []>} : vector<8x128xbf16>, vector<128x384xbf16>, vector<8x384xf32> -> vector<8x384xf32>
    %192 = arith.addf %191, %5 : vector<8x384xf32>
    %193 = vector.extract_strided_slice %188 {offsets = [0, 0], sizes = [8, 256], strides = [1, 1]} : vector<8x384xf32> to vector<8x256xf32>
    %194 = vector.extract_strided_slice %192 {offsets = [0, 0], sizes = [8, 256], strides = [1, 1]} : vector<8x384xf32> to vector<8x256xf32>
    %195 = arith.addf %193, %194 : vector<8x256xf32>
    %196 = arith.negf %195 : vector<8x256xf32>
    %197 = math.exp %196 : vector<8x256xf32>
    %cst_63 = arith.constant 1.000000e+00 : f32
    %198 = vector.broadcast %cst_63 : f32 to vector<8x256xf32>
    %199 = arith.addf %198, %197 : vector<8x256xf32>
    %200 = arith.divf %198, %199 : vector<8x256xf32>
    %201 = vector.extract_strided_slice %200 {offsets = [0, 0], sizes = [8, 128], strides = [1, 1]} : vector<8x256xf32> to vector<8x128xf32>
    %202 = vector.extract_strided_slice %200 {offsets = [0, 128], sizes = [8, 128], strides = [1, 1]} : vector<8x256xf32> to vector<8x128xf32>
    %203 = vector.extract_strided_slice %188 {offsets = [0, 256], sizes = [8, 128], strides = [1, 1]} : vector<8x384xf32> to vector<8x128xf32>
    %204 = vector.extract_strided_slice %192 {offsets = [0, 256], sizes = [8, 128], strides = [1, 1]} : vector<8x384xf32> to vector<8x128xf32>
    %205 = arith.mulf %201, %204 : vector<8x128xf32>
    %206 = arith.addf %203, %205 : vector<8x128xf32>
    %207 = math.tanh %206 : vector<8x128xf32>
    %cst_64 = arith.constant 1.000000e+00 : f32
    %208 = vector.broadcast %cst_64 : f32 to vector<8x128xf32>
    %209 = arith.subf %208, %202 : vector<8x128xf32>
    %210 = arith.mulf %209, %207 : vector<8x128xf32>
    %211 = arith.mulf %202, %159 : vector<8x128xf32>
    %212 = arith.addf %210, %211 : vector<8x128xf32>
    %213 = arith.truncf %212 : vector<8x128xf32> to vector<8x128xbf16>
    %c0_65 = arith.constant 0 : index
    %c0_66 = arith.constant 0 : index
    %214 = vector.load %arg5[%c0_65, %c0_66] : memref<128x384xbf16, #tpu.memory_space<vmem>>, vector<128x384xbf16>
    %cst_67 = arith.constant dense<0.000000e+00> : vector<8x384xf32>
    %215 = tpu.matmul %213, %214, %cst_67 {dimension_numbers = #tpu.dot_dimension_numbers<[1], [0], [0], [1], [0, 0, 1, 1], [], []>} : vector<8x128xbf16>, vector<128x384xbf16>, vector<8x384xf32> -> vector<8x384xf32>
    %216 = arith.addf %215, %2 : vector<8x384xf32>
    %217 = arith.truncf %187 : vector<8x128xf32> to vector<8x128xbf16>
    %c0_68 = arith.constant 0 : index
    %c0_69 = arith.constant 0 : index
    %218 = vector.load %arg6[%c0_68, %c0_69] : memref<128x384xbf16, #tpu.memory_space<vmem>>, vector<128x384xbf16>
    %cst_70 = arith.constant dense<0.000000e+00> : vector<8x384xf32>
    %219 = tpu.matmul %217, %218, %cst_70 {dimension_numbers = #tpu.dot_dimension_numbers<[1], [0], [0], [1], [0, 0, 1, 1], [], []>} : vector<8x128xbf16>, vector<128x384xbf16>, vector<8x384xf32> -> vector<8x384xf32>
    %220 = arith.addf %219, %8 : vector<8x384xf32>
    %221 = vector.extract_strided_slice %216 {offsets = [0, 0], sizes = [8, 256], strides = [1, 1]} : vector<8x384xf32> to vector<8x256xf32>
    %222 = vector.extract_strided_slice %220 {offsets = [0, 0], sizes = [8, 256], strides = [1, 1]} : vector<8x384xf32> to vector<8x256xf32>
    %223 = arith.addf %221, %222 : vector<8x256xf32>
    %224 = arith.negf %223 : vector<8x256xf32>
    %225 = math.exp %224 : vector<8x256xf32>
    %cst_71 = arith.constant 1.000000e+00 : f32
    %226 = vector.broadcast %cst_71 : f32 to vector<8x256xf32>
    %227 = arith.addf %226, %225 : vector<8x256xf32>
    %228 = arith.divf %226, %227 : vector<8x256xf32>
    %229 = vector.extract_strided_slice %228 {offsets = [0, 0], sizes = [8, 128], strides = [1, 1]} : vector<8x256xf32> to vector<8x128xf32>
    %230 = vector.extract_strided_slice %228 {offsets = [0, 128], sizes = [8, 128], strides = [1, 1]} : vector<8x256xf32> to vector<8x128xf32>
    %231 = vector.extract_strided_slice %216 {offsets = [0, 256], sizes = [8, 128], strides = [1, 1]} : vector<8x384xf32> to vector<8x128xf32>
    %232 = vector.extract_strided_slice %220 {offsets = [0, 256], sizes = [8, 128], strides = [1, 1]} : vector<8x384xf32> to vector<8x128xf32>
    %233 = arith.mulf %229, %232 : vector<8x128xf32>
    %234 = arith.addf %231, %233 : vector<8x128xf32>
    %235 = math.tanh %234 : vector<8x128xf32>
    %cst_72 = arith.constant 1.000000e+00 : f32
    %236 = vector.broadcast %cst_72 : f32 to vector<8x128xf32>
    %237 = arith.subf %236, %230 : vector<8x128xf32>
    %238 = arith.mulf %237, %235 : vector<8x128xf32>
    %239 = arith.mulf %230, %187 : vector<8x128xf32>
    %240 = arith.addf %238, %239 : vector<8x128xf32>
    %241 = vector.extract_strided_slice %26 {offsets = [32, 0], sizes = [8, 384], strides = [1, 1]} : vector<64x384xf32> to vector<8x384xf32>
    %242 = arith.truncf %212 : vector<8x128xf32> to vector<8x128xbf16>
    %c0_73 = arith.constant 0 : index
    %c0_74 = arith.constant 0 : index
    %243 = vector.load %arg2[%c0_73, %c0_74] : memref<128x384xbf16, #tpu.memory_space<vmem>>, vector<128x384xbf16>
    %cst_75 = arith.constant dense<0.000000e+00> : vector<8x384xf32>
    %244 = tpu.matmul %242, %243, %cst_75 {dimension_numbers = #tpu.dot_dimension_numbers<[1], [0], [0], [1], [0, 0, 1, 1], [], []>} : vector<8x128xbf16>, vector<128x384xbf16>, vector<8x384xf32> -> vector<8x384xf32>
    %245 = arith.addf %244, %5 : vector<8x384xf32>
    %246 = vector.extract_strided_slice %241 {offsets = [0, 0], sizes = [8, 256], strides = [1, 1]} : vector<8x384xf32> to vector<8x256xf32>
    %247 = vector.extract_strided_slice %245 {offsets = [0, 0], sizes = [8, 256], strides = [1, 1]} : vector<8x384xf32> to vector<8x256xf32>
    %248 = arith.addf %246, %247 : vector<8x256xf32>
    %249 = arith.negf %248 : vector<8x256xf32>
    %250 = math.exp %249 : vector<8x256xf32>
    %cst_76 = arith.constant 1.000000e+00 : f32
    %251 = vector.broadcast %cst_76 : f32 to vector<8x256xf32>
    %252 = arith.addf %251, %250 : vector<8x256xf32>
    %253 = arith.divf %251, %252 : vector<8x256xf32>
    %254 = vector.extract_strided_slice %253 {offsets = [0, 0], sizes = [8, 128], strides = [1, 1]} : vector<8x256xf32> to vector<8x128xf32>
    %255 = vector.extract_strided_slice %253 {offsets = [0, 128], sizes = [8, 128], strides = [1, 1]} : vector<8x256xf32> to vector<8x128xf32>
    %256 = vector.extract_strided_slice %241 {offsets = [0, 256], sizes = [8, 128], strides = [1, 1]} : vector<8x384xf32> to vector<8x128xf32>
    %257 = vector.extract_strided_slice %245 {offsets = [0, 256], sizes = [8, 128], strides = [1, 1]} : vector<8x384xf32> to vector<8x128xf32>
    %258 = arith.mulf %254, %257 : vector<8x128xf32>
    %259 = arith.addf %256, %258 : vector<8x128xf32>
    %260 = math.tanh %259 : vector<8x128xf32>
    %cst_77 = arith.constant 1.000000e+00 : f32
    %261 = vector.broadcast %cst_77 : f32 to vector<8x128xf32>
    %262 = arith.subf %261, %255 : vector<8x128xf32>
    %263 = arith.mulf %262, %260 : vector<8x128xf32>
    %264 = arith.mulf %255, %212 : vector<8x128xf32>
    %265 = arith.addf %263, %264 : vector<8x128xf32>
    %266 = arith.truncf %265 : vector<8x128xf32> to vector<8x128xbf16>
    %c0_78 = arith.constant 0 : index
    %c0_79 = arith.constant 0 : index
    %267 = vector.load %arg5[%c0_78, %c0_79] : memref<128x384xbf16, #tpu.memory_space<vmem>>, vector<128x384xbf16>
    %cst_80 = arith.constant dense<0.000000e+00> : vector<8x384xf32>
    %268 = tpu.matmul %266, %267, %cst_80 {dimension_numbers = #tpu.dot_dimension_numbers<[1], [0], [0], [1], [0, 0, 1, 1], [], []>} : vector<8x128xbf16>, vector<128x384xbf16>, vector<8x384xf32> -> vector<8x384xf32>
    %269 = arith.addf %268, %2 : vector<8x384xf32>
    %270 = arith.truncf %240 : vector<8x128xf32> to vector<8x128xbf16>
    %c0_81 = arith.constant 0 : index
    %c0_82 = arith.constant 0 : index
    %271 = vector.load %arg6[%c0_81, %c0_82] : memref<128x384xbf16, #tpu.memory_space<vmem>>, vector<128x384xbf16>
    %cst_83 = arith.constant dense<0.000000e+00> : vector<8x384xf32>
    %272 = tpu.matmul %270, %271, %cst_83 {dimension_numbers = #tpu.dot_dimension_numbers<[1], [0], [0], [1], [0, 0, 1, 1], [], []>} : vector<8x128xbf16>, vector<128x384xbf16>, vector<8x384xf32> -> vector<8x384xf32>
    %273 = arith.addf %272, %8 : vector<8x384xf32>
    %274 = vector.extract_strided_slice %269 {offsets = [0, 0], sizes = [8, 256], strides = [1, 1]} : vector<8x384xf32> to vector<8x256xf32>
    %275 = vector.extract_strided_slice %273 {offsets = [0, 0], sizes = [8, 256], strides = [1, 1]} : vector<8x384xf32> to vector<8x256xf32>
    %276 = arith.addf %274, %275 : vector<8x256xf32>
    %277 = arith.negf %276 : vector<8x256xf32>
    %278 = math.exp %277 : vector<8x256xf32>
    %cst_84 = arith.constant 1.000000e+00 : f32
    %279 = vector.broadcast %cst_84 : f32 to vector<8x256xf32>
    %280 = arith.addf %279, %278 : vector<8x256xf32>
    %281 = arith.divf %279, %280 : vector<8x256xf32>
    %282 = vector.extract_strided_slice %281 {offsets = [0, 0], sizes = [8, 128], strides = [1, 1]} : vector<8x256xf32> to vector<8x128xf32>
    %283 = vector.extract_strided_slice %281 {offsets = [0, 128], sizes = [8, 128], strides = [1, 1]} : vector<8x256xf32> to vector<8x128xf32>
    %284 = vector.extract_strided_slice %269 {offsets = [0, 256], sizes = [8, 128], strides = [1, 1]} : vector<8x384xf32> to vector<8x128xf32>
    %285 = vector.extract_strided_slice %273 {offsets = [0, 256], sizes = [8, 128], strides = [1, 1]} : vector<8x384xf32> to vector<8x128xf32>
    %286 = arith.mulf %282, %285 : vector<8x128xf32>
    %287 = arith.addf %284, %286 : vector<8x128xf32>
    %288 = math.tanh %287 : vector<8x128xf32>
    %cst_85 = arith.constant 1.000000e+00 : f32
    %289 = vector.broadcast %cst_85 : f32 to vector<8x128xf32>
    %290 = arith.subf %289, %283 : vector<8x128xf32>
    %291 = arith.mulf %290, %288 : vector<8x128xf32>
    %292 = arith.mulf %283, %240 : vector<8x128xf32>
    %293 = arith.addf %291, %292 : vector<8x128xf32>
    %294 = vector.extract_strided_slice %26 {offsets = [40, 0], sizes = [8, 384], strides = [1, 1]} : vector<64x384xf32> to vector<8x384xf32>
    %295 = arith.truncf %265 : vector<8x128xf32> to vector<8x128xbf16>
    %c0_86 = arith.constant 0 : index
    %c0_87 = arith.constant 0 : index
    %296 = vector.load %arg2[%c0_86, %c0_87] : memref<128x384xbf16, #tpu.memory_space<vmem>>, vector<128x384xbf16>
    %cst_88 = arith.constant dense<0.000000e+00> : vector<8x384xf32>
    %297 = tpu.matmul %295, %296, %cst_88 {dimension_numbers = #tpu.dot_dimension_numbers<[1], [0], [0], [1], [0, 0, 1, 1], [], []>} : vector<8x128xbf16>, vector<128x384xbf16>, vector<8x384xf32> -> vector<8x384xf32>
    %298 = arith.addf %297, %5 : vector<8x384xf32>
    %299 = vector.extract_strided_slice %294 {offsets = [0, 0], sizes = [8, 256], strides = [1, 1]} : vector<8x384xf32> to vector<8x256xf32>
    %300 = vector.extract_strided_slice %298 {offsets = [0, 0], sizes = [8, 256], strides = [1, 1]} : vector<8x384xf32> to vector<8x256xf32>
    %301 = arith.addf %299, %300 : vector<8x256xf32>
    %302 = arith.negf %301 : vector<8x256xf32>
    %303 = math.exp %302 : vector<8x256xf32>
    %cst_89 = arith.constant 1.000000e+00 : f32
    %304 = vector.broadcast %cst_89 : f32 to vector<8x256xf32>
    %305 = arith.addf %304, %303 : vector<8x256xf32>
    %306 = arith.divf %304, %305 : vector<8x256xf32>
    %307 = vector.extract_strided_slice %306 {offsets = [0, 0], sizes = [8, 128], strides = [1, 1]} : vector<8x256xf32> to vector<8x128xf32>
    %308 = vector.extract_strided_slice %306 {offsets = [0, 128], sizes = [8, 128], strides = [1, 1]} : vector<8x256xf32> to vector<8x128xf32>
    %309 = vector.extract_strided_slice %294 {offsets = [0, 256], sizes = [8, 128], strides = [1, 1]} : vector<8x384xf32> to vector<8x128xf32>
    %310 = vector.extract_strided_slice %298 {offsets = [0, 256], sizes = [8, 128], strides = [1, 1]} : vector<8x384xf32> to vector<8x128xf32>
    %311 = arith.mulf %307, %310 : vector<8x128xf32>
    %312 = arith.addf %309, %311 : vector<8x128xf32>
    %313 = math.tanh %312 : vector<8x128xf32>
    %cst_90 = arith.constant 1.000000e+00 : f32
    %314 = vector.broadcast %cst_90 : f32 to vector<8x128xf32>
    %315 = arith.subf %314, %308 : vector<8x128xf32>
    %316 = arith.mulf %315, %313 : vector<8x128xf32>
    %317 = arith.mulf %308, %265 : vector<8x128xf32>
    %318 = arith.addf %316, %317 : vector<8x128xf32>
    %319 = arith.truncf %318 : vector<8x128xf32> to vector<8x128xbf16>
    %c0_91 = arith.constant 0 : index
    %c0_92 = arith.constant 0 : index
    %320 = vector.load %arg5[%c0_91, %c0_92] : memref<128x384xbf16, #tpu.memory_space<vmem>>, vector<128x384xbf16>
    %cst_93 = arith.constant dense<0.000000e+00> : vector<8x384xf32>
    %321 = tpu.matmul %319, %320, %cst_93 {dimension_numbers = #tpu.dot_dimension_numbers<[1], [0], [0], [1], [0, 0, 1, 1], [], []>} : vector<8x128xbf16>, vector<128x384xbf16>, vector<8x384xf32> -> vector<8x384xf32>
    %322 = arith.addf %321, %2 : vector<8x384xf32>
    %323 = arith.truncf %293 : vector<8x128xf32> to vector<8x128xbf16>
    %c0_94 = arith.constant 0 : index
    %c0_95 = arith.constant 0 : index
    %324 = vector.load %arg6[%c0_94, %c0_95] : memref<128x384xbf16, #tpu.memory_space<vmem>>, vector<128x384xbf16>
    %cst_96 = arith.constant dense<0.000000e+00> : vector<8x384xf32>
    %325 = tpu.matmul %323, %324, %cst_96 {dimension_numbers = #tpu.dot_dimension_numbers<[1], [0], [0], [1], [0, 0, 1, 1], [], []>} : vector<8x128xbf16>, vector<128x384xbf16>, vector<8x384xf32> -> vector<8x384xf32>
    %326 = arith.addf %325, %8 : vector<8x384xf32>
    %327 = vector.extract_strided_slice %322 {offsets = [0, 0], sizes = [8, 256], strides = [1, 1]} : vector<8x384xf32> to vector<8x256xf32>
    %328 = vector.extract_strided_slice %326 {offsets = [0, 0], sizes = [8, 256], strides = [1, 1]} : vector<8x384xf32> to vector<8x256xf32>
    %329 = arith.addf %327, %328 : vector<8x256xf32>
    %330 = arith.negf %329 : vector<8x256xf32>
    %331 = math.exp %330 : vector<8x256xf32>
    %cst_97 = arith.constant 1.000000e+00 : f32
    %332 = vector.broadcast %cst_97 : f32 to vector<8x256xf32>
    %333 = arith.addf %332, %331 : vector<8x256xf32>
    %334 = arith.divf %332, %333 : vector<8x256xf32>
    %335 = vector.extract_strided_slice %334 {offsets = [0, 0], sizes = [8, 128], strides = [1, 1]} : vector<8x256xf32> to vector<8x128xf32>
    %336 = vector.extract_strided_slice %334 {offsets = [0, 128], sizes = [8, 128], strides = [1, 1]} : vector<8x256xf32> to vector<8x128xf32>
    %337 = vector.extract_strided_slice %322 {offsets = [0, 256], sizes = [8, 128], strides = [1, 1]} : vector<8x384xf32> to vector<8x128xf32>
    %338 = vector.extract_strided_slice %326 {offsets = [0, 256], sizes = [8, 128], strides = [1, 1]} : vector<8x384xf32> to vector<8x128xf32>
    %339 = arith.mulf %335, %338 : vector<8x128xf32>
    %340 = arith.addf %337, %339 : vector<8x128xf32>
    %341 = math.tanh %340 : vector<8x128xf32>
    %cst_98 = arith.constant 1.000000e+00 : f32
    %342 = vector.broadcast %cst_98 : f32 to vector<8x128xf32>
    %343 = arith.subf %342, %336 : vector<8x128xf32>
    %344 = arith.mulf %343, %341 : vector<8x128xf32>
    %345 = arith.mulf %336, %293 : vector<8x128xf32>
    %346 = arith.addf %344, %345 : vector<8x128xf32>
    %347 = vector.extract_strided_slice %26 {offsets = [48, 0], sizes = [8, 384], strides = [1, 1]} : vector<64x384xf32> to vector<8x384xf32>
    %348 = arith.truncf %318 : vector<8x128xf32> to vector<8x128xbf16>
    %c0_99 = arith.constant 0 : index
    %c0_100 = arith.constant 0 : index
    %349 = vector.load %arg2[%c0_99, %c0_100] : memref<128x384xbf16, #tpu.memory_space<vmem>>, vector<128x384xbf16>
    %cst_101 = arith.constant dense<0.000000e+00> : vector<8x384xf32>
    %350 = tpu.matmul %348, %349, %cst_101 {dimension_numbers = #tpu.dot_dimension_numbers<[1], [0], [0], [1], [0, 0, 1, 1], [], []>} : vector<8x128xbf16>, vector<128x384xbf16>, vector<8x384xf32> -> vector<8x384xf32>
    %351 = arith.addf %350, %5 : vector<8x384xf32>
    %352 = vector.extract_strided_slice %347 {offsets = [0, 0], sizes = [8, 256], strides = [1, 1]} : vector<8x384xf32> to vector<8x256xf32>
    %353 = vector.extract_strided_slice %351 {offsets = [0, 0], sizes = [8, 256], strides = [1, 1]} : vector<8x384xf32> to vector<8x256xf32>
    %354 = arith.addf %352, %353 : vector<8x256xf32>
    %355 = arith.negf %354 : vector<8x256xf32>
    %356 = math.exp %355 : vector<8x256xf32>
    %cst_102 = arith.constant 1.000000e+00 : f32
    %357 = vector.broadcast %cst_102 : f32 to vector<8x256xf32>
    %358 = arith.addf %357, %356 : vector<8x256xf32>
    %359 = arith.divf %357, %358 : vector<8x256xf32>
    %360 = vector.extract_strided_slice %359 {offsets = [0, 0], sizes = [8, 128], strides = [1, 1]} : vector<8x256xf32> to vector<8x128xf32>
    %361 = vector.extract_strided_slice %359 {offsets = [0, 128], sizes = [8, 128], strides = [1, 1]} : vector<8x256xf32> to vector<8x128xf32>
    %362 = vector.extract_strided_slice %347 {offsets = [0, 256], sizes = [8, 128], strides = [1, 1]} : vector<8x384xf32> to vector<8x128xf32>
    %363 = vector.extract_strided_slice %351 {offsets = [0, 256], sizes = [8, 128], strides = [1, 1]} : vector<8x384xf32> to vector<8x128xf32>
    %364 = arith.mulf %360, %363 : vector<8x128xf32>
    %365 = arith.addf %362, %364 : vector<8x128xf32>
    %366 = math.tanh %365 : vector<8x128xf32>
    %cst_103 = arith.constant 1.000000e+00 : f32
    %367 = vector.broadcast %cst_103 : f32 to vector<8x128xf32>
    %368 = arith.subf %367, %361 : vector<8x128xf32>
    %369 = arith.mulf %368, %366 : vector<8x128xf32>
    %370 = arith.mulf %361, %318 : vector<8x128xf32>
    %371 = arith.addf %369, %370 : vector<8x128xf32>
    %372 = arith.truncf %371 : vector<8x128xf32> to vector<8x128xbf16>
    %c0_104 = arith.constant 0 : index
    %c0_105 = arith.constant 0 : index
    %373 = vector.load %arg5[%c0_104, %c0_105] : memref<128x384xbf16, #tpu.memory_space<vmem>>, vector<128x384xbf16>
    %cst_106 = arith.constant dense<0.000000e+00> : vector<8x384xf32>
    %374 = tpu.matmul %372, %373, %cst_106 {dimension_numbers = #tpu.dot_dimension_numbers<[1], [0], [0], [1], [0, 0, 1, 1], [], []>} : vector<8x128xbf16>, vector<128x384xbf16>, vector<8x384xf32> -> vector<8x384xf32>
    %375 = arith.addf %374, %2 : vector<8x384xf32>
    %376 = arith.truncf %346 : vector<8x128xf32> to vector<8x128xbf16>
    %c0_107 = arith.constant 0 : index
    %c0_108 = arith.constant 0 : index
    %377 = vector.load %arg6[%c0_107, %c0_108] : memref<128x384xbf16, #tpu.memory_space<vmem>>, vector<128x384xbf16>
    %cst_109 = arith.constant dense<0.000000e+00> : vector<8x384xf32>
    %378 = tpu.matmul %376, %377, %cst_109 {dimension_numbers = #tpu.dot_dimension_numbers<[1], [0], [0], [1], [0, 0, 1, 1], [], []>} : vector<8x128xbf16>, vector<128x384xbf16>, vector<8x384xf32> -> vector<8x384xf32>
    %379 = arith.addf %378, %8 : vector<8x384xf32>
    %380 = vector.extract_strided_slice %375 {offsets = [0, 0], sizes = [8, 256], strides = [1, 1]} : vector<8x384xf32> to vector<8x256xf32>
    %381 = vector.extract_strided_slice %379 {offsets = [0, 0], sizes = [8, 256], strides = [1, 1]} : vector<8x384xf32> to vector<8x256xf32>
    %382 = arith.addf %380, %381 : vector<8x256xf32>
    %383 = arith.negf %382 : vector<8x256xf32>
    %384 = math.exp %383 : vector<8x256xf32>
    %cst_110 = arith.constant 1.000000e+00 : f32
    %385 = vector.broadcast %cst_110 : f32 to vector<8x256xf32>
    %386 = arith.addf %385, %384 : vector<8x256xf32>
    %387 = arith.divf %385, %386 : vector<8x256xf32>
    %388 = vector.extract_strided_slice %387 {offsets = [0, 0], sizes = [8, 128], strides = [1, 1]} : vector<8x256xf32> to vector<8x128xf32>
    %389 = vector.extract_strided_slice %387 {offsets = [0, 128], sizes = [8, 128], strides = [1, 1]} : vector<8x256xf32> to vector<8x128xf32>
    %390 = vector.extract_strided_slice %375 {offsets = [0, 256], sizes = [8, 128], strides = [1, 1]} : vector<8x384xf32> to vector<8x128xf32>
    %391 = vector.extract_strided_slice %379 {offsets = [0, 256], sizes = [8, 128], strides = [1, 1]} : vector<8x384xf32> to vector<8x128xf32>
    %392 = arith.mulf %388, %391 : vector<8x128xf32>
    %393 = arith.addf %390, %392 : vector<8x128xf32>
    %394 = math.tanh %393 : vector<8x128xf32>
    %cst_111 = arith.constant 1.000000e+00 : f32
    %395 = vector.broadcast %cst_111 : f32 to vector<8x128xf32>
    %396 = arith.subf %395, %389 : vector<8x128xf32>
    %397 = arith.mulf %396, %394 : vector<8x128xf32>
    %398 = arith.mulf %389, %346 : vector<8x128xf32>
    %399 = arith.addf %397, %398 : vector<8x128xf32>
    %400 = vector.extract_strided_slice %26 {offsets = [56, 0], sizes = [8, 384], strides = [1, 1]} : vector<64x384xf32> to vector<8x384xf32>
    %401 = arith.truncf %371 : vector<8x128xf32> to vector<8x128xbf16>
    %c0_112 = arith.constant 0 : index
    %c0_113 = arith.constant 0 : index
    %402 = vector.load %arg2[%c0_112, %c0_113] : memref<128x384xbf16, #tpu.memory_space<vmem>>, vector<128x384xbf16>
    %cst_114 = arith.constant dense<0.000000e+00> : vector<8x384xf32>
    %403 = tpu.matmul %401, %402, %cst_114 {dimension_numbers = #tpu.dot_dimension_numbers<[1], [0], [0], [1], [0, 0, 1, 1], [], []>} : vector<8x128xbf16>, vector<128x384xbf16>, vector<8x384xf32> -> vector<8x384xf32>
    %404 = arith.addf %403, %5 : vector<8x384xf32>
    %405 = vector.extract_strided_slice %400 {offsets = [0, 0], sizes = [8, 256], strides = [1, 1]} : vector<8x384xf32> to vector<8x256xf32>
    %406 = vector.extract_strided_slice %404 {offsets = [0, 0], sizes = [8, 256], strides = [1, 1]} : vector<8x384xf32> to vector<8x256xf32>
    %407 = arith.addf %405, %406 : vector<8x256xf32>
    %408 = arith.negf %407 : vector<8x256xf32>
    %409 = math.exp %408 : vector<8x256xf32>
    %cst_115 = arith.constant 1.000000e+00 : f32
    %410 = vector.broadcast %cst_115 : f32 to vector<8x256xf32>
    %411 = arith.addf %410, %409 : vector<8x256xf32>
    %412 = arith.divf %410, %411 : vector<8x256xf32>
    %413 = vector.extract_strided_slice %412 {offsets = [0, 0], sizes = [8, 128], strides = [1, 1]} : vector<8x256xf32> to vector<8x128xf32>
    %414 = vector.extract_strided_slice %412 {offsets = [0, 128], sizes = [8, 128], strides = [1, 1]} : vector<8x256xf32> to vector<8x128xf32>
    %415 = vector.extract_strided_slice %400 {offsets = [0, 256], sizes = [8, 128], strides = [1, 1]} : vector<8x384xf32> to vector<8x128xf32>
    %416 = vector.extract_strided_slice %404 {offsets = [0, 256], sizes = [8, 128], strides = [1, 1]} : vector<8x384xf32> to vector<8x128xf32>
    %417 = arith.mulf %413, %416 : vector<8x128xf32>
    %418 = arith.addf %415, %417 : vector<8x128xf32>
    %419 = math.tanh %418 : vector<8x128xf32>
    %cst_116 = arith.constant 1.000000e+00 : f32
    %420 = vector.broadcast %cst_116 : f32 to vector<8x128xf32>
    %421 = arith.subf %420, %414 : vector<8x128xf32>
    %422 = arith.mulf %421, %419 : vector<8x128xf32>
    %423 = arith.mulf %414, %371 : vector<8x128xf32>
    %424 = arith.addf %422, %423 : vector<8x128xf32>
    %425 = arith.truncf %424 : vector<8x128xf32> to vector<8x128xbf16>
    %c0_117 = arith.constant 0 : index
    %c0_118 = arith.constant 0 : index
    %426 = vector.load %arg5[%c0_117, %c0_118] : memref<128x384xbf16, #tpu.memory_space<vmem>>, vector<128x384xbf16>
    %cst_119 = arith.constant dense<0.000000e+00> : vector<8x384xf32>
    %427 = tpu.matmul %425, %426, %cst_119 {dimension_numbers = #tpu.dot_dimension_numbers<[1], [0], [0], [1], [0, 0, 1, 1], [], []>} : vector<8x128xbf16>, vector<128x384xbf16>, vector<8x384xf32> -> vector<8x384xf32>
    %428 = arith.addf %427, %2 : vector<8x384xf32>
    %429 = arith.truncf %399 : vector<8x128xf32> to vector<8x128xbf16>
    %c0_120 = arith.constant 0 : index
    %c0_121 = arith.constant 0 : index
    %430 = vector.load %arg6[%c0_120, %c0_121] : memref<128x384xbf16, #tpu.memory_space<vmem>>, vector<128x384xbf16>
    %cst_122 = arith.constant dense<0.000000e+00> : vector<8x384xf32>
    %431 = tpu.matmul %429, %430, %cst_122 {dimension_numbers = #tpu.dot_dimension_numbers<[1], [0], [0], [1], [0, 0, 1, 1], [], []>} : vector<8x128xbf16>, vector<128x384xbf16>, vector<8x384xf32> -> vector<8x384xf32>
    %432 = arith.addf %431, %8 : vector<8x384xf32>
    %433 = vector.extract_strided_slice %428 {offsets = [0, 0], sizes = [8, 256], strides = [1, 1]} : vector<8x384xf32> to vector<8x256xf32>
    %434 = vector.extract_strided_slice %432 {offsets = [0, 0], sizes = [8, 256], strides = [1, 1]} : vector<8x384xf32> to vector<8x256xf32>
    %435 = arith.addf %433, %434 : vector<8x256xf32>
    %436 = arith.negf %435 : vector<8x256xf32>
    %437 = math.exp %436 : vector<8x256xf32>
    %cst_123 = arith.constant 1.000000e+00 : f32
    %438 = vector.broadcast %cst_123 : f32 to vector<8x256xf32>
    %439 = arith.addf %438, %437 : vector<8x256xf32>
    %440 = arith.divf %438, %439 : vector<8x256xf32>
    %441 = vector.extract_strided_slice %440 {offsets = [0, 0], sizes = [8, 128], strides = [1, 1]} : vector<8x256xf32> to vector<8x128xf32>
    %442 = vector.extract_strided_slice %440 {offsets = [0, 128], sizes = [8, 128], strides = [1, 1]} : vector<8x256xf32> to vector<8x128xf32>
    %443 = vector.extract_strided_slice %428 {offsets = [0, 256], sizes = [8, 128], strides = [1, 1]} : vector<8x384xf32> to vector<8x128xf32>
    %444 = vector.extract_strided_slice %432 {offsets = [0, 256], sizes = [8, 128], strides = [1, 1]} : vector<8x384xf32> to vector<8x128xf32>
    %445 = arith.mulf %441, %444 : vector<8x128xf32>
    %446 = arith.addf %443, %445 : vector<8x128xf32>
    %447 = math.tanh %446 : vector<8x128xf32>
    %cst_124 = arith.constant 1.000000e+00 : f32
    %448 = vector.broadcast %cst_124 : f32 to vector<8x128xf32>
    %449 = arith.subf %448, %442 : vector<8x128xf32>
    %450 = arith.mulf %449, %447 : vector<8x128xf32>
    %451 = arith.mulf %442, %399 : vector<8x128xf32>
    %452 = arith.addf %450, %451 : vector<8x128xf32>
    %453 = math.tanh %452 : vector<8x128xf32>
    %454 = arith.truncf %453 : vector<8x128xf32> to vector<8x128xbf16>
    %c0_125 = arith.constant 0 : index
    %c0_126 = arith.constant 0 : index
    %455 = vector.load %arg9[%c0_125, %c0_126] : memref<128x384xbf16, #tpu.memory_space<vmem>>, vector<128x384xbf16>
    %cst_127 = arith.constant dense<0.000000e+00> : vector<8x384xf32>
    %456 = tpu.matmul %454, %455, %cst_127 {dimension_numbers = #tpu.dot_dimension_numbers<[1], [0], [0], [1], [0, 0, 1, 1], [], []>} : vector<8x128xbf16>, vector<128x384xbf16>, vector<8x384xf32> -> vector<8x384xf32>
    %457 = arith.addf %456, %11 : vector<8x384xf32>
    %458 = arith.truncf %424 : vector<8x128xf32> to vector<8x128xbf16>
    %c0_128 = arith.constant 0 : index
    %c0_129 = arith.constant 0 : index
    %459 = vector.load %arg10[%c0_128, %c0_129] : memref<128x384xbf16, #tpu.memory_space<vmem>>, vector<128x384xbf16>
    %cst_130 = arith.constant dense<0.000000e+00> : vector<8x384xf32>
    %460 = tpu.matmul %458, %459, %cst_130 {dimension_numbers = #tpu.dot_dimension_numbers<[1], [0], [0], [1], [0, 0, 1, 1], [], []>} : vector<8x128xbf16>, vector<128x384xbf16>, vector<8x384xf32> -> vector<8x384xf32>
    %461 = arith.addf %460, %17 : vector<8x384xf32>
    %462 = vector.extract_strided_slice %457 {offsets = [0, 0], sizes = [8, 256], strides = [1, 1]} : vector<8x384xf32> to vector<8x256xf32>
    %463 = vector.extract_strided_slice %461 {offsets = [0, 0], sizes = [8, 256], strides = [1, 1]} : vector<8x384xf32> to vector<8x256xf32>
    %464 = arith.addf %462, %463 : vector<8x256xf32>
    %465 = arith.negf %464 : vector<8x256xf32>
    %466 = math.exp %465 : vector<8x256xf32>
    %cst_131 = arith.constant 1.000000e+00 : f32
    %467 = vector.broadcast %cst_131 : f32 to vector<8x256xf32>
    %468 = arith.addf %467, %466 : vector<8x256xf32>
    %469 = arith.divf %467, %468 : vector<8x256xf32>
    %470 = vector.extract_strided_slice %469 {offsets = [0, 0], sizes = [8, 128], strides = [1, 1]} : vector<8x256xf32> to vector<8x128xf32>
    %471 = vector.extract_strided_slice %469 {offsets = [0, 128], sizes = [8, 128], strides = [1, 1]} : vector<8x256xf32> to vector<8x128xf32>
    %472 = vector.extract_strided_slice %457 {offsets = [0, 256], sizes = [8, 128], strides = [1, 1]} : vector<8x384xf32> to vector<8x128xf32>
    %473 = vector.extract_strided_slice %461 {offsets = [0, 256], sizes = [8, 128], strides = [1, 1]} : vector<8x384xf32> to vector<8x128xf32>
    %474 = arith.mulf %470, %473 : vector<8x128xf32>
    %475 = arith.addf %472, %474 : vector<8x128xf32>
    %476 = math.tanh %475 : vector<8x128xf32>
    %cst_132 = arith.constant 1.000000e+00 : f32
    %477 = vector.broadcast %cst_132 : f32 to vector<8x128xf32>
    %478 = arith.subf %477, %471 : vector<8x128xf32>
    %479 = arith.mulf %478, %476 : vector<8x128xf32>
    %480 = arith.mulf %471, %424 : vector<8x128xf32>
    %481 = arith.addf %479, %480 : vector<8x128xf32>
    %482 = arith.truncf %481 : vector<8x128xf32> to vector<8x128xbf16>
    %c0_133 = arith.constant 0 : index
    %c0_134 = arith.constant 0 : index
    %483 = vector.load %arg13[%c0_133, %c0_134] : memref<128x384xbf16, #tpu.memory_space<vmem>>, vector<128x384xbf16>
    %cst_135 = arith.constant dense<0.000000e+00> : vector<8x384xf32>
    %484 = tpu.matmul %482, %483, %cst_135 {dimension_numbers = #tpu.dot_dimension_numbers<[1], [0], [0], [1], [0, 0, 1, 1], [], []>} : vector<8x128xbf16>, vector<128x384xbf16>, vector<8x384xf32> -> vector<8x384xf32>
    %485 = arith.addf %484, %14 : vector<8x384xf32>
    %486 = arith.truncf %452 : vector<8x128xf32> to vector<8x128xbf16>
    %c0_136 = arith.constant 0 : index
    %c0_137 = arith.constant 0 : index
    %487 = vector.load %arg14[%c0_136, %c0_137] : memref<128x384xbf16, #tpu.memory_space<vmem>>, vector<128x384xbf16>
    %cst_138 = arith.constant dense<0.000000e+00> : vector<8x384xf32>
    %488 = tpu.matmul %486, %487, %cst_138 {dimension_numbers = #tpu.dot_dimension_numbers<[1], [0], [0], [1], [0, 0, 1, 1], [], []>} : vector<8x128xbf16>, vector<128x384xbf16>, vector<8x384xf32> -> vector<8x384xf32>
    %489 = arith.addf %488, %20 : vector<8x384xf32>
    %490 = vector.extract_strided_slice %485 {offsets = [0, 0], sizes = [8, 256], strides = [1, 1]} : vector<8x384xf32> to vector<8x256xf32>
    %491 = vector.extract_strided_slice %489 {offsets = [0, 0], sizes = [8, 256], strides = [1, 1]} : vector<8x384xf32> to vector<8x256xf32>
    %492 = arith.addf %490, %491 : vector<8x256xf32>
    %493 = arith.negf %492 : vector<8x256xf32>
    %494 = math.exp %493 : vector<8x256xf32>
    %cst_139 = arith.constant 1.000000e+00 : f32
    %495 = vector.broadcast %cst_139 : f32 to vector<8x256xf32>
    %496 = arith.addf %495, %494 : vector<8x256xf32>
    %497 = arith.divf %495, %496 : vector<8x256xf32>
    %498 = vector.extract_strided_slice %497 {offsets = [0, 0], sizes = [8, 128], strides = [1, 1]} : vector<8x256xf32> to vector<8x128xf32>
    %499 = vector.extract_strided_slice %497 {offsets = [0, 128], sizes = [8, 128], strides = [1, 1]} : vector<8x256xf32> to vector<8x128xf32>
    %500 = vector.extract_strided_slice %485 {offsets = [0, 256], sizes = [8, 128], strides = [1, 1]} : vector<8x384xf32> to vector<8x128xf32>
    %501 = vector.extract_strided_slice %489 {offsets = [0, 256], sizes = [8, 128], strides = [1, 1]} : vector<8x384xf32> to vector<8x128xf32>
    %502 = arith.mulf %498, %501 : vector<8x128xf32>
    %503 = arith.addf %500, %502 : vector<8x128xf32>
    %504 = math.tanh %503 : vector<8x128xf32>
    %cst_140 = arith.constant 1.000000e+00 : f32
    %505 = vector.broadcast %cst_140 : f32 to vector<8x128xf32>
    %506 = arith.subf %505, %499 : vector<8x128xf32>
    %507 = arith.mulf %506, %504 : vector<8x128xf32>
    %508 = arith.mulf %499, %452 : vector<8x128xf32>
    %509 = arith.addf %507, %508 : vector<8x128xf32>
    %510 = arith.truncf %509 : vector<8x128xf32> to vector<8x128xbf16>
    %c0_141 = arith.constant 0 : index
    %c0_142 = arith.constant 0 : index
    %511 = vector.load %arg9[%c0_141, %c0_142] : memref<128x384xbf16, #tpu.memory_space<vmem>>, vector<128x384xbf16>
    %cst_143 = arith.constant dense<0.000000e+00> : vector<8x384xf32>
    %512 = tpu.matmul %510, %511, %cst_143 {dimension_numbers = #tpu.dot_dimension_numbers<[1], [0], [0], [1], [0, 0, 1, 1], [], []>} : vector<8x128xbf16>, vector<128x384xbf16>, vector<8x384xf32> -> vector<8x384xf32>
    %513 = arith.addf %512, %11 : vector<8x384xf32>
    %514 = arith.truncf %481 : vector<8x128xf32> to vector<8x128xbf16>
    %c0_144 = arith.constant 0 : index
    %c0_145 = arith.constant 0 : index
    %515 = vector.load %arg10[%c0_144, %c0_145] : memref<128x384xbf16, #tpu.memory_space<vmem>>, vector<128x384xbf16>
    %cst_146 = arith.constant dense<0.000000e+00> : vector<8x384xf32>
    %516 = tpu.matmul %514, %515, %cst_146 {dimension_numbers = #tpu.dot_dimension_numbers<[1], [0], [0], [1], [0, 0, 1, 1], [], []>} : vector<8x128xbf16>, vector<128x384xbf16>, vector<8x384xf32> -> vector<8x384xf32>
    %517 = arith.addf %516, %17 : vector<8x384xf32>
    %518 = vector.extract_strided_slice %513 {offsets = [0, 0], sizes = [8, 256], strides = [1, 1]} : vector<8x384xf32> to vector<8x256xf32>
    %519 = vector.extract_strided_slice %517 {offsets = [0, 0], sizes = [8, 256], strides = [1, 1]} : vector<8x384xf32> to vector<8x256xf32>
    %520 = arith.addf %518, %519 : vector<8x256xf32>
    %521 = arith.negf %520 : vector<8x256xf32>
    %522 = math.exp %521 : vector<8x256xf32>
    %cst_147 = arith.constant 1.000000e+00 : f32
    %523 = vector.broadcast %cst_147 : f32 to vector<8x256xf32>
    %524 = arith.addf %523, %522 : vector<8x256xf32>
    %525 = arith.divf %523, %524 : vector<8x256xf32>
    %526 = vector.extract_strided_slice %525 {offsets = [0, 0], sizes = [8, 128], strides = [1, 1]} : vector<8x256xf32> to vector<8x128xf32>
    %527 = vector.extract_strided_slice %525 {offsets = [0, 128], sizes = [8, 128], strides = [1, 1]} : vector<8x256xf32> to vector<8x128xf32>
    %528 = vector.extract_strided_slice %513 {offsets = [0, 256], sizes = [8, 128], strides = [1, 1]} : vector<8x384xf32> to vector<8x128xf32>
    %529 = vector.extract_strided_slice %517 {offsets = [0, 256], sizes = [8, 128], strides = [1, 1]} : vector<8x384xf32> to vector<8x128xf32>
    %530 = arith.mulf %526, %529 : vector<8x128xf32>
    %531 = arith.addf %528, %530 : vector<8x128xf32>
    %532 = math.tanh %531 : vector<8x128xf32>
    %cst_148 = arith.constant 1.000000e+00 : f32
    %533 = vector.broadcast %cst_148 : f32 to vector<8x128xf32>
    %534 = arith.subf %533, %527 : vector<8x128xf32>
    %535 = arith.mulf %534, %532 : vector<8x128xf32>
    %536 = arith.mulf %527, %481 : vector<8x128xf32>
    %537 = arith.addf %535, %536 : vector<8x128xf32>
    %538 = arith.truncf %537 : vector<8x128xf32> to vector<8x128xbf16>
    %c0_149 = arith.constant 0 : index
    %c0_150 = arith.constant 0 : index
    %539 = vector.load %arg13[%c0_149, %c0_150] : memref<128x384xbf16, #tpu.memory_space<vmem>>, vector<128x384xbf16>
    %cst_151 = arith.constant dense<0.000000e+00> : vector<8x384xf32>
    %540 = tpu.matmul %538, %539, %cst_151 {dimension_numbers = #tpu.dot_dimension_numbers<[1], [0], [0], [1], [0, 0, 1, 1], [], []>} : vector<8x128xbf16>, vector<128x384xbf16>, vector<8x384xf32> -> vector<8x384xf32>
    %541 = arith.addf %540, %14 : vector<8x384xf32>
    %542 = arith.truncf %509 : vector<8x128xf32> to vector<8x128xbf16>
    %c0_152 = arith.constant 0 : index
    %c0_153 = arith.constant 0 : index
    %543 = vector.load %arg14[%c0_152, %c0_153] : memref<128x384xbf16, #tpu.memory_space<vmem>>, vector<128x384xbf16>
    %cst_154 = arith.constant dense<0.000000e+00> : vector<8x384xf32>
    %544 = tpu.matmul %542, %543, %cst_154 {dimension_numbers = #tpu.dot_dimension_numbers<[1], [0], [0], [1], [0, 0, 1, 1], [], []>} : vector<8x128xbf16>, vector<128x384xbf16>, vector<8x384xf32> -> vector<8x384xf32>
    %545 = arith.addf %544, %20 : vector<8x384xf32>
    %546 = vector.extract_strided_slice %541 {offsets = [0, 0], sizes = [8, 256], strides = [1, 1]} : vector<8x384xf32> to vector<8x256xf32>
    %547 = vector.extract_strided_slice %545 {offsets = [0, 0], sizes = [8, 256], strides = [1, 1]} : vector<8x384xf32> to vector<8x256xf32>
    %548 = arith.addf %546, %547 : vector<8x256xf32>
    %549 = arith.negf %548 : vector<8x256xf32>
    %550 = math.exp %549 : vector<8x256xf32>
    %cst_155 = arith.constant 1.000000e+00 : f32
    %551 = vector.broadcast %cst_155 : f32 to vector<8x256xf32>
    %552 = arith.addf %551, %550 : vector<8x256xf32>
    %553 = arith.divf %551, %552 : vector<8x256xf32>
    %554 = vector.extract_strided_slice %553 {offsets = [0, 0], sizes = [8, 128], strides = [1, 1]} : vector<8x256xf32> to vector<8x128xf32>
    %555 = vector.extract_strided_slice %553 {offsets = [0, 128], sizes = [8, 128], strides = [1, 1]} : vector<8x256xf32> to vector<8x128xf32>
    %556 = vector.extract_strided_slice %541 {offsets = [0, 256], sizes = [8, 128], strides = [1, 1]} : vector<8x384xf32> to vector<8x128xf32>
    %557 = vector.extract_strided_slice %545 {offsets = [0, 256], sizes = [8, 128], strides = [1, 1]} : vector<8x384xf32> to vector<8x128xf32>
    %558 = arith.mulf %554, %557 : vector<8x128xf32>
    %559 = arith.addf %556, %558 : vector<8x128xf32>
    %560 = math.tanh %559 : vector<8x128xf32>
    %cst_156 = arith.constant 1.000000e+00 : f32
    %561 = vector.broadcast %cst_156 : f32 to vector<8x128xf32>
    %562 = arith.subf %561, %555 : vector<8x128xf32>
    %563 = arith.mulf %562, %560 : vector<8x128xf32>
    %564 = arith.mulf %555, %509 : vector<8x128xf32>
    %565 = arith.addf %563, %564 : vector<8x128xf32>
    %566 = arith.truncf %565 : vector<8x128xf32> to vector<8x128xbf16>
    %c0_157 = arith.constant 0 : index
    %c0_158 = arith.constant 0 : index
    %567 = vector.load %arg9[%c0_157, %c0_158] : memref<128x384xbf16, #tpu.memory_space<vmem>>, vector<128x384xbf16>
    %cst_159 = arith.constant dense<0.000000e+00> : vector<8x384xf32>
    %568 = tpu.matmul %566, %567, %cst_159 {dimension_numbers = #tpu.dot_dimension_numbers<[1], [0], [0], [1], [0, 0, 1, 1], [], []>} : vector<8x128xbf16>, vector<128x384xbf16>, vector<8x384xf32> -> vector<8x384xf32>
    %569 = arith.addf %568, %11 : vector<8x384xf32>
    %570 = arith.truncf %537 : vector<8x128xf32> to vector<8x128xbf16>
    %c0_160 = arith.constant 0 : index
    %c0_161 = arith.constant 0 : index
    %571 = vector.load %arg10[%c0_160, %c0_161] : memref<128x384xbf16, #tpu.memory_space<vmem>>, vector<128x384xbf16>
    %cst_162 = arith.constant dense<0.000000e+00> : vector<8x384xf32>
    %572 = tpu.matmul %570, %571, %cst_162 {dimension_numbers = #tpu.dot_dimension_numbers<[1], [0], [0], [1], [0, 0, 1, 1], [], []>} : vector<8x128xbf16>, vector<128x384xbf16>, vector<8x384xf32> -> vector<8x384xf32>
    %573 = arith.addf %572, %17 : vector<8x384xf32>
    %574 = vector.extract_strided_slice %569 {offsets = [0, 0], sizes = [8, 256], strides = [1, 1]} : vector<8x384xf32> to vector<8x256xf32>
    %575 = vector.extract_strided_slice %573 {offsets = [0, 0], sizes = [8, 256], strides = [1, 1]} : vector<8x384xf32> to vector<8x256xf32>
    %576 = arith.addf %574, %575 : vector<8x256xf32>
    %577 = arith.negf %576 : vector<8x256xf32>
    %578 = math.exp %577 : vector<8x256xf32>
    %cst_163 = arith.constant 1.000000e+00 : f32
    %579 = vector.broadcast %cst_163 : f32 to vector<8x256xf32>
    %580 = arith.addf %579, %578 : vector<8x256xf32>
    %581 = arith.divf %579, %580 : vector<8x256xf32>
    %582 = vector.extract_strided_slice %581 {offsets = [0, 0], sizes = [8, 128], strides = [1, 1]} : vector<8x256xf32> to vector<8x128xf32>
    %583 = vector.extract_strided_slice %581 {offsets = [0, 128], sizes = [8, 128], strides = [1, 1]} : vector<8x256xf32> to vector<8x128xf32>
    %584 = vector.extract_strided_slice %569 {offsets = [0, 256], sizes = [8, 128], strides = [1, 1]} : vector<8x384xf32> to vector<8x128xf32>
    %585 = vector.extract_strided_slice %573 {offsets = [0, 256], sizes = [8, 128], strides = [1, 1]} : vector<8x384xf32> to vector<8x128xf32>
    %586 = arith.mulf %582, %585 : vector<8x128xf32>
    %587 = arith.addf %584, %586 : vector<8x128xf32>
    %588 = math.tanh %587 : vector<8x128xf32>
    %cst_164 = arith.constant 1.000000e+00 : f32
    %589 = vector.broadcast %cst_164 : f32 to vector<8x128xf32>
    %590 = arith.subf %589, %583 : vector<8x128xf32>
    %591 = arith.mulf %590, %588 : vector<8x128xf32>
    %592 = arith.mulf %583, %537 : vector<8x128xf32>
    %593 = arith.addf %591, %592 : vector<8x128xf32>
    %594 = arith.truncf %593 : vector<8x128xf32> to vector<8x128xbf16>
    %c0_165 = arith.constant 0 : index
    %c0_166 = arith.constant 0 : index
    %595 = vector.load %arg13[%c0_165, %c0_166] : memref<128x384xbf16, #tpu.memory_space<vmem>>, vector<128x384xbf16>
    %cst_167 = arith.constant dense<0.000000e+00> : vector<8x384xf32>
    %596 = tpu.matmul %594, %595, %cst_167 {dimension_numbers = #tpu.dot_dimension_numbers<[1], [0], [0], [1], [0, 0, 1, 1], [], []>} : vector<8x128xbf16>, vector<128x384xbf16>, vector<8x384xf32> -> vector<8x384xf32>
    %597 = arith.addf %596, %14 : vector<8x384xf32>
    %598 = arith.truncf %565 : vector<8x128xf32> to vector<8x128xbf16>
    %c0_168 = arith.constant 0 : index
    %c0_169 = arith.constant 0 : index
    %599 = vector.load %arg14[%c0_168, %c0_169] : memref<128x384xbf16, #tpu.memory_space<vmem>>, vector<128x384xbf16>
    %cst_170 = arith.constant dense<0.000000e+00> : vector<8x384xf32>
    %600 = tpu.matmul %598, %599, %cst_170 {dimension_numbers = #tpu.dot_dimension_numbers<[1], [0], [0], [1], [0, 0, 1, 1], [], []>} : vector<8x128xbf16>, vector<128x384xbf16>, vector<8x384xf32> -> vector<8x384xf32>
    %601 = arith.addf %600, %20 : vector<8x384xf32>
    %602 = vector.extract_strided_slice %597 {offsets = [0, 0], sizes = [8, 256], strides = [1, 1]} : vector<8x384xf32> to vector<8x256xf32>
    %603 = vector.extract_strided_slice %601 {offsets = [0, 0], sizes = [8, 256], strides = [1, 1]} : vector<8x384xf32> to vector<8x256xf32>
    %604 = arith.addf %602, %603 : vector<8x256xf32>
    %605 = arith.negf %604 : vector<8x256xf32>
    %606 = math.exp %605 : vector<8x256xf32>
    %cst_171 = arith.constant 1.000000e+00 : f32
    %607 = vector.broadcast %cst_171 : f32 to vector<8x256xf32>
    %608 = arith.addf %607, %606 : vector<8x256xf32>
    %609 = arith.divf %607, %608 : vector<8x256xf32>
    %610 = vector.extract_strided_slice %609 {offsets = [0, 0], sizes = [8, 128], strides = [1, 1]} : vector<8x256xf32> to vector<8x128xf32>
    %611 = vector.extract_strided_slice %609 {offsets = [0, 128], sizes = [8, 128], strides = [1, 1]} : vector<8x256xf32> to vector<8x128xf32>
    %612 = vector.extract_strided_slice %597 {offsets = [0, 256], sizes = [8, 128], strides = [1, 1]} : vector<8x384xf32> to vector<8x128xf32>
    %613 = vector.extract_strided_slice %601 {offsets = [0, 256], sizes = [8, 128], strides = [1, 1]} : vector<8x384xf32> to vector<8x128xf32>
    %614 = arith.mulf %610, %613 : vector<8x128xf32>
    %615 = arith.addf %612, %614 : vector<8x128xf32>
    %616 = math.tanh %615 : vector<8x128xf32>
    %cst_172 = arith.constant 1.000000e+00 : f32
    %617 = vector.broadcast %cst_172 : f32 to vector<8x128xf32>
    %618 = arith.subf %617, %611 : vector<8x128xf32>
    %619 = arith.mulf %618, %616 : vector<8x128xf32>
    %620 = arith.mulf %611, %565 : vector<8x128xf32>
    %621 = arith.addf %619, %620 : vector<8x128xf32>
    %622 = arith.truncf %621 : vector<8x128xf32> to vector<8x128xbf16>
    %c0_173 = arith.constant 0 : index
    %c0_174 = arith.constant 0 : index
    %623 = vector.load %arg9[%c0_173, %c0_174] : memref<128x384xbf16, #tpu.memory_space<vmem>>, vector<128x384xbf16>
    %cst_175 = arith.constant dense<0.000000e+00> : vector<8x384xf32>
    %624 = tpu.matmul %622, %623, %cst_175 {dimension_numbers = #tpu.dot_dimension_numbers<[1], [0], [0], [1], [0, 0, 1, 1], [], []>} : vector<8x128xbf16>, vector<128x384xbf16>, vector<8x384xf32> -> vector<8x384xf32>
    %625 = arith.addf %624, %11 : vector<8x384xf32>
    %626 = arith.truncf %593 : vector<8x128xf32> to vector<8x128xbf16>
    %c0_176 = arith.constant 0 : index
    %c0_177 = arith.constant 0 : index
    %627 = vector.load %arg10[%c0_176, %c0_177] : memref<128x384xbf16, #tpu.memory_space<vmem>>, vector<128x384xbf16>
    %cst_178 = arith.constant dense<0.000000e+00> : vector<8x384xf32>
    %628 = tpu.matmul %626, %627, %cst_178 {dimension_numbers = #tpu.dot_dimension_numbers<[1], [0], [0], [1], [0, 0, 1, 1], [], []>} : vector<8x128xbf16>, vector<128x384xbf16>, vector<8x384xf32> -> vector<8x384xf32>
    %629 = arith.addf %628, %17 : vector<8x384xf32>
    %630 = vector.extract_strided_slice %625 {offsets = [0, 0], sizes = [8, 256], strides = [1, 1]} : vector<8x384xf32> to vector<8x256xf32>
    %631 = vector.extract_strided_slice %629 {offsets = [0, 0], sizes = [8, 256], strides = [1, 1]} : vector<8x384xf32> to vector<8x256xf32>
    %632 = arith.addf %630, %631 : vector<8x256xf32>
    %633 = arith.negf %632 : vector<8x256xf32>
    %634 = math.exp %633 : vector<8x256xf32>
    %cst_179 = arith.constant 1.000000e+00 : f32
    %635 = vector.broadcast %cst_179 : f32 to vector<8x256xf32>
    %636 = arith.addf %635, %634 : vector<8x256xf32>
    %637 = arith.divf %635, %636 : vector<8x256xf32>
    %638 = vector.extract_strided_slice %637 {offsets = [0, 0], sizes = [8, 128], strides = [1, 1]} : vector<8x256xf32> to vector<8x128xf32>
    %639 = vector.extract_strided_slice %637 {offsets = [0, 128], sizes = [8, 128], strides = [1, 1]} : vector<8x256xf32> to vector<8x128xf32>
    %640 = vector.extract_strided_slice %625 {offsets = [0, 256], sizes = [8, 128], strides = [1, 1]} : vector<8x384xf32> to vector<8x128xf32>
    %641 = vector.extract_strided_slice %629 {offsets = [0, 256], sizes = [8, 128], strides = [1, 1]} : vector<8x384xf32> to vector<8x128xf32>
    %642 = arith.mulf %638, %641 : vector<8x128xf32>
    %643 = arith.addf %640, %642 : vector<8x128xf32>
    %644 = math.tanh %643 : vector<8x128xf32>
    %cst_180 = arith.constant 1.000000e+00 : f32
    %645 = vector.broadcast %cst_180 : f32 to vector<8x128xf32>
    %646 = arith.subf %645, %639 : vector<8x128xf32>
    %647 = arith.mulf %646, %644 : vector<8x128xf32>
    %648 = arith.mulf %639, %593 : vector<8x128xf32>
    %649 = arith.addf %647, %648 : vector<8x128xf32>
    %650 = arith.truncf %649 : vector<8x128xf32> to vector<8x128xbf16>
    %c0_181 = arith.constant 0 : index
    %c0_182 = arith.constant 0 : index
    %651 = vector.load %arg13[%c0_181, %c0_182] : memref<128x384xbf16, #tpu.memory_space<vmem>>, vector<128x384xbf16>
    %cst_183 = arith.constant dense<0.000000e+00> : vector<8x384xf32>
    %652 = tpu.matmul %650, %651, %cst_183 {dimension_numbers = #tpu.dot_dimension_numbers<[1], [0], [0], [1], [0, 0, 1, 1], [], []>} : vector<8x128xbf16>, vector<128x384xbf16>, vector<8x384xf32> -> vector<8x384xf32>
    %653 = arith.addf %652, %14 : vector<8x384xf32>
    %654 = arith.truncf %621 : vector<8x128xf32> to vector<8x128xbf16>
    %c0_184 = arith.constant 0 : index
    %c0_185 = arith.constant 0 : index
    %655 = vector.load %arg14[%c0_184, %c0_185] : memref<128x384xbf16, #tpu.memory_space<vmem>>, vector<128x384xbf16>
    %cst_186 = arith.constant dense<0.000000e+00> : vector<8x384xf32>
    %656 = tpu.matmul %654, %655, %cst_186 {dimension_numbers = #tpu.dot_dimension_numbers<[1], [0], [0], [1], [0, 0, 1, 1], [], []>} : vector<8x128xbf16>, vector<128x384xbf16>, vector<8x384xf32> -> vector<8x384xf32>
    %657 = arith.addf %656, %20 : vector<8x384xf32>
    %658 = vector.extract_strided_slice %653 {offsets = [0, 0], sizes = [8, 256], strides = [1, 1]} : vector<8x384xf32> to vector<8x256xf32>
    %659 = vector.extract_strided_slice %657 {offsets = [0, 0], sizes = [8, 256], strides = [1, 1]} : vector<8x384xf32> to vector<8x256xf32>
    %660 = arith.addf %658, %659 : vector<8x256xf32>
    %661 = arith.negf %660 : vector<8x256xf32>
    %662 = math.exp %661 : vector<8x256xf32>
    %cst_187 = arith.constant 1.000000e+00 : f32
    %663 = vector.broadcast %cst_187 : f32 to vector<8x256xf32>
    %664 = arith.addf %663, %662 : vector<8x256xf32>
    %665 = arith.divf %663, %664 : vector<8x256xf32>
    %666 = vector.extract_strided_slice %665 {offsets = [0, 0], sizes = [8, 128], strides = [1, 1]} : vector<8x256xf32> to vector<8x128xf32>
    %667 = vector.extract_strided_slice %665 {offsets = [0, 128], sizes = [8, 128], strides = [1, 1]} : vector<8x256xf32> to vector<8x128xf32>
    %668 = vector.extract_strided_slice %653 {offsets = [0, 256], sizes = [8, 128], strides = [1, 1]} : vector<8x384xf32> to vector<8x128xf32>
    %669 = vector.extract_strided_slice %657 {offsets = [0, 256], sizes = [8, 128], strides = [1, 1]} : vector<8x384xf32> to vector<8x128xf32>
    %670 = arith.mulf %666, %669 : vector<8x128xf32>
    %671 = arith.addf %668, %670 : vector<8x128xf32>
    %672 = math.tanh %671 : vector<8x128xf32>
    %cst_188 = arith.constant 1.000000e+00 : f32
    %673 = vector.broadcast %cst_188 : f32 to vector<8x128xf32>
    %674 = arith.subf %673, %667 : vector<8x128xf32>
    %675 = arith.mulf %674, %672 : vector<8x128xf32>
    %676 = arith.mulf %667, %621 : vector<8x128xf32>
    %677 = arith.addf %675, %676 : vector<8x128xf32>
    %678 = arith.truncf %677 : vector<8x128xf32> to vector<8x128xbf16>
    %c0_189 = arith.constant 0 : index
    %c0_190 = arith.constant 0 : index
    %679 = vector.load %arg9[%c0_189, %c0_190] : memref<128x384xbf16, #tpu.memory_space<vmem>>, vector<128x384xbf16>
    %cst_191 = arith.constant dense<0.000000e+00> : vector<8x384xf32>
    %680 = tpu.matmul %678, %679, %cst_191 {dimension_numbers = #tpu.dot_dimension_numbers<[1], [0], [0], [1], [0, 0, 1, 1], [], []>} : vector<8x128xbf16>, vector<128x384xbf16>, vector<8x384xf32> -> vector<8x384xf32>
    %681 = arith.addf %680, %11 : vector<8x384xf32>
    %682 = arith.truncf %649 : vector<8x128xf32> to vector<8x128xbf16>
    %c0_192 = arith.constant 0 : index
    %c0_193 = arith.constant 0 : index
    %683 = vector.load %arg10[%c0_192, %c0_193] : memref<128x384xbf16, #tpu.memory_space<vmem>>, vector<128x384xbf16>
    %cst_194 = arith.constant dense<0.000000e+00> : vector<8x384xf32>
    %684 = tpu.matmul %682, %683, %cst_194 {dimension_numbers = #tpu.dot_dimension_numbers<[1], [0], [0], [1], [0, 0, 1, 1], [], []>} : vector<8x128xbf16>, vector<128x384xbf16>, vector<8x384xf32> -> vector<8x384xf32>
    %685 = arith.addf %684, %17 : vector<8x384xf32>
    %686 = vector.extract_strided_slice %681 {offsets = [0, 0], sizes = [8, 256], strides = [1, 1]} : vector<8x384xf32> to vector<8x256xf32>
    %687 = vector.extract_strided_slice %685 {offsets = [0, 0], sizes = [8, 256], strides = [1, 1]} : vector<8x384xf32> to vector<8x256xf32>
    %688 = arith.addf %686, %687 : vector<8x256xf32>
    %689 = arith.negf %688 : vector<8x256xf32>
    %690 = math.exp %689 : vector<8x256xf32>
    %cst_195 = arith.constant 1.000000e+00 : f32
    %691 = vector.broadcast %cst_195 : f32 to vector<8x256xf32>
    %692 = arith.addf %691, %690 : vector<8x256xf32>
    %693 = arith.divf %691, %692 : vector<8x256xf32>
    %694 = vector.extract_strided_slice %693 {offsets = [0, 0], sizes = [8, 128], strides = [1, 1]} : vector<8x256xf32> to vector<8x128xf32>
    %695 = vector.extract_strided_slice %693 {offsets = [0, 128], sizes = [8, 128], strides = [1, 1]} : vector<8x256xf32> to vector<8x128xf32>
    %696 = vector.extract_strided_slice %681 {offsets = [0, 256], sizes = [8, 128], strides = [1, 1]} : vector<8x384xf32> to vector<8x128xf32>
    %697 = vector.extract_strided_slice %685 {offsets = [0, 256], sizes = [8, 128], strides = [1, 1]} : vector<8x384xf32> to vector<8x128xf32>
    %698 = arith.mulf %694, %697 : vector<8x128xf32>
    %699 = arith.addf %696, %698 : vector<8x128xf32>
    %700 = math.tanh %699 : vector<8x128xf32>
    %cst_196 = arith.constant 1.000000e+00 : f32
    %701 = vector.broadcast %cst_196 : f32 to vector<8x128xf32>
    %702 = arith.subf %701, %695 : vector<8x128xf32>
    %703 = arith.mulf %702, %700 : vector<8x128xf32>
    %704 = arith.mulf %695, %649 : vector<8x128xf32>
    %705 = arith.addf %703, %704 : vector<8x128xf32>
    %706 = arith.truncf %705 : vector<8x128xf32> to vector<8x128xbf16>
    %c0_197 = arith.constant 0 : index
    %c0_198 = arith.constant 0 : index
    %707 = vector.load %arg13[%c0_197, %c0_198] : memref<128x384xbf16, #tpu.memory_space<vmem>>, vector<128x384xbf16>
    %cst_199 = arith.constant dense<0.000000e+00> : vector<8x384xf32>
    %708 = tpu.matmul %706, %707, %cst_199 {dimension_numbers = #tpu.dot_dimension_numbers<[1], [0], [0], [1], [0, 0, 1, 1], [], []>} : vector<8x128xbf16>, vector<128x384xbf16>, vector<8x384xf32> -> vector<8x384xf32>
    %709 = arith.addf %708, %14 : vector<8x384xf32>
    %710 = arith.truncf %677 : vector<8x128xf32> to vector<8x128xbf16>
    %c0_200 = arith.constant 0 : index
    %c0_201 = arith.constant 0 : index
    %711 = vector.load %arg14[%c0_200, %c0_201] : memref<128x384xbf16, #tpu.memory_space<vmem>>, vector<128x384xbf16>
    %cst_202 = arith.constant dense<0.000000e+00> : vector<8x384xf32>
    %712 = tpu.matmul %710, %711, %cst_202 {dimension_numbers = #tpu.dot_dimension_numbers<[1], [0], [0], [1], [0, 0, 1, 1], [], []>} : vector<8x128xbf16>, vector<128x384xbf16>, vector<8x384xf32> -> vector<8x384xf32>
    %713 = arith.addf %712, %20 : vector<8x384xf32>
    %714 = vector.extract_strided_slice %709 {offsets = [0, 0], sizes = [8, 256], strides = [1, 1]} : vector<8x384xf32> to vector<8x256xf32>
    %715 = vector.extract_strided_slice %713 {offsets = [0, 0], sizes = [8, 256], strides = [1, 1]} : vector<8x384xf32> to vector<8x256xf32>
    %716 = arith.addf %714, %715 : vector<8x256xf32>
    %717 = arith.negf %716 : vector<8x256xf32>
    %718 = math.exp %717 : vector<8x256xf32>
    %cst_203 = arith.constant 1.000000e+00 : f32
    %719 = vector.broadcast %cst_203 : f32 to vector<8x256xf32>
    %720 = arith.addf %719, %718 : vector<8x256xf32>
    %721 = arith.divf %719, %720 : vector<8x256xf32>
    %722 = vector.extract_strided_slice %721 {offsets = [0, 0], sizes = [8, 128], strides = [1, 1]} : vector<8x256xf32> to vector<8x128xf32>
    %723 = vector.extract_strided_slice %721 {offsets = [0, 128], sizes = [8, 128], strides = [1, 1]} : vector<8x256xf32> to vector<8x128xf32>
    %724 = vector.extract_strided_slice %709 {offsets = [0, 256], sizes = [8, 128], strides = [1, 1]} : vector<8x384xf32> to vector<8x128xf32>
    %725 = vector.extract_strided_slice %713 {offsets = [0, 256], sizes = [8, 128], strides = [1, 1]} : vector<8x384xf32> to vector<8x128xf32>
    %726 = arith.mulf %722, %725 : vector<8x128xf32>
    %727 = arith.addf %724, %726 : vector<8x128xf32>
    %728 = math.tanh %727 : vector<8x128xf32>
    %cst_204 = arith.constant 1.000000e+00 : f32
    %729 = vector.broadcast %cst_204 : f32 to vector<8x128xf32>
    %730 = arith.subf %729, %723 : vector<8x128xf32>
    %731 = arith.mulf %730, %728 : vector<8x128xf32>
    %732 = arith.mulf %723, %677 : vector<8x128xf32>
    %733 = arith.addf %731, %732 : vector<8x128xf32>
    %734 = arith.truncf %733 : vector<8x128xf32> to vector<8x128xbf16>
    %c0_205 = arith.constant 0 : index
    %c0_206 = arith.constant 0 : index
    %735 = vector.load %arg9[%c0_205, %c0_206] : memref<128x384xbf16, #tpu.memory_space<vmem>>, vector<128x384xbf16>
    %cst_207 = arith.constant dense<0.000000e+00> : vector<8x384xf32>
    %736 = tpu.matmul %734, %735, %cst_207 {dimension_numbers = #tpu.dot_dimension_numbers<[1], [0], [0], [1], [0, 0, 1, 1], [], []>} : vector<8x128xbf16>, vector<128x384xbf16>, vector<8x384xf32> -> vector<8x384xf32>
    %737 = arith.addf %736, %11 : vector<8x384xf32>
    %738 = arith.truncf %705 : vector<8x128xf32> to vector<8x128xbf16>
    %c0_208 = arith.constant 0 : index
    %c0_209 = arith.constant 0 : index
    %739 = vector.load %arg10[%c0_208, %c0_209] : memref<128x384xbf16, #tpu.memory_space<vmem>>, vector<128x384xbf16>
    %cst_210 = arith.constant dense<0.000000e+00> : vector<8x384xf32>
    %740 = tpu.matmul %738, %739, %cst_210 {dimension_numbers = #tpu.dot_dimension_numbers<[1], [0], [0], [1], [0, 0, 1, 1], [], []>} : vector<8x128xbf16>, vector<128x384xbf16>, vector<8x384xf32> -> vector<8x384xf32>
    %741 = arith.addf %740, %17 : vector<8x384xf32>
    %742 = vector.extract_strided_slice %737 {offsets = [0, 0], sizes = [8, 256], strides = [1, 1]} : vector<8x384xf32> to vector<8x256xf32>
    %743 = vector.extract_strided_slice %741 {offsets = [0, 0], sizes = [8, 256], strides = [1, 1]} : vector<8x384xf32> to vector<8x256xf32>
    %744 = arith.addf %742, %743 : vector<8x256xf32>
    %745 = arith.negf %744 : vector<8x256xf32>
    %746 = math.exp %745 : vector<8x256xf32>
    %cst_211 = arith.constant 1.000000e+00 : f32
    %747 = vector.broadcast %cst_211 : f32 to vector<8x256xf32>
    %748 = arith.addf %747, %746 : vector<8x256xf32>
    %749 = arith.divf %747, %748 : vector<8x256xf32>
    %750 = vector.extract_strided_slice %749 {offsets = [0, 0], sizes = [8, 128], strides = [1, 1]} : vector<8x256xf32> to vector<8x128xf32>
    %751 = vector.extract_strided_slice %749 {offsets = [0, 128], sizes = [8, 128], strides = [1, 1]} : vector<8x256xf32> to vector<8x128xf32>
    %752 = vector.extract_strided_slice %737 {offsets = [0, 256], sizes = [8, 128], strides = [1, 1]} : vector<8x384xf32> to vector<8x128xf32>
    %753 = vector.extract_strided_slice %741 {offsets = [0, 256], sizes = [8, 128], strides = [1, 1]} : vector<8x384xf32> to vector<8x128xf32>
    %754 = arith.mulf %750, %753 : vector<8x128xf32>
    %755 = arith.addf %752, %754 : vector<8x128xf32>
    %756 = math.tanh %755 : vector<8x128xf32>
    %cst_212 = arith.constant 1.000000e+00 : f32
    %757 = vector.broadcast %cst_212 : f32 to vector<8x128xf32>
    %758 = arith.subf %757, %751 : vector<8x128xf32>
    %759 = arith.mulf %758, %756 : vector<8x128xf32>
    %760 = arith.mulf %751, %705 : vector<8x128xf32>
    %761 = arith.addf %759, %760 : vector<8x128xf32>
    %762 = arith.truncf %761 : vector<8x128xf32> to vector<8x128xbf16>
    %c0_213 = arith.constant 0 : index
    %c0_214 = arith.constant 0 : index
    %763 = vector.load %arg13[%c0_213, %c0_214] : memref<128x384xbf16, #tpu.memory_space<vmem>>, vector<128x384xbf16>
    %cst_215 = arith.constant dense<0.000000e+00> : vector<8x384xf32>
    %764 = tpu.matmul %762, %763, %cst_215 {dimension_numbers = #tpu.dot_dimension_numbers<[1], [0], [0], [1], [0, 0, 1, 1], [], []>} : vector<8x128xbf16>, vector<128x384xbf16>, vector<8x384xf32> -> vector<8x384xf32>
    %765 = arith.addf %764, %14 : vector<8x384xf32>
    %766 = arith.truncf %733 : vector<8x128xf32> to vector<8x128xbf16>
    %c0_216 = arith.constant 0 : index
    %c0_217 = arith.constant 0 : index
    %767 = vector.load %arg14[%c0_216, %c0_217] : memref<128x384xbf16, #tpu.memory_space<vmem>>, vector<128x384xbf16>
    %cst_218 = arith.constant dense<0.000000e+00> : vector<8x384xf32>
    %768 = tpu.matmul %766, %767, %cst_218 {dimension_numbers = #tpu.dot_dimension_numbers<[1], [0], [0], [1], [0, 0, 1, 1], [], []>} : vector<8x128xbf16>, vector<128x384xbf16>, vector<8x384xf32> -> vector<8x384xf32>
    %769 = arith.addf %768, %20 : vector<8x384xf32>
    %770 = vector.extract_strided_slice %765 {offsets = [0, 0], sizes = [8, 256], strides = [1, 1]} : vector<8x384xf32> to vector<8x256xf32>
    %771 = vector.extract_strided_slice %769 {offsets = [0, 0], sizes = [8, 256], strides = [1, 1]} : vector<8x384xf32> to vector<8x256xf32>
    %772 = arith.addf %770, %771 : vector<8x256xf32>
    %773 = arith.negf %772 : vector<8x256xf32>
    %774 = math.exp %773 : vector<8x256xf32>
    %cst_219 = arith.constant 1.000000e+00 : f32
    %775 = vector.broadcast %cst_219 : f32 to vector<8x256xf32>
    %776 = arith.addf %775, %774 : vector<8x256xf32>
    %777 = arith.divf %775, %776 : vector<8x256xf32>
    %778 = vector.extract_strided_slice %777 {offsets = [0, 0], sizes = [8, 128], strides = [1, 1]} : vector<8x256xf32> to vector<8x128xf32>
    %779 = vector.extract_strided_slice %777 {offsets = [0, 128], sizes = [8, 128], strides = [1, 1]} : vector<8x256xf32> to vector<8x128xf32>
    %780 = vector.extract_strided_slice %765 {offsets = [0, 256], sizes = [8, 128], strides = [1, 1]} : vector<8x384xf32> to vector<8x128xf32>
    %781 = vector.extract_strided_slice %769 {offsets = [0, 256], sizes = [8, 128], strides = [1, 1]} : vector<8x384xf32> to vector<8x128xf32>
    %782 = arith.mulf %778, %781 : vector<8x128xf32>
    %783 = arith.addf %780, %782 : vector<8x128xf32>
    %784 = math.tanh %783 : vector<8x128xf32>
    %cst_220 = arith.constant 1.000000e+00 : f32
    %785 = vector.broadcast %cst_220 : f32 to vector<8x128xf32>
    %786 = arith.subf %785, %779 : vector<8x128xf32>
    %787 = arith.mulf %786, %784 : vector<8x128xf32>
    %788 = arith.mulf %779, %733 : vector<8x128xf32>
    %789 = arith.addf %787, %788 : vector<8x128xf32>
    %790 = arith.truncf %789 : vector<8x128xf32> to vector<8x128xbf16>
    %c0_221 = arith.constant 0 : index
    %c0_222 = arith.constant 0 : index
    %791 = vector.load %arg9[%c0_221, %c0_222] : memref<128x384xbf16, #tpu.memory_space<vmem>>, vector<128x384xbf16>
    %cst_223 = arith.constant dense<0.000000e+00> : vector<8x384xf32>
    %792 = tpu.matmul %790, %791, %cst_223 {dimension_numbers = #tpu.dot_dimension_numbers<[1], [0], [0], [1], [0, 0, 1, 1], [], []>} : vector<8x128xbf16>, vector<128x384xbf16>, vector<8x384xf32> -> vector<8x384xf32>
    %793 = arith.addf %792, %11 : vector<8x384xf32>
    %794 = arith.truncf %761 : vector<8x128xf32> to vector<8x128xbf16>
    %c0_224 = arith.constant 0 : index
    %c0_225 = arith.constant 0 : index
    %795 = vector.load %arg10[%c0_224, %c0_225] : memref<128x384xbf16, #tpu.memory_space<vmem>>, vector<128x384xbf16>
    %cst_226 = arith.constant dense<0.000000e+00> : vector<8x384xf32>
    %796 = tpu.matmul %794, %795, %cst_226 {dimension_numbers = #tpu.dot_dimension_numbers<[1], [0], [0], [1], [0, 0, 1, 1], [], []>} : vector<8x128xbf16>, vector<128x384xbf16>, vector<8x384xf32> -> vector<8x384xf32>
    %797 = arith.addf %796, %17 : vector<8x384xf32>
    %798 = vector.extract_strided_slice %793 {offsets = [0, 0], sizes = [8, 256], strides = [1, 1]} : vector<8x384xf32> to vector<8x256xf32>
    %799 = vector.extract_strided_slice %797 {offsets = [0, 0], sizes = [8, 256], strides = [1, 1]} : vector<8x384xf32> to vector<8x256xf32>
    %800 = arith.addf %798, %799 : vector<8x256xf32>
    %801 = arith.negf %800 : vector<8x256xf32>
    %802 = math.exp %801 : vector<8x256xf32>
    %cst_227 = arith.constant 1.000000e+00 : f32
    %803 = vector.broadcast %cst_227 : f32 to vector<8x256xf32>
    %804 = arith.addf %803, %802 : vector<8x256xf32>
    %805 = arith.divf %803, %804 : vector<8x256xf32>
    %806 = vector.extract_strided_slice %805 {offsets = [0, 0], sizes = [8, 128], strides = [1, 1]} : vector<8x256xf32> to vector<8x128xf32>
    %807 = vector.extract_strided_slice %805 {offsets = [0, 128], sizes = [8, 128], strides = [1, 1]} : vector<8x256xf32> to vector<8x128xf32>
    %808 = vector.extract_strided_slice %793 {offsets = [0, 256], sizes = [8, 128], strides = [1, 1]} : vector<8x384xf32> to vector<8x128xf32>
    %809 = vector.extract_strided_slice %797 {offsets = [0, 256], sizes = [8, 128], strides = [1, 1]} : vector<8x384xf32> to vector<8x128xf32>
    %810 = arith.mulf %806, %809 : vector<8x128xf32>
    %811 = arith.addf %808, %810 : vector<8x128xf32>
    %812 = math.tanh %811 : vector<8x128xf32>
    %cst_228 = arith.constant 1.000000e+00 : f32
    %813 = vector.broadcast %cst_228 : f32 to vector<8x128xf32>
    %814 = arith.subf %813, %807 : vector<8x128xf32>
    %815 = arith.mulf %814, %812 : vector<8x128xf32>
    %816 = arith.mulf %807, %761 : vector<8x128xf32>
    %817 = arith.addf %815, %816 : vector<8x128xf32>
    %818 = arith.truncf %817 : vector<8x128xf32> to vector<8x128xbf16>
    %c0_229 = arith.constant 0 : index
    %c0_230 = arith.constant 0 : index
    %819 = vector.load %arg13[%c0_229, %c0_230] : memref<128x384xbf16, #tpu.memory_space<vmem>>, vector<128x384xbf16>
    %cst_231 = arith.constant dense<0.000000e+00> : vector<8x384xf32>
    %820 = tpu.matmul %818, %819, %cst_231 {dimension_numbers = #tpu.dot_dimension_numbers<[1], [0], [0], [1], [0, 0, 1, 1], [], []>} : vector<8x128xbf16>, vector<128x384xbf16>, vector<8x384xf32> -> vector<8x384xf32>
    %821 = arith.addf %820, %14 : vector<8x384xf32>
    %822 = arith.truncf %789 : vector<8x128xf32> to vector<8x128xbf16>
    %c0_232 = arith.constant 0 : index
    %c0_233 = arith.constant 0 : index
    %823 = vector.load %arg14[%c0_232, %c0_233] : memref<128x384xbf16, #tpu.memory_space<vmem>>, vector<128x384xbf16>
    %cst_234 = arith.constant dense<0.000000e+00> : vector<8x384xf32>
    %824 = tpu.matmul %822, %823, %cst_234 {dimension_numbers = #tpu.dot_dimension_numbers<[1], [0], [0], [1], [0, 0, 1, 1], [], []>} : vector<8x128xbf16>, vector<128x384xbf16>, vector<8x384xf32> -> vector<8x384xf32>
    %825 = arith.addf %824, %20 : vector<8x384xf32>
    %826 = vector.extract_strided_slice %821 {offsets = [0, 0], sizes = [8, 256], strides = [1, 1]} : vector<8x384xf32> to vector<8x256xf32>
    %827 = vector.extract_strided_slice %825 {offsets = [0, 0], sizes = [8, 256], strides = [1, 1]} : vector<8x384xf32> to vector<8x256xf32>
    %828 = arith.addf %826, %827 : vector<8x256xf32>
    %829 = arith.negf %828 : vector<8x256xf32>
    %830 = math.exp %829 : vector<8x256xf32>
    %cst_235 = arith.constant 1.000000e+00 : f32
    %831 = vector.broadcast %cst_235 : f32 to vector<8x256xf32>
    %832 = arith.addf %831, %830 : vector<8x256xf32>
    %833 = arith.divf %831, %832 : vector<8x256xf32>
    %834 = vector.extract_strided_slice %833 {offsets = [0, 0], sizes = [8, 128], strides = [1, 1]} : vector<8x256xf32> to vector<8x128xf32>
    %835 = vector.extract_strided_slice %833 {offsets = [0, 128], sizes = [8, 128], strides = [1, 1]} : vector<8x256xf32> to vector<8x128xf32>
    %836 = vector.extract_strided_slice %821 {offsets = [0, 256], sizes = [8, 128], strides = [1, 1]} : vector<8x384xf32> to vector<8x128xf32>
    %837 = vector.extract_strided_slice %825 {offsets = [0, 256], sizes = [8, 128], strides = [1, 1]} : vector<8x384xf32> to vector<8x128xf32>
    %838 = arith.mulf %834, %837 : vector<8x128xf32>
    %839 = arith.addf %836, %838 : vector<8x128xf32>
    %840 = math.tanh %839 : vector<8x128xf32>
    %cst_236 = arith.constant 1.000000e+00 : f32
    %841 = vector.broadcast %cst_236 : f32 to vector<8x128xf32>
    %842 = arith.subf %841, %835 : vector<8x128xf32>
    %843 = arith.mulf %842, %840 : vector<8x128xf32>
    %844 = arith.mulf %835, %789 : vector<8x128xf32>
    %845 = arith.addf %843, %844 : vector<8x128xf32>
    %846 = arith.truncf %845 : vector<8x128xf32> to vector<8x128xbf16>
    %c0_237 = arith.constant 0 : index
    %c0_238 = arith.constant 0 : index
    %847 = vector.load %arg9[%c0_237, %c0_238] : memref<128x384xbf16, #tpu.memory_space<vmem>>, vector<128x384xbf16>
    %cst_239 = arith.constant dense<0.000000e+00> : vector<8x384xf32>
    %848 = tpu.matmul %846, %847, %cst_239 {dimension_numbers = #tpu.dot_dimension_numbers<[1], [0], [0], [1], [0, 0, 1, 1], [], []>} : vector<8x128xbf16>, vector<128x384xbf16>, vector<8x384xf32> -> vector<8x384xf32>
    %849 = arith.addf %848, %11 : vector<8x384xf32>
    %850 = arith.truncf %817 : vector<8x128xf32> to vector<8x128xbf16>
    %c0_240 = arith.constant 0 : index
    %c0_241 = arith.constant 0 : index
    %851 = vector.load %arg10[%c0_240, %c0_241] : memref<128x384xbf16, #tpu.memory_space<vmem>>, vector<128x384xbf16>
    %cst_242 = arith.constant dense<0.000000e+00> : vector<8x384xf32>
    %852 = tpu.matmul %850, %851, %cst_242 {dimension_numbers = #tpu.dot_dimension_numbers<[1], [0], [0], [1], [0, 0, 1, 1], [], []>} : vector<8x128xbf16>, vector<128x384xbf16>, vector<8x384xf32> -> vector<8x384xf32>
    %853 = arith.addf %852, %17 : vector<8x384xf32>
    %854 = vector.extract_strided_slice %849 {offsets = [0, 0], sizes = [8, 256], strides = [1, 1]} : vector<8x384xf32> to vector<8x256xf32>
    %855 = vector.extract_strided_slice %853 {offsets = [0, 0], sizes = [8, 256], strides = [1, 1]} : vector<8x384xf32> to vector<8x256xf32>
    %856 = arith.addf %854, %855 : vector<8x256xf32>
    %857 = arith.negf %856 : vector<8x256xf32>
    %858 = math.exp %857 : vector<8x256xf32>
    %cst_243 = arith.constant 1.000000e+00 : f32
    %859 = vector.broadcast %cst_243 : f32 to vector<8x256xf32>
    %860 = arith.addf %859, %858 : vector<8x256xf32>
    %861 = arith.divf %859, %860 : vector<8x256xf32>
    %862 = vector.extract_strided_slice %861 {offsets = [0, 0], sizes = [8, 128], strides = [1, 1]} : vector<8x256xf32> to vector<8x128xf32>
    %863 = vector.extract_strided_slice %861 {offsets = [0, 128], sizes = [8, 128], strides = [1, 1]} : vector<8x256xf32> to vector<8x128xf32>
    %864 = vector.extract_strided_slice %849 {offsets = [0, 256], sizes = [8, 128], strides = [1, 1]} : vector<8x384xf32> to vector<8x128xf32>
    %865 = vector.extract_strided_slice %853 {offsets = [0, 256], sizes = [8, 128], strides = [1, 1]} : vector<8x384xf32> to vector<8x128xf32>
    %866 = arith.mulf %862, %865 : vector<8x128xf32>
    %867 = arith.addf %864, %866 : vector<8x128xf32>
    %868 = math.tanh %867 : vector<8x128xf32>
    %cst_244 = arith.constant 1.000000e+00 : f32
    %869 = vector.broadcast %cst_244 : f32 to vector<8x128xf32>
    %870 = arith.subf %869, %863 : vector<8x128xf32>
    %871 = arith.mulf %870, %868 : vector<8x128xf32>
    %872 = arith.mulf %863, %817 : vector<8x128xf32>
    %873 = arith.addf %871, %872 : vector<8x128xf32>
    %874 = arith.truncf %873 : vector<8x128xf32> to vector<8x128xbf16>
    %c0_245 = arith.constant 0 : index
    %c0_246 = arith.constant 0 : index
    %875 = vector.load %arg13[%c0_245, %c0_246] : memref<128x384xbf16, #tpu.memory_space<vmem>>, vector<128x384xbf16>
    %cst_247 = arith.constant dense<0.000000e+00> : vector<8x384xf32>
    %876 = tpu.matmul %874, %875, %cst_247 {dimension_numbers = #tpu.dot_dimension_numbers<[1], [0], [0], [1], [0, 0, 1, 1], [], []>} : vector<8x128xbf16>, vector<128x384xbf16>, vector<8x384xf32> -> vector<8x384xf32>
    %877 = arith.addf %876, %14 : vector<8x384xf32>
    %878 = arith.truncf %845 : vector<8x128xf32> to vector<8x128xbf16>
    %c0_248 = arith.constant 0 : index
    %c0_249 = arith.constant 0 : index
    %879 = vector.load %arg14[%c0_248, %c0_249] : memref<128x384xbf16, #tpu.memory_space<vmem>>, vector<128x384xbf16>
    %cst_250 = arith.constant dense<0.000000e+00> : vector<8x384xf32>
    %880 = tpu.matmul %878, %879, %cst_250 {dimension_numbers = #tpu.dot_dimension_numbers<[1], [0], [0], [1], [0, 0, 1, 1], [], []>} : vector<8x128xbf16>, vector<128x384xbf16>, vector<8x384xf32> -> vector<8x384xf32>
    %881 = arith.addf %880, %20 : vector<8x384xf32>
    %882 = vector.extract_strided_slice %877 {offsets = [0, 0], sizes = [8, 256], strides = [1, 1]} : vector<8x384xf32> to vector<8x256xf32>
    %883 = vector.extract_strided_slice %881 {offsets = [0, 0], sizes = [8, 256], strides = [1, 1]} : vector<8x384xf32> to vector<8x256xf32>
    %884 = arith.addf %882, %883 : vector<8x256xf32>
    %885 = arith.negf %884 : vector<8x256xf32>
    %886 = math.exp %885 : vector<8x256xf32>
    %cst_251 = arith.constant 1.000000e+00 : f32
    %887 = vector.broadcast %cst_251 : f32 to vector<8x256xf32>
    %888 = arith.addf %887, %886 : vector<8x256xf32>
    %889 = arith.divf %887, %888 : vector<8x256xf32>
    %890 = vector.extract_strided_slice %889 {offsets = [0, 0], sizes = [8, 128], strides = [1, 1]} : vector<8x256xf32> to vector<8x128xf32>
    %891 = vector.extract_strided_slice %889 {offsets = [0, 128], sizes = [8, 128], strides = [1, 1]} : vector<8x256xf32> to vector<8x128xf32>
    %892 = vector.extract_strided_slice %877 {offsets = [0, 256], sizes = [8, 128], strides = [1, 1]} : vector<8x384xf32> to vector<8x128xf32>
    %893 = vector.extract_strided_slice %881 {offsets = [0, 256], sizes = [8, 128], strides = [1, 1]} : vector<8x384xf32> to vector<8x128xf32>
    %894 = arith.mulf %890, %893 : vector<8x128xf32>
    %895 = arith.addf %892, %894 : vector<8x128xf32>
    %896 = math.tanh %895 : vector<8x128xf32>
    %cst_252 = arith.constant 1.000000e+00 : f32
    %897 = vector.broadcast %cst_252 : f32 to vector<8x128xf32>
    %898 = arith.subf %897, %891 : vector<8x128xf32>
    %899 = arith.mulf %898, %896 : vector<8x128xf32>
    %900 = arith.mulf %891, %845 : vector<8x128xf32>
    %901 = arith.addf %899, %900 : vector<8x128xf32>
    %902 = tpu.concatenate %509, %565, %621, %677, %733, %789, %845, %901 in 0 : vector<8x128xf32>, vector<8x128xf32>, vector<8x128xf32>, vector<8x128xf32>, vector<8x128xf32>, vector<8x128xf32>, vector<8x128xf32>, vector<8x128xf32> -> vector<64x128xf32>
    %903 = arith.truncf %902 : vector<64x128xf32> to vector<64x128xbf16>
    %c0_253 = arith.constant 0 : index
    %c0_254 = arith.constant 0 : index
    %904 = vector.load %arg17[%c0_253, %c0_254] : memref<128x16xbf16, #tpu.memory_space<vmem>>, vector<128x16xbf16>
    %cst_255 = arith.constant dense<0.000000e+00> : vector<64x16xf32>
    %905 = tpu.matmul %903, %904, %cst_255 {dimension_numbers = #tpu.dot_dimension_numbers<[1], [0], [0], [1], [0, 0, 1, 1], [], []>} : vector<64x128xbf16>, vector<128x16xbf16>, vector<64x16xf32> -> vector<64x16xf32>
    %c0_256 = arith.constant 0 : index
    %c0_257 = arith.constant 0 : index
    %906 = vector.load %arg18[%c0_256, %c0_257] : memref<1x16xf32, #tpu.memory_space<vmem>>, vector<1x16xf32>
    %907 = vector.broadcast %906 : vector<1x16xf32> to vector<64x16xf32>
    %908 = arith.addf %905, %907 : vector<64x16xf32>
    %cst_258 = arith.constant 0.000000e+00 : f32
    %909 = vector.broadcast %cst_258 : f32 to vector<64x16xf32>
    %910 = arith.cmpf oge, %908, %909 : vector<64x16xf32>
    %cst_259 = arith.constant 0.00999999977 : f32
    %911 = vector.broadcast %cst_259 : f32 to vector<64x16xf32>
    %912 = arith.mulf %911, %908 : vector<64x16xf32>
    %913 = arith.select %910, %908, %912 : vector<64x16xi1>, vector<64x16xf32>
    %914 = arith.truncf %913 : vector<64x16xf32> to vector<64x16xbf16>
    %c0_260 = arith.constant 0 : index
    %c0_261 = arith.constant 0 : index
    %915 = vector.load %arg19[%c0_260, %c0_261] : memref<16x2xbf16, #tpu.memory_space<vmem>>, vector<16x2xbf16>
    %cst_262 = arith.constant dense<0.000000e+00> : vector<64x2xf32>
    %916 = tpu.matmul %914, %915, %cst_262 {dimension_numbers = #tpu.dot_dimension_numbers<[1], [0], [0], [1], [0, 0, 1, 1], [], []>} : vector<64x16xbf16>, vector<16x2xbf16>, vector<64x2xf32> -> vector<64x2xf32>
    %c0_263 = arith.constant 0 : index
    %c0_264 = arith.constant 0 : index
    %917 = vector.load %arg20[%c0_263, %c0_264] : memref<1x2xf32, #tpu.memory_space<vmem>>, vector<1x2xf32>
    %918 = vector.broadcast %917 : vector<1x2xf32> to vector<64x2xf32>
    %919 = arith.addf %916, %918 : vector<64x2xf32>
    %920 = tpu.iota {dimensions = array<i32: 1>} : vector<64x2xi32>
    %c0_i32 = arith.constant 0 : i32
    %921 = vector.broadcast %c0_i32 : i32 to vector<64x2xi32>
    %922 = arith.cmpi eq, %920, %921 : vector<64x2xi32>
    %923 = math.tanh %919 : vector<64x2xf32>
    %924 = arith.negf %919 : vector<64x2xf32>
    %925 = math.exp %924 : vector<64x2xf32>
    %cst_265 = arith.constant 1.000000e+00 : f32
    %926 = vector.broadcast %cst_265 : f32 to vector<64x2xf32>
    %927 = arith.addf %926, %925 : vector<64x2xf32>
    %928 = arith.divf %926, %927 : vector<64x2xf32>
    %929 = arith.select %922, %923, %928 : vector<64x2xi1>, vector<64x2xf32>
    %c0_266 = arith.constant 0 : index
    %c0_267 = arith.constant 0 : index
    %930 = vector.load %arg21[%c0_266, %c0_267] : memref<64x2xf32, #tpu.memory_space<vmem>>, vector<64x2xf32>
    tpu.vector_store %arg21[%c0_266, %c0_267], %929 {strides = array<i32>} : memref<64x2xf32, #tpu.memory_space<vmem>>, vector<64x2xf32>,
    return
  }
}

</mosaic_0001>

<llo_original>
// kernel: tpu_custom_call.1
$region0: #{tpu_custom_call.1}
  #allocation0 [shape = 'u32[]', space=smem, size = 0x4, offset = 0x4, fixed_abs, tag = 'smem constant byte address 0x4 - core index']
  #allocation1 [shape = 'u32[72,128]{1,0:T(1,128)}', space=vmem, size = 0x9000, scoped, tag = 'internal scratch']
  %s0 = inlined_call_operand.vmem [shape: bf16[64,8], index: 0, kind: input, shape index: {}]
  %s1 = inlined_call_operand.vmem [shape: bf16[8,384], index: 1, kind: input, shape index: {}]
  %s2 = inlined_call_operand.hbm [shape: bf16[128,384], index: 2, kind: input, shape index: {}]
  %s3 = inlined_call_operand.vmem [shape: f32[1,384], index: 3, kind: input, shape index: {}]
  %s4 = inlined_call_operand.vmem [shape: f32[1,384], index: 4, kind: input, shape index: {}]
  %s5 = inlined_call_operand.hbm [shape: bf16[128,384], index: 5, kind: input, shape index: {}]
  %s6 = inlined_call_operand.hbm [shape: bf16[128,384], index: 6, kind: input, shape index: {}]
  %s7 = inlined_call_operand.vmem [shape: f32[1,384], index: 7, kind: input, shape index: {}]
  %s8 = inlined_call_operand.vmem [shape: f32[1,384], index: 8, kind: input, shape index: {}]
  %s9 = inlined_call_operand.hbm [shape: bf16[128,384], index: 9, kind: input, shape index: {}]
  %s10 = inlined_call_operand.hbm [shape: bf16[128,384], index: 10, kind: input, shape index: {}]
  %s11 = inlined_call_operand.vmem [shape: f32[1,384], index: 11, kind: input, shape index: {}]
  %s12 = inlined_call_operand.vmem [shape: f32[1,384], index: 12, kind: input, shape index: {}]
  %s13 = inlined_call_operand.hbm [shape: bf16[128,384], index: 13, kind: input, shape index: {}]
  %s14 = inlined_call_operand.hbm [shape: bf16[128,384], index: 14, kind: input, shape index: {}]
  %s15 = inlined_call_operand.vmem [shape: f32[1,384], index: 15, kind: input, shape index: {}]
  %s16 = inlined_call_operand.vmem [shape: f32[1,384], index: 16, kind: input, shape index: {}]
  %s17 = inlined_call_operand.vmem [shape: bf16[128,16], index: 17, kind: input, shape index: {}]
  %s18 = inlined_call_operand.vmem [shape: f32[1,16], index: 18, kind: input, shape index: {}]
  %s19 = inlined_call_operand.vmem [shape: bf16[16,2], index: 19, kind: input, shape index: {}]
  %s20 = inlined_call_operand.vmem [shape: f32[1,2], index: 20, kind: input, shape index: {}]
  %s21 = inlined_call_operand.vmem [shape: f32[64,2], index: 21, kind: output, shape index: {}]
  %s22 = sld [smem:[#allocation0]]
  $region122: #{tpu_custom_call.1} parent=0
    _
  %s24 = ssub.s32 1, %s22
  %s25 = scalar_select 0, %s24, %s22
  $region1: #{tpu_custom_call.1} parent=0
    #allocation2 [shape = 'u8[98304]{0}', space=vmem, size = 0x18000, scoped, tag = 'input window, operand 2, single buffered']
    #allocation3 [shape = 's32[1]{0}', space=sflag, size = 0x4, scoped, tag = 'scoped memory for tpu_custom_call.1']
    #allocation4 [shape = 'u8[98304]{0}', space=vmem, size = 0x18000, scoped, tag = 'input window, operand 5, single buffered']
    #allocation5 [shape = 's32[1]{0}', space=sflag, size = 0x4, scoped, tag = 'scoped memory for tpu_custom_call.1']
    #allocation6 [shape = 'u8[98304]{0}', space=vmem, size = 0x18000, scoped, tag = 'input window, operand 6, single buffered']
    #allocation7 [shape = 'u8[98304]{0}', space=vmem, size = 0x18000, scoped, tag = 'input window, operand 9, single buffered']
    #allocation8 [shape = 's32[1]{0}', space=sflag, size = 0x4, scoped, tag = 'scoped memory for tpu_custom_call.1']
    #allocation9 [shape = 'u8[98304]{0}', space=vmem, size = 0x18000, scoped, tag = 'input window, operand 10, single buffered']
    #allocation10 [shape = 'u8[98304]{0}', space=vmem, size = 0x18000, scoped, tag = 'input window, operand 13, single buffered']
    #allocation11 [shape = 's32[1]{0}', space=sflag, size = 0x4, scoped, tag = 'scoped memory for tpu_custom_call.1']
    #allocation12 [shape = 'u8[98304]{0}', space=vmem, size = 0x18000, scoped, tag = 'input window, operand 14, single buffered']
    %26 = vsyncpa [#allocation3], 0
    %27 = vsyncpa [#allocation5], 0
    %28 = vsyncpa [#allocation8], 0
    %29 = vsyncpa [#allocation11], 0
    // Predicated region
    $region2: #{tpu_custom_call.1} parent=1 // pred_check
      _
    $region3: #{tpu_custom_call.1} parent=1 // pred_check_branch
      %31 = sbr.rel (0) target = $region5
    $region4: #{tpu_custom_call.1} parent=1 // pred_region
      _
    $region5: #{tpu_custom_call.1} parent=1 // pred_fallthru
      _
    // Predicated region
    $region6: #{tpu_custom_call.1} parent=1 // pred_check
      _
    $region7: #{tpu_custom_call.1} parent=1 // pred_check_branch
      %33 = sbr.rel (0) target = $region9
    $region8: #{tpu_custom_call.1} parent=1 // pred_region
      _
    $region9: #{tpu_custom_call.1} parent=1 // pred_fallthru
      _
    // Predicated region
    $region10: #{tpu_custom_call.1} parent=1 // pred_check
      _
    $region11: #{tpu_custom_call.1} parent=1 // pred_check_branch
      %35 = sbr.rel (0) target = $region13
    $region12: #{tpu_custom_call.1} parent=1 // pred_region
      %37 = vsyncadd [#allocation3], 0
      %s38 = sshll.u32 %s2, 4
      %s39 = int_to_ptr.hbm [resolvable:$true] %s38
      %s40 = sshll.u32 [#allocation2], 4
      %s41 = int_to_ptr.vmem [resolvable:$true] %s40
      %46 = dma.hbm_to_vmem [thread:$0]  %s39, 3072, %s41, [#allocation3], 192, 192, 12
    $region13: #{tpu_custom_call.1} parent=1 // pred_fallthru
      _
    // Predicated region
    $region14: #{tpu_custom_call.1} parent=1 // pred_check
      _
    $region15: #{tpu_custom_call.1} parent=1 // pred_check_branch
      %48 = sbr.rel (0) target = $region17
    $region16: #{tpu_custom_call.1} parent=1 // pred_region
      _
    $region17: #{tpu_custom_call.1} parent=1 // pred_fallthru
      _
    // Predicated region
    $region18: #{tpu_custom_call.1} parent=1 // pred_check
      _
    $region19: #{tpu_custom_call.1} parent=1 // pred_check_branch
      %50 = sbr.rel (0) target = $region21
    $region20: #{tpu_custom_call.1} parent=1 // pred_region
      _
    $region21: #{tpu_custom_call.1} parent=1 // pred_fallthru
      _
    // Predicated region
    $region22: #{tpu_custom_call.1} parent=1 // pred_check
      _
    $region23: #{tpu_custom_call.1} parent=1 // pred_check_branch
      %52 = sbr.rel (0) target = $region25
    $region24: #{tpu_custom_call.1} parent=1 // pred_region
      %54 = vsyncadd [#allocation5], 0
      %s55 = sshll.u32 %s5, 4
      %s56 = int_to_ptr.hbm [resolvable:$true] %s55
      %s57 = sshll.u32 [#allocation4], 4
      %s58 = int_to_ptr.vmem [resolvable:$true] %s57
      %63 = dma.hbm_to_vmem [thread:$0]  %s56, 3072, %s58, [#allocation5], 192, 192, 12
    $region25: #{tpu_custom_call.1} parent=1 // pred_fallthru
      _
    // Predicated region
    $region26: #{tpu_custom_call.1} parent=1 // pred_check
      _
    $region27: #{tpu_custom_call.1} parent=1 // pred_check_branch
      %65 = sbr.rel (0) target = $region29
    $region28: #{tpu_custom_call.1} parent=1 // pred_region
      %67 = vsyncadd [#allocation5], 0
      %s68 = sshll.u32 %s6, 4
      %s69 = int_to_ptr.hbm [resolvable:$true] %s68
      %s70 = sshll.u32 [#allocation6], 4
      %s71 = int_to_ptr.vmem [resolvable:$true] %s70
      %76 = dma.hbm_to_vmem [thread:$0]  %s69, 3072, %s71, [#allocation5], 192, 192, 12
    $region29: #{tpu_custom_call.1} parent=1 // pred_fallthru
      _
    // Predicated region
    $region30: #{tpu_custom_call.1} parent=1 // pred_check
      _
    $region31: #{tpu_custom_call.1} parent=1 // pred_check_branch
      %78 = sbr.rel (0) target = $region33
    $region32: #{tpu_custom_call.1} parent=1 // pred_region
      _
    $region33: #{tpu_custom_call.1} parent=1 // pred_fallthru
      _
    // Predicated region
    $region34: #{tpu_custom_call.1} parent=1 // pred_check
      _
    $region35: #{tpu_custom_call.1} parent=1 // pred_check_branch
      %80 = sbr.rel (0) target = $region37
    $region36: #{tpu_custom_call.1} parent=1 // pred_region
      _
    $region37: #{tpu_custom_call.1} parent=1 // pred_fallthru
      _
    // Predicated region
    $region38: #{tpu_custom_call.1} parent=1 // pred_check
      _
    $region39: #{tpu_custom_call.1} parent=1 // pred_check_branch
      %82 = sbr.rel (0) target = $region41
    $region40: #{tpu_custom_call.1} parent=1 // pred_region
      %84 = vsyncadd [#allocation8], 0
      %s85 = sshll.u32 %s9, 4
      %s86 = int_to_ptr.hbm [resolvable:$true] %s85
      %s87 = sshll.u32 [#allocation7], 4
      %s88 = int_to_ptr.vmem [resolvable:$true] %s87
      %93 = dma.hbm_to_vmem [thread:$0]  %s86, 3072, %s88, [#allocation8], 192, 192, 12
    $region41: #{tpu_custom_call.1} parent=1 // pred_fallthru
      _
    // Predicated region
    $region42: #{tpu_custom_call.1} parent=1 // pred_check
      _
    $region43: #{tpu_custom_call.1} parent=1 // pred_check_branch
      %95 = sbr.rel (0) target = $region45
    $region44: #{tpu_custom_call.1} parent=1 // pred_region
      %97 = vsyncadd [#allocation8], 0
      %s98 = sshll.u32 %s10, 4
      %s99 = int_to_ptr.hbm [resolvable:$true] %s98
      %s100 = sshll.u32 [#allocation9], 4
      %s101 = int_to_ptr.vmem [resolvable:$true] %s100
      %106 = dma.hbm_to_vmem [thread:$0]  %s99, 3072, %s101, [#allocation8], 192, 192, 12
    $region45: #{tpu_custom_call.1} parent=1 // pred_fallthru
      _
    // Predicated region
    $region46: #{tpu_custom_call.1} parent=1 // pred_check
      _
    $region47: #{tpu_custom_call.1} parent=1 // pred_check_branch
      %108 = sbr.rel (0) target = $region49
    $region48: #{tpu_custom_call.1} parent=1 // pred_region
      _
    $region49: #{tpu_custom_call.1} parent=1 // pred_fallthru
      _
    // Predicated region
    $region50: #{tpu_custom_call.1} parent=1 // pred_check
      _
    $region51: #{tpu_custom_call.1} parent=1 // pred_check_branch
      %110 = sbr.rel (0) target = $region53
    $region52: #{tpu_custom_call.1} parent=1 // pred_region
      _
    $region53: #{tpu_custom_call.1} parent=1 // pred_fallthru
      _
    // Predicated region
    $region54: #{tpu_custom_call.1} parent=1 // pred_check
      _
    $region55: #{tpu_custom_call.1} parent=1 // pred_check_branch
      %112 = sbr.rel (0) target = $region57
    $region56: #{tpu_custom_call.1} parent=1 // pred_region
      %114 = vsyncadd [#allocation11], 0
      %s115 = sshll.u32 %s13, 4
      %s116 = int_to_ptr.hbm [resolvable:$true] %s115
      %s117 = sshll.u32 [#allocation10], 4
      %s118 = int_to_ptr.vmem [resolvable:$true] %s117
      %123 = dma.hbm_to_vmem [thread:$0]  %s116, 3072, %s118, [#allocation11], 192, 192, 12
    $region57: #{tpu_custom_call.1} parent=1 // pred_fallthru
      _
    // Predicated region
    $region58: #{tpu_custom_call.1} parent=1 // pred_check
      _
    $region59: #{tpu_custom_call.1} parent=1 // pred_check_branch
      %125 = sbr.rel (0) target = $region61
    $region60: #{tpu_custom_call.1} parent=1 // pred_region
      %127 = vsyncadd [#allocation11], 0
      %s128 = sshll.u32 %s14, 4
      %s129 = int_to_ptr.hbm [resolvable:$true] %s128
      %s130 = sshll.u32 [#allocation12], 4
      %s131 = int_to_ptr.vmem [resolvable:$true] %s130
      %136 = dma.hbm_to_vmem [thread:$0]  %s129, 3072, %s131, [#allocation11], 192, 192, 12
    $region61: #{tpu_custom_call.1} parent=1 // pred_fallthru
      _
    // Predicated region
    $region62: #{tpu_custom_call.1} parent=1 // pred_check
      _
    $region63: #{tpu_custom_call.1} parent=1 // pred_check_branch
      %138 = sbr.rel (0) target = $region65
    $region64: #{tpu_custom_call.1} parent=1 // pred_region
      _
    $region65: #{tpu_custom_call.1} parent=1 // pred_fallthru
      _
    // Predicated region
    $region66: #{tpu_custom_call.1} parent=1 // pred_check
      _
    $region67: #{tpu_custom_call.1} parent=1 // pred_check_branch
      %140 = sbr.rel (0) target = $region69
    $region68: #{tpu_custom_call.1} parent=1 // pred_region
      _
    $region69: #{tpu_custom_call.1} parent=1 // pred_fallthru
      _
    // Predicated region
    $region70: #{tpu_custom_call.1} parent=1 // pred_check
      _
    $region71: #{tpu_custom_call.1} parent=1 // pred_check_branch
      %142 = sbr.rel (0) target = $region73
    $region72: #{tpu_custom_call.1} parent=1 // pred_region
      _
    $region73: #{tpu_custom_call.1} parent=1 // pred_fallthru
      _
    // Predicated region
    $region74: #{tpu_custom_call.1} parent=1 // pred_check
      _
    $region75: #{tpu_custom_call.1} parent=1 // pred_check_branch
      %144 = sbr.rel (0) target = $region77
    $region76: #{tpu_custom_call.1} parent=1 // pred_region
      _
    $region77: #{tpu_custom_call.1} parent=1 // pred_fallthru
      _
    // Predicated region
    $region78: #{tpu_custom_call.1} parent=1 // pred_check
      _
    $region79: #{tpu_custom_call.1} parent=1 // pred_check_branch
      %146 = sbr.rel (0) target = $region81
    $region80: #{tpu_custom_call.1} parent=1 // pred_region
      _
    $region81: #{tpu_custom_call.1} parent=1 // pred_fallthru
      _
    // Predicated region
    $region82: #{tpu_custom_call.1} parent=1 // pred_check
      _
    $region83: #{tpu_custom_call.1} parent=1 // pred_check_branch
      %148 = sbr.rel (0) target = $region85
    $region84: #{tpu_custom_call.1} parent=1 // pred_region
      _
    $region85: #{tpu_custom_call.1} parent=1 // pred_fallthru
      _
    // Predicated region
    $region86: #{tpu_custom_call.1} parent=1 // pred_check
      _
    $region87: #{tpu_custom_call.1} parent=1 // pred_check_branch
      %150 = sbr.rel (0) target = $region89
    $region88: #{tpu_custom_call.1} parent=1 // pred_region
      %152 = dma.done [#allocation3], 3072
    $region89: #{tpu_custom_call.1} parent=1 // pred_fallthru
      _
    // Predicated region
    $region90: #{tpu_custom_call.1} parent=1 // pred_check
      _
    $region91: #{tpu_custom_call.1} parent=1 // pred_check_branch
      %154 = sbr.rel (0) target = $region93
    $region92: #{tpu_custom_call.1} parent=1 // pred_region
      %156 = dma.done [#allocation5], 3072
    $region93: #{tpu_custom_call.1} parent=1 // pred_fallthru
      _
    // Predicated region
    $region94: #{tpu_custom_call.1} parent=1 // pred_check
      _
    $region95: #{tpu_custom_call.1} parent=1 // pred_check_branch
      %158 = sbr.rel (0) target = $region97
    $region96: #{tpu_custom_call.1} parent=1 // pred_region
      %160 = dma.done [#allocation5], 3072
    $region97: #{tpu_custom_call.1} parent=1 // pred_fallthru
      _
    // Predicated region
    $region98: #{tpu_custom_call.1} parent=1 // pred_check
      _
    $region99: #{tpu_custom_call.1} parent=1 // pred_check_branch
      %162 = sbr.rel (0) target = $region101
    $region100: #{tpu_custom_call.1} parent=1 // pred_region
      %164 = dma.done [#allocation8], 3072
    $region101: #{tpu_custom_call.1} parent=1 // pred_fallthru
      _
    // Predicated region
    $region102: #{tpu_custom_call.1} parent=1 // pred_check
      _
    $region103: #{tpu_custom_call.1} parent=1 // pred_check_branch
      %166 = sbr.rel (0) target = $region105
    $region104: #{tpu_custom_call.1} parent=1 // pred_region
      %168 = dma.done [#allocation8], 3072
    $region105: #{tpu_custom_call.1} parent=1 // pred_fallthru
      _
    // Predicated region
    $region106: #{tpu_custom_call.1} parent=1 // pred_check
      _
    $region107: #{tpu_custom_call.1} parent=1 // pred_check_branch
      %170 = sbr.rel (0) target = $region109
    $region108: #{tpu_custom_call.1} parent=1 // pred_region
      %172 = dma.done [#allocation11], 3072
    $region109: #{tpu_custom_call.1} parent=1 // pred_fallthru
      _
    // Predicated region
    $region110: #{tpu_custom_call.1} parent=1 // pred_check
      _
    $region111: #{tpu_custom_call.1} parent=1 // pred_check_branch
      %174 = sbr.rel (0) target = $region113
    $region112: #{tpu_custom_call.1} parent=1 // pred_region
      %176 = dma.done [#allocation11], 3072
    $region113: #{tpu_custom_call.1} parent=1 // pred_fallthru
      _
    %v178 = vld [vmem:[%s7] sm:$0x7]
    %v180 = vperm.slane %v178, 0
    %v181 = vperm.slane %v178, 1
    %v182 = vperm.slane %v178, 2
    %v186 = vld [vmem:[%s4] sm:$0x7]
    %v188 = vperm.slane %v186, 0
    %v189 = vperm.slane %v186, 1
    %v190 = vperm.slane %v186, 2
    %v194 = vld [vmem:[%s8] sm:$0x7]
    %v196 = vperm.slane %v194, 0
    %v197 = vperm.slane %v194, 1
    %v198 = vperm.slane %v194, 2
    %v202 = vld [vmem:[%s11] sm:$0x7]
    %v204 = vperm.slane %v202, 0
    %v205 = vperm.slane %v202, 1
    %v206 = vperm.slane %v202, 2
    %v210 = vld [vmem:[%s15] sm:$0x7]
    %v212 = vperm.slane %v210, 0
    %v213 = vperm.slane %v210, 1
    %v214 = vperm.slane %v210, 2
    %v218 = vld [vmem:[%s12] sm:$0x7]
    %v220 = vperm.slane %v218, 0
    %v221 = vperm.slane %v218, 1
    %v222 = vperm.slane %v218, 2
    %v226 = vld [vmem:[%s16] sm:$0x7]
    %v228 = vperm.slane %v226, 0
    %v229 = vperm.slane %v226, 1
    %v230 = vperm.slane %v226, 2
    %v234 = vld [vmem:[%s0] sm:$0xf]
    %v235 = vld [vmem:[%s0 + $0x4] sm:$0xf]
    %v236 = vld [vmem:[%s0 + $0x8] sm:$0xf]
    %v237 = vld [vmem:[%s0 + $0xc] sm:$0xf]
    %v238 = vld [vmem:[%s0 + $0x10] sm:$0xf]
    %v239 = vld [vmem:[%s0 + $0x14] sm:$0xf]
    %v240 = vld [vmem:[%s0 + $0x18] sm:$0xf]
    %v241 = vld [vmem:[%s0 + $0x1c] sm:$0xf]
    %v242 = vld [vmem:[%s1] sm:$0xff]
    %v243 = vld [vmem:[%s1 + $0x8] sm:$0xf]
    %v244 = vld [vmem:[%s3] sm:$0x7]
    %v246 = vperm.slane %v244, 0
    %v247 = vperm.slane %v244, 1
    %v248 = vperm.slane %v244, 2
    %v260 = vunpack.c.l.b16 %v234
    %v261 = vunpack.c.l.b16 %v235
    %v262 = vunpack.c.l.b16 %v236
    %v263 = vunpack.c.l.b16 %v237
    %v264 = vunpack.c.l.b16 %v238
    %v265 = vunpack.c.l.b16 %v239
    %v266 = vunpack.c.l.b16 %v240
    %v267 = vunpack.c.l.b16 %v241
    %v268 = vpack.c.b16 %v261, %v260
    %v269 = vpack.c.b16 %v263, %v262
    %v270 = vpack.c.b16 %v265, %v264
    %v271 = vpack.c.b16 %v267, %v266
    %v274 = vunpack.c.l.b16 %v242
    %v275 = vunpack.c.h.b16 %v242
    %v276 = vunpack.c.l.b16 %v243
    %v277 = vpack.c.b16 %v274, %v274
    %v278 = vpack.c.b16 %v275, %v275
    %v279 = vpack.c.b16 %v276, %v276
    %vm280 = vcmask 64512
    %v282 = vsel %vm280, %v268, 0
    %v285 = vsel %vm280, %v269, 0
    %v288 = vsel %vm280, %v270, 0
    %v291 = vsel %vm280, %v271, 0
    %vm293 = vcmask 1043456
    %v295 = vsel %vm293, %v277, 0
    %v298 = vsel %vm293, %v278, 0
    %v301 = vsel %vm293, %v279, 0
    %303 = vmatpush.bf16.msra.mxu0 0
    %304 = vmatpush.bf16.msra.mxu0 0
    %305 = vmatpush.bf16.msra.mxu0 0
    %306 = vmatpush.bf16.msra.mxu0 0
    %307 = vmatpush.bf16.msra.mxu0 0
    %308 = vmatpush.bf16.msra.mxu0 0
    %309 = vmatpush.bf16.msra.mxu0 0
    %310 = vmatpush.bf16.msra.mxu0 %v295
    %311 = vmatmul.bf16.gmra.mxu0 %v282
    %v312 = vpop.f32.mrf.mxu0
    %v313 = vadd.f32 %v246, %v312
    %v314 = vpop.f32.mrf.mxu0
    %v315 = vadd.f32 %v246, %v314
    %316 = vmatmul.bf16.gmra.mxu0 %v285
    %v317 = vpop.f32.mrf.mxu0
    %v318 = vadd.f32 %v246, %v317
    %v319 = vpop.f32.mrf.mxu0
    %v320 = vadd.f32 %v246, %v319
    %321 = vmatmul.bf16.gmra.mxu0 %v288
    %v322 = vpop.f32.mrf.mxu0
    %v323 = vadd.f32 %v246, %v322
    %v324 = vpop.f32.mrf.mxu0
    %v325 = vadd.f32 %v246, %v324
    %326 = vmatmul.bf16.gmra.mxu0 %v291
    %v327 = vpop.f32.mrf.mxu0
    %v328 = vadd.f32 %v246, %v327
    %v329 = vpop.f32.mrf.mxu0
    %v330 = vadd.f32 %v246, %v329
    %331 = vdwg.mxu0
    %332 = vmatpush.bf16.msra.mxu0 0
    %333 = vmatpush.bf16.msra.mxu0 0
    %334 = vmatpush.bf16.msra.mxu0 0
    %335 = vmatpush.bf16.msra.mxu0 0
    %336 = vmatpush.bf16.msra.mxu0 0
    %337 = vmatpush.bf16.msra.mxu0 0
    %338 = vmatpush.bf16.msra.mxu0 0
    %339 = vmatpush.bf16.msra.mxu0 %v298
    %340 = vmatmul.bf16.gmra.mxu0 %v282
    %v341 = vpop.f32.mrf.mxu0
    %v342 = vadd.f32 %v247, %v341
    %v343 = vpop.f32.mrf.mxu0
    %v344 = vadd.f32 %v247, %v343
    %345 = vmatmul.bf16.gmra.mxu0 %v285
    %v346 = vpop.f32.mrf.mxu0
    %v347 = vadd.f32 %v247, %v346
    %v348 = vpop.f32.mrf.mxu0
    %v349 = vadd.f32 %v247, %v348
    %350 = vmatmul.bf16.gmra.mxu0 %v288
    %v351 = vpop.f32.mrf.mxu0
    %v352 = vadd.f32 %v247, %v351
    %v353 = vpop.f32.mrf.mxu0
    %v354 = vadd.f32 %v247, %v353
    %355 = vmatmul.bf16.gmra.mxu0 %v291
    %v356 = vpop.f32.mrf.mxu0
    %v357 = vadd.f32 %v247, %v356
    %v358 = vpop.f32.mrf.mxu0
    %v359 = vadd.f32 %v247, %v358
    %360 = vdwg.mxu0
    %361 = vmatpush.bf16.msra.mxu0 0
    %362 = vmatpush.bf16.msra.mxu0 0
    %363 = vmatpush.bf16.msra.mxu0 0
    %364 = vmatpush.bf16.msra.mxu0 0
    %365 = vmatpush.bf16.msra.mxu0 0
    %366 = vmatpush.bf16.msra.mxu0 0
    %367 = vmatpush.bf16.msra.mxu0 0
    %368 = vmatpush.bf16.msra.mxu0 %v301
    %369 = vmatmul.bf16.gmra.mxu0 %v282
    %v370 = vpop.f32.mrf.mxu0
    %v371 = vadd.f32 %v248, %v370
    %v372 = vpop.f32.mrf.mxu0
    %v373 = vadd.f32 %v248, %v372
    %374 = vmatmul.bf16.gmra.mxu0 %v285
    %v375 = vpop.f32.mrf.mxu0
    %v376 = vadd.f32 %v248, %v375
    %v377 = vpop.f32.mrf.mxu0
    %v378 = vadd.f32 %v248, %v377
    %379 = vmatmul.bf16.gmra.mxu0 %v288
    %v380 = vpop.f32.mrf.mxu0
    %v381 = vadd.f32 %v248, %v380
    %v382 = vpop.f32.mrf.mxu0
    %v383 = vadd.f32 %v248, %v382
    %384 = vmatmul.bf16.gmra.mxu0 %v291
    %v385 = vpop.f32.mrf.mxu0
    %v386 = vadd.f32 %v248, %v385
    %v387 = vpop.f32.mrf.mxu0
    %v388 = vadd.f32 %v248, %v387
    %389 = vdwg.mxu0
    %v390 = vld [vmem:[#allocation2] sm:$0xff]
    %v391 = vld [vmem:[#allocation2 + $0x8] sm:$0xf]
    %v392 = vld [vmem:[#allocation2 + $0xc] sm:$0xff]
    %v393 = vld [vmem:[#allocation2 + $0x14] sm:$0xf]
    %v394 = vld [vmem:[#allocation2 + $0x18] sm:$0xff]
    %v395 = vld [vmem:[#allocation2 + $0x20] sm:$0xf]
    %v396 = vld [vmem:[#allocation2 + $0x24] sm:$0xff]
    %v397 = vld [vmem:[#allocation2 + $0x2c] sm:$0xf]
    %v398 = vld [vmem:[#allocation2 + $0x30] sm:$0xff]
    %v399 = vld [vmem:[#allocation2 + $0x38] sm:$0xf]
    %v400 = vld [vmem:[#allocation2 + $0x3c] sm:$0xff]
    %v401 = vld [vmem:[#allocation2 + $0x44] sm:$0xf]
    %v402 = vld [vmem:[#allocation2 + $0x48] sm:$0xff]
    %v403 = vld [vmem:[#allocation2 + $0x50] sm:$0xf]
    %v404 = vld [vmem:[#allocation2 + $0x54] sm:$0xff]
    %v405 = vld [vmem:[#allocation2 + $0x5c] sm:$0xf]
    %v406 = vld [vmem:[#allocation2 + $0x60] sm:$0xff]
    %v407 = vld [vmem:[#allocation2 + $0x68] sm:$0xf]
    %v408 = vld [vmem:[#allocation2 + $0x6c] sm:$0xff]
    %v409 = vld [vmem:[#allocation2 + $0x74] sm:$0xf]
    %v410 = vld [vmem:[#allocation2 + $0x78] sm:$0xff]
    %v411 = vld [vmem:[#allocation2 + $0x80] sm:$0xf]
    %v412 = vld [vmem:[#allocation2 + $0x84] sm:$0xff]
    %v413 = vld [vmem:[#allocation2 + $0x8c] sm:$0xf]
    %v414 = vld [vmem:[#allocation2 + $0x90] sm:$0xff]
    %v415 = vld [vmem:[#allocation2 + $0x98] sm:$0xf]
    %v416 = vld [vmem:[#allocation2 + $0x9c] sm:$0xff]
    %v417 = vld [vmem:[#allocation2 + $0xa4] sm:$0xf]
    %v418 = vld [vmem:[#allocation2 + $0xa8] sm:$0xff]
    %v419 = vld [vmem:[#allocation2 + $0xb0] sm:$0xf]
    %v420 = vld [vmem:[#allocation2 + $0xb4] sm:$0xff]
    %v421 = vld [vmem:[#allocation2 + $0xbc] sm:$0xf]
    %v454 = vunpack.c.l.b16 %v390
    %v455 = vunpack.c.h.b16 %v390
    %v456 = vunpack.c.l.b16 %v391
    %v457 = vunpack.c.l.b16 %v392
    %v458 = vunpack.c.h.b16 %v392
    %v459 = vunpack.c.l.b16 %v393
    %v460 = vunpack.c.l.b16 %v394
    %v461 = vunpack.c.h.b16 %v394
    %v462 = vunpack.c.l.b16 %v395
    %v463 = vunpack.c.l.b16 %v396
    %v464 = vunpack.c.h.b16 %v396
    %v465 = vunpack.c.l.b16 %v397
    %v466 = vunpack.c.l.b16 %v398
    %v467 = vunpack.c.h.b16 %v398
    %v468 = vunpack.c.l.b16 %v399
    %v469 = vunpack.c.l.b16 %v400
    %v470 = vunpack.c.h.b16 %v400
    %v471 = vunpack.c.l.b16 %v401
    %v472 = vunpack.c.l.b16 %v402
    %v473 = vunpack.c.h.b16 %v402
    %v474 = vunpack.c.l.b16 %v403
    %v475 = vunpack.c.l.b16 %v404
    %v476 = vunpack.c.h.b16 %v404
    %v477 = vunpack.c.l.b16 %v405
    %v478 = vunpack.c.l.b16 %v406
    %v479 = vunpack.c.h.b16 %v406
    %v480 = vunpack.c.l.b16 %v407
    %v481 = vunpack.c.l.b16 %v408
    %v482 = vunpack.c.h.b16 %v408
    %v483 = vunpack.c.l.b16 %v409
    %v484 = vunpack.c.l.b16 %v410
    %v485 = vunpack.c.h.b16 %v410
    %v486 = vunpack.c.l.b16 %v411
    %v487 = vunpack.c.l.b16 %v412
    %v488 = vunpack.c.h.b16 %v412
    %v489 = vunpack.c.l.b16 %v413
    %v490 = vunpack.c.l.b16 %v414
    %v491 = vunpack.c.h.b16 %v414
    %v492 = vunpack.c.l.b16 %v415
    %v493 = vunpack.c.l.b16 %v416
    %v494 = vunpack.c.h.b16 %v416
    %v495 = vunpack.c.l.b16 %v417
    %v496 = vunpack.c.l.b16 %v418
    %v497 = vunpack.c.h.b16 %v418
    %v498 = vunpack.c.l.b16 %v419
    %v499 = vunpack.c.l.b16 %v420
    %v500 = vunpack.c.h.b16 %v420
    %v501 = vunpack.c.l.b16 %v421
    %v502 = vpack.c.b16 %v457, %v454
    %v503 = vpack.c.b16 %v458, %v455
    %v504 = vpack.c.b16 %v459, %v456
    %v505 = vpack.c.b16 %v463, %v460
    %v506 = vpack.c.b16 %v464, %v461
    %v507 = vpack.c.b16 %v465, %v462
    %v508 = vpack.c.b16 %v469, %v466
    %v509 = vpack.c.b16 %v470, %v467
    %v510 = vpack.c.b16 %v471, %v468
    %v511 = vpack.c.b16 %v475, %v472
    %v512 = vpack.c.b16 %v476, %v473
    %v513 = vpack.c.b16 %v477, %v474
    %v514 = vpack.c.b16 %v481, %v478
    %v515 = vpack.c.b16 %v482, %v479
    %v516 = vpack.c.b16 %v483, %v480
    %v517 = vpack.c.b16 %v487, %v484
    %v518 = vpack.c.b16 %v488, %v485
    %v519 = vpack.c.b16 %v489, %v486
    %v520 = vpack.c.b16 %v493, %v490
    %v521 = vpack.c.b16 %v494, %v491
    %v522 = vpack.c.b16 %v495, %v492
    %v523 = vpack.c.b16 %v499, %v496
    %v524 = vpack.c.b16 %v500, %v497
    %v525 = vpack.c.b16 %v501, %v498
    %550 = vmatpush.bf16.msra.mxu0 %v523
    %551 = vmatpush.bf16.msra.mxu0 %v520
    %552 = vmatpush.bf16.msra.mxu0 %v517
    %553 = vmatpush.bf16.msra.mxu0 %v514
    %554 = vmatpush.bf16.msra.mxu0 %v511
    %555 = vmatpush.bf16.msra.mxu0 %v508
    %556 = vmatpush.bf16.msra.mxu0 %v505
    %557 = vmatpush.bf16.msra.mxu0 %v502
    %558 = vmatmul.bf16.gmra.mxu0 0
    %v559 = vpop.f32.mrf.mxu0
    %v560 = vadd.f32 %v188, %v559
    %v561 = vpop.f32.mrf.mxu0
    %562 = vdwg.mxu0
    %563 = vmatpush.bf16.msra.mxu0 %v524
    %564 = vmatpush.bf16.msra.mxu0 %v521
    %565 = vmatpush.bf16.msra.mxu0 %v518
    %566 = vmatpush.bf16.msra.mxu0 %v515
    %567 = vmatpush.bf16.msra.mxu0 %v512
    %568 = vmatpush.bf16.msra.mxu0 %v509
    %569 = vmatpush.bf16.msra.mxu0 %v506
    %570 = vmatpush.bf16.msra.mxu0 %v503
    %571 = vmatmul.bf16.gmra.mxu0 0
    %v572 = vpop.f32.mrf.mxu0
    %v573 = vadd.f32 %v189, %v572
    %v574 = vpop.f32.mrf.mxu0
    %575 = vdwg.mxu0
    %576 = vmatpush.bf16.msra.mxu0 %v525
    %577 = vmatpush.bf16.msra.mxu0 %v522
    %578 = vmatpush.bf16.msra.mxu0 %v519
    %579 = vmatpush.bf16.msra.mxu0 %v516
    %580 = vmatpush.bf16.msra.mxu0 %v513
    %581 = vmatpush.bf16.msra.mxu0 %v510
    %582 = vmatpush.bf16.msra.mxu0 %v507
    %583 = vmatpush.bf16.msra.mxu0 %v504
    %584 = vmatmul.bf16.gmra.mxu0 0
    %v585 = vpop.f32.mrf.mxu0
    %v586 = vadd.f32 %v190, %v585
    %v587 = vpop.f32.mrf.mxu0
    %588 = vdwg.mxu0
    %v589 = vadd.f32 %v313, %v560
    %v590 = vadd.f32 %v342, %v573
    %v591 = vxor.u32 %v589, 2147483648
    %v592 = vxor.u32 %v590, 2147483648
    %v593 = vmul.f32 %v591, 1.442695
    %v594 = vpow.pop %v593
    %v595 = vmul.f32 %v592, 1.442695
    %v596 = vpow.pop %v595
    %v597 = vadd.f32 %v594, 1.0
    %v598 = vadd.f32 %v596, 1.0
    %v599 = vrcp.pop %v597
    %v600 = vmul.f32 %v597, %v599
    %v601 = vsub.f32 1.0, %v600
    %v602 = vmul.f32 %v599, %v601
    %v603 = vadd.f32 %v599, %v602
    %vm604 = vweird.f32 %v597
    %vm605 = vweird.f32 %v599
    %vm606 = vmor %vm604, %vm605
    %v607 = vsel %vm606, %v599, %v603
    %v608 = vand.u32 2147483647, %v597
    %vm609 = vcmp.eq.f32.partialorder %v608, 8.507059e+37
    %v610 = vand.u32 %v597, 2147483648
    %v611 = vor.u32 1.1754944e-38, %v610
    %v612 = vsel %vm609, %v611, %v607
    %v613 = vmul.f32 1.0, %v612
    %v614 = vrcp.pop %v598
    %v615 = vmul.f32 %v598, %v614
    %v616 = vsub.f32 1.0, %v615
    %v617 = vmul.f32 %v614, %v616
    %v618 = vadd.f32 %v614, %v617
    %vm619 = vweird.f32 %v598
    %vm620 = vweird.f32 %v614
    %vm621 = vmor %vm619, %vm620
    %v622 = vsel %vm621, %v614, %v618
    %v623 = vand.u32 2147483647, %v598
    %vm624 = vcmp.eq.f32.partialorder %v623, 8.507059e+37
    %v625 = vand.u32 %v598, 2147483648
    %v626 = vor.u32 1.1754944e-38, %v625
    %v627 = vsel %vm624, %v626, %v622
    %v628 = vmul.f32 1.0, %v627
    %v629 = vmul.f32 %v613, %v586
    %v630 = vadd.f32 %v371, %v629
    %v631 = vtanh.pop %v630
    %v632 = vsub.f32 1.0, %v628
    %v633 = vmul.f32 %v632, %v631
    %v634 = vmul.f32 %v628, 0.0
    %v635 = vadd.f32 %v633, %v634
    %v636 = vpack.c.bf16 %v635, %v635
    %v637 = vld [vmem:[#allocation4] sm:$0xff]
    %v638 = vld [vmem:[#allocation4 + $0x8] sm:$0xf]
    %v639 = vld [vmem:[#allocation4 + $0xc] sm:$0xff]
    %v640 = vld [vmem:[#allocation4 + $0x14] sm:$0xf]
    %v641 = vld [vmem:[#allocation4 + $0x18] sm:$0xff]
    %v642 = vld [vmem:[#allocation4 + $0x20] sm:$0xf]
    %v643 = vld [vmem:[#allocation4 + $0x24] sm:$0xff]
    %v644 = vld [vmem:[#allocation4 + $0x2c] sm:$0xf]
    %v645 = vld [vmem:[#allocation4 + $0x30] sm:$0xff]
    %v646 = vld [vmem:[#allocation4 + $0x38] sm:$0xf]
    %v647 = vld [vmem:[#allocation4 + $0x3c] sm:$0xff]
    %v648 = vld [vmem:[#allocation4 + $0x44] sm:$0xf]
    %v649 = vld [vmem:[#allocation4 + $0x48] sm:$0xff]
    %v650 = vld [vmem:[#allocation4 + $0x50] sm:$0xf]
    %v651 = vld [vmem:[#allocation4 + $0x54] sm:$0xff]
    %v652 = vld [vmem:[#allocation4 + $0x5c] sm:$0xf]
    %v653 = vld [vmem:[#allocation4 + $0x60] sm:$0xff]
    %v654 = vld [vmem:[#allocation4 + $0x68] sm:$0xf]
    %v655 = vld [vmem:[#allocation4 + $0x6c] sm:$0xff]
    %v656 = vld [vmem:[#allocation4 + $0x74] sm:$0xf]
    %v657 = vld [vmem:[#allocation4 + $0x78] sm:$0xff]
    %v658 = vld [vmem:[#allocation4 + $0x80] sm:$0xf]
    %v659 = vld [vmem:[#allocation4 + $0x84] sm:$0xff]
    %v660 = vld [vmem:[#allocation4 + $0x8c] sm:$0xf]
    %v661 = vld [vmem:[#allocation4 + $0x90] sm:$0xff]
    %v662 = vld [vmem:[#allocation4 + $0x98] sm:$0xf]
    %v663 = vld [vmem:[#allocation4 + $0x9c] sm:$0xff]
    %v664 = vld [vmem:[#allocation4 + $0xa4] sm:$0xf]
    %v665 = vld [vmem:[#allocation4 + $0xa8] sm:$0xff]
    %v666 = vld [vmem:[#allocation4 + $0xb0] sm:$0xf]
    %v667 = vld [vmem:[#allocation4 + $0xb4] sm:$0xff]
    %v668 = vld [vmem:[#allocation4 + $0xbc] sm:$0xf]
    %v701 = vunpack.c.l.b16 %v637
    %v702 = vunpack.c.h.b16 %v637
    %v703 = vunpack.c.l.b16 %v638
    %v704 = vunpack.c.l.b16 %v639
    %v705 = vunpack.c.h.b16 %v639
    %v706 = vunpack.c.l.b16 %v640
    %v707 = vunpack.c.l.b16 %v641
    %v708 = vunpack.c.h.b16 %v641
    %v709 = vunpack.c.l.b16 %v642
    %v710 = vunpack.c.l.b16 %v643
    %v711 = vunpack.c.h.b16 %v643
    %v712 = vunpack.c.l.b16 %v644
    %v713 = vunpack.c.l.b16 %v645
    %v714 = vunpack.c.h.b16 %v645
    %v715 = vunpack.c.l.b16 %v646
    %v716 = vunpack.c.l.b16 %v647
    %v717 = vunpack.c.h.b16 %v647
    %v718 = vunpack.c.l.b16 %v648
    %v719 = vunpack.c.l.b16 %v649
    %v720 = vunpack.c.h.b16 %v649
    %v721 = vunpack.c.l.b16 %v650
    %v722 = vunpack.c.l.b16 %v651
    %v723 = vunpack.c.h.b16 %v651
    %v724 = vunpack.c.l.b16 %v652
    %v725 = vunpack.c.l.b16 %v653
    %v726 = vunpack.c.h.b16 %v653
    %v727 = vunpack.c.l.b16 %v654
    %v728 = vunpack.c.l.b16 %v655
    %v729 = vunpack.c.h.b16 %v655
    %v730 = vunpack.c.l.b16 %v656
    %v731 = vunpack.c.l.b16 %v657
    %v732 = vunpack.c.h.b16 %v657
    %v733 = vunpack.c.l.b16 %v658
    %v734 = vunpack.c.l.b16 %v659
    %v735 = vunpack.c.h.b16 %v659
    %v736 = vunpack.c.l.b16 %v660
    %v737 = vunpack.c.l.b16 %v661
    %v738 = vunpack.c.h.b16 %v661
    %v739 = vunpack.c.l.b16 %v662
    %v740 = vunpack.c.l.b16 %v663
    %v741 = vunpack.c.h.b16 %v663
    %v742 = vunpack.c.l.b16 %v664
    %v743 = vunpack.c.l.b16 %v665
    %v744 = vunpack.c.h.b16 %v665
    %v745 = vunpack.c.l.b16 %v666
    %v746 = vunpack.c.l.b16 %v667
    %v747 = vunpack.c.h.b16 %v667
    %v748 = vunpack.c.l.b16 %v668
    %v749 = vpack.c.b16 %v704, %v701
    %v750 = vpack.c.b16 %v705, %v702
    %v751 = vpack.c.b16 %v706, %v703
    %v752 = vpack.c.b16 %v710, %v707
    %v753 = vpack.c.b16 %v711, %v708
    %v754 = vpack.c.b16 %v712, %v709
    %v755 = vpack.c.b16 %v716, %v713
    %v756 = vpack.c.b16 %v717, %v714
    %v757 = vpack.c.b16 %v718, %v715
    %v758 = vpack.c.b16 %v722, %v719
    %v759 = vpack.c.b16 %v723, %v720
    %v760 = vpack.c.b16 %v724, %v721
    %v761 = vpack.c.b16 %v728, %v725
    %v762 = vpack.c.b16 %v729, %v726
    %v763 = vpack.c.b16 %v730, %v727
    %v764 = vpack.c.b16 %v734, %v731
    %v765 = vpack.c.b16 %v735, %v732
    %v766 = vpack.c.b16 %v736, %v733
    %v767 = vpack.c.b16 %v740, %v737
    %v768 = vpack.c.b16 %v741, %v738
    %v769 = vpack.c.b16 %v742, %v739
    %v770 = vpack.c.b16 %v746, %v743
    %v771 = vpack.c.b16 %v747, %v744
    %v772 = vpack.c.b16 %v748, %v745
    %797 = vmatpush.bf16.msra.mxu0 %v770
    %798 = vmatpush.bf16.msra.mxu0 %v767
    %799 = vmatpush.bf16.msra.mxu0 %v764
    %800 = vmatpush.bf16.msra.mxu0 %v761
    %801 = vmatpush.bf16.msra.mxu0 %v758
    %802 = vmatpush.bf16.msra.mxu0 %v755
    %803 = vmatpush.bf16.msra.mxu0 %v752
    %804 = vmatpush.bf16.msra.mxu0 %v749
    %805 = vmatmul.bf16.gmra.mxu0 %v636
    %v806 = vpop.f32.mrf.mxu0
    %v807 = vadd.f32 %v180, %v806
    %v808 = vpop.f32.mrf.mxu0
    %809 = vdwg.mxu0
    %810 = vmatpush.bf16.msra.mxu0 %v771
    %811 = vmatpush.bf16.msra.mxu0 %v768
    %812 = vmatpush.bf16.msra.mxu0 %v765
    %813 = vmatpush.bf16.msra.mxu0 %v762
    %814 = vmatpush.bf16.msra.mxu0 %v759
    %815 = vmatpush.bf16.msra.mxu0 %v756
    %816 = vmatpush.bf16.msra.mxu0 %v753
    %817 = vmatpush.bf16.msra.mxu0 %v750
    %818 = vmatmul.bf16.gmra.mxu0 %v636
    %v819 = vpop.f32.mrf.mxu0
    %v820 = vadd.f32 %v181, %v819
    %v821 = vpop.f32.mrf.mxu0
    %822 = vdwg.mxu0
    %823 = vmatpush.bf16.msra.mxu0 %v772
    %824 = vmatpush.bf16.msra.mxu0 %v769
    %825 = vmatpush.bf16.msra.mxu0 %v766
    %826 = vmatpush.bf16.msra.mxu0 %v763
    %827 = vmatpush.bf16.msra.mxu0 %v760
    %828 = vmatpush.bf16.msra.mxu0 %v757
    %829 = vmatpush.bf16.msra.mxu0 %v754
    %830 = vmatpush.bf16.msra.mxu0 %v751
    %831 = vmatmul.bf16.gmra.mxu0 %v636
    %v832 = vpop.f32.mrf.mxu0
    %v833 = vadd.f32 %v182, %v832
    %v834 = vpop.f32.mrf.mxu0
    %835 = vdwg.mxu0
    %v836 = vld [vmem:[#allocation6] sm:$0xff]
    %v837 = vld [vmem:[#allocation6 + $0x8] sm:$0xf]
    %v838 = vld [vmem:[#allocation6 + $0xc] sm:$0xff]
    %v839 = vld [vmem:[#allocation6 + $0x14] sm:$0xf]
    %v840 = vld [vmem:[#allocation6 + $0x18] sm:$0xff]
    %v841 = vld [vmem:[#allocation6 + $0x20] sm:$0xf]
    %v842 = vld [vmem:[#allocation6 + $0x24] sm:$0xff]
    %v843 = vld [vmem:[#allocation6 + $0x2c] sm:$0xf]
    %v844 = vld [vmem:[#allocation6 + $0x30] sm:$0xff]
    %v845 = vld [vmem:[#allocation6 + $0x38] sm:$0xf]
    %v846 = vld [vmem:[#allocation6 + $0x3c] sm:$0xff]
    %v847 = vld [vmem:[#allocation6 + $0x44] sm:$0xf]
    %v848 = vld [vmem:[#allocation6 + $0x48] sm:$0xff]
    %v849 = vld [vmem:[#allocation6 + $0x50] sm:$0xf]
    %v850 = vld [vmem:[#allocation6 + $0x54] sm:$0xff]
    %v851 = vld [vmem:[#allocation6 + $0x5c] sm:$0xf]
    %v852 = vld [vmem:[#allocation6 + $0x60] sm:$0xff]
    %v853 = vld [vmem:[#allocation6 + $0x68] sm:$0xf]
    %v854 = vld [vmem:[#allocation6 + $0x6c] sm:$0xff]
    %v855 = vld [vmem:[#allocation6 + $0x74] sm:$0xf]
    %v856 = vld [vmem:[#allocation6 + $0x78] sm:$0xff]
    %v857 = vld [vmem:[#allocation6 + $0x80] sm:$0xf]
    %v858 = vld [vmem:[#allocation6 + $0x84] sm:$0xff]
    %v859 = vld [vmem:[#allocation6 + $0x8c] sm:$0xf]
    %v860 = vld [vmem:[#allocation6 + $0x90] sm:$0xff]
    %v861 = vld [vmem:[#allocation6 + $0x98] sm:$0xf]
    %v862 = vld [vmem:[#allocation6 + $0x9c] sm:$0xff]
    %v863 = vld [vmem:[#allocation6 + $0xa4] sm:$0xf]
    %v864 = vld [vmem:[#allocation6 + $0xa8] sm:$0xff]
    %v865 = vld [vmem:[#allocation6 + $0xb0] sm:$0xf]
    %v866 = vld [vmem:[#allocation6 + $0xb4] sm:$0xff]
    %v867 = vld [vmem:[#allocation6 + $0xbc] sm:$0xf]
    %v900 = vunpack.c.l.b16 %v836
    %v901 = vunpack.c.h.b16 %v836
    %v902 = vunpack.c.l.b16 %v837
    %v903 = vunpack.c.l.b16 %v838
    %v904 = vunpack.c.h.b16 %v838
    %v905 = vunpack.c.l.b16 %v839
    %v906 = vunpack.c.l.b16 %v840
    %v907 = vunpack.c.h.b16 %v840
    %v908 = vunpack.c.l.b16 %v841
    %v909 = vunpack.c.l.b16 %v842
    %v910 = vunpack.c.h.b16 %v842
    %v911 = vunpack.c.l.b16 %v843
    %v912 = vunpack.c.l.b16 %v844
    %v913 = vunpack.c.h.b16 %v844
    %v914 = vunpack.c.l.b16 %v845
    %v915 = vunpack.c.l.b16 %v846
    %v916 = vunpack.c.h.b16 %v846
    %v917 = vunpack.c.l.b16 %v847
    %v918 = vunpack.c.l.b16 %v848
    %v919 = vunpack.c.h.b16 %v848
    %v920 = vunpack.c.l.b16 %v849
    %v921 = vunpack.c.l.b16 %v850
    %v922 = vunpack.c.h.b16 %v850
    %v923 = vunpack.c.l.b16 %v851
    %v924 = vunpack.c.l.b16 %v852
    %v925 = vunpack.c.h.b16 %v852
    %v926 = vunpack.c.l.b16 %v853
    %v927 = vunpack.c.l.b16 %v854
    %v928 = vunpack.c.h.b16 %v854
    %v929 = vunpack.c.l.b16 %v855
    %v930 = vunpack.c.l.b16 %v856
    %v931 = vunpack.c.h.b16 %v856
    %v932 = vunpack.c.l.b16 %v857
    %v933 = vunpack.c.l.b16 %v858
    %v934 = vunpack.c.h.b16 %v858
    %v935 = vunpack.c.l.b16 %v859
    %v936 = vunpack.c.l.b16 %v860
    %v937 = vunpack.c.h.b16 %v860
    %v938 = vunpack.c.l.b16 %v861
    %v939 = vunpack.c.l.b16 %v862
    %v940 = vunpack.c.h.b16 %v862
    %v941 = vunpack.c.l.b16 %v863
    %v942 = vunpack.c.l.b16 %v864
    %v943 = vunpack.c.h.b16 %v864
    %v944 = vunpack.c.l.b16 %v865
    %v945 = vunpack.c.l.b16 %v866
    %v946 = vunpack.c.h.b16 %v866
    %v947 = vunpack.c.l.b16 %v867
    %v948 = vpack.c.b16 %v903, %v900
    %v949 = vpack.c.b16 %v904, %v901
    %v950 = vpack.c.b16 %v905, %v902
    %v951 = vpack.c.b16 %v909, %v906
    %v952 = vpack.c.b16 %v910, %v907
    %v953 = vpack.c.b16 %v911, %v908
    %v954 = vpack.c.b16 %v915, %v912
    %v955 = vpack.c.b16 %v916, %v913
    %v956 = vpack.c.b16 %v917, %v914
    %v957 = vpack.c.b16 %v921, %v918
    %v958 = vpack.c.b16 %v922, %v919
    %v959 = vpack.c.b16 %v923, %v920
    %v960 = vpack.c.b16 %v927, %v924
    %v961 = vpack.c.b16 %v928, %v925
    %v962 = vpack.c.b16 %v929, %v926
    %v963 = vpack.c.b16 %v933, %v930
    %v964 = vpack.c.b16 %v934, %v931
    %v965 = vpack.c.b16 %v935, %v932
    %v966 = vpack.c.b16 %v939, %v936
    %v967 = vpack.c.b16 %v940, %v937
    %v968 = vpack.c.b16 %v941, %v938
    %v969 = vpack.c.b16 %v945, %v942
    %v970 = vpack.c.b16 %v946, %v943
    %v971 = vpack.c.b16 %v947, %v944
    %996 = vmatpush.bf16.msra.mxu0 %v969
    %997 = vmatpush.bf16.msra.mxu0 %v966
    %998 = vmatpush.bf16.msra.mxu0 %v963
    %999 = vmatpush.bf16.msra.mxu0 %v960
    %1000 = vmatpush.bf16.msra.mxu0 %v957
    %1001 = vmatpush.bf16.msra.mxu0 %v954
    %1002 = vmatpush.bf16.msra.mxu0 %v951
    %1003 = vmatpush.bf16.msra.mxu0 %v948
    %1004 = vmatmul.bf16.gmra.mxu0 0
    %v1005 = vpop.f32.mrf.mxu0
    %v1006 = vadd.f32 %v196, %v1005
    %v1007 = vpop.f32.mrf.mxu0
    %1008 = vdwg.mxu0
    %1009 = vmatpush.bf16.msra.mxu0 %v970
    %1010 = vmatpush.bf16.msra.mxu0 %v967
    %1011 = vmatpush.bf16.msra.mxu0 %v964
    %1012 = vmatpush.bf16.msra.mxu0 %v961
    %1013 = vmatpush.bf16.msra.mxu0 %v958
    %1014 = vmatpush.bf16.msra.mxu0 %v955
    %1015 = vmatpush.bf16.msra.mxu0 %v952
    %1016 = vmatpush.bf16.msra.mxu0 %v949
    %1017 = vmatmul.bf16.gmra.mxu0 0
    %v1018 = vpop.f32.mrf.mxu0
    %v1019 = vadd.f32 %v197, %v1018
    %v1020 = vpop.f32.mrf.mxu0
    %1021 = vdwg.mxu0
    %1022 = vmatpush.bf16.msra.mxu0 %v971
    %1023 = vmatpush.bf16.msra.mxu0 %v968
    %1024 = vmatpush.bf16.msra.mxu0 %v965
    %1025 = vmatpush.bf16.msra.mxu0 %v962
    %1026 = vmatpush.bf16.msra.mxu0 %v959
    %1027 = vmatpush.bf16.msra.mxu0 %v956
    %1028 = vmatpush.bf16.msra.mxu0 %v953
    %1029 = vmatpush.bf16.msra.mxu0 %v950
    %1030 = vmatmul.bf16.gmra.mxu0 0
    %v1031 = vpop.f32.mrf.mxu0
    %v1032 = vadd.f32 %v198, %v1031
    %v1033 = vpop.f32.mrf.mxu0
    %1034 = vdwg.mxu0
    %v1035 = vadd.f32 %v807, %v1006
    %v1036 = vadd.f32 %v820, %v1019
    %v1037 = vxor.u32 %v1035, 2147483648
    %v1038 = vxor.u32 %v1036, 2147483648
    %v1039 = vmul.f32 %v1037, 1.442695
    %v1040 = vpow.pop %v1039
    %v1041 = vmul.f32 %v1038, 1.442695
    %v1042 = vpow.pop %v1041
    %v1043 = vadd.f32 %v1040, 1.0
    %v1044 = vadd.f32 %v1042, 1.0
    %v1045 = vrcp.pop %v1043
    %v1046 = vmul.f32 %v1043, %v1045
    %v1047 = vsub.f32 1.0, %v1046
    %v1048 = vmul.f32 %v1045, %v1047
    %v1049 = vadd.f32 %v1045, %v1048
    %vm1050 = vweird.f32 %v1043
    %vm1051 = vweird.f32 %v1045
    %vm1052 = vmor %vm1050, %vm1051
    %v1053 = vsel %vm1052, %v1045, %v1049
    %v1054 = vand.u32 2147483647, %v1043
    %vm1055 = vcmp.eq.f32.partialorder %v1054, 8.507059e+37
    %v1056 = vand.u32 %v1043, 2147483648
    %v1057 = vor.u32 1.1754944e-38, %v1056
    %v1058 = vsel %vm1055, %v1057, %v1053
    %v1059 = vmul.f32 1.0, %v1058
    %v1060 = vrcp.pop %v1044
    %v1061 = vmul.f32 %v1044, %v1060
    %v1062 = vsub.f32 1.0, %v1061
    %v1063 = vmul.f32 %v1060, %v1062
    %v1064 = vadd.f32 %v1060, %v1063
    %vm1065 = vweird.f32 %v1044
    %vm1066 = vweird.f32 %v1060
    %vm1067 = vmor %vm1065, %vm1066
    %v1068 = vsel %vm1067, %v1060, %v1064
    %v1069 = vand.u32 2147483647, %v1044
    %vm1070 = vcmp.eq.f32.partialorder %v1069, 8.507059e+37
    %v1071 = vand.u32 %v1044, 2147483648
    %v1072 = vor.u32 1.1754944e-38, %v1071
    %v1073 = vsel %vm1070, %v1072, %v1068
    %v1074 = vmul.f32 1.0, %v1073
    %v1075 = vmul.f32 %v1059, %v1032
    %v1076 = vadd.f32 %v833, %v1075
    %v1077 = vtanh.pop %v1076
    %v1078 = vsub.f32 1.0, %v1074
    %v1079 = vmul.f32 %v1078, %v1077
    %v1080 = vmul.f32 %v1074, 0.0
    %v1081 = vadd.f32 %v1079, %v1080
    %1082 = vmatpush.bf16.msra.mxu0 %v523
    %1083 = vmatpush.bf16.msra.mxu0 %v520
    %1084 = vmatpush.bf16.msra.mxu0 %v517
    %1085 = vmatpush.bf16.msra.mxu0 %v514
    %1086 = vmatpush.bf16.msra.mxu0 %v511
    %1087 = vmatpush.bf16.msra.mxu0 %v508
    %1088 = vmatpush.bf16.msra.mxu0 %v505
    %1089 = vmatpush.bf16.msra.mxu0 %v502
    %1090 = vmatmul.bf16.gmra.mxu0 %v636
    %v1091 = vpop.f32.mrf.mxu0
    %v1092 = vadd.f32 %v188, %v1091
    %v1093 = vpop.f32.mrf.mxu0
    %1094 = vdwg.mxu0
    %1095 = vmatpush.bf16.msra.mxu0 %v524
    %1096 = vmatpush.bf16.msra.mxu0 %v521
    %1097 = vmatpush.bf16.msra.mxu0 %v518
    %1098 = vmatpush.bf16.msra.mxu0 %v515
    %1099 = vmatpush.bf16.msra.mxu0 %v512
    %1100 = vmatpush.bf16.msra.mxu0 %v509
    %1101 = vmatpush.bf16.msra.mxu0 %v506
    %1102 = vmatpush.bf16.msra.mxu0 %v503
    %1103 = vmatmul.bf16.gmra.mxu0 %v636
    %v1104 = vpop.f32.mrf.mxu0
    %v1105 = vadd.f32 %v189, %v1104
    %v1106 = vpop.f32.mrf.mxu0
    %1107 = vdwg.mxu0
    %1108 = vmatpush.bf16.msra.mxu0 %v525
    %1109 = vmatpush.bf16.msra.mxu0 %v522
    %1110 = vmatpush.bf16.msra.mxu0 %v519
    %1111 = vmatpush.bf16.msra.mxu0 %v516
    %1112 = vmatpush.bf16.msra.mxu0 %v513
    %1113 = vmatpush.bf16.msra.mxu0 %v510
    %1114 = vmatpush.bf16.msra.mxu0 %v507
    %1115 = vmatpush.bf16.msra.mxu0 %v504
    %1116 = vmatmul.bf16.gmra.mxu0 %v636
    %v1117 = vpop.f32.mrf.mxu0
    %v1118 = vadd.f32 %v190, %v1117
    %v1119 = vpop.f32.mrf.mxu0
    %1120 = vdwg.mxu0
    %v1121 = vadd.f32 %v315, %v1092
    %v1122 = vadd.f32 %v344, %v1105
    %v1123 = vxor.u32 %v1121, 2147483648
    %v1124 = vxor.u32 %v1122, 2147483648
    %v1125 = vmul.f32 %v1123, 1.442695
    %v1126 = vpow.pop %v1125
    %v1127 = vmul.f32 %v1124, 1.442695
    %v1128 = vpow.pop %v1127
    %v1129 = vadd.f32 %v1126, 1.0
    %v1130 = vadd.f32 %v1128, 1.0
    %v1131 = vrcp.pop %v1129
    %v1132 = vmul.f32 %v1129, %v1131
    %v1133 = vsub.f32 1.0, %v1132
    %v1134 = vmul.f32 %v1131, %v1133
    %v1135 = vadd.f32 %v1131, %v1134
    %vm1136 = vweird.f32 %v1129
    %vm1137 = vweird.f32 %v1131
    %vm1138 = vmor %vm1136, %vm1137
    %v1139 = vsel %vm1138, %v1131, %v1135
    %v1140 = vand.u32 2147483647, %v1129
    %vm1141 = vcmp.eq.f32.partialorder %v1140, 8.507059e+37
    %v1142 = vand.u32 %v1129, 2147483648
    %v1143 = vor.u32 1.1754944e-38, %v1142
    %v1144 = vsel %vm1141, %v1143, %v1139
    %v1145 = vmul.f32 1.0, %v1144
    %v1146 = vrcp.pop %v1130
    %v1147 = vmul.f32 %v1130, %v1146
    %v1148 = vsub.f32 1.0, %v1147
    %v1149 = vmul.f32 %v1146, %v1148
    %v1150 = vadd.f32 %v1146, %v1149
    %vm1151 = vweird.f32 %v1130
    %vm1152 = vweird.f32 %v1146
    %vm1153 = vmor %vm1151, %vm1152
    %v1154 = vsel %vm1153, %v1146, %v1150
    %v1155 = vand.u32 2147483647, %v1130
    %vm1156 = vcmp.eq.f32.partialorder %v1155, 8.507059e+37
    %v1157 = vand.u32 %v1130, 2147483648
    %v1158 = vor.u32 1.1754944e-38, %v1157
    %v1159 = vsel %vm1156, %v1158, %v1154
    %v1160 = vmul.f32 1.0, %v1159
    %v1161 = vmul.f32 %v1145, %v1118
    %v1162 = vadd.f32 %v373, %v1161
    %v1163 = vtanh.pop %v1162
    %v1164 = vsub.f32 1.0, %v1160
    %v1165 = vmul.f32 %v1164, %v1163
    %v1166 = vmul.f32 %v1160, %v635
    %v1167 = vadd.f32 %v1165, %v1166
    %v1168 = vpack.c.bf16 %v1167, %v1167
    %1169 = vmatpush.bf16.msra.mxu0 %v770
    %1170 = vmatpush.bf16.msra.mxu0 %v767
    %1171 = vmatpush.bf16.msra.mxu0 %v764
    %1172 = vmatpush.bf16.msra.mxu0 %v761
    %1173 = vmatpush.bf16.msra.mxu0 %v758
    %1174 = vmatpush.bf16.msra.mxu0 %v755
    %1175 = vmatpush.bf16.msra.mxu0 %v752
    %1176 = vmatpush.bf16.msra.mxu0 %v749
    %1177 = vmatmul.bf16.gmra.mxu0 %v1168
    %v1178 = vpop.f32.mrf.mxu0
    %v1179 = vadd.f32 %v180, %v1178
    %v1180 = vpop.f32.mrf.mxu0
    %1181 = vdwg.mxu0
    %1182 = vmatpush.bf16.msra.mxu0 %v771
    %1183 = vmatpush.bf16.msra.mxu0 %v768
    %1184 = vmatpush.bf16.msra.mxu0 %v765
    %1185 = vmatpush.bf16.msra.mxu0 %v762
    %1186 = vmatpush.bf16.msra.mxu0 %v759
    %1187 = vmatpush.bf16.msra.mxu0 %v756
    %1188 = vmatpush.bf16.msra.mxu0 %v753
    %1189 = vmatpush.bf16.msra.mxu0 %v750
    %1190 = vmatmul.bf16.gmra.mxu0 %v1168
    %v1191 = vpop.f32.mrf.mxu0
    %v1192 = vadd.f32 %v181, %v1191
    %v1193 = vpop.f32.mrf.mxu0
    %1194 = vdwg.mxu0
    %1195 = vmatpush.bf16.msra.mxu0 %v772
    %1196 = vmatpush.bf16.msra.mxu0 %v769
    %1197 = vmatpush.bf16.msra.mxu0 %v766
    %1198 = vmatpush.bf16.msra.mxu0 %v763
    %1199 = vmatpush.bf16.msra.mxu0 %v760
    %1200 = vmatpush.bf16.msra.mxu0 %v757
    %1201 = vmatpush.bf16.msra.mxu0 %v754
    %1202 = vmatpush.bf16.msra.mxu0 %v751
    %1203 = vmatmul.bf16.gmra.mxu0 %v1168
    %v1204 = vpop.f32.mrf.mxu0
    %v1205 = vadd.f32 %v182, %v1204
    %v1206 = vpop.f32.mrf.mxu0
    %1207 = vdwg.mxu0
    %v1208 = vpack.c.bf16 %v1081, %v1081
    %1209 = vmatpush.bf16.msra.mxu0 %v969
    %1210 = vmatpush.bf16.msra.mxu0 %v966
    %1211 = vmatpush.bf16.msra.mxu0 %v963
    %1212 = vmatpush.bf16.msra.mxu0 %v960
    %1213 = vmatpush.bf16.msra.mxu0 %v957
    %1214 = vmatpush.bf16.msra.mxu0 %v954
    %1215 = vmatpush.bf16.msra.mxu0 %v951
    %1216 = vmatpush.bf16.msra.mxu0 %v948
    %1217 = vmatmul.bf16.gmra.mxu0 %v1208
    %v1218 = vpop.f32.mrf.mxu0
    %v1219 = vadd.f32 %v196, %v1218
    %v1220 = vpop.f32.mrf.mxu0
    %1221 = vdwg.mxu0
    %1222 = vmatpush.bf16.msra.mxu0 %v970
    %1223 = vmatpush.bf16.msra.mxu0 %v967
    %1224 = vmatpush.bf16.msra.mxu0 %v964
    %1225 = vmatpush.bf16.msra.mxu0 %v961
    %1226 = vmatpush.bf16.msra.mxu0 %v958
    %1227 = vmatpush.bf16.msra.mxu0 %v955
    %1228 = vmatpush.bf16.msra.mxu0 %v952
    %1229 = vmatpush.bf16.msra.mxu0 %v949
    %1230 = vmatmul.bf16.gmra.mxu0 %v1208
    %v1231 = vpop.f32.mrf.mxu0
    %v1232 = vadd.f32 %v197, %v1231
    %v1233 = vpop.f32.mrf.mxu0
    %1234 = vdwg.mxu0
    %1235 = vmatpush.bf16.msra.mxu0 %v971
    %1236 = vmatpush.bf16.msra.mxu0 %v968
    %1237 = vmatpush.bf16.msra.mxu0 %v965
    %1238 = vmatpush.bf16.msra.mxu0 %v962
    %1239 = vmatpush.bf16.msra.mxu0 %v959
    %1240 = vmatpush.bf16.msra.mxu0 %v956
    %1241 = vmatpush.bf16.msra.mxu0 %v953
    %1242 = vmatpush.bf16.msra.mxu0 %v950
    %1243 = vmatmul.bf16.gmra.mxu0 %v1208
    %v1244 = vpop.f32.mrf.mxu0
    %v1245 = vadd.f32 %v198, %v1244
    %v1246 = vpop.f32.mrf.mxu0
    %1247 = vdwg.mxu0
    %v1248 = vadd.f32 %v1179, %v1219
    %v1249 = vadd.f32 %v1192, %v1232
    %v1250 = vxor.u32 %v1248, 2147483648
    %v1251 = vxor.u32 %v1249, 2147483648
    %v1252 = vmul.f32 %v1250, 1.442695
    %v1253 = vpow.pop %v1252
    %v1254 = vmul.f32 %v1251, 1.442695
    %v1255 = vpow.pop %v1254
    %v1256 = vadd.f32 %v1253, 1.0
    %v1257 = vadd.f32 %v1255, 1.0
    %v1258 = vrcp.pop %v1256
    %v1259 = vmul.f32 %v1256, %v1258
    %v1260 = vsub.f32 1.0, %v1259
    %v1261 = vmul.f32 %v1258, %v1260
    %v1262 = vadd.f32 %v1258, %v1261
    %vm1263 = vweird.f32 %v1256
    %vm1264 = vweird.f32 %v1258
    %vm1265 = vmor %vm1263, %vm1264
    %v1266 = vsel %vm1265, %v1258, %v1262
    %v1267 = vand.u32 2147483647, %v1256
    %vm1268 = vcmp.eq.f32.partialorder %v1267, 8.507059e+37
    %v1269 = vand.u32 %v1256, 2147483648
    %v1270 = vor.u32 1.1754944e-38, %v1269
    %v1271 = vsel %vm1268, %v1270, %v1266
    %v1272 = vmul.f32 1.0, %v1271
    %v1273 = vrcp.pop %v1257
    %v1274 = vmul.f32 %v1257, %v1273
    %v1275 = vsub.f32 1.0, %v1274
    %v1276 = vmul.f32 %v1273, %v1275
    %v1277 = vadd.f32 %v1273, %v1276
    %vm1278 = vweird.f32 %v1257
    %vm1279 = vweird.f32 %v1273
    %vm1280 = vmor %vm1278, %vm1279
    %v1281 = vsel %vm1280, %v1273, %v1277
    %v1282 = vand.u32 2147483647, %v1257
    %vm1283 = vcmp.eq.f32.partialorder %v1282, 8.507059e+37
    %v1284 = vand.u32 %v1257, 2147483648
    %v1285 = vor.u32 1.1754944e-38, %v1284
    %v1286 = vsel %vm1283, %v1285, %v1281
    %v1287 = vmul.f32 1.0, %v1286
    %v1288 = vmul.f32 %v1272, %v1245
    %v1289 = vadd.f32 %v1205, %v1288
    %v1290 = vtanh.pop %v1289
    %v1291 = vsub.f32 1.0, %v1287
    %v1292 = vmul.f32 %v1291, %v1290
    %v1293 = vmul.f32 %v1287, %v1081
    %v1294 = vadd.f32 %v1292, %v1293
    %1295 = vmatpush.bf16.msra.mxu0 %v523
    %1296 = vmatpush.bf16.msra.mxu0 %v520
    %1297 = vmatpush.bf16.msra.mxu0 %v517
    %1298 = vmatpush.bf16.msra.mxu0 %v514
    %1299 = vmatpush.bf16.msra.mxu0 %v511
    %1300 = vmatpush.bf16.msra.mxu0 %v508
    %1301 = vmatpush.bf16.msra.mxu0 %v505
    %1302 = vmatpush.bf16.msra.mxu0 %v502
    %1303 = vmatmul.bf16.gmra.mxu0 %v1168
    %v1304 = vpop.f32.mrf.mxu0
    %v1305 = vadd.f32 %v188, %v1304
    %v1306 = vpop.f32.mrf.mxu0
    %1307 = vdwg.mxu0
    %1308 = vmatpush.bf16.msra.mxu0 %v524
    %1309 = vmatpush.bf16.msra.mxu0 %v521
    %1310 = vmatpush.bf16.msra.mxu0 %v518
    %1311 = vmatpush.bf16.msra.mxu0 %v515
    %1312 = vmatpush.bf16.msra.mxu0 %v512
    %1313 = vmatpush.bf16.msra.mxu0 %v509
    %1314 = vmatpush.bf16.msra.mxu0 %v506
    %1315 = vmatpush.bf16.msra.mxu0 %v503
    %1316 = vmatmul.bf16.gmra.mxu0 %v1168
    %v1317 = vpop.f32.mrf.mxu0
    %v1318 = vadd.f32 %v189, %v1317
    %v1319 = vpop.f32.mrf.mxu0
    %1320 = vdwg.mxu0
    %1321 = vmatpush.bf16.msra.mxu0 %v525
    %1322 = vmatpush.bf16.msra.mxu0 %v522
    %1323 = vmatpush.bf16.msra.mxu0 %v519
    %1324 = vmatpush.bf16.msra.mxu0 %v516
    %1325 = vmatpush.bf16.msra.mxu0 %v513
    %1326 = vmatpush.bf16.msra.mxu0 %v510
    %1327 = vmatpush.bf16.msra.mxu0 %v507
    %1328 = vmatpush.bf16.msra.mxu0 %v504
    %1329 = vmatmul.bf16.gmra.mxu0 %v1168
    %v1330 = vpop.f32.mrf.mxu0
    %v1331 = vadd.f32 %v190, %v1330
    %v1332 = vpop.f32.mrf.mxu0
    %1333 = vdwg.mxu0
    %v1334 = vadd.f32 %v318, %v1305
    %v1335 = vadd.f32 %v347, %v1318
    %v1336 = vxor.u32 %v1334, 2147483648
    %v1337 = vxor.u32 %v1335, 2147483648
    %v1338 = vmul.f32 %v1336, 1.442695
    %v1339 = vpow.pop %v1338
    %v1340 = vmul.f32 %v1337, 1.442695
    %v1341 = vpow.pop %v1340
    %v1342 = vadd.f32 %v1339, 1.0
    %v1343 = vadd.f32 %v1341, 1.0
    %v1344 = vrcp.pop %v1342
    %v1345 = vmul.f32 %v1342, %v1344
    %v1346 = vsub.f32 1.0, %v1345
    %v1347 = vmul.f32 %v1344, %v1346
    %v1348 = vadd.f32 %v1344, %v1347
    %vm1349 = vweird.f32 %v1342
    %vm1350 = vweird.f32 %v1344
    %vm1351 = vmor %vm1349, %vm1350
    %v1352 = vsel %vm1351, %v1344, %v1348
    %v1353 = vand.u32 2147483647, %v1342
    %vm1354 = vcmp.eq.f32.partialorder %v1353, 8.507059e+37
    %v1355 = vand.u32 %v1342, 2147483648
    %v1356 = vor.u32 1.1754944e-38, %v1355
    %v1357 = vsel %vm1354, %v1356, %v1352
    %v1358 = vmul.f32 1.0, %v1357
    %v1359 = vrcp.pop %v1343
    %v1360 = vmul.f32 %v1343, %v1359
    %v1361 = vsub.f32 1.0, %v1360
    %v1362 = vmul.f32 %v1359, %v1361
    %v1363 = vadd.f32 %v1359, %v1362
    %vm1364 = vweird.f32 %v1343
    %vm1365 = vweird.f32 %v1359
    %vm1366 = vmor %vm1364, %vm1365
    %v1367 = vsel %vm1366, %v1359, %v1363
    %v1368 = vand.u32 2147483647, %v1343
    %vm1369 = vcmp.eq.f32.partialorder %v1368, 8.507059e+37
    %v1370 = vand.u32 %v1343, 2147483648
    %v1371 = vor.u32 1.1754944e-38, %v1370
    %v1372 = vsel %vm1369, %v1371, %v1367
    %v1373 = vmul.f32 1.0, %v1372
    %v1374 = vmul.f32 %v1358, %v1331
    %v1375 = vadd.f32 %v376, %v1374
    %v1376 = vtanh.pop %v1375
    %v1377 = vsub.f32 1.0, %v1373
    %v1378 = vmul.f32 %v1377, %v1376
    %v1379 = vmul.f32 %v1373, %v1167
    %v1380 = vadd.f32 %v1378, %v1379
    %v1381 = vpack.c.bf16 %v1380, %v1380
    %1382 = vmatpush.bf16.msra.mxu0 %v770
    %1383 = vmatpush.bf16.msra.mxu0 %v767
    %1384 = vmatpush.bf16.msra.mxu0 %v764
    %1385 = vmatpush.bf16.msra.mxu0 %v761
    %1386 = vmatpush.bf16.msra.mxu0 %v758
    %1387 = vmatpush.bf16.msra.mxu0 %v755
    %1388 = vmatpush.bf16.msra.mxu0 %v752
    %1389 = vmatpush.bf16.msra.mxu0 %v749
    %1390 = vmatmul.bf16.gmra.mxu0 %v1381
    %v1391 = vpop.f32.mrf.mxu0
    %v1392 = vadd.f32 %v180, %v1391
    %v1393 = vpop.f32.mrf.mxu0
    %1394 = vdwg.mxu0
    %1395 = vmatpush.bf16.msra.mxu0 %v771
    %1396 = vmatpush.bf16.msra.mxu0 %v768
    %1397 = vmatpush.bf16.msra.mxu0 %v765
    %1398 = vmatpush.bf16.msra.mxu0 %v762
    %1399 = vmatpush.bf16.msra.mxu0 %v759
    %1400 = vmatpush.bf16.msra.mxu0 %v756
    %1401 = vmatpush.bf16.msra.mxu0 %v753
    %1402 = vmatpush.bf16.msra.mxu0 %v750
    %1403 = vmatmul.bf16.gmra.mxu0 %v1381
    %v1404 = vpop.f32.mrf.mxu0
    %v1405 = vadd.f32 %v181, %v1404
    %v1406 = vpop.f32.mrf.mxu0
    %1407 = vdwg.mxu0
    %1408 = vmatpush.bf16.msra.mxu0 %v772
    %1409 = vmatpush.bf16.msra.mxu0 %v769
    %1410 = vmatpush.bf16.msra.mxu0 %v766
    %1411 = vmatpush.bf16.msra.mxu0 %v763
    %1412 = vmatpush.bf16.msra.mxu0 %v760
    %1413 = vmatpush.bf16.msra.mxu0 %v757
    %1414 = vmatpush.bf16.msra.mxu0 %v754
    %1415 = vmatpush.bf16.msra.mxu0 %v751
    %1416 = vmatmul.bf16.gmra.mxu0 %v1381
    %v1417 = vpop.f32.mrf.mxu0
    %v1418 = vadd.f32 %v182, %v1417
    %v1419 = vpop.f32.mrf.mxu0
    %1420 = vdwg.mxu0
    %v1421 = vpack.c.bf16 %v1294, %v1294
    %1422 = vmatpush.bf16.msra.mxu0 %v969
    %1423 = vmatpush.bf16.msra.mxu0 %v966
    %1424 = vmatpush.bf16.msra.mxu0 %v963
    %1425 = vmatpush.bf16.msra.mxu0 %v960
    %1426 = vmatpush.bf16.msra.mxu0 %v957
    %1427 = vmatpush.bf16.msra.mxu0 %v954
    %1428 = vmatpush.bf16.msra.mxu0 %v951
    %1429 = vmatpush.bf16.msra.mxu0 %v948
    %1430 = vmatmul.bf16.gmra.mxu0 %v1421
    %v1431 = vpop.f32.mrf.mxu0
    %v1432 = vadd.f32 %v196, %v1431
    %v1433 = vpop.f32.mrf.mxu0
    %1434 = vdwg.mxu0
    %1435 = vmatpush.bf16.msra.mxu0 %v970
    %1436 = vmatpush.bf16.msra.mxu0 %v967
    %1437 = vmatpush.bf16.msra.mxu0 %v964
    %1438 = vmatpush.bf16.msra.mxu0 %v961
    %1439 = vmatpush.bf16.msra.mxu0 %v958
    %1440 = vmatpush.bf16.msra.mxu0 %v955
    %1441 = vmatpush.bf16.msra.mxu0 %v952
    %1442 = vmatpush.bf16.msra.mxu0 %v949
    %1443 = vmatmul.bf16.gmra.mxu0 %v1421
    %v1444 = vpop.f32.mrf.mxu0
    %v1445 = vadd.f32 %v197, %v1444
    %v1446 = vpop.f32.mrf.mxu0
    %1447 = vdwg.mxu0
    %1448 = vmatpush.bf16.msra.mxu0 %v971
    %1449 = vmatpush.bf16.msra.mxu0 %v968
    %1450 = vmatpush.bf16.msra.mxu0 %v965
    %1451 = vmatpush.bf16.msra.mxu0 %v962
    %1452 = vmatpush.bf16.msra.mxu0 %v959
    %1453 = vmatpush.bf16.msra.mxu0 %v956
    %1454 = vmatpush.bf16.msra.mxu0 %v953
    %1455 = vmatpush.bf16.msra.mxu0 %v950
    %1456 = vmatmul.bf16.gmra.mxu0 %v1421
    %v1457 = vpop.f32.mrf.mxu0
    %v1458 = vadd.f32 %v198, %v1457
    %v1459 = vpop.f32.mrf.mxu0
    %1460 = vdwg.mxu0
    %v1461 = vadd.f32 %v1392, %v1432
    %v1462 = vadd.f32 %v1405, %v1445
    %v1463 = vxor.u32 %v1461, 2147483648
    %v1464 = vxor.u32 %v1462, 2147483648
    %v1465 = vmul.f32 %v1463, 1.442695
    %v1466 = vpow.pop %v1465
    %v1467 = vmul.f32 %v1464, 1.442695
    %v1468 = vpow.pop %v1467
    %v1469 = vadd.f32 %v1466, 1.0
    %v1470 = vadd.f32 %v1468, 1.0
    %v1471 = vrcp.pop %v1469
    %v1472 = vmul.f32 %v1469, %v1471
    %v1473 = vsub.f32 1.0, %v1472
    %v1474 = vmul.f32 %v1471, %v1473
    %v1475 = vadd.f32 %v1471, %v1474
    %vm1476 = vweird.f32 %v1469
    %vm1477 = vweird.f32 %v1471
    %vm1478 = vmor %vm1476, %vm1477
    %v1479 = vsel %vm1478, %v1471, %v1475
    %v1480 = vand.u32 2147483647, %v1469
    %vm1481 = vcmp.eq.f32.partialorder %v1480, 8.507059e+37
    %v1482 = vand.u32 %v1469, 2147483648
    %v1483 = vor.u32 1.1754944e-38, %v1482
    %v1484 = vsel %vm1481, %v1483, %v1479
    %v1485 = vmul.f32 1.0, %v1484
    %v1486 = vrcp.pop %v1470
    %v1487 = vmul.f32 %v1470, %v1486
    %v1488 = vsub.f32 1.0, %v1487
    %v1489 = vmul.f32 %v1486, %v1488
    %v1490 = vadd.f32 %v1486, %v1489
    %vm1491 = vweird.f32 %v1470
    %vm1492 = vweird.f32 %v1486
    %vm1493 = vmor %vm1491, %vm1492
    %v1494 = vsel %vm1493, %v1486, %v1490
    %v1495 = vand.u32 2147483647, %v1470
    %vm1496 = vcmp.eq.f32.partialorder %v1495, 8.507059e+37
    %v1497 = vand.u32 %v1470, 2147483648
    %v1498 = vor.u32 1.1754944e-38, %v1497
    %v1499 = vsel %vm1496, %v1498, %v1494
    %v1500 = vmul.f32 1.0, %v1499
    %v1501 = vmul.f32 %v1485, %v1458
    %v1502 = vadd.f32 %v1418, %v1501
    %v1503 = vtanh.pop %v1502
    %v1504 = vsub.f32 1.0, %v1500
    %v1505 = vmul.f32 %v1504, %v1503
    %v1506 = vmul.f32 %v1500, %v1294
    %v1507 = vadd.f32 %v1505, %v1506
    %1508 = vmatpush.bf16.msra.mxu0 %v523
    %1509 = vmatpush.bf16.msra.mxu0 %v520
    %1510 = vmatpush.bf16.msra.mxu0 %v517
    %1511 = vmatpush.bf16.msra.mxu0 %v514
    %1512 = vmatpush.bf16.msra.mxu0 %v511
    %1513 = vmatpush.bf16.msra.mxu0 %v508
    %1514 = vmatpush.bf16.msra.mxu0 %v505
    %1515 = vmatpush.bf16.msra.mxu0 %v502
    %1516 = vmatmul.bf16.gmra.mxu0 %v1381
    %v1517 = vpop.f32.mrf.mxu0
    %v1518 = vadd.f32 %v188, %v1517
    %v1519 = vpop.f32.mrf.mxu0
    %1520 = vdwg.mxu0
    %1521 = vmatpush.bf16.msra.mxu0 %v524
    %1522 = vmatpush.bf16.msra.mxu0 %v521
    %1523 = vmatpush.bf16.msra.mxu0 %v518
    %1524 = vmatpush.bf16.msra.mxu0 %v515
    %1525 = vmatpush.bf16.msra.mxu0 %v512
    %1526 = vmatpush.bf16.msra.mxu0 %v509
    %1527 = vmatpush.bf16.msra.mxu0 %v506
    %1528 = vmatpush.bf16.msra.mxu0 %v503
    %1529 = vmatmul.bf16.gmra.mxu0 %v1381
    %v1530 = vpop.f32.mrf.mxu0
    %v1531 = vadd.f32 %v189, %v1530
    %v1532 = vpop.f32.mrf.mxu0
    %1533 = vdwg.mxu0
    %1534 = vmatpush.bf16.msra.mxu0 %v525
    %1535 = vmatpush.bf16.msra.mxu0 %v522
    %1536 = vmatpush.bf16.msra.mxu0 %v519
    %1537 = vmatpush.bf16.msra.mxu0 %v516
    %1538 = vmatpush.bf16.msra.mxu0 %v513
    %1539 = vmatpush.bf16.msra.mxu0 %v510
    %1540 = vmatpush.bf16.msra.mxu0 %v507
    %1541 = vmatpush.bf16.msra.mxu0 %v504
    %1542 = vmatmul.bf16.gmra.mxu0 %v1381
    %v1543 = vpop.f32.mrf.mxu0
    %v1544 = vadd.f32 %v190, %v1543
    %v1545 = vpop.f32.mrf.mxu0
    %1546 = vdwg.mxu0
    %v1547 = vadd.f32 %v320, %v1518
    %v1548 = vadd.f32 %v349, %v1531
    %v1549 = vxor.u32 %v1547, 2147483648
    %v1550 = vxor.u32 %v1548, 2147483648
    %v1551 = vmul.f32 %v1549, 1.442695
    %v1552 = vpow.pop %v1551
    %v1553 = vmul.f32 %v1550, 1.442695
    %v1554 = vpow.pop %v1553
    %v1555 = vadd.f32 %v1552, 1.0
    %v1556 = vadd.f32 %v1554, 1.0
    %v1557 = vrcp.pop %v1555
    %v1558 = vmul.f32 %v1555, %v1557
    %v1559 = vsub.f32 1.0, %v1558
    %v1560 = vmul.f32 %v1557, %v1559
    %v1561 = vadd.f32 %v1557, %v1560
    %vm1562 = vweird.f32 %v1555
    %vm1563 = vweird.f32 %v1557
    %vm1564 = vmor %vm1562, %vm1563
    %v1565 = vsel %vm1564, %v1557, %v1561
    %v1566 = vand.u32 2147483647, %v1555
    %vm1567 = vcmp.eq.f32.partialorder %v1566, 8.507059e+37
    %v1568 = vand.u32 %v1555, 2147483648
    %v1569 = vor.u32 1.1754944e-38, %v1568
    %v1570 = vsel %vm1567, %v1569, %v1565
    %v1571 = vmul.f32 1.0, %v1570
    %v1572 = vrcp.pop %v1556
    %v1573 = vmul.f32 %v1556, %v1572
    %v1574 = vsub.f32 1.0, %v1573
    %v1575 = vmul.f32 %v1572, %v1574
    %v1576 = vadd.f32 %v1572, %v1575
    %vm1577 = vweird.f32 %v1556
    %vm1578 = vweird.f32 %v1572
    %vm1579 = vmor %vm1577, %vm1578
    %v1580 = vsel %vm1579, %v1572, %v1576
    %v1581 = vand.u32 2147483647, %v1556
    %vm1582 = vcmp.eq.f32.partialorder %v1581, 8.507059e+37
    %v1583 = vand.u32 %v1556, 2147483648
    %v1584 = vor.u32 1.1754944e-38, %v1583
    %v1585 = vsel %vm1582, %v1584, %v1580
    %v1586 = vmul.f32 1.0, %v1585
    %v1587 = vmul.f32 %v1571, %v1544
    %v1588 = vadd.f32 %v378, %v1587
    %v1589 = vtanh.pop %v1588
    %v1590 = vsub.f32 1.0, %v1586
    %v1591 = vmul.f32 %v1590, %v1589
    %v1592 = vmul.f32 %v1586, %v1380
    %v1593 = vadd.f32 %v1591, %v1592
    %v1594 = vpack.c.bf16 %v1593, %v1593
    %1595 = vmatpush.bf16.msra.mxu0 %v770
    %1596 = vmatpush.bf16.msra.mxu0 %v767
    %1597 = vmatpush.bf16.msra.mxu0 %v764
    %1598 = vmatpush.bf16.msra.mxu0 %v761
    %1599 = vmatpush.bf16.msra.mxu0 %v758
    %1600 = vmatpush.bf16.msra.mxu0 %v755
    %1601 = vmatpush.bf16.msra.mxu0 %v752
    %1602 = vmatpush.bf16.msra.mxu0 %v749
    %1603 = vmatmul.bf16.gmra.mxu0 %v1594
    %v1604 = vpop.f32.mrf.mxu0
    %v1605 = vadd.f32 %v180, %v1604
    %v1606 = vpop.f32.mrf.mxu0
    %1607 = vdwg.mxu0
    %1608 = vmatpush.bf16.msra.mxu0 %v771
    %1609 = vmatpush.bf16.msra.mxu0 %v768
    %1610 = vmatpush.bf16.msra.mxu0 %v765
    %1611 = vmatpush.bf16.msra.mxu0 %v762
    %1612 = vmatpush.bf16.msra.mxu0 %v759
    %1613 = vmatpush.bf16.msra.mxu0 %v756
    %1614 = vmatpush.bf16.msra.mxu0 %v753
    %1615 = vmatpush.bf16.msra.mxu0 %v750
    %1616 = vmatmul.bf16.gmra.mxu0 %v1594
    %v1617 = vpop.f32.mrf.mxu0
    %v1618 = vadd.f32 %v181, %v1617
    %v1619 = vpop.f32.mrf.mxu0
    %1620 = vdwg.mxu0
    %1621 = vmatpush.bf16.msra.mxu0 %v772
    %1622 = vmatpush.bf16.msra.mxu0 %v769
    %1623 = vmatpush.bf16.msra.mxu0 %v766
    %1624 = vmatpush.bf16.msra.mxu0 %v763
    %1625 = vmatpush.bf16.msra.mxu0 %v760
    %1626 = vmatpush.bf16.msra.mxu0 %v757
    %1627 = vmatpush.bf16.msra.mxu0 %v754
    %1628 = vmatpush.bf16.msra.mxu0 %v751
    %1629 = vmatmul.bf16.gmra.mxu0 %v1594
    %v1630 = vpop.f32.mrf.mxu0
    %v1631 = vadd.f32 %v182, %v1630
    %v1632 = vpop.f32.mrf.mxu0
    %1633 = vdwg.mxu0
    %v1634 = vpack.c.bf16 %v1507, %v1507
    %1635 = vmatpush.bf16.msra.mxu0 %v969
    %1636 = vmatpush.bf16.msra.mxu0 %v966
    %1637 = vmatpush.bf16.msra.mxu0 %v963
    %1638 = vmatpush.bf16.msra.mxu0 %v960
    %1639 = vmatpush.bf16.msra.mxu0 %v957
    %1640 = vmatpush.bf16.msra.mxu0 %v954
    %1641 = vmatpush.bf16.msra.mxu0 %v951
    %1642 = vmatpush.bf16.msra.mxu0 %v948
    %1643 = vmatmul.bf16.gmra.mxu0 %v1634
    %v1644 = vpop.f32.mrf.mxu0
    %v1645 = vadd.f32 %v196, %v1644
    %v1646 = vpop.f32.mrf.mxu0
    %1647 = vdwg.mxu0
    %1648 = vmatpush.bf16.msra.mxu0 %v970
    %1649 = vmatpush.bf16.msra.mxu0 %v967
    %1650 = vmatpush.bf16.msra.mxu0 %v964
    %1651 = vmatpush.bf16.msra.mxu0 %v961
    %1652 = vmatpush.bf16.msra.mxu0 %v958
    %1653 = vmatpush.bf16.msra.mxu0 %v955
    %1654 = vmatpush.bf16.msra.mxu0 %v952
    %1655 = vmatpush.bf16.msra.mxu0 %v949
    %1656 = vmatmul.bf16.gmra.mxu0 %v1634
    %v1657 = vpop.f32.mrf.mxu0
    %v1658 = vadd.f32 %v197, %v1657
    %v1659 = vpop.f32.mrf.mxu0
    %1660 = vdwg.mxu0
    %1661 = vmatpush.bf16.msra.mxu0 %v971
    %1662 = vmatpush.bf16.msra.mxu0 %v968
    %1663 = vmatpush.bf16.msra.mxu0 %v965
    %1664 = vmatpush.bf16.msra.mxu0 %v962
    %1665 = vmatpush.bf16.msra.mxu0 %v959
    %1666 = vmatpush.bf16.msra.mxu0 %v956
    %1667 = vmatpush.bf16.msra.mxu0 %v953
    %1668 = vmatpush.bf16.msra.mxu0 %v950
    %1669 = vmatmul.bf16.gmra.mxu0 %v1634
    %v1670 = vpop.f32.mrf.mxu0
    %v1671 = vadd.f32 %v198, %v1670
    %v1672 = vpop.f32.mrf.mxu0
    %1673 = vdwg.mxu0
    %v1674 = vadd.f32 %v1605, %v1645
    %v1675 = vadd.f32 %v1618, %v1658
    %v1676 = vxor.u32 %v1674, 2147483648
    %v1677 = vxor.u32 %v1675, 2147483648
    %v1678 = vmul.f32 %v1676, 1.442695
    %v1679 = vpow.pop %v1678
    %v1680 = vmul.f32 %v1677, 1.442695
    %v1681 = vpow.pop %v1680
    %v1682 = vadd.f32 %v1679, 1.0
    %v1683 = vadd.f32 %v1681, 1.0
    %v1684 = vrcp.pop %v1682
    %v1685 = vmul.f32 %v1682, %v1684
    %v1686 = vsub.f32 1.0, %v1685
    %v1687 = vmul.f32 %v1684, %v1686
    %v1688 = vadd.f32 %v1684, %v1687
    %vm1689 = vweird.f32 %v1682
    %vm1690 = vweird.f32 %v1684
    %vm1691 = vmor %vm1689, %vm1690
    %v1692 = vsel %vm1691, %v1684, %v1688
    %v1693 = vand.u32 2147483647, %v1682
    %vm1694 = vcmp.eq.f32.partialorder %v1693, 8.507059e+37
    %v1695 = vand.u32 %v1682, 2147483648
    %v1696 = vor.u32 1.1754944e-38, %v1695
    %v1697 = vsel %vm1694, %v1696, %v1692
    %v1698 = vmul.f32 1.0, %v1697
    %v1699 = vrcp.pop %v1683
    %v1700 = vmul.f32 %v1683, %v1699
    %v1701 = vsub.f32 1.0, %v1700
    %v1702 = vmul.f32 %v1699, %v1701
    %v1703 = vadd.f32 %v1699, %v1702
    %vm1704 = vweird.f32 %v1683
    %vm1705 = vweird.f32 %v1699
    %vm1706 = vmor %vm1704, %vm1705
    %v1707 = vsel %vm1706, %v1699, %v1703
    %v1708 = vand.u32 2147483647, %v1683
    %vm1709 = vcmp.eq.f32.partialorder %v1708, 8.507059e+37
    %v1710 = vand.u32 %v1683, 2147483648
    %v1711 = vor.u32 1.1754944e-38, %v1710
    %v1712 = vsel %vm1709, %v1711, %v1707
    %v1713 = vmul.f32 1.0, %v1712
    %v1714 = vmul.f32 %v1698, %v1671
    %v1715 = vadd.f32 %v1631, %v1714
    %v1716 = vtanh.pop %v1715
    %v1717 = vsub.f32 1.0, %v1713
    %v1718 = vmul.f32 %v1717, %v1716
    %v1719 = vmul.f32 %v1713, %v1507
    %v1720 = vadd.f32 %v1718, %v1719
    %1721 = vmatpush.bf16.msra.mxu0 %v523
    %1722 = vmatpush.bf16.msra.mxu0 %v520
    %1723 = vmatpush.bf16.msra.mxu0 %v517
    %1724 = vmatpush.bf16.msra.mxu0 %v514
    %1725 = vmatpush.bf16.msra.mxu0 %v511
    %1726 = vmatpush.bf16.msra.mxu0 %v508
    %1727 = vmatpush.bf16.msra.mxu0 %v505
    %1728 = vmatpush.bf16.msra.mxu0 %v502
    %1729 = vmatmul.bf16.gmra.mxu0 %v1594
    %v1730 = vpop.f32.mrf.mxu0
    %v1731 = vadd.f32 %v188, %v1730
    %v1732 = vpop.f32.mrf.mxu0
    %1733 = vdwg.mxu0
    %1734 = vmatpush.bf16.msra.mxu0 %v524
    %1735 = vmatpush.bf16.msra.mxu0 %v521
    %1736 = vmatpush.bf16.msra.mxu0 %v518
    %1737 = vmatpush.bf16.msra.mxu0 %v515
    %1738 = vmatpush.bf16.msra.mxu0 %v512
    %1739 = vmatpush.bf16.msra.mxu0 %v509
    %1740 = vmatpush.bf16.msra.mxu0 %v506
    %1741 = vmatpush.bf16.msra.mxu0 %v503
    %1742 = vmatmul.bf16.gmra.mxu0 %v1594
    %v1743 = vpop.f32.mrf.mxu0
    %v1744 = vadd.f32 %v189, %v1743
    %v1745 = vpop.f32.mrf.mxu0
    %1746 = vdwg.mxu0
    %1747 = vmatpush.bf16.msra.mxu0 %v525
    %1748 = vmatpush.bf16.msra.mxu0 %v522
    %1749 = vmatpush.bf16.msra.mxu0 %v519
    %1750 = vmatpush.bf16.msra.mxu0 %v516
    %1751 = vmatpush.bf16.msra.mxu0 %v513
    %1752 = vmatpush.bf16.msra.mxu0 %v510
    %1753 = vmatpush.bf16.msra.mxu0 %v507
    %1754 = vmatpush.bf16.msra.mxu0 %v504
    %1755 = vmatmul.bf16.gmra.mxu0 %v1594
    %v1756 = vpop.f32.mrf.mxu0
    %v1757 = vadd.f32 %v190, %v1756
    %v1758 = vpop.f32.mrf.mxu0
    %1759 = vdwg.mxu0
    %v1760 = vadd.f32 %v323, %v1731
    %v1761 = vadd.f32 %v352, %v1744
    %v1762 = vxor.u32 %v1760, 2147483648
    %v1763 = vxor.u32 %v1761, 2147483648
    %v1764 = vmul.f32 %v1762, 1.442695
    %v1765 = vpow.pop %v1764
    %v1766 = vmul.f32 %v1763, 1.442695
    %v1767 = vpow.pop %v1766
    %v1768 = vadd.f32 %v1765, 1.0
    %v1769 = vadd.f32 %v1767, 1.0
    %v1770 = vrcp.pop %v1768
    %v1771 = vmul.f32 %v1768, %v1770
    %v1772 = vsub.f32 1.0, %v1771
    %v1773 = vmul.f32 %v1770, %v1772
    %v1774 = vadd.f32 %v1770, %v1773
    %vm1775 = vweird.f32 %v1768
    %vm1776 = vweird.f32 %v1770
    %vm1777 = vmor %vm1775, %vm1776
    %v1778 = vsel %vm1777, %v1770, %v1774
    %v1779 = vand.u32 2147483647, %v1768
    %vm1780 = vcmp.eq.f32.partialorder %v1779, 8.507059e+37
    %v1781 = vand.u32 %v1768, 2147483648
    %v1782 = vor.u32 1.1754944e-38, %v1781
    %v1783 = vsel %vm1780, %v1782, %v1778
    %v1784 = vmul.f32 1.0, %v1783
    %v1785 = vrcp.pop %v1769
    %v1786 = vmul.f32 %v1769, %v1785
    %v1787 = vsub.f32 1.0, %v1786
    %v1788 = vmul.f32 %v1785, %v1787
    %v1789 = vadd.f32 %v1785, %v1788
    %vm1790 = vweird.f32 %v1769
    %vm1791 = vweird.f32 %v1785
    %vm1792 = vmor %vm1790, %vm1791
    %v1793 = vsel %vm1792, %v1785, %v1789
    %v1794 = vand.u32 2147483647, %v1769
    %vm1795 = vcmp.eq.f32.partialorder %v1794, 8.507059e+37
    %v1796 = vand.u32 %v1769, 2147483648
    %v1797 = vor.u32 1.1754944e-38, %v1796
    %v1798 = vsel %vm1795, %v1797, %v1793
    %v1799 = vmul.f32 1.0, %v1798
    %v1800 = vmul.f32 %v1784, %v1757
    %v1801 = vadd.f32 %v381, %v1800
    %v1802 = vtanh.pop %v1801
    %v1803 = vsub.f32 1.0, %v1799
    %v1804 = vmul.f32 %v1803, %v1802
    %v1805 = vmul.f32 %v1799, %v1593
    %v1806 = vadd.f32 %v1804, %v1805
    %v1807 = vpack.c.bf16 %v1806, %v1806
    %1808 = vmatpush.bf16.msra.mxu0 %v770
    %1809 = vmatpush.bf16.msra.mxu0 %v767
    %1810 = vmatpush.bf16.msra.mxu0 %v764
    %1811 = vmatpush.bf16.msra.mxu0 %v761
    %1812 = vmatpush.bf16.msra.mxu0 %v758
    %1813 = vmatpush.bf16.msra.mxu0 %v755
    %1814 = vmatpush.bf16.msra.mxu0 %v752
    %1815 = vmatpush.bf16.msra.mxu0 %v749
    %1816 = vmatmul.bf16.gmra.mxu0 %v1807
    %v1817 = vpop.f32.mrf.mxu0
    %v1818 = vadd.f32 %v180, %v1817
    %v1819 = vpop.f32.mrf.mxu0
    %1820 = vdwg.mxu0
    %1821 = vmatpush.bf16.msra.mxu0 %v771
    %1822 = vmatpush.bf16.msra.mxu0 %v768
    %1823 = vmatpush.bf16.msra.mxu0 %v765
    %1824 = vmatpush.bf16.msra.mxu0 %v762
    %1825 = vmatpush.bf16.msra.mxu0 %v759
    %1826 = vmatpush.bf16.msra.mxu0 %v756
    %1827 = vmatpush.bf16.msra.mxu0 %v753
    %1828 = vmatpush.bf16.msra.mxu0 %v750
    %1829 = vmatmul.bf16.gmra.mxu0 %v1807
    %v1830 = vpop.f32.mrf.mxu0
    %v1831 = vadd.f32 %v181, %v1830
    %v1832 = vpop.f32.mrf.mxu0
    %1833 = vdwg.mxu0
    %1834 = vmatpush.bf16.msra.mxu0 %v772
    %1835 = vmatpush.bf16.msra.mxu0 %v769
    %1836 = vmatpush.bf16.msra.mxu0 %v766
    %1837 = vmatpush.bf16.msra.mxu0 %v763
    %1838 = vmatpush.bf16.msra.mxu0 %v760
    %1839 = vmatpush.bf16.msra.mxu0 %v757
    %1840 = vmatpush.bf16.msra.mxu0 %v754
    %1841 = vmatpush.bf16.msra.mxu0 %v751
    %1842 = vmatmul.bf16.gmra.mxu0 %v1807
    %v1843 = vpop.f32.mrf.mxu0
    %v1844 = vadd.f32 %v182, %v1843
    %v1845 = vpop.f32.mrf.mxu0
    %1846 = vdwg.mxu0
    %v1847 = vpack.c.bf16 %v1720, %v1720
    %1848 = vmatpush.bf16.msra.mxu0 %v969
    %1849 = vmatpush.bf16.msra.mxu0 %v966
    %1850 = vmatpush.bf16.msra.mxu0 %v963
    %1851 = vmatpush.bf16.msra.mxu0 %v960
    %1852 = vmatpush.bf16.msra.mxu0 %v957
    %1853 = vmatpush.bf16.msra.mxu0 %v954
    %1854 = vmatpush.bf16.msra.mxu0 %v951
    %1855 = vmatpush.bf16.msra.mxu0 %v948
    %1856 = vmatmul.bf16.gmra.mxu0 %v1847
    %v1857 = vpop.f32.mrf.mxu0
    %v1858 = vadd.f32 %v196, %v1857
    %v1859 = vpop.f32.mrf.mxu0
    %1860 = vdwg.mxu0
    %1861 = vmatpush.bf16.msra.mxu0 %v970
    %1862 = vmatpush.bf16.msra.mxu0 %v967
    %1863 = vmatpush.bf16.msra.mxu0 %v964
    %1864 = vmatpush.bf16.msra.mxu0 %v961
    %1865 = vmatpush.bf16.msra.mxu0 %v958
    %1866 = vmatpush.bf16.msra.mxu0 %v955
    %1867 = vmatpush.bf16.msra.mxu0 %v952
    %1868 = vmatpush.bf16.msra.mxu0 %v949
    %1869 = vmatmul.bf16.gmra.mxu0 %v1847
    %v1870 = vpop.f32.mrf.mxu0
    %v1871 = vadd.f32 %v197, %v1870
    %v1872 = vpop.f32.mrf.mxu0
    %1873 = vdwg.mxu0
    %1874 = vmatpush.bf16.msra.mxu0 %v971
    %1875 = vmatpush.bf16.msra.mxu0 %v968
    %1876 = vmatpush.bf16.msra.mxu0 %v965
    %1877 = vmatpush.bf16.msra.mxu0 %v962
    %1878 = vmatpush.bf16.msra.mxu0 %v959
    %1879 = vmatpush.bf16.msra.mxu0 %v956
    %1880 = vmatpush.bf16.msra.mxu0 %v953
    %1881 = vmatpush.bf16.msra.mxu0 %v950
    %1882 = vmatmul.bf16.gmra.mxu0 %v1847
    %v1883 = vpop.f32.mrf.mxu0
    %v1884 = vadd.f32 %v198, %v1883
    %v1885 = vpop.f32.mrf.mxu0
    %1886 = vdwg.mxu0
    %v1887 = vadd.f32 %v1818, %v1858
    %v1888 = vadd.f32 %v1831, %v1871
    %v1889 = vxor.u32 %v1887, 2147483648
    %v1890 = vxor.u32 %v1888, 2147483648
    %v1891 = vmul.f32 %v1889, 1.442695
    %v1892 = vpow.pop %v1891
    %v1893 = vmul.f32 %v1890, 1.442695
    %v1894 = vpow.pop %v1893
    %v1895 = vadd.f32 %v1892, 1.0
    %v1896 = vadd.f32 %v1894, 1.0
    %v1897 = vrcp.pop %v1895
    %v1898 = vmul.f32 %v1895, %v1897
    %v1899 = vsub.f32 1.0, %v1898
    %v1900 = vmul.f32 %v1897, %v1899
    %v1901 = vadd.f32 %v1897, %v1900
    %vm1902 = vweird.f32 %v1895
    %vm1903 = vweird.f32 %v1897
    %vm1904 = vmor %vm1902, %vm1903
    %v1905 = vsel %vm1904, %v1897, %v1901
    %v1906 = vand.u32 2147483647, %v1895
    %vm1907 = vcmp.eq.f32.partialorder %v1906, 8.507059e+37
    %v1908 = vand.u32 %v1895, 2147483648
    %v1909 = vor.u32 1.1754944e-38, %v1908
    %v1910 = vsel %vm1907, %v1909, %v1905
    %v1911 = vmul.f32 1.0, %v1910
    %v1912 = vrcp.pop %v1896
    %v1913 = vmul.f32 %v1896, %v1912
    %v1914 = vsub.f32 1.0, %v1913
    %v1915 = vmul.f32 %v1912, %v1914
    %v1916 = vadd.f32 %v1912, %v1915
    %vm1917 = vweird.f32 %v1896
    %vm1918 = vweird.f32 %v1912
    %vm1919 = vmor %vm1917, %vm1918
    %v1920 = vsel %vm1919, %v1912, %v1916
    %v1921 = vand.u32 2147483647, %v1896
    %vm1922 = vcmp.eq.f32.partialorder %v1921, 8.507059e+37
    %v1923 = vand.u32 %v1896, 2147483648
    %v1924 = vor.u32 1.1754944e-38, %v1923
    %v1925 = vsel %vm1922, %v1924, %v1920
    %v1926 = vmul.f32 1.0, %v1925
    %v1927 = vmul.f32 %v1911, %v1884
    %v1928 = vadd.f32 %v1844, %v1927
    %v1929 = vtanh.pop %v1928
    %v1930 = vsub.f32 1.0, %v1926
    %v1931 = vmul.f32 %v1930, %v1929
    %v1932 = vmul.f32 %v1926, %v1720
    %v1933 = vadd.f32 %v1931, %v1932
    %1934 = vmatpush.bf16.msra.mxu0 %v523
    %1935 = vmatpush.bf16.msra.mxu0 %v520
    %1936 = vmatpush.bf16.msra.mxu0 %v517
    %1937 = vmatpush.bf16.msra.mxu0 %v514
    %1938 = vmatpush.bf16.msra.mxu0 %v511
    %1939 = vmatpush.bf16.msra.mxu0 %v508
    %1940 = vmatpush.bf16.msra.mxu0 %v505
    %1941 = vmatpush.bf16.msra.mxu0 %v502
    %1942 = vmatmul.bf16.gmra.mxu0 %v1807
    %v1943 = vpop.f32.mrf.mxu0
    %v1944 = vadd.f32 %v188, %v1943
    %v1945 = vpop.f32.mrf.mxu0
    %1946 = vdwg.mxu0
    %1947 = vmatpush.bf16.msra.mxu0 %v524
    %1948 = vmatpush.bf16.msra.mxu0 %v521
    %1949 = vmatpush.bf16.msra.mxu0 %v518
    %1950 = vmatpush.bf16.msra.mxu0 %v515
    %1951 = vmatpush.bf16.msra.mxu0 %v512
    %1952 = vmatpush.bf16.msra.mxu0 %v509
    %1953 = vmatpush.bf16.msra.mxu0 %v506
    %1954 = vmatpush.bf16.msra.mxu0 %v503
    %1955 = vmatmul.bf16.gmra.mxu0 %v1807
    %v1956 = vpop.f32.mrf.mxu0
    %v1957 = vadd.f32 %v189, %v1956
    %v1958 = vpop.f32.mrf.mxu0
    %1959 = vdwg.mxu0
    %1960 = vmatpush.bf16.msra.mxu0 %v525
    %1961 = vmatpush.bf16.msra.mxu0 %v522
    %1962 = vmatpush.bf16.msra.mxu0 %v519
    %1963 = vmatpush.bf16.msra.mxu0 %v516
    %1964 = vmatpush.bf16.msra.mxu0 %v513
    %1965 = vmatpush.bf16.msra.mxu0 %v510
    %1966 = vmatpush.bf16.msra.mxu0 %v507
    %1967 = vmatpush.bf16.msra.mxu0 %v504
    %1968 = vmatmul.bf16.gmra.mxu0 %v1807
    %v1969 = vpop.f32.mrf.mxu0
    %v1970 = vadd.f32 %v190, %v1969
    %v1971 = vpop.f32.mrf.mxu0
    %1972 = vdwg.mxu0
    %v1973 = vadd.f32 %v325, %v1944
    %v1974 = vadd.f32 %v354, %v1957
    %v1975 = vxor.u32 %v1973, 2147483648
    %v1976 = vxor.u32 %v1974, 2147483648
    %v1977 = vmul.f32 %v1975, 1.442695
    %v1978 = vpow.pop %v1977
    %v1979 = vmul.f32 %v1976, 1.442695
    %v1980 = vpow.pop %v1979
    %v1981 = vadd.f32 %v1978, 1.0
    %v1982 = vadd.f32 %v1980, 1.0
    %v1983 = vrcp.pop %v1981
    %v1984 = vmul.f32 %v1981, %v1983
    %v1985 = vsub.f32 1.0, %v1984
    %v1986 = vmul.f32 %v1983, %v1985
    %v1987 = vadd.f32 %v1983, %v1986
    %vm1988 = vweird.f32 %v1981
    %vm1989 = vweird.f32 %v1983
    %vm1990 = vmor %vm1988, %vm1989
    %v1991 = vsel %vm1990, %v1983, %v1987
    %v1992 = vand.u32 2147483647, %v1981
    %vm1993 = vcmp.eq.f32.partialorder %v1992, 8.507059e+37
    %v1994 = vand.u32 %v1981, 2147483648
    %v1995 = vor.u32 1.1754944e-38, %v1994
    %v1996 = vsel %vm1993, %v1995, %v1991
    %v1997 = vmul.f32 1.0, %v1996
    %v1998 = vrcp.pop %v1982
    %v1999 = vmul.f32 %v1982, %v1998
    %v2000 = vsub.f32 1.0, %v1999
    %v2001 = vmul.f32 %v1998, %v2000
    %v2002 = vadd.f32 %v1998, %v2001
    %vm2003 = vweird.f32 %v1982
    %vm2004 = vweird.f32 %v1998
    %vm2005 = vmor %vm2003, %vm2004
    %v2006 = vsel %vm2005, %v1998, %v2002
    %v2007 = vand.u32 2147483647, %v1982
    %vm2008 = vcmp.eq.f32.partialorder %v2007, 8.507059e+37
    %v2009 = vand.u32 %v1982, 2147483648
    %v2010 = vor.u32 1.1754944e-38, %v2009
    %v2011 = vsel %vm2008, %v2010, %v2006
    %v2012 = vmul.f32 1.0, %v2011
    %v2013 = vmul.f32 %v1997, %v1970
    %v2014 = vadd.f32 %v383, %v2013
    %v2015 = vtanh.pop %v2014
    %v2016 = vsub.f32 1.0, %v2012
    %v2017 = vmul.f32 %v2016, %v2015
    %v2018 = vmul.f32 %v2012, %v1806
    %v2019 = vadd.f32 %v2017, %v2018
    %v2020 = vpack.c.bf16 %v2019, %v2019
    %2021 = vmatpush.bf16.msra.mxu0 %v770
    %2022 = vmatpush.bf16.msra.mxu0 %v767
    %2023 = vmatpush.bf16.msra.mxu0 %v764
    %2024 = vmatpush.bf16.msra.mxu0 %v761
    %2025 = vmatpush.bf16.msra.mxu0 %v758
    %2026 = vmatpush.bf16.msra.mxu0 %v755
    %2027 = vmatpush.bf16.msra.mxu0 %v752
    %2028 = vmatpush.bf16.msra.mxu0 %v749
    %2029 = vmatmul.bf16.gmra.mxu0 %v2020
    %v2030 = vpop.f32.mrf.mxu0
    %v2031 = vadd.f32 %v180, %v2030
    %v2032 = vpop.f32.mrf.mxu0
    %2033 = vdwg.mxu0
    %2034 = vmatpush.bf16.msra.mxu0 %v771
    %2035 = vmatpush.bf16.msra.mxu0 %v768
    %2036 = vmatpush.bf16.msra.mxu0 %v765
    %2037 = vmatpush.bf16.msra.mxu0 %v762
    %2038 = vmatpush.bf16.msra.mxu0 %v759
    %2039 = vmatpush.bf16.msra.mxu0 %v756
    %2040 = vmatpush.bf16.msra.mxu0 %v753
    %2041 = vmatpush.bf16.msra.mxu0 %v750
    %2042 = vmatmul.bf16.gmra.mxu0 %v2020
    %v2043 = vpop.f32.mrf.mxu0
    %v2044 = vadd.f32 %v181, %v2043
    %v2045 = vpop.f32.mrf.mxu0
    %2046 = vdwg.mxu0
    %2047 = vmatpush.bf16.msra.mxu0 %v772
    %2048 = vmatpush.bf16.msra.mxu0 %v769
    %2049 = vmatpush.bf16.msra.mxu0 %v766
    %2050 = vmatpush.bf16.msra.mxu0 %v763
    %2051 = vmatpush.bf16.msra.mxu0 %v760
    %2052 = vmatpush.bf16.msra.mxu0 %v757
    %2053 = vmatpush.bf16.msra.mxu0 %v754
    %2054 = vmatpush.bf16.msra.mxu0 %v751
    %2055 = vmatmul.bf16.gmra.mxu0 %v2020
    %v2056 = vpop.f32.mrf.mxu0
    %v2057 = vadd.f32 %v182, %v2056
    %v2058 = vpop.f32.mrf.mxu0
    %2059 = vdwg.mxu0
    %v2060 = vpack.c.bf16 %v1933, %v1933
    %2061 = vmatpush.bf16.msra.mxu0 %v969
    %2062 = vmatpush.bf16.msra.mxu0 %v966
    %2063 = vmatpush.bf16.msra.mxu0 %v963
    %2064 = vmatpush.bf16.msra.mxu0 %v960
    %2065 = vmatpush.bf16.msra.mxu0 %v957
    %2066 = vmatpush.bf16.msra.mxu0 %v954
    %2067 = vmatpush.bf16.msra.mxu0 %v951
    %2068 = vmatpush.bf16.msra.mxu0 %v948
    %2069 = vmatmul.bf16.gmra.mxu0 %v2060
    %v2070 = vpop.f32.mrf.mxu0
    %v2071 = vadd.f32 %v196, %v2070
    %v2072 = vpop.f32.mrf.mxu0
    %2073 = vdwg.mxu0
    %2074 = vmatpush.bf16.msra.mxu0 %v970
    %2075 = vmatpush.bf16.msra.mxu0 %v967
    %2076 = vmatpush.bf16.msra.mxu0 %v964
    %2077 = vmatpush.bf16.msra.mxu0 %v961
    %2078 = vmatpush.bf16.msra.mxu0 %v958
    %2079 = vmatpush.bf16.msra.mxu0 %v955
    %2080 = vmatpush.bf16.msra.mxu0 %v952
    %2081 = vmatpush.bf16.msra.mxu0 %v949
    %2082 = vmatmul.bf16.gmra.mxu0 %v2060
    %v2083 = vpop.f32.mrf.mxu0
    %v2084 = vadd.f32 %v197, %v2083
    %v2085 = vpop.f32.mrf.mxu0
    %2086 = vdwg.mxu0
    %2087 = vmatpush.bf16.msra.mxu0 %v971
    %2088 = vmatpush.bf16.msra.mxu0 %v968
    %2089 = vmatpush.bf16.msra.mxu0 %v965
    %2090 = vmatpush.bf16.msra.mxu0 %v962
    %2091 = vmatpush.bf16.msra.mxu0 %v959
    %2092 = vmatpush.bf16.msra.mxu0 %v956
    %2093 = vmatpush.bf16.msra.mxu0 %v953
    %2094 = vmatpush.bf16.msra.mxu0 %v950
    %2095 = vmatmul.bf16.gmra.mxu0 %v2060
    %v2096 = vpop.f32.mrf.mxu0
    %v2097 = vadd.f32 %v198, %v2096
    %v2098 = vpop.f32.mrf.mxu0
    %2099 = vdwg.mxu0
    %v2100 = vadd.f32 %v2031, %v2071
    %v2101 = vadd.f32 %v2044, %v2084
    %v2102 = vxor.u32 %v2100, 2147483648
    %v2103 = vxor.u32 %v2101, 2147483648
    %v2104 = vmul.f32 %v2102, 1.442695
    %v2105 = vpow.pop %v2104
    %v2106 = vmul.f32 %v2103, 1.442695
    %v2107 = vpow.pop %v2106
    %v2108 = vadd.f32 %v2105, 1.0
    %v2109 = vadd.f32 %v2107, 1.0
    %v2110 = vrcp.pop %v2108
    %v2111 = vmul.f32 %v2108, %v2110
    %v2112 = vsub.f32 1.0, %v2111
    %v2113 = vmul.f32 %v2110, %v2112
    %v2114 = vadd.f32 %v2110, %v2113
    %vm2115 = vweird.f32 %v2108
    %vm2116 = vweird.f32 %v2110
    %vm2117 = vmor %vm2115, %vm2116
    %v2118 = vsel %vm2117, %v2110, %v2114
    %v2119 = vand.u32 2147483647, %v2108
    %vm2120 = vcmp.eq.f32.partialorder %v2119, 8.507059e+37
    %v2121 = vand.u32 %v2108, 2147483648
    %v2122 = vor.u32 1.1754944e-38, %v2121
    %v2123 = vsel %vm2120, %v2122, %v2118
    %v2124 = vmul.f32 1.0, %v2123
    %v2125 = vrcp.pop %v2109
    %v2126 = vmul.f32 %v2109, %v2125
    %v2127 = vsub.f32 1.0, %v2126
    %v2128 = vmul.f32 %v2125, %v2127
    %v2129 = vadd.f32 %v2125, %v2128
    %vm2130 = vweird.f32 %v2109
    %vm2131 = vweird.f32 %v2125
    %vm2132 = vmor %vm2130, %vm2131
    %v2133 = vsel %vm2132, %v2125, %v2129
    %v2134 = vand.u32 2147483647, %v2109
    %vm2135 = vcmp.eq.f32.partialorder %v2134, 8.507059e+37
    %v2136 = vand.u32 %v2109, 2147483648
    %v2137 = vor.u32 1.1754944e-38, %v2136
    %v2138 = vsel %vm2135, %v2137, %v2133
    %v2139 = vmul.f32 1.0, %v2138
    %v2140 = vmul.f32 %v2124, %v2097
    %v2141 = vadd.f32 %v2057, %v2140
    %v2142 = vtanh.pop %v2141
    %v2143 = vsub.f32 1.0, %v2139
    %v2144 = vmul.f32 %v2143, %v2142
    %v2145 = vmul.f32 %v2139, %v1933
    %v2146 = vadd.f32 %v2144, %v2145
    %2147 = vmatpush.bf16.msra.mxu0 %v523
    %2148 = vmatpush.bf16.msra.mxu0 %v520
    %2149 = vmatpush.bf16.msra.mxu0 %v517
    %2150 = vmatpush.bf16.msra.mxu0 %v514
    %2151 = vmatpush.bf16.msra.mxu0 %v511
    %2152 = vmatpush.bf16.msra.mxu0 %v508
    %2153 = vmatpush.bf16.msra.mxu0 %v505
    %2154 = vmatpush.bf16.msra.mxu0 %v502
    %2155 = vmatmul.bf16.gmra.mxu0 %v2020
    %v2156 = vpop.f32.mrf.mxu0
    %v2157 = vadd.f32 %v188, %v2156
    %v2158 = vpop.f32.mrf.mxu0
    %2159 = vdwg.mxu0
    %2160 = vmatpush.bf16.msra.mxu0 %v524
    %2161 = vmatpush.bf16.msra.mxu0 %v521
    %2162 = vmatpush.bf16.msra.mxu0 %v518
    %2163 = vmatpush.bf16.msra.mxu0 %v515
    %2164 = vmatpush.bf16.msra.mxu0 %v512
    %2165 = vmatpush.bf16.msra.mxu0 %v509
    %2166 = vmatpush.bf16.msra.mxu0 %v506
    %2167 = vmatpush.bf16.msra.mxu0 %v503
    %2168 = vmatmul.bf16.gmra.mxu0 %v2020
    %v2169 = vpop.f32.mrf.mxu0
    %v2170 = vadd.f32 %v189, %v2169
    %v2171 = vpop.f32.mrf.mxu0
    %2172 = vdwg.mxu0
    %2173 = vmatpush.bf16.msra.mxu0 %v525
    %2174 = vmatpush.bf16.msra.mxu0 %v522
    %2175 = vmatpush.bf16.msra.mxu0 %v519
    %2176 = vmatpush.bf16.msra.mxu0 %v516
    %2177 = vmatpush.bf16.msra.mxu0 %v513
    %2178 = vmatpush.bf16.msra.mxu0 %v510
    %2179 = vmatpush.bf16.msra.mxu0 %v507
    %2180 = vmatpush.bf16.msra.mxu0 %v504
    %2181 = vmatmul.bf16.gmra.mxu0 %v2020
    %v2182 = vpop.f32.mrf.mxu0
    %v2183 = vadd.f32 %v190, %v2182
    %v2184 = vpop.f32.mrf.mxu0
    %2185 = vdwg.mxu0
    %v2186 = vadd.f32 %v328, %v2157
    %v2187 = vadd.f32 %v357, %v2170
    %v2188 = vxor.u32 %v2186, 2147483648
    %v2189 = vxor.u32 %v2187, 2147483648
    %v2190 = vmul.f32 %v2188, 1.442695
    %v2191 = vpow.pop %v2190
    %v2192 = vmul.f32 %v2189, 1.442695
    %v2193 = vpow.pop %v2192
    %v2194 = vadd.f32 %v2191, 1.0
    %v2195 = vadd.f32 %v2193, 1.0
    %v2196 = vrcp.pop %v2194
    %v2197 = vmul.f32 %v2194, %v2196
    %v2198 = vsub.f32 1.0, %v2197
    %v2199 = vmul.f32 %v2196, %v2198
    %v2200 = vadd.f32 %v2196, %v2199
    %vm2201 = vweird.f32 %v2194
    %vm2202 = vweird.f32 %v2196
    %vm2203 = vmor %vm2201, %vm2202
    %v2204 = vsel %vm2203, %v2196, %v2200
    %v2205 = vand.u32 2147483647, %v2194
    %vm2206 = vcmp.eq.f32.partialorder %v2205, 8.507059e+37
    %v2207 = vand.u32 %v2194, 2147483648
    %v2208 = vor.u32 1.1754944e-38, %v2207
    %v2209 = vsel %vm2206, %v2208, %v2204
    %v2210 = vmul.f32 1.0, %v2209
    %v2211 = vrcp.pop %v2195
    %v2212 = vmul.f32 %v2195, %v2211
    %v2213 = vsub.f32 1.0, %v2212
    %v2214 = vmul.f32 %v2211, %v2213
    %v2215 = vadd.f32 %v2211, %v2214
    %vm2216 = vweird.f32 %v2195
    %vm2217 = vweird.f32 %v2211
    %vm2218 = vmor %vm2216, %vm2217
    %v2219 = vsel %vm2218, %v2211, %v2215
    %v2220 = vand.u32 2147483647, %v2195
    %vm2221 = vcmp.eq.f32.partialorder %v2220, 8.507059e+37
    %v2222 = vand.u32 %v2195, 2147483648
    %v2223 = vor.u32 1.1754944e-38, %v2222
    %v2224 = vsel %vm2221, %v2223, %v2219
    %v2225 = vmul.f32 1.0, %v2224
    %v2226 = vmul.f32 %v2210, %v2183
    %v2227 = vadd.f32 %v386, %v2226
    %v2228 = vtanh.pop %v2227
    %v2229 = vsub.f32 1.0, %v2225
    %v2230 = vmul.f32 %v2229, %v2228
    %v2231 = vmul.f32 %v2225, %v2019
    %v2232 = vadd.f32 %v2230, %v2231
    %v2233 = vpack.c.bf16 %v2232, %v2232
    %2234 = vmatpush.bf16.msra.mxu0 %v770
    %2235 = vmatpush.bf16.msra.mxu0 %v767
    %2236 = vmatpush.bf16.msra.mxu0 %v764
    %2237 = vmatpush.bf16.msra.mxu0 %v761
    %2238 = vmatpush.bf16.msra.mxu0 %v758
    %2239 = vmatpush.bf16.msra.mxu0 %v755
    %2240 = vmatpush.bf16.msra.mxu0 %v752
    %2241 = vmatpush.bf16.msra.mxu0 %v749
    %2242 = vmatmul.bf16.gmra.mxu0 %v2233
    %v2243 = vpop.f32.mrf.mxu0
    %v2244 = vadd.f32 %v180, %v2243
    %v2245 = vpop.f32.mrf.mxu0
    %2246 = vdwg.mxu0
    %2247 = vmatpush.bf16.msra.mxu0 %v771
    %2248 = vmatpush.bf16.msra.mxu0 %v768
    %2249 = vmatpush.bf16.msra.mxu0 %v765
    %2250 = vmatpush.bf16.msra.mxu0 %v762
    %2251 = vmatpush.bf16.msra.mxu0 %v759
    %2252 = vmatpush.bf16.msra.mxu0 %v756
    %2253 = vmatpush.bf16.msra.mxu0 %v753
    %2254 = vmatpush.bf16.msra.mxu0 %v750
    %2255 = vmatmul.bf16.gmra.mxu0 %v2233
    %v2256 = vpop.f32.mrf.mxu0
    %v2257 = vadd.f32 %v181, %v2256
    %v2258 = vpop.f32.mrf.mxu0
    %2259 = vdwg.mxu0
    %2260 = vmatpush.bf16.msra.mxu0 %v772
    %2261 = vmatpush.bf16.msra.mxu0 %v769
    %2262 = vmatpush.bf16.msra.mxu0 %v766
    %2263 = vmatpush.bf16.msra.mxu0 %v763
    %2264 = vmatpush.bf16.msra.mxu0 %v760
    %2265 = vmatpush.bf16.msra.mxu0 %v757
    %2266 = vmatpush.bf16.msra.mxu0 %v754
    %2267 = vmatpush.bf16.msra.mxu0 %v751
    %2268 = vmatmul.bf16.gmra.mxu0 %v2233
    %v2269 = vpop.f32.mrf.mxu0
    %v2270 = vadd.f32 %v182, %v2269
    %v2271 = vpop.f32.mrf.mxu0
    %2272 = vdwg.mxu0
    %v2273 = vpack.c.bf16 %v2146, %v2146
    %2274 = vmatpush.bf16.msra.mxu0 %v969
    %2275 = vmatpush.bf16.msra.mxu0 %v966
    %2276 = vmatpush.bf16.msra.mxu0 %v963
    %2277 = vmatpush.bf16.msra.mxu0 %v960
    %2278 = vmatpush.bf16.msra.mxu0 %v957
    %2279 = vmatpush.bf16.msra.mxu0 %v954
    %2280 = vmatpush.bf16.msra.mxu0 %v951
    %2281 = vmatpush.bf16.msra.mxu0 %v948
    %2282 = vmatmul.bf16.gmra.mxu0 %v2273
    %v2283 = vpop.f32.mrf.mxu0
    %v2284 = vadd.f32 %v196, %v2283
    %v2285 = vpop.f32.mrf.mxu0
    %2286 = vdwg.mxu0
    %2287 = vmatpush.bf16.msra.mxu0 %v970
    %2288 = vmatpush.bf16.msra.mxu0 %v967
    %2289 = vmatpush.bf16.msra.mxu0 %v964
    %2290 = vmatpush.bf16.msra.mxu0 %v961
    %2291 = vmatpush.bf16.msra.mxu0 %v958
    %2292 = vmatpush.bf16.msra.mxu0 %v955
    %2293 = vmatpush.bf16.msra.mxu0 %v952
    %2294 = vmatpush.bf16.msra.mxu0 %v949
    %2295 = vmatmul.bf16.gmra.mxu0 %v2273
    %v2296 = vpop.f32.mrf.mxu0
    %v2297 = vadd.f32 %v197, %v2296
    %v2298 = vpop.f32.mrf.mxu0
    %2299 = vdwg.mxu0
    %2300 = vmatpush.bf16.msra.mxu0 %v971
    %2301 = vmatpush.bf16.msra.mxu0 %v968
    %2302 = vmatpush.bf16.msra.mxu0 %v965
    %2303 = vmatpush.bf16.msra.mxu0 %v962
    %2304 = vmatpush.bf16.msra.mxu0 %v959
    %2305 = vmatpush.bf16.msra.mxu0 %v956
    %2306 = vmatpush.bf16.msra.mxu0 %v953
    %2307 = vmatpush.bf16.msra.mxu0 %v950
    %2308 = vmatmul.bf16.gmra.mxu0 %v2273
    %v2309 = vpop.f32.mrf.mxu0
    %v2310 = vadd.f32 %v198, %v2309
    %v2311 = vpop.f32.mrf.mxu0
    %2312 = vdwg.mxu0
    %v2313 = vadd.f32 %v2244, %v2284
    %v2314 = vadd.f32 %v2257, %v2297
    %v2315 = vxor.u32 %v2313, 2147483648
    %v2316 = vxor.u32 %v2314, 2147483648
    %v2317 = vmul.f32 %v2315, 1.442695
    %v2318 = vpow.pop %v2317
    %v2319 = vmul.f32 %v2316, 1.442695
    %v2320 = vpow.pop %v2319
    %v2321 = vadd.f32 %v2318, 1.0
    %v2322 = vadd.f32 %v2320, 1.0
    %v2323 = vrcp.pop %v2321
    %v2324 = vmul.f32 %v2321, %v2323
    %v2325 = vsub.f32 1.0, %v2324
    %v2326 = vmul.f32 %v2323, %v2325
    %v2327 = vadd.f32 %v2323, %v2326
    %vm2328 = vweird.f32 %v2321
    %vm2329 = vweird.f32 %v2323
    %vm2330 = vmor %vm2328, %vm2329
    %v2331 = vsel %vm2330, %v2323, %v2327
    %v2332 = vand.u32 2147483647, %v2321
    %vm2333 = vcmp.eq.f32.partialorder %v2332, 8.507059e+37
    %v2334 = vand.u32 %v2321, 2147483648
    %v2335 = vor.u32 1.1754944e-38, %v2334
    %v2336 = vsel %vm2333, %v2335, %v2331
    %v2337 = vmul.f32 1.0, %v2336
    %v2338 = vrcp.pop %v2322
    %v2339 = vmul.f32 %v2322, %v2338
    %v2340 = vsub.f32 1.0, %v2339
    %v2341 = vmul.f32 %v2338, %v2340
    %v2342 = vadd.f32 %v2338, %v2341
    %vm2343 = vweird.f32 %v2322
    %vm2344 = vweird.f32 %v2338
    %vm2345 = vmor %vm2343, %vm2344
    %v2346 = vsel %vm2345, %v2338, %v2342
    %v2347 = vand.u32 2147483647, %v2322
    %vm2348 = vcmp.eq.f32.partialorder %v2347, 8.507059e+37
    %v2349 = vand.u32 %v2322, 2147483648
    %v2350 = vor.u32 1.1754944e-38, %v2349
    %v2351 = vsel %vm2348, %v2350, %v2346
    %v2352 = vmul.f32 1.0, %v2351
    %v2353 = vmul.f32 %v2337, %v2310
    %v2354 = vadd.f32 %v2270, %v2353
    %v2355 = vtanh.pop %v2354
    %v2356 = vsub.f32 1.0, %v2352
    %v2357 = vmul.f32 %v2356, %v2355
    %v2358 = vmul.f32 %v2352, %v2146
    %v2359 = vadd.f32 %v2357, %v2358
    %2360 = vmatpush.bf16.msra.mxu0 %v523
    %2361 = vmatpush.bf16.msra.mxu0 %v520
    %2362 = vmatpush.bf16.msra.mxu0 %v517
    %2363 = vmatpush.bf16.msra.mxu0 %v514
    %2364 = vmatpush.bf16.msra.mxu0 %v511
    %2365 = vmatpush.bf16.msra.mxu0 %v508
    %2366 = vmatpush.bf16.msra.mxu0 %v505
    %2367 = vmatpush.bf16.msra.mxu0 %v502
    %2368 = vmatmul.bf16.gmra.mxu0 %v2233
    %v2369 = vpop.f32.mrf.mxu0
    %v2370 = vadd.f32 %v188, %v2369
    %v2371 = vpop.f32.mrf.mxu0
    %2372 = vdwg.mxu0
    %2373 = vmatpush.bf16.msra.mxu0 %v524
    %2374 = vmatpush.bf16.msra.mxu0 %v521
    %2375 = vmatpush.bf16.msra.mxu0 %v518
    %2376 = vmatpush.bf16.msra.mxu0 %v515
    %2377 = vmatpush.bf16.msra.mxu0 %v512
    %2378 = vmatpush.bf16.msra.mxu0 %v509
    %2379 = vmatpush.bf16.msra.mxu0 %v506
    %2380 = vmatpush.bf16.msra.mxu0 %v503
    %2381 = vmatmul.bf16.gmra.mxu0 %v2233
    %v2382 = vpop.f32.mrf.mxu0
    %v2383 = vadd.f32 %v189, %v2382
    %v2384 = vpop.f32.mrf.mxu0
    %2385 = vdwg.mxu0
    %2386 = vmatpush.bf16.msra.mxu0 %v525
    %2387 = vmatpush.bf16.msra.mxu0 %v522
    %2388 = vmatpush.bf16.msra.mxu0 %v519
    %2389 = vmatpush.bf16.msra.mxu0 %v516
    %2390 = vmatpush.bf16.msra.mxu0 %v513
    %2391 = vmatpush.bf16.msra.mxu0 %v510
    %2392 = vmatpush.bf16.msra.mxu0 %v507
    %2393 = vmatpush.bf16.msra.mxu0 %v504
    %2394 = vmatmul.bf16.gmra.mxu0 %v2233
    %v2395 = vpop.f32.mrf.mxu0
    %v2396 = vadd.f32 %v190, %v2395
    %v2397 = vpop.f32.mrf.mxu0
    %2398 = vdwg.mxu0
    %v2399 = vadd.f32 %v330, %v2370
    %v2400 = vadd.f32 %v359, %v2383
    %v2401 = vxor.u32 %v2399, 2147483648
    %v2402 = vxor.u32 %v2400, 2147483648
    %v2403 = vmul.f32 %v2401, 1.442695
    %v2404 = vpow.pop %v2403
    %v2405 = vmul.f32 %v2402, 1.442695
    %v2406 = vpow.pop %v2405
    %v2407 = vadd.f32 %v2404, 1.0
    %v2408 = vadd.f32 %v2406, 1.0
    %v2409 = vrcp.pop %v2407
    %v2410 = vmul.f32 %v2407, %v2409
    %v2411 = vsub.f32 1.0, %v2410
    %v2412 = vmul.f32 %v2409, %v2411
    %v2413 = vadd.f32 %v2409, %v2412
    %vm2414 = vweird.f32 %v2407
    %vm2415 = vweird.f32 %v2409
    %vm2416 = vmor %vm2414, %vm2415
    %v2417 = vsel %vm2416, %v2409, %v2413
    %v2418 = vand.u32 2147483647, %v2407
    %vm2419 = vcmp.eq.f32.partialorder %v2418, 8.507059e+37
    %v2420 = vand.u32 %v2407, 2147483648
    %v2421 = vor.u32 1.1754944e-38, %v2420
    %v2422 = vsel %vm2419, %v2421, %v2417
    %v2423 = vmul.f32 1.0, %v2422
    %v2424 = vrcp.pop %v2408
    %v2425 = vmul.f32 %v2408, %v2424
    %v2426 = vsub.f32 1.0, %v2425
    %v2427 = vmul.f32 %v2424, %v2426
    %v2428 = vadd.f32 %v2424, %v2427
    %vm2429 = vweird.f32 %v2408
    %vm2430 = vweird.f32 %v2424
    %vm2431 = vmor %vm2429, %vm2430
    %v2432 = vsel %vm2431, %v2424, %v2428
    %v2433 = vand.u32 2147483647, %v2408
    %vm2434 = vcmp.eq.f32.partialorder %v2433, 8.507059e+37
    %v2435 = vand.u32 %v2408, 2147483648
    %v2436 = vor.u32 1.1754944e-38, %v2435
    %v2437 = vsel %vm2434, %v2436, %v2432
    %v2438 = vmul.f32 1.0, %v2437
    %v2439 = vmul.f32 %v2423, %v2396
    %v2440 = vadd.f32 %v388, %v2439
    %v2441 = vtanh.pop %v2440
    %v2442 = vsub.f32 1.0, %v2438
    %v2443 = vmul.f32 %v2442, %v2441
    %v2444 = vmul.f32 %v2438, %v2232
    %v2445 = vadd.f32 %v2443, %v2444
    %v2446 = vpack.c.bf16 %v2445, %v2445
    %2447 = vmatpush.bf16.msra.mxu0 %v770
    %2448 = vmatpush.bf16.msra.mxu0 %v767
    %2449 = vmatpush.bf16.msra.mxu0 %v764
    %2450 = vmatpush.bf16.msra.mxu0 %v761
    %2451 = vmatpush.bf16.msra.mxu0 %v758
    %2452 = vmatpush.bf16.msra.mxu0 %v755
    %2453 = vmatpush.bf16.msra.mxu0 %v752
    %2454 = vmatpush.bf16.msra.mxu0 %v749
    %2455 = vmatmul.bf16.gmra.mxu0 %v2446
    %v2456 = vpop.f32.mrf.mxu0
    %v2457 = vadd.f32 %v180, %v2456
    %v2458 = vpop.f32.mrf.mxu0
    %2459 = vdwg.mxu0
    %2460 = vmatpush.bf16.msra.mxu0 %v771
    %2461 = vmatpush.bf16.msra.mxu0 %v768
    %2462 = vmatpush.bf16.msra.mxu0 %v765
    %2463 = vmatpush.bf16.msra.mxu0 %v762
    %2464 = vmatpush.bf16.msra.mxu0 %v759
    %2465 = vmatpush.bf16.msra.mxu0 %v756
    %2466 = vmatpush.bf16.msra.mxu0 %v753
    %2467 = vmatpush.bf16.msra.mxu0 %v750
    %2468 = vmatmul.bf16.gmra.mxu0 %v2446
    %v2469 = vpop.f32.mrf.mxu0
    %v2470 = vadd.f32 %v181, %v2469
    %v2471 = vpop.f32.mrf.mxu0
    %2472 = vdwg.mxu0
    %2473 = vmatpush.bf16.msra.mxu0 %v772
    %2474 = vmatpush.bf16.msra.mxu0 %v769
    %2475 = vmatpush.bf16.msra.mxu0 %v766
    %2476 = vmatpush.bf16.msra.mxu0 %v763
    %2477 = vmatpush.bf16.msra.mxu0 %v760
    %2478 = vmatpush.bf16.msra.mxu0 %v757
    %2479 = vmatpush.bf16.msra.mxu0 %v754
    %2480 = vmatpush.bf16.msra.mxu0 %v751
    %2481 = vmatmul.bf16.gmra.mxu0 %v2446
    %v2482 = vpop.f32.mrf.mxu0
    %v2483 = vadd.f32 %v182, %v2482
    %v2484 = vpop.f32.mrf.mxu0
    %2485 = vdwg.mxu0
    %v2486 = vpack.c.bf16 %v2359, %v2359
    %2487 = vmatpush.bf16.msra.mxu0 %v969
    %2488 = vmatpush.bf16.msra.mxu0 %v966
    %2489 = vmatpush.bf16.msra.mxu0 %v963
    %2490 = vmatpush.bf16.msra.mxu0 %v960
    %2491 = vmatpush.bf16.msra.mxu0 %v957
    %2492 = vmatpush.bf16.msra.mxu0 %v954
    %2493 = vmatpush.bf16.msra.mxu0 %v951
    %2494 = vmatpush.bf16.msra.mxu0 %v948
    %2495 = vmatmul.bf16.gmra.mxu0 %v2486
    %v2496 = vpop.f32.mrf.mxu0
    %v2497 = vadd.f32 %v196, %v2496
    %v2498 = vpop.f32.mrf.mxu0
    %2499 = vdwg.mxu0
    %2500 = vmatpush.bf16.msra.mxu0 %v970
    %2501 = vmatpush.bf16.msra.mxu0 %v967
    %2502 = vmatpush.bf16.msra.mxu0 %v964
    %2503 = vmatpush.bf16.msra.mxu0 %v961
    %2504 = vmatpush.bf16.msra.mxu0 %v958
    %2505 = vmatpush.bf16.msra.mxu0 %v955
    %2506 = vmatpush.bf16.msra.mxu0 %v952
    %2507 = vmatpush.bf16.msra.mxu0 %v949
    %2508 = vmatmul.bf16.gmra.mxu0 %v2486
    %v2509 = vpop.f32.mrf.mxu0
    %v2510 = vadd.f32 %v197, %v2509
    %v2511 = vpop.f32.mrf.mxu0
    %2512 = vdwg.mxu0
    %2513 = vmatpush.bf16.msra.mxu0 %v971
    %2514 = vmatpush.bf16.msra.mxu0 %v968
    %2515 = vmatpush.bf16.msra.mxu0 %v965
    %2516 = vmatpush.bf16.msra.mxu0 %v962
    %2517 = vmatpush.bf16.msra.mxu0 %v959
    %2518 = vmatpush.bf16.msra.mxu0 %v956
    %2519 = vmatpush.bf16.msra.mxu0 %v953
    %2520 = vmatpush.bf16.msra.mxu0 %v950
    %2521 = vmatmul.bf16.gmra.mxu0 %v2486
    %v2522 = vpop.f32.mrf.mxu0
    %v2523 = vadd.f32 %v198, %v2522
    %v2524 = vpop.f32.mrf.mxu0
    %2525 = vdwg.mxu0
    %v2526 = vadd.f32 %v2457, %v2497
    %v2527 = vadd.f32 %v2470, %v2510
    %v2528 = vxor.u32 %v2526, 2147483648
    %v2529 = vxor.u32 %v2527, 2147483648
    %v2530 = vmul.f32 %v2528, 1.442695
    %v2531 = vpow.pop %v2530
    %v2532 = vmul.f32 %v2529, 1.442695
    %v2533 = vpow.pop %v2532
    %v2534 = vadd.f32 %v2531, 1.0
    %v2535 = vadd.f32 %v2533, 1.0
    %v2536 = vrcp.pop %v2534
    %v2537 = vmul.f32 %v2534, %v2536
    %v2538 = vsub.f32 1.0, %v2537
    %v2539 = vmul.f32 %v2536, %v2538
    %v2540 = vadd.f32 %v2536, %v2539
    %vm2541 = vweird.f32 %v2534
    %vm2542 = vweird.f32 %v2536
    %vm2543 = vmor %vm2541, %vm2542
    %v2544 = vsel %vm2543, %v2536, %v2540
    %v2545 = vand.u32 2147483647, %v2534
    %vm2546 = vcmp.eq.f32.partialorder %v2545, 8.507059e+37
    %v2547 = vand.u32 %v2534, 2147483648
    %v2548 = vor.u32 1.1754944e-38, %v2547
    %v2549 = vsel %vm2546, %v2548, %v2544
    %v2550 = vmul.f32 1.0, %v2549
    %v2551 = vrcp.pop %v2535
    %v2552 = vmul.f32 %v2535, %v2551
    %v2553 = vsub.f32 1.0, %v2552
    %v2554 = vmul.f32 %v2551, %v2553
    %v2555 = vadd.f32 %v2551, %v2554
    %vm2556 = vweird.f32 %v2535
    %vm2557 = vweird.f32 %v2551
    %vm2558 = vmor %vm2556, %vm2557
    %v2559 = vsel %vm2558, %v2551, %v2555
    %v2560 = vand.u32 2147483647, %v2535
    %vm2561 = vcmp.eq.f32.partialorder %v2560, 8.507059e+37
    %v2562 = vand.u32 %v2535, 2147483648
    %v2563 = vor.u32 1.1754944e-38, %v2562
    %v2564 = vsel %vm2561, %v2563, %v2559
    %v2565 = vmul.f32 1.0, %v2564
    %v2566 = vmul.f32 %v2550, %v2523
    %v2567 = vadd.f32 %v2483, %v2566
    %v2568 = vtanh.pop %v2567
    %v2569 = vsub.f32 1.0, %v2565
    %v2570 = vmul.f32 %v2569, %v2568
    %v2571 = vmul.f32 %v2565, %v2359
    %v2572 = vadd.f32 %v2570, %v2571
    %v2573 = vtanh.pop %v2572
    %v2574 = vpack.c.bf16 %v2573, %v2573
    %v2575 = vld [vmem:[#allocation7] sm:$0xff]
    %v2576 = vld [vmem:[#allocation7 + $0x8] sm:$0xf]
    %v2577 = vld [vmem:[#allocation7 + $0xc] sm:$0xff]
    %v2578 = vld [vmem:[#allocation7 + $0x14] sm:$0xf]
    %v2579 = vld [vmem:[#allocation7 + $0x18] sm:$0xff]
    %v2580 = vld [vmem:[#allocation7 + $0x20] sm:$0xf]
    %v2581 = vld [vmem:[#allocation7 + $0x24] sm:$0xff]
    %v2582 = vld [vmem:[#allocation7 + $0x2c] sm:$0xf]
    %v2583 = vld [vmem:[#allocation7 + $0x30] sm:$0xff]
    %v2584 = vld [vmem:[#allocation7 + $0x38] sm:$0xf]
    %v2585 = vld [vmem:[#allocation7 + $0x3c] sm:$0xff]
    %v2586 = vld [vmem:[#allocation7 + $0x44] sm:$0xf]
    %v2587 = vld [vmem:[#allocation7 + $0x48] sm:$0xff]
    %v2588 = vld [vmem:[#allocation7 + $0x50] sm:$0xf]
    %v2589 = vld [vmem:[#allocation7 + $0x54] sm:$0xff]
    %v2590 = vld [vmem:[#allocation7 + $0x5c] sm:$0xf]
    %v2591 = vld [vmem:[#allocation7 + $0x60] sm:$0xff]
    %v2592 = vld [vmem:[#allocation7 + $0x68] sm:$0xf]
    %v2593 = vld [vmem:[#allocation7 + $0x6c] sm:$0xff]
    %v2594 = vld [vmem:[#allocation7 + $0x74] sm:$0xf]
    %v2595 = vld [vmem:[#allocation7 + $0x78] sm:$0xff]
    %v2596 = vld [vmem:[#allocation7 + $0x80] sm:$0xf]
    %v2597 = vld [vmem:[#allocation7 + $0x84] sm:$0xff]
    %v2598 = vld [vmem:[#allocation7 + $0x8c] sm:$0xf]
    %v2599 = vld [vmem:[#allocation7 + $0x90] sm:$0xff]
    %v2600 = vld [vmem:[#allocation7 + $0x98] sm:$0xf]
    %v2601 = vld [vmem:[#allocation7 + $0x9c] sm:$0xff]
    %v2602 = vld [vmem:[#allocation7 + $0xa4] sm:$0xf]
    %v2603 = vld [vmem:[#allocation7 + $0xa8] sm:$0xff]
    %v2604 = vld [vmem:[#allocation7 + $0xb0] sm:$0xf]
    %v2605 = vld [vmem:[#allocation7 + $0xb4] sm:$0xff]
    %v2606 = vld [vmem:[#allocation7 + $0xbc] sm:$0xf]
    %v2639 = vunpack.c.l.b16 %v2575
    %v2640 = vunpack.c.h.b16 %v2575
    %v2641 = vunpack.c.l.b16 %v2576
    %v2642 = vunpack.c.l.b16 %v2577
    %v2643 = vunpack.c.h.b16 %v2577
    %v2644 = vunpack.c.l.b16 %v2578
    %v2645 = vunpack.c.l.b16 %v2579
    %v2646 = vunpack.c.h.b16 %v2579
    %v2647 = vunpack.c.l.b16 %v2580
    %v2648 = vunpack.c.l.b16 %v2581
    %v2649 = vunpack.c.h.b16 %v2581
    %v2650 = vunpack.c.l.b16 %v2582
    %v2651 = vunpack.c.l.b16 %v2583
    %v2652 = vunpack.c.h.b16 %v2583
    %v2653 = vunpack.c.l.b16 %v2584
    %v2654 = vunpack.c.l.b16 %v2585
    %v2655 = vunpack.c.h.b16 %v2585
    %v2656 = vunpack.c.l.b16 %v2586
    %v2657 = vunpack.c.l.b16 %v2587
    %v2658 = vunpack.c.h.b16 %v2587
    %v2659 = vunpack.c.l.b16 %v2588
    %v2660 = vunpack.c.l.b16 %v2589
    %v2661 = vunpack.c.h.b16 %v2589
    %v2662 = vunpack.c.l.b16 %v2590
    %v2663 = vunpack.c.l.b16 %v2591
    %v2664 = vunpack.c.h.b16 %v2591
    %v2665 = vunpack.c.l.b16 %v2592
    %v2666 = vunpack.c.l.b16 %v2593
    %v2667 = vunpack.c.h.b16 %v2593
    %v2668 = vunpack.c.l.b16 %v2594
    %v2669 = vunpack.c.l.b16 %v2595
    %v2670 = vunpack.c.h.b16 %v2595
    %v2671 = vunpack.c.l.b16 %v2596
    %v2672 = vunpack.c.l.b16 %v2597
    %v2673 = vunpack.c.h.b16 %v2597
    %v2674 = vunpack.c.l.b16 %v2598
    %v2675 = vunpack.c.l.b16 %v2599
    %v2676 = vunpack.c.h.b16 %v2599
    %v2677 = vunpack.c.l.b16 %v2600
    %v2678 = vunpack.c.l.b16 %v2601
    %v2679 = vunpack.c.h.b16 %v2601
    %v2680 = vunpack.c.l.b16 %v2602
    %v2681 = vunpack.c.l.b16 %v2603
    %v2682 = vunpack.c.h.b16 %v2603
    %v2683 = vunpack.c.l.b16 %v2604
    %v2684 = vunpack.c.l.b16 %v2605
    %v2685 = vunpack.c.h.b16 %v2605
    %v2686 = vunpack.c.l.b16 %v2606
    %v2687 = vpack.c.b16 %v2642, %v2639
    %v2688 = vpack.c.b16 %v2643, %v2640
    %v2689 = vpack.c.b16 %v2644, %v2641
    %v2690 = vpack.c.b16 %v2648, %v2645
    %v2691 = vpack.c.b16 %v2649, %v2646
    %v2692 = vpack.c.b16 %v2650, %v2647
    %v2693 = vpack.c.b16 %v2654, %v2651
    %v2694 = vpack.c.b16 %v2655, %v2652
    %v2695 = vpack.c.b16 %v2656, %v2653
    %v2696 = vpack.c.b16 %v2660, %v2657
    %v2697 = vpack.c.b16 %v2661, %v2658
    %v2698 = vpack.c.b16 %v2662, %v2659
    %v2699 = vpack.c.b16 %v2666, %v2663
    %v2700 = vpack.c.b16 %v2667, %v2664
    %v2701 = vpack.c.b16 %v2668, %v2665
    %v2702 = vpack.c.b16 %v2672, %v2669
    %v2703 = vpack.c.b16 %v2673, %v2670
    %v2704 = vpack.c.b16 %v2674, %v2671
    %v2705 = vpack.c.b16 %v2678, %v2675
    %v2706 = vpack.c.b16 %v2679, %v2676
    %v2707 = vpack.c.b16 %v2680, %v2677
    %v2708 = vpack.c.b16 %v2684, %v2681
    %v2709 = vpack.c.b16 %v2685, %v2682
    %v2710 = vpack.c.b16 %v2686, %v2683
    %2735 = vmatpush.bf16.msra.mxu0 %v2708
    %2736 = vmatpush.bf16.msra.mxu0 %v2705
    %2737 = vmatpush.bf16.msra.mxu0 %v2702
    %2738 = vmatpush.bf16.msra.mxu0 %v2699
    %2739 = vmatpush.bf16.msra.mxu0 %v2696
    %2740 = vmatpush.bf16.msra.mxu0 %v2693
    %2741 = vmatpush.bf16.msra.mxu0 %v2690
    %2742 = vmatpush.bf16.msra.mxu0 %v2687
    %2743 = vmatmul.bf16.gmra.mxu0 %v2574
    %v2744 = vpop.f32.mrf.mxu0
    %v2745 = vadd.f32 %v204, %v2744
    %v2746 = vpop.f32.mrf.mxu0
    %2747 = vdwg.mxu0
    %2748 = vmatpush.bf16.msra.mxu0 %v2709
    %2749 = vmatpush.bf16.msra.mxu0 %v2706
    %2750 = vmatpush.bf16.msra.mxu0 %v2703
    %2751 = vmatpush.bf16.msra.mxu0 %v2700
    %2752 = vmatpush.bf16.msra.mxu0 %v2697
    %2753 = vmatpush.bf16.msra.mxu0 %v2694
    %2754 = vmatpush.bf16.msra.mxu0 %v2691
    %2755 = vmatpush.bf16.msra.mxu0 %v2688
    %2756 = vmatmul.bf16.gmra.mxu0 %v2574
    %v2757 = vpop.f32.mrf.mxu0
    %v2758 = vadd.f32 %v205, %v2757
    %v2759 = vpop.f32.mrf.mxu0
    %2760 = vdwg.mxu0
    %2761 = vmatpush.bf16.msra.mxu0 %v2710
    %2762 = vmatpush.bf16.msra.mxu0 %v2707
    %2763 = vmatpush.bf16.msra.mxu0 %v2704
    %2764 = vmatpush.bf16.msra.mxu0 %v2701
    %2765 = vmatpush.bf16.msra.mxu0 %v2698
    %2766 = vmatpush.bf16.msra.mxu0 %v2695
    %2767 = vmatpush.bf16.msra.mxu0 %v2692
    %2768 = vmatpush.bf16.msra.mxu0 %v2689
    %2769 = vmatmul.bf16.gmra.mxu0 %v2574
    %v2770 = vpop.f32.mrf.mxu0
    %v2771 = vadd.f32 %v206, %v2770
    %v2772 = vpop.f32.mrf.mxu0
    %2773 = vdwg.mxu0
    %v2774 = vld [vmem:[#allocation9] sm:$0xff]
    %v2775 = vld [vmem:[#allocation9 + $0x8] sm:$0xf]
    %v2776 = vld [vmem:[#allocation9 + $0xc] sm:$0xff]
    %v2777 = vld [vmem:[#allocation9 + $0x14] sm:$0xf]
    %v2778 = vld [vmem:[#allocation9 + $0x18] sm:$0xff]
    %v2779 = vld [vmem:[#allocation9 + $0x20] sm:$0xf]
    %v2780 = vld [vmem:[#allocation9 + $0x24] sm:$0xff]
    %v2781 = vld [vmem:[#allocation9 + $0x2c] sm:$0xf]
    %v2782 = vld [vmem:[#allocation9 + $0x30] sm:$0xff]
    %v2783 = vld [vmem:[#allocation9 + $0x38] sm:$0xf]
    %v2784 = vld [vmem:[#allocation9 + $0x3c] sm:$0xff]
    %v2785 = vld [vmem:[#allocation9 + $0x44] sm:$0xf]
    %v2786 = vld [vmem:[#allocation9 + $0x48] sm:$0xff]
    %v2787 = vld [vmem:[#allocation9 + $0x50] sm:$0xf]
    %v2788 = vld [vmem:[#allocation9 + $0x54] sm:$0xff]
    %v2789 = vld [vmem:[#allocation9 + $0x5c] sm:$0xf]
    %v2790 = vld [vmem:[#allocation9 + $0x60] sm:$0xff]
    %v2791 = vld [vmem:[#allocation9 + $0x68] sm:$0xf]
    %v2792 = vld [vmem:[#allocation9 + $0x6c] sm:$0xff]
    %v2793 = vld [vmem:[#allocation9 + $0x74] sm:$0xf]
    %v2794 = vld [vmem:[#allocation9 + $0x78] sm:$0xff]
    %v2795 = vld [vmem:[#allocation9 + $0x80] sm:$0xf]
    %v2796 = vld [vmem:[#allocation9 + $0x84] sm:$0xff]
    %v2797 = vld [vmem:[#allocation9 + $0x8c] sm:$0xf]
    %v2798 = vld [vmem:[#allocation9 + $0x90] sm:$0xff]
    %v2799 = vld [vmem:[#allocation9 + $0x98] sm:$0xf]
    %v2800 = vld [vmem:[#allocation9 + $0x9c] sm:$0xff]
    %v2801 = vld [vmem:[#allocation9 + $0xa4] sm:$0xf]
    %v2802 = vld [vmem:[#allocation9 + $0xa8] sm:$0xff]
    %v2803 = vld [vmem:[#allocation9 + $0xb0] sm:$0xf]
    %v2804 = vld [vmem:[#allocation9 + $0xb4] sm:$0xff]
    %v2805 = vld [vmem:[#allocation9 + $0xbc] sm:$0xf]
    %v2838 = vunpack.c.l.b16 %v2774
    %v2839 = vunpack.c.h.b16 %v2774
    %v2840 = vunpack.c.l.b16 %v2775
    %v2841 = vunpack.c.l.b16 %v2776
    %v2842 = vunpack.c.h.b16 %v2776
    %v2843 = vunpack.c.l.b16 %v2777
    %v2844 = vunpack.c.l.b16 %v2778
    %v2845 = vunpack.c.h.b16 %v2778
    %v2846 = vunpack.c.l.b16 %v2779
    %v2847 = vunpack.c.l.b16 %v2780
    %v2848 = vunpack.c.h.b16 %v2780
    %v2849 = vunpack.c.l.b16 %v2781
    %v2850 = vunpack.c.l.b16 %v2782
    %v2851 = vunpack.c.h.b16 %v2782
    %v2852 = vunpack.c.l.b16 %v2783
    %v2853 = vunpack.c.l.b16 %v2784
    %v2854 = vunpack.c.h.b16 %v2784
    %v2855 = vunpack.c.l.b16 %v2785
    %v2856 = vunpack.c.l.b16 %v2786
    %v2857 = vunpack.c.h.b16 %v2786
    %v2858 = vunpack.c.l.b16 %v2787
    %v2859 = vunpack.c.l.b16 %v2788
    %v2860 = vunpack.c.h.b16 %v2788
    %v2861 = vunpack.c.l.b16 %v2789
    %v2862 = vunpack.c.l.b16 %v2790
    %v2863 = vunpack.c.h.b16 %v2790
    %v2864 = vunpack.c.l.b16 %v2791
    %v2865 = vunpack.c.l.b16 %v2792
    %v2866 = vunpack.c.h.b16 %v2792
    %v2867 = vunpack.c.l.b16 %v2793
    %v2868 = vunpack.c.l.b16 %v2794
    %v2869 = vunpack.c.h.b16 %v2794
    %v2870 = vunpack.c.l.b16 %v2795
    %v2871 = vunpack.c.l.b16 %v2796
    %v2872 = vunpack.c.h.b16 %v2796
    %v2873 = vunpack.c.l.b16 %v2797
    %v2874 = vunpack.c.l.b16 %v2798
    %v2875 = vunpack.c.h.b16 %v2798
    %v2876 = vunpack.c.l.b16 %v2799
    %v2877 = vunpack.c.l.b16 %v2800
    %v2878 = vunpack.c.h.b16 %v2800
    %v2879 = vunpack.c.l.b16 %v2801
    %v2880 = vunpack.c.l.b16 %v2802
    %v2881 = vunpack.c.h.b16 %v2802
    %v2882 = vunpack.c.l.b16 %v2803
    %v2883 = vunpack.c.l.b16 %v2804
    %v2884 = vunpack.c.h.b16 %v2804
    %v2885 = vunpack.c.l.b16 %v2805
    %v2886 = vpack.c.b16 %v2841, %v2838
    %v2887 = vpack.c.b16 %v2842, %v2839
    %v2888 = vpack.c.b16 %v2843, %v2840
    %v2889 = vpack.c.b16 %v2847, %v2844
    %v2890 = vpack.c.b16 %v2848, %v2845
    %v2891 = vpack.c.b16 %v2849, %v2846
    %v2892 = vpack.c.b16 %v2853, %v2850
    %v2893 = vpack.c.b16 %v2854, %v2851
    %v2894 = vpack.c.b16 %v2855, %v2852
    %v2895 = vpack.c.b16 %v2859, %v2856
    %v2896 = vpack.c.b16 %v2860, %v2857
    %v2897 = vpack.c.b16 %v2861, %v2858
    %v2898 = vpack.c.b16 %v2865, %v2862
    %v2899 = vpack.c.b16 %v2866, %v2863
    %v2900 = vpack.c.b16 %v2867, %v2864
    %v2901 = vpack.c.b16 %v2871, %v2868
    %v2902 = vpack.c.b16 %v2872, %v2869
    %v2903 = vpack.c.b16 %v2873, %v2870
    %v2904 = vpack.c.b16 %v2877, %v2874
    %v2905 = vpack.c.b16 %v2878, %v2875
    %v2906 = vpack.c.b16 %v2879, %v2876
    %v2907 = vpack.c.b16 %v2883, %v2880
    %v2908 = vpack.c.b16 %v2884, %v2881
    %v2909 = vpack.c.b16 %v2885, %v2882
    %2934 = vmatpush.bf16.msra.mxu0 %v2907
    %2935 = vmatpush.bf16.msra.mxu0 %v2904
    %2936 = vmatpush.bf16.msra.mxu0 %v2901
    %2937 = vmatpush.bf16.msra.mxu0 %v2898
    %2938 = vmatpush.bf16.msra.mxu0 %v2895
    %2939 = vmatpush.bf16.msra.mxu0 %v2892
    %2940 = vmatpush.bf16.msra.mxu0 %v2889
    %2941 = vmatpush.bf16.msra.mxu0 %v2886
    %2942 = vmatmul.bf16.gmra.mxu0 %v2446
    %v2943 = vpop.f32.mrf.mxu0
    %v2944 = vadd.f32 %v220, %v2943
    %v2945 = vpop.f32.mrf.mxu0
    %2946 = vdwg.mxu0
    %2947 = vmatpush.bf16.msra.mxu0 %v2908
    %2948 = vmatpush.bf16.msra.mxu0 %v2905
    %2949 = vmatpush.bf16.msra.mxu0 %v2902
    %2950 = vmatpush.bf16.msra.mxu0 %v2899
    %2951 = vmatpush.bf16.msra.mxu0 %v2896
    %2952 = vmatpush.bf16.msra.mxu0 %v2893
    %2953 = vmatpush.bf16.msra.mxu0 %v2890
    %2954 = vmatpush.bf16.msra.mxu0 %v2887
    %2955 = vmatmul.bf16.gmra.mxu0 %v2446
    %v2956 = vpop.f32.mrf.mxu0
    %v2957 = vadd.f32 %v221, %v2956
    %v2958 = vpop.f32.mrf.mxu0
    %2959 = vdwg.mxu0
    %2960 = vmatpush.bf16.msra.mxu0 %v2909
    %2961 = vmatpush.bf16.msra.mxu0 %v2906
    %2962 = vmatpush.bf16.msra.mxu0 %v2903
    %2963 = vmatpush.bf16.msra.mxu0 %v2900
    %2964 = vmatpush.bf16.msra.mxu0 %v2897
    %2965 = vmatpush.bf16.msra.mxu0 %v2894
    %2966 = vmatpush.bf16.msra.mxu0 %v2891
    %2967 = vmatpush.bf16.msra.mxu0 %v2888
    %2968 = vmatmul.bf16.gmra.mxu0 %v2446
    %v2969 = vpop.f32.mrf.mxu0
    %v2970 = vadd.f32 %v222, %v2969
    %v2971 = vpop.f32.mrf.mxu0
    %2972 = vdwg.mxu0
    %v2973 = vadd.f32 %v2745, %v2944
    %v2974 = vadd.f32 %v2758, %v2957
    %v2975 = vxor.u32 %v2973, 2147483648
    %v2976 = vxor.u32 %v2974, 2147483648
    %v2977 = vmul.f32 %v2975, 1.442695
    %v2978 = vpow.pop %v2977
    %v2979 = vmul.f32 %v2976, 1.442695
    %v2980 = vpow.pop %v2979
    %v2981 = vadd.f32 %v2978, 1.0
    %v2982 = vadd.f32 %v2980, 1.0
    %v2983 = vrcp.pop %v2981
    %v2984 = vmul.f32 %v2981, %v2983
    %v2985 = vsub.f32 1.0, %v2984
    %v2986 = vmul.f32 %v2983, %v2985
    %v2987 = vadd.f32 %v2983, %v2986
    %vm2988 = vweird.f32 %v2981
    %vm2989 = vweird.f32 %v2983
    %vm2990 = vmor %vm2988, %vm2989
    %v2991 = vsel %vm2990, %v2983, %v2987
    %v2992 = vand.u32 2147483647, %v2981
    %vm2993 = vcmp.eq.f32.partialorder %v2992, 8.507059e+37
    %v2994 = vand.u32 %v2981, 2147483648
    %v2995 = vor.u32 1.1754944e-38, %v2994
    %v2996 = vsel %vm2993, %v2995, %v2991
    %v2997 = vmul.f32 1.0, %v2996
    %v2998 = vrcp.pop %v2982
    %v2999 = vmul.f32 %v2982, %v2998
    %v3000 = vsub.f32 1.0, %v2999
    %v3001 = vmul.f32 %v2998, %v3000
    %v3002 = vadd.f32 %v2998, %v3001
    %vm3003 = vweird.f32 %v2982
    %vm3004 = vweird.f32 %v2998
    %vm3005 = vmor %vm3003, %vm3004
    %v3006 = vsel %vm3005, %v2998, %v3002
    %v3007 = vand.u32 2147483647, %v2982
    %vm3008 = vcmp.eq.f32.partialorder %v3007, 8.507059e+37
    %v3009 = vand.u32 %v2982, 2147483648
    %v3010 = vor.u32 1.1754944e-38, %v3009
    %v3011 = vsel %vm3008, %v3010, %v3006
    %v3012 = vmul.f32 1.0, %v3011
    %v3013 = vmul.f32 %v2997, %v2970
    %v3014 = vadd.f32 %v2771, %v3013
    %v3015 = vtanh.pop %v3014
    %v3016 = vsub.f32 1.0, %v3012
    %v3017 = vmul.f32 %v3016, %v3015
    %v3018 = vmul.f32 %v3012, %v2445
    %v3019 = vadd.f32 %v3017, %v3018
    %v3020 = vpack.c.bf16 %v3019, %v3019
    %v3021 = vld [vmem:[#allocation10] sm:$0xff]
    %v3022 = vld [vmem:[#allocation10 + $0x8] sm:$0xf]
    %v3023 = vld [vmem:[#allocation10 + $0xc] sm:$0xff]
    %v3024 = vld [vmem:[#allocation10 + $0x14] sm:$0xf]
    %v3025 = vld [vmem:[#allocation10 + $0x18] sm:$0xff]
    %v3026 = vld [vmem:[#allocation10 + $0x20] sm:$0xf]
    %v3027 = vld [vmem:[#allocation10 + $0x24] sm:$0xff]
    %v3028 = vld [vmem:[#allocation10 + $0x2c] sm:$0xf]
    %v3029 = vld [vmem:[#allocation10 + $0x30] sm:$0xff]
    %v3030 = vld [vmem:[#allocation10 + $0x38] sm:$0xf]
    %v3031 = vld [vmem:[#allocation10 + $0x3c] sm:$0xff]
    %v3032 = vld [vmem:[#allocation10 + $0x44] sm:$0xf]
    %v3033 = vld [vmem:[#allocation10 + $0x48] sm:$0xff]
    %v3034 = vld [vmem:[#allocation10 + $0x50] sm:$0xf]
    %v3035 = vld [vmem:[#allocation10 + $0x54] sm:$0xff]
    %v3036 = vld [vmem:[#allocation10 + $0x5c] sm:$0xf]
    %v3037 = vld [vmem:[#allocation10 + $0x60] sm:$0xff]
    %v3038 = vld [vmem:[#allocation10 + $0x68] sm:$0xf]
    %v3039 = vld [vmem:[#allocation10 + $0x6c] sm:$0xff]
    %v3040 = vld [vmem:[#allocation10 + $0x74] sm:$0xf]
    %v3041 = vld [vmem:[#allocation10 + $0x78] sm:$0xff]
    %v3042 = vld [vmem:[#allocation10 + $0x80] sm:$0xf]
    %v3043 = vld [vmem:[#allocation10 + $0x84] sm:$0xff]
    %v3044 = vld [vmem:[#allocation10 + $0x8c] sm:$0xf]
    %v3045 = vld [vmem:[#allocation10 + $0x90] sm:$0xff]
    %v3046 = vld [vmem:[#allocation10 + $0x98] sm:$0xf]
    %v3047 = vld [vmem:[#allocation10 + $0x9c] sm:$0xff]
    %v3048 = vld [vmem:[#allocation10 + $0xa4] sm:$0xf]
    %v3049 = vld [vmem:[#allocation10 + $0xa8] sm:$0xff]
    %v3050 = vld [vmem:[#allocation10 + $0xb0] sm:$0xf]
    %v3051 = vld [vmem:[#allocation10 + $0xb4] sm:$0xff]
    %v3052 = vld [vmem:[#allocation10 + $0xbc] sm:$0xf]
    %v3085 = vunpack.c.l.b16 %v3021
    %v3086 = vunpack.c.h.b16 %v3021
    %v3087 = vunpack.c.l.b16 %v3022
    %v3088 = vunpack.c.l.b16 %v3023
    %v3089 = vunpack.c.h.b16 %v3023
    %v3090 = vunpack.c.l.b16 %v3024
    %v3091 = vunpack.c.l.b16 %v3025
    %v3092 = vunpack.c.h.b16 %v3025
    %v3093 = vunpack.c.l.b16 %v3026
    %v3094 = vunpack.c.l.b16 %v3027
    %v3095 = vunpack.c.h.b16 %v3027
    %v3096 = vunpack.c.l.b16 %v3028
    %v3097 = vunpack.c.l.b16 %v3029
    %v3098 = vunpack.c.h.b16 %v3029
    %v3099 = vunpack.c.l.b16 %v3030
    %v3100 = vunpack.c.l.b16 %v3031
    %v3101 = vunpack.c.h.b16 %v3031
    %v3102 = vunpack.c.l.b16 %v3032
    %v3103 = vunpack.c.l.b16 %v3033
    %v3104 = vunpack.c.h.b16 %v3033
    %v3105 = vunpack.c.l.b16 %v3034
    %v3106 = vunpack.c.l.b16 %v3035
    %v3107 = vunpack.c.h.b16 %v3035
    %v3108 = vunpack.c.l.b16 %v3036
    %v3109 = vunpack.c.l.b16 %v3037
    %v3110 = vunpack.c.h.b16 %v3037
    %v3111 = vunpack.c.l.b16 %v3038
    %v3112 = vunpack.c.l.b16 %v3039
    %v3113 = vunpack.c.h.b16 %v3039
    %v3114 = vunpack.c.l.b16 %v3040
    %v3115 = vunpack.c.l.b16 %v3041
    %v3116 = vunpack.c.h.b16 %v3041
    %v3117 = vunpack.c.l.b16 %v3042
    %v3118 = vunpack.c.l.b16 %v3043
    %v3119 = vunpack.c.h.b16 %v3043
    %v3120 = vunpack.c.l.b16 %v3044
    %v3121 = vunpack.c.l.b16 %v3045
    %v3122 = vunpack.c.h.b16 %v3045
    %v3123 = vunpack.c.l.b16 %v3046
    %v3124 = vunpack.c.l.b16 %v3047
    %v3125 = vunpack.c.h.b16 %v3047
    %v3126 = vunpack.c.l.b16 %v3048
    %v3127 = vunpack.c.l.b16 %v3049
    %v3128 = vunpack.c.h.b16 %v3049
    %v3129 = vunpack.c.l.b16 %v3050
    %v3130 = vunpack.c.l.b16 %v3051
    %v3131 = vunpack.c.h.b16 %v3051
    %v3132 = vunpack.c.l.b16 %v3052
    %v3133 = vpack.c.b16 %v3088, %v3085
    %v3134 = vpack.c.b16 %v3089, %v3086
    %v3135 = vpack.c.b16 %v3090, %v3087
    %v3136 = vpack.c.b16 %v3094, %v3091
    %v3137 = vpack.c.b16 %v3095, %v3092
    %v3138 = vpack.c.b16 %v3096, %v3093
    %v3139 = vpack.c.b16 %v3100, %v3097
    %v3140 = vpack.c.b16 %v3101, %v3098
    %v3141 = vpack.c.b16 %v3102, %v3099
    %v3142 = vpack.c.b16 %v3106, %v3103
    %v3143 = vpack.c.b16 %v3107, %v3104
    %v3144 = vpack.c.b16 %v3108, %v3105
    %v3145 = vpack.c.b16 %v3112, %v3109
    %v3146 = vpack.c.b16 %v3113, %v3110
    %v3147 = vpack.c.b16 %v3114, %v3111
    %v3148 = vpack.c.b16 %v3118, %v3115
    %v3149 = vpack.c.b16 %v3119, %v3116
    %v3150 = vpack.c.b16 %v3120, %v3117
    %v3151 = vpack.c.b16 %v3124, %v3121
    %v3152 = vpack.c.b16 %v3125, %v3122
    %v3153 = vpack.c.b16 %v3126, %v3123
    %v3154 = vpack.c.b16 %v3130, %v3127
    %v3155 = vpack.c.b16 %v3131, %v3128
    %v3156 = vpack.c.b16 %v3132, %v3129
    %3181 = vmatpush.bf16.msra.mxu0 %v3154
    %3182 = vmatpush.bf16.msra.mxu0 %v3151
    %3183 = vmatpush.bf16.msra.mxu0 %v3148
    %3184 = vmatpush.bf16.msra.mxu0 %v3145
    %3185 = vmatpush.bf16.msra.mxu0 %v3142
    %3186 = vmatpush.bf16.msra.mxu0 %v3139
    %3187 = vmatpush.bf16.msra.mxu0 %v3136
    %3188 = vmatpush.bf16.msra.mxu0 %v3133
    %3189 = vmatmul.bf16.gmra.mxu0 %v3020
    %v3190 = vpop.f32.mrf.mxu0
    %v3191 = vadd.f32 %v212, %v3190
    %v3192 = vpop.f32.mrf.mxu0
    %3193 = vdwg.mxu0
    %3194 = vmatpush.bf16.msra.mxu0 %v3155
    %3195 = vmatpush.bf16.msra.mxu0 %v3152
    %3196 = vmatpush.bf16.msra.mxu0 %v3149
    %3197 = vmatpush.bf16.msra.mxu0 %v3146
    %3198 = vmatpush.bf16.msra.mxu0 %v3143
    %3199 = vmatpush.bf16.msra.mxu0 %v3140
    %3200 = vmatpush.bf16.msra.mxu0 %v3137
    %3201 = vmatpush.bf16.msra.mxu0 %v3134
    %3202 = vmatmul.bf16.gmra.mxu0 %v3020
    %v3203 = vpop.f32.mrf.mxu0
    %v3204 = vadd.f32 %v213, %v3203
    %v3205 = vpop.f32.mrf.mxu0
    %3206 = vdwg.mxu0
    %3207 = vmatpush.bf16.msra.mxu0 %v3156
    %3208 = vmatpush.bf16.msra.mxu0 %v3153
    %3209 = vmatpush.bf16.msra.mxu0 %v3150
    %3210 = vmatpush.bf16.msra.mxu0 %v3147
    %3211 = vmatpush.bf16.msra.mxu0 %v3144
    %3212 = vmatpush.bf16.msra.mxu0 %v3141
    %3213 = vmatpush.bf16.msra.mxu0 %v3138
    %3214 = vmatpush.bf16.msra.mxu0 %v3135
    %3215 = vmatmul.bf16.gmra.mxu0 %v3020
    %v3216 = vpop.f32.mrf.mxu0
    %v3217 = vadd.f32 %v214, %v3216
    %v3218 = vpop.f32.mrf.mxu0
    %3219 = vdwg.mxu0
    %v3220 = vpack.c.bf16 %v2572, %v2572
    %v3221 = vld [vmem:[#allocation12] sm:$0xff]
    %v3222 = vld [vmem:[#allocation12 + $0x8] sm:$0xf]
    %v3223 = vld [vmem:[#allocation12 + $0xc] sm:$0xff]
    %v3224 = vld [vmem:[#allocation12 + $0x14] sm:$0xf]
    %v3225 = vld [vmem:[#allocation12 + $0x18] sm:$0xff]
    %v3226 = vld [vmem:[#allocation12 + $0x20] sm:$0xf]
    %v3227 = vld [vmem:[#allocation12 + $0x24] sm:$0xff]
    %v3228 = vld [vmem:[#allocation12 + $0x2c] sm:$0xf]
    %v3229 = vld [vmem:[#allocation12 + $0x30] sm:$0xff]
    %v3230 = vld [vmem:[#allocation12 + $0x38] sm:$0xf]
    %v3231 = vld [vmem:[#allocation12 + $0x3c] sm:$0xff]
    %v3232 = vld [vmem:[#allocation12 + $0x44] sm:$0xf]
    %v3233 = vld [vmem:[#allocation12 + $0x48] sm:$0xff]
    %v3234 = vld [vmem:[#allocation12 + $0x50] sm:$0xf]
    %v3235 = vld [vmem:[#allocation12 + $0x54] sm:$0xff]
    %v3236 = vld [vmem:[#allocation12 + $0x5c] sm:$0xf]
    %v3237 = vld [vmem:[#allocation12 + $0x60] sm:$0xff]
    %v3238 = vld [vmem:[#allocation12 + $0x68] sm:$0xf]
    %v3239 = vld [vmem:[#allocation12 + $0x6c] sm:$0xff]
    %v3240 = vld [vmem:[#allocation12 + $0x74] sm:$0xf]
    %v3241 = vld [vmem:[#allocation12 + $0x78] sm:$0xff]
    %v3242 = vld [vmem:[#allocation12 + $0x80] sm:$0xf]
    %v3243 = vld [vmem:[#allocation12 + $0x84] sm:$0xff]
    %v3244 = vld [vmem:[#allocation12 + $0x8c] sm:$0xf]
    %v3245 = vld [vmem:[#allocation12 + $0x90] sm:$0xff]
    %v3246 = vld [vmem:[#allocation12 + $0x98] sm:$0xf]
    %v3247 = vld [vmem:[#allocation12 + $0x9c] sm:$0xff]
    %v3248 = vld [vmem:[#allocation12 + $0xa4] sm:$0xf]
    %v3249 = vld [vmem:[#allocation12 + $0xa8] sm:$0xff]
    %v3250 = vld [vmem:[#allocation12 + $0xb0] sm:$0xf]
    %v3251 = vld [vmem:[#allocation12 + $0xb4] sm:$0xff]
    %v3252 = vld [vmem:[#allocation12 + $0xbc] sm:$0xf]
    %v3285 = vunpack.c.l.b16 %v3221
    %v3286 = vunpack.c.h.b16 %v3221
    %v3287 = vunpack.c.l.b16 %v3222
    %v3288 = vunpack.c.l.b16 %v3223
    %v3289 = vunpack.c.h.b16 %v3223
    %v3290 = vunpack.c.l.b16 %v3224
    %v3291 = vunpack.c.l.b16 %v3225
    %v3292 = vunpack.c.h.b16 %v3225
    %v3293 = vunpack.c.l.b16 %v3226
    %v3294 = vunpack.c.l.b16 %v3227
    %v3295 = vunpack.c.h.b16 %v3227
    %v3296 = vunpack.c.l.b16 %v3228
    %v3297 = vunpack.c.l.b16 %v3229
    %v3298 = vunpack.c.h.b16 %v3229
    %v3299 = vunpack.c.l.b16 %v3230
    %v3300 = vunpack.c.l.b16 %v3231
    %v3301 = vunpack.c.h.b16 %v3231
    %v3302 = vunpack.c.l.b16 %v3232
    %v3303 = vunpack.c.l.b16 %v3233
    %v3304 = vunpack.c.h.b16 %v3233
    %v3305 = vunpack.c.l.b16 %v3234
    %v3306 = vunpack.c.l.b16 %v3235
    %v3307 = vunpack.c.h.b16 %v3235
    %v3308 = vunpack.c.l.b16 %v3236
    %v3309 = vunpack.c.l.b16 %v3237
    %v3310 = vunpack.c.h.b16 %v3237
    %v3311 = vunpack.c.l.b16 %v3238
    %v3312 = vunpack.c.l.b16 %v3239
    %v3313 = vunpack.c.h.b16 %v3239
    %v3314 = vunpack.c.l.b16 %v3240
    %v3315 = vunpack.c.l.b16 %v3241
    %v3316 = vunpack.c.h.b16 %v3241
    %v3317 = vunpack.c.l.b16 %v3242
    %v3318 = vunpack.c.l.b16 %v3243
    %v3319 = vunpack.c.h.b16 %v3243
    %v3320 = vunpack.c.l.b16 %v3244
    %v3321 = vunpack.c.l.b16 %v3245
    %v3322 = vunpack.c.h.b16 %v3245
    %v3323 = vunpack.c.l.b16 %v3246
    %v3324 = vunpack.c.l.b16 %v3247
    %v3325 = vunpack.c.h.b16 %v3247
    %v3326 = vunpack.c.l.b16 %v3248
    %v3327 = vunpack.c.l.b16 %v3249
    %v3328 = vunpack.c.h.b16 %v3249
    %v3329 = vunpack.c.l.b16 %v3250
    %v3330 = vunpack.c.l.b16 %v3251
    %v3331 = vunpack.c.h.b16 %v3251
    %v3332 = vunpack.c.l.b16 %v3252
    %v3333 = vpack.c.b16 %v3288, %v3285
    %v3334 = vpack.c.b16 %v3289, %v3286
    %v3335 = vpack.c.b16 %v3290, %v3287
    %v3336 = vpack.c.b16 %v3294, %v3291
    %v3337 = vpack.c.b16 %v3295, %v3292
    %v3338 = vpack.c.b16 %v3296, %v3293
    %v3339 = vpack.c.b16 %v3300, %v3297
    %v3340 = vpack.c.b16 %v3301, %v3298
    %v3341 = vpack.c.b16 %v3302, %v3299
    %v3342 = vpack.c.b16 %v3306, %v3303
    %v3343 = vpack.c.b16 %v3307, %v3304
    %v3344 = vpack.c.b16 %v3308, %v3305
    %v3345 = vpack.c.b16 %v3312, %v3309
    %v3346 = vpack.c.b16 %v3313, %v3310
    %v3347 = vpack.c.b16 %v3314, %v3311
    %v3348 = vpack.c.b16 %v3318, %v3315
    %v3349 = vpack.c.b16 %v3319, %v3316
    %v3350 = vpack.c.b16 %v3320, %v3317
    %v3351 = vpack.c.b16 %v3324, %v3321
    %v3352 = vpack.c.b16 %v3325, %v3322
    %v3353 = vpack.c.b16 %v3326, %v3323
    %v3354 = vpack.c.b16 %v3330, %v3327
    %v3355 = vpack.c.b16 %v3331, %v3328
    %v3356 = vpack.c.b16 %v3332, %v3329
    %3381 = vmatpush.bf16.msra.mxu0 %v3354
    %3382 = vmatpush.bf16.msra.mxu0 %v3351
    %3383 = vmatpush.bf16.msra.mxu0 %v3348
    %3384 = vmatpush.bf16.msra.mxu0 %v3345
    %3385 = vmatpush.bf16.msra.mxu0 %v3342
    %3386 = vmatpush.bf16.msra.mxu0 %v3339
    %3387 = vmatpush.bf16.msra.mxu0 %v3336
    %3388 = vmatpush.bf16.msra.mxu0 %v3333
    %3389 = vmatmul.bf16.gmra.mxu0 %v3220
    %v3390 = vpop.f32.mrf.mxu0
    %v3391 = vadd.f32 %v228, %v3390
    %v3392 = vpop.f32.mrf.mxu0
    %3393 = vdwg.mxu0
    %3394 = vmatpush.bf16.msra.mxu0 %v3355
    %3395 = vmatpush.bf16.msra.mxu0 %v3352
    %3396 = vmatpush.bf16.msra.mxu0 %v3349
    %3397 = vmatpush.bf16.msra.mxu0 %v3346
    %3398 = vmatpush.bf16.msra.mxu0 %v3343
    %3399 = vmatpush.bf16.msra.mxu0 %v3340
    %3400 = vmatpush.bf16.msra.mxu0 %v3337
    %3401 = vmatpush.bf16.msra.mxu0 %v3334
    %3402 = vmatmul.bf16.gmra.mxu0 %v3220
    %v3403 = vpop.f32.mrf.mxu0
    %v3404 = vadd.f32 %v229, %v3403
    %v3405 = vpop.f32.mrf.mxu0
    %3406 = vdwg.mxu0
    %3407 = vmatpush.bf16.msra.mxu0 %v3356
    %3408 = vmatpush.bf16.msra.mxu0 %v3353
    %3409 = vmatpush.bf16.msra.mxu0 %v3350
    %3410 = vmatpush.bf16.msra.mxu0 %v3347
    %3411 = vmatpush.bf16.msra.mxu0 %v3344
    %3412 = vmatpush.bf16.msra.mxu0 %v3341
    %3413 = vmatpush.bf16.msra.mxu0 %v3338
    %3414 = vmatpush.bf16.msra.mxu0 %v3335
    %3415 = vmatmul.bf16.gmra.mxu0 %v3220
    %v3416 = vpop.f32.mrf.mxu0
    %v3417 = vadd.f32 %v230, %v3416
    %v3418 = vpop.f32.mrf.mxu0
    %3419 = vdwg.mxu0
    %v3420 = vadd.f32 %v3191, %v3391
    %v3421 = vadd.f32 %v3204, %v3404
    %v3422 = vxor.u32 %v3420, 2147483648
    %v3423 = vxor.u32 %v3421, 2147483648
    %v3424 = vmul.f32 %v3422, 1.442695
    %v3425 = vpow.pop %v3424
    %v3426 = vmul.f32 %v3423, 1.442695
    %v3427 = vpow.pop %v3426
    %v3428 = vadd.f32 %v3425, 1.0
    %v3429 = vadd.f32 %v3427, 1.0
    %v3430 = vrcp.pop %v3428
    %v3431 = vmul.f32 %v3428, %v3430
    %v3432 = vsub.f32 1.0, %v3431
    %v3433 = vmul.f32 %v3430, %v3432
    %v3434 = vadd.f32 %v3430, %v3433
    %vm3435 = vweird.f32 %v3428
    %vm3436 = vweird.f32 %v3430
    %vm3437 = vmor %vm3435, %vm3436
    %v3438 = vsel %vm3437, %v3430, %v3434
    %v3439 = vand.u32 2147483647, %v3428
    %vm3440 = vcmp.eq.f32.partialorder %v3439, 8.507059e+37
    %v3441 = vand.u32 %v3428, 2147483648
    %v3442 = vor.u32 1.1754944e-38, %v3441
    %v3443 = vsel %vm3440, %v3442, %v3438
    %v3444 = vmul.f32 1.0, %v3443
    %v3445 = vrcp.pop %v3429
    %v3446 = vmul.f32 %v3429, %v3445
    %v3447 = vsub.f32 1.0, %v3446
    %v3448 = vmul.f32 %v3445, %v3447
    %v3449 = vadd.f32 %v3445, %v3448
    %vm3450 = vweird.f32 %v3429
    %vm3451 = vweird.f32 %v3445
    %vm3452 = vmor %vm3450, %vm3451
    %v3453 = vsel %vm3452, %v3445, %v3449
    %v3454 = vand.u32 2147483647, %v3429
    %vm3455 = vcmp.eq.f32.partialorder %v3454, 8.507059e+37
    %v3456 = vand.u32 %v3429, 2147483648
    %v3457 = vor.u32 1.1754944e-38, %v3456
    %v3458 = vsel %vm3455, %v3457, %v3453
    %v3459 = vmul.f32 1.0, %v3458
    %v3460 = vmul.f32 %v3444, %v3417
    %v3461 = vadd.f32 %v3217, %v3460
    %v3462 = vtanh.pop %v3461
    %v3463 = vsub.f32 1.0, %v3459
    %v3464 = vmul.f32 %v3463, %v3462
    %v3465 = vmul.f32 %v3459, %v2572
    %v3466 = vadd.f32 %v3464, %v3465
    %v3467 = vpack.c.bf16 %v3466, %v3466
    %3468 = vmatpush.bf16.msra.mxu0 %v2708
    %3469 = vmatpush.bf16.msra.mxu0 %v2705
    %3470 = vmatpush.bf16.msra.mxu0 %v2702
    %3471 = vmatpush.bf16.msra.mxu0 %v2699
    %3472 = vmatpush.bf16.msra.mxu0 %v2696
    %3473 = vmatpush.bf16.msra.mxu0 %v2693
    %3474 = vmatpush.bf16.msra.mxu0 %v2690
    %3475 = vmatpush.bf16.msra.mxu0 %v2687
    %3476 = vmatmul.bf16.gmra.mxu0 %v3467
    %v3477 = vpop.f32.mrf.mxu0
    %v3478 = vadd.f32 %v204, %v3477
    %v3479 = vpop.f32.mrf.mxu0
    %3480 = vdwg.mxu0
    %3481 = vmatpush.bf16.msra.mxu0 %v2709
    %3482 = vmatpush.bf16.msra.mxu0 %v2706
    %3483 = vmatpush.bf16.msra.mxu0 %v2703
    %3484 = vmatpush.bf16.msra.mxu0 %v2700
    %3485 = vmatpush.bf16.msra.mxu0 %v2697
    %3486 = vmatpush.bf16.msra.mxu0 %v2694
    %3487 = vmatpush.bf16.msra.mxu0 %v2691
    %3488 = vmatpush.bf16.msra.mxu0 %v2688
    %3489 = vmatmul.bf16.gmra.mxu0 %v3467
    %v3490 = vpop.f32.mrf.mxu0
    %v3491 = vadd.f32 %v205, %v3490
    %v3492 = vpop.f32.mrf.mxu0
    %3493 = vdwg.mxu0
    %3494 = vmatpush.bf16.msra.mxu0 %v2710
    %3495 = vmatpush.bf16.msra.mxu0 %v2707
    %3496 = vmatpush.bf16.msra.mxu0 %v2704
    %3497 = vmatpush.bf16.msra.mxu0 %v2701
    %3498 = vmatpush.bf16.msra.mxu0 %v2698
    %3499 = vmatpush.bf16.msra.mxu0 %v2695
    %3500 = vmatpush.bf16.msra.mxu0 %v2692
    %3501 = vmatpush.bf16.msra.mxu0 %v2689
    %3502 = vmatmul.bf16.gmra.mxu0 %v3467
    %v3503 = vpop.f32.mrf.mxu0
    %v3504 = vadd.f32 %v206, %v3503
    %v3505 = vpop.f32.mrf.mxu0
    %3506 = vdwg.mxu0
    %3507 = vmatpush.bf16.msra.mxu0 %v2907
    %3508 = vmatpush.bf16.msra.mxu0 %v2904
    %3509 = vmatpush.bf16.msra.mxu0 %v2901
    %3510 = vmatpush.bf16.msra.mxu0 %v2898
    %3511 = vmatpush.bf16.msra.mxu0 %v2895
    %3512 = vmatpush.bf16.msra.mxu0 %v2892
    %3513 = vmatpush.bf16.msra.mxu0 %v2889
    %3514 = vmatpush.bf16.msra.mxu0 %v2886
    %3515 = vmatmul.bf16.gmra.mxu0 %v3020
    %v3516 = vpop.f32.mrf.mxu0
    %v3517 = vadd.f32 %v220, %v3516
    %v3518 = vpop.f32.mrf.mxu0
    %3519 = vdwg.mxu0
    %3520 = vmatpush.bf16.msra.mxu0 %v2908
    %3521 = vmatpush.bf16.msra.mxu0 %v2905
    %3522 = vmatpush.bf16.msra.mxu0 %v2902
    %3523 = vmatpush.bf16.msra.mxu0 %v2899
    %3524 = vmatpush.bf16.msra.mxu0 %v2896
    %3525 = vmatpush.bf16.msra.mxu0 %v2893
    %3526 = vmatpush.bf16.msra.mxu0 %v2890
    %3527 = vmatpush.bf16.msra.mxu0 %v2887
    %3528 = vmatmul.bf16.gmra.mxu0 %v3020
    %v3529 = vpop.f32.mrf.mxu0
    %v3530 = vadd.f32 %v221, %v3529
    %v3531 = vpop.f32.mrf.mxu0
    %3532 = vdwg.mxu0
    %3533 = vmatpush.bf16.msra.mxu0 %v2909
    %3534 = vmatpush.bf16.msra.mxu0 %v2906
    %3535 = vmatpush.bf16.msra.mxu0 %v2903
    %3536 = vmatpush.bf16.msra.mxu0 %v2900
    %3537 = vmatpush.bf16.msra.mxu0 %v2897
    %3538 = vmatpush.bf16.msra.mxu0 %v2894
    %3539 = vmatpush.bf16.msra.mxu0 %v2891
    %3540 = vmatpush.bf16.msra.mxu0 %v2888
    %3541 = vmatmul.bf16.gmra.mxu0 %v3020
    %v3542 = vpop.f32.mrf.mxu0
    %v3543 = vadd.f32 %v222, %v3542
    %v3544 = vpop.f32.mrf.mxu0
    %3545 = vdwg.mxu0
    %v3546 = vadd.f32 %v3478, %v3517
    %v3547 = vadd.f32 %v3491, %v3530
    %v3548 = vxor.u32 %v3546, 2147483648
    %v3549 = vxor.u32 %v3547, 2147483648
    %v3550 = vmul.f32 %v3548, 1.442695
    %v3551 = vpow.pop %v3550
    %v3552 = vmul.f32 %v3549, 1.442695
    %v3553 = vpow.pop %v3552
    %v3554 = vadd.f32 %v3551, 1.0
    %v3555 = vadd.f32 %v3553, 1.0
    %v3556 = vrcp.pop %v3554
    %v3557 = vmul.f32 %v3554, %v3556
    %v3558 = vsub.f32 1.0, %v3557
    %v3559 = vmul.f32 %v3556, %v3558
    %v3560 = vadd.f32 %v3556, %v3559
    %vm3561 = vweird.f32 %v3554
    %vm3562 = vweird.f32 %v3556
    %vm3563 = vmor %vm3561, %vm3562
    %v3564 = vsel %vm3563, %v3556, %v3560
    %v3565 = vand.u32 2147483647, %v3554
    %vm3566 = vcmp.eq.f32.partialorder %v3565, 8.507059e+37
    %v3567 = vand.u32 %v3554, 2147483648
    %v3568 = vor.u32 1.1754944e-38, %v3567
    %v3569 = vsel %vm3566, %v3568, %v3564
    %v3570 = vmul.f32 1.0, %v3569
    %v3571 = vrcp.pop %v3555
    %v3572 = vmul.f32 %v3555, %v3571
    %v3573 = vsub.f32 1.0, %v3572
    %v3574 = vmul.f32 %v3571, %v3573
    %v3575 = vadd.f32 %v3571, %v3574
    %vm3576 = vweird.f32 %v3555
    %vm3577 = vweird.f32 %v3571
    %vm3578 = vmor %vm3576, %vm3577
    %v3579 = vsel %vm3578, %v3571, %v3575
    %v3580 = vand.u32 2147483647, %v3555
    %vm3581 = vcmp.eq.f32.partialorder %v3580, 8.507059e+37
    %v3582 = vand.u32 %v3555, 2147483648
    %v3583 = vor.u32 1.1754944e-38, %v3582
    %v3584 = vsel %vm3581, %v3583, %v3579
    %v3585 = vmul.f32 1.0, %v3584
    %v3586 = vmul.f32 %v3570, %v3543
    %v3587 = vadd.f32 %v3504, %v3586
    %v3588 = vtanh.pop %v3587
    %v3589 = vsub.f32 1.0, %v3585
    %v3590 = vmul.f32 %v3589, %v3588
    %v3591 = vmul.f32 %v3585, %v3019
    %v3592 = vadd.f32 %v3590, %v3591
    %v3593 = vpack.c.bf16 %v3592, %v3592
    %3594 = vmatpush.bf16.msra.mxu0 %v3154
    %3595 = vmatpush.bf16.msra.mxu0 %v3151
    %3596 = vmatpush.bf16.msra.mxu0 %v3148
    %3597 = vmatpush.bf16.msra.mxu0 %v3145
    %3598 = vmatpush.bf16.msra.mxu0 %v3142
    %3599 = vmatpush.bf16.msra.mxu0 %v3139
    %3600 = vmatpush.bf16.msra.mxu0 %v3136
    %3601 = vmatpush.bf16.msra.mxu0 %v3133
    %3602 = vmatmul.bf16.gmra.mxu0 %v3593
    %v3603 = vpop.f32.mrf.mxu0
    %v3604 = vadd.f32 %v212, %v3603
    %v3605 = vpop.f32.mrf.mxu0
    %3606 = vdwg.mxu0
    %3607 = vmatpush.bf16.msra.mxu0 %v3155
    %3608 = vmatpush.bf16.msra.mxu0 %v3152
    %3609 = vmatpush.bf16.msra.mxu0 %v3149
    %3610 = vmatpush.bf16.msra.mxu0 %v3146
    %3611 = vmatpush.bf16.msra.mxu0 %v3143
    %3612 = vmatpush.bf16.msra.mxu0 %v3140
    %3613 = vmatpush.bf16.msra.mxu0 %v3137
    %3614 = vmatpush.bf16.msra.mxu0 %v3134
    %3615 = vmatmul.bf16.gmra.mxu0 %v3593
    %v3616 = vpop.f32.mrf.mxu0
    %v3617 = vadd.f32 %v213, %v3616
    %v3618 = vpop.f32.mrf.mxu0
    %3619 = vdwg.mxu0
    %3620 = vmatpush.bf16.msra.mxu0 %v3156
    %3621 = vmatpush.bf16.msra.mxu0 %v3153
    %3622 = vmatpush.bf16.msra.mxu0 %v3150
    %3623 = vmatpush.bf16.msra.mxu0 %v3147
    %3624 = vmatpush.bf16.msra.mxu0 %v3144
    %3625 = vmatpush.bf16.msra.mxu0 %v3141
    %3626 = vmatpush.bf16.msra.mxu0 %v3138
    %3627 = vmatpush.bf16.msra.mxu0 %v3135
    %3628 = vmatmul.bf16.gmra.mxu0 %v3593
    %v3629 = vpop.f32.mrf.mxu0
    %v3630 = vadd.f32 %v214, %v3629
    %v3631 = vpop.f32.mrf.mxu0
    %3632 = vdwg.mxu0
    %3633 = vmatpush.bf16.msra.mxu0 %v3354
    %3634 = vmatpush.bf16.msra.mxu0 %v3351
    %3635 = vmatpush.bf16.msra.mxu0 %v3348
    %3636 = vmatpush.bf16.msra.mxu0 %v3345
    %3637 = vmatpush.bf16.msra.mxu0 %v3342
    %3638 = vmatpush.bf16.msra.mxu0 %v3339
    %3639 = vmatpush.bf16.msra.mxu0 %v3336
    %3640 = vmatpush.bf16.msra.mxu0 %v3333
    %3641 = vmatmul.bf16.gmra.mxu0 %v3467
    %v3642 = vpop.f32.mrf.mxu0
    %v3643 = vadd.f32 %v228, %v3642
    %v3644 = vpop.f32.mrf.mxu0
    %3645 = vdwg.mxu0
    %3646 = vmatpush.bf16.msra.mxu0 %v3355
    %3647 = vmatpush.bf16.msra.mxu0 %v3352
    %3648 = vmatpush.bf16.msra.mxu0 %v3349
    %3649 = vmatpush.bf16.msra.mxu0 %v3346
    %3650 = vmatpush.bf16.msra.mxu0 %v3343
    %3651 = vmatpush.bf16.msra.mxu0 %v3340
    %3652 = vmatpush.bf16.msra.mxu0 %v3337
    %3653 = vmatpush.bf16.msra.mxu0 %v3334
    %3654 = vmatmul.bf16.gmra.mxu0 %v3467
    %v3655 = vpop.f32.mrf.mxu0
    %v3656 = vadd.f32 %v229, %v3655
    %v3657 = vpop.f32.mrf.mxu0
    %3658 = vdwg.mxu0
    %3659 = vmatpush.bf16.msra.mxu0 %v3356
    %3660 = vmatpush.bf16.msra.mxu0 %v3353
    %3661 = vmatpush.bf16.msra.mxu0 %v3350
    %3662 = vmatpush.bf16.msra.mxu0 %v3347
    %3663 = vmatpush.bf16.msra.mxu0 %v3344
    %3664 = vmatpush.bf16.msra.mxu0 %v3341
    %3665 = vmatpush.bf16.msra.mxu0 %v3338
    %3666 = vmatpush.bf16.msra.mxu0 %v3335
    %3667 = vmatmul.bf16.gmra.mxu0 %v3467
    %v3668 = vpop.f32.mrf.mxu0
    %v3669 = vadd.f32 %v230, %v3668
    %v3670 = vpop.f32.mrf.mxu0
    %3671 = vdwg.mxu0
    %v3672 = vadd.f32 %v3604, %v3643
    %v3673 = vadd.f32 %v3617, %v3656
    %v3674 = vxor.u32 %v3672, 2147483648
    %v3675 = vxor.u32 %v3673, 2147483648
    %v3676 = vmul.f32 %v3674, 1.442695
    %v3677 = vpow.pop %v3676
    %v3678 = vmul.f32 %v3675, 1.442695
    %v3679 = vpow.pop %v3678
    %v3680 = vadd.f32 %v3677, 1.0
    %v3681 = vadd.f32 %v3679, 1.0
    %v3682 = vrcp.pop %v3680
    %v3683 = vmul.f32 %v3680, %v3682
    %v3684 = vsub.f32 1.0, %v3683
    %v3685 = vmul.f32 %v3682, %v3684
    %v3686 = vadd.f32 %v3682, %v3685
    %vm3687 = vweird.f32 %v3680
    %vm3688 = vweird.f32 %v3682
    %vm3689 = vmor %vm3687, %vm3688
    %v3690 = vsel %vm3689, %v3682, %v3686
    %v3691 = vand.u32 2147483647, %v3680
    %vm3692 = vcmp.eq.f32.partialorder %v3691, 8.507059e+37
    %v3693 = vand.u32 %v3680, 2147483648
    %v3694 = vor.u32 1.1754944e-38, %v3693
    %v3695 = vsel %vm3692, %v3694, %v3690
    %v3696 = vmul.f32 1.0, %v3695
    %v3697 = vrcp.pop %v3681
    %v3698 = vmul.f32 %v3681, %v3697
    %v3699 = vsub.f32 1.0, %v3698
    %v3700 = vmul.f32 %v3697, %v3699
    %v3701 = vadd.f32 %v3697, %v3700
    %vm3702 = vweird.f32 %v3681
    %vm3703 = vweird.f32 %v3697
    %vm3704 = vmor %vm3702, %vm3703
    %v3705 = vsel %vm3704, %v3697, %v3701
    %v3706 = vand.u32 2147483647, %v3681
    %vm3707 = vcmp.eq.f32.partialorder %v3706, 8.507059e+37
    %v3708 = vand.u32 %v3681, 2147483648
    %v3709 = vor.u32 1.1754944e-38, %v3708
    %v3710 = vsel %vm3707, %v3709, %v3705
    %v3711 = vmul.f32 1.0, %v3710
    %v3712 = vmul.f32 %v3696, %v3669
    %v3713 = vadd.f32 %v3630, %v3712
    %v3714 = vtanh.pop %v3713
    %v3715 = vsub.f32 1.0, %v3711
    %v3716 = vmul.f32 %v3715, %v3714
    %v3717 = vmul.f32 %v3711, %v3466
    %v3718 = vadd.f32 %v3716, %v3717
    %v3719 = vpack.c.bf16 %v3718, %v3718
    %3720 = vmatpush.bf16.msra.mxu0 %v2708
    %3721 = vmatpush.bf16.msra.mxu0 %v2705
    %3722 = vmatpush.bf16.msra.mxu0 %v2702
    %3723 = vmatpush.bf16.msra.mxu0 %v2699
    %3724 = vmatpush.bf16.msra.mxu0 %v2696
    %3725 = vmatpush.bf16.msra.mxu0 %v2693
    %3726 = vmatpush.bf16.msra.mxu0 %v2690
    %3727 = vmatpush.bf16.msra.mxu0 %v2687
    %3728 = vmatmul.bf16.gmra.mxu0 %v3719
    %v3729 = vpop.f32.mrf.mxu0
    %v3730 = vadd.f32 %v204, %v3729
    %v3731 = vpop.f32.mrf.mxu0
    %3732 = vdwg.mxu0
    %3733 = vmatpush.bf16.msra.mxu0 %v2709
    %3734 = vmatpush.bf16.msra.mxu0 %v2706
    %3735 = vmatpush.bf16.msra.mxu0 %v2703
    %3736 = vmatpush.bf16.msra.mxu0 %v2700
    %3737 = vmatpush.bf16.msra.mxu0 %v2697
    %3738 = vmatpush.bf16.msra.mxu0 %v2694
    %3739 = vmatpush.bf16.msra.mxu0 %v2691
    %3740 = vmatpush.bf16.msra.mxu0 %v2688
    %3741 = vmatmul.bf16.gmra.mxu0 %v3719
    %v3742 = vpop.f32.mrf.mxu0
    %v3743 = vadd.f32 %v205, %v3742
    %v3744 = vpop.f32.mrf.mxu0
    %3745 = vdwg.mxu0
    %3746 = vmatpush.bf16.msra.mxu0 %v2710
    %3747 = vmatpush.bf16.msra.mxu0 %v2707
    %3748 = vmatpush.bf16.msra.mxu0 %v2704
    %3749 = vmatpush.bf16.msra.mxu0 %v2701
    %3750 = vmatpush.bf16.msra.mxu0 %v2698
    %3751 = vmatpush.bf16.msra.mxu0 %v2695
    %3752 = vmatpush.bf16.msra.mxu0 %v2692
    %3753 = vmatpush.bf16.msra.mxu0 %v2689
    %3754 = vmatmul.bf16.gmra.mxu0 %v3719
    %v3755 = vpop.f32.mrf.mxu0
    %v3756 = vadd.f32 %v206, %v3755
    %v3757 = vpop.f32.mrf.mxu0
    %3758 = vdwg.mxu0
    %3759 = vmatpush.bf16.msra.mxu0 %v2907
    %3760 = vmatpush.bf16.msra.mxu0 %v2904
    %3761 = vmatpush.bf16.msra.mxu0 %v2901
    %3762 = vmatpush.bf16.msra.mxu0 %v2898
    %3763 = vmatpush.bf16.msra.mxu0 %v2895
    %3764 = vmatpush.bf16.msra.mxu0 %v2892
    %3765 = vmatpush.bf16.msra.mxu0 %v2889
    %3766 = vmatpush.bf16.msra.mxu0 %v2886
    %3767 = vmatmul.bf16.gmra.mxu0 %v3593
    %v3768 = vpop.f32.mrf.mxu0
    %v3769 = vadd.f32 %v220, %v3768
    %v3770 = vpop.f32.mrf.mxu0
    %3771 = vdwg.mxu0
    %3772 = vmatpush.bf16.msra.mxu0 %v2908
    %3773 = vmatpush.bf16.msra.mxu0 %v2905
    %3774 = vmatpush.bf16.msra.mxu0 %v2902
    %3775 = vmatpush.bf16.msra.mxu0 %v2899
    %3776 = vmatpush.bf16.msra.mxu0 %v2896
    %3777 = vmatpush.bf16.msra.mxu0 %v2893
    %3778 = vmatpush.bf16.msra.mxu0 %v2890
    %3779 = vmatpush.bf16.msra.mxu0 %v2887
    %3780 = vmatmul.bf16.gmra.mxu0 %v3593
    %v3781 = vpop.f32.mrf.mxu0
    %v3782 = vadd.f32 %v221, %v3781
    %v3783 = vpop.f32.mrf.mxu0
    %3784 = vdwg.mxu0
    %3785 = vmatpush.bf16.msra.mxu0 %v2909
    %3786 = vmatpush.bf16.msra.mxu0 %v2906
    %3787 = vmatpush.bf16.msra.mxu0 %v2903
    %3788 = vmatpush.bf16.msra.mxu0 %v2900
    %3789 = vmatpush.bf16.msra.mxu0 %v2897
    %3790 = vmatpush.bf16.msra.mxu0 %v2894
    %3791 = vmatpush.bf16.msra.mxu0 %v2891
    %3792 = vmatpush.bf16.msra.mxu0 %v2888
    %3793 = vmatmul.bf16.gmra.mxu0 %v3593
    %v3794 = vpop.f32.mrf.mxu0
    %v3795 = vadd.f32 %v222, %v3794
    %v3796 = vpop.f32.mrf.mxu0
    %3797 = vdwg.mxu0
    %v3798 = vadd.f32 %v3730, %v3769
    %v3799 = vadd.f32 %v3743, %v3782
    %v3800 = vxor.u32 %v3798, 2147483648
    %v3801 = vxor.u32 %v3799, 2147483648
    %v3802 = vmul.f32 %v3800, 1.442695
    %v3803 = vpow.pop %v3802
    %v3804 = vmul.f32 %v3801, 1.442695
    %v3805 = vpow.pop %v3804
    %v3806 = vadd.f32 %v3803, 1.0
    %v3807 = vadd.f32 %v3805, 1.0
    %v3808 = vrcp.pop %v3806
    %v3809 = vmul.f32 %v3806, %v3808
    %v3810 = vsub.f32 1.0, %v3809
    %v3811 = vmul.f32 %v3808, %v3810
    %v3812 = vadd.f32 %v3808, %v3811
    %vm3813 = vweird.f32 %v3806
    %vm3814 = vweird.f32 %v3808
    %vm3815 = vmor %vm3813, %vm3814
    %v3816 = vsel %vm3815, %v3808, %v3812
    %v3817 = vand.u32 2147483647, %v3806
    %vm3818 = vcmp.eq.f32.partialorder %v3817, 8.507059e+37
    %v3819 = vand.u32 %v3806, 2147483648
    %v3820 = vor.u32 1.1754944e-38, %v3819
    %v3821 = vsel %vm3818, %v3820, %v3816
    %v3822 = vmul.f32 1.0, %v3821
    %v3823 = vrcp.pop %v3807
    %v3824 = vmul.f32 %v3807, %v3823
    %v3825 = vsub.f32 1.0, %v3824
    %v3826 = vmul.f32 %v3823, %v3825
    %v3827 = vadd.f32 %v3823, %v3826
    %vm3828 = vweird.f32 %v3807
    %vm3829 = vweird.f32 %v3823
    %vm3830 = vmor %vm3828, %vm3829
    %v3831 = vsel %vm3830, %v3823, %v3827
    %v3832 = vand.u32 2147483647, %v3807
    %vm3833 = vcmp.eq.f32.partialorder %v3832, 8.507059e+37
    %v3834 = vand.u32 %v3807, 2147483648
    %v3835 = vor.u32 1.1754944e-38, %v3834
    %v3836 = vsel %vm3833, %v3835, %v3831
    %v3837 = vmul.f32 1.0, %v3836
    %v3838 = vmul.f32 %v3822, %v3795
    %v3839 = vadd.f32 %v3756, %v3838
    %v3840 = vtanh.pop %v3839
    %v3841 = vsub.f32 1.0, %v3837
    %v3842 = vmul.f32 %v3841, %v3840
    %v3843 = vmul.f32 %v3837, %v3592
    %v3844 = vadd.f32 %v3842, %v3843
    %v3845 = vpack.c.bf16 %v3844, %v3844
    %3846 = vmatpush.bf16.msra.mxu0 %v3154
    %3847 = vmatpush.bf16.msra.mxu0 %v3151
    %3848 = vmatpush.bf16.msra.mxu0 %v3148
    %3849 = vmatpush.bf16.msra.mxu0 %v3145
    %3850 = vmatpush.bf16.msra.mxu0 %v3142
    %3851 = vmatpush.bf16.msra.mxu0 %v3139
    %3852 = vmatpush.bf16.msra.mxu0 %v3136
    %3853 = vmatpush.bf16.msra.mxu0 %v3133
    %3854 = vmatmul.bf16.gmra.mxu0 %v3845
    %v3855 = vpop.f32.mrf.mxu0
    %v3856 = vadd.f32 %v212, %v3855
    %v3857 = vpop.f32.mrf.mxu0
    %3858 = vdwg.mxu0
    %3859 = vmatpush.bf16.msra.mxu0 %v3155
    %3860 = vmatpush.bf16.msra.mxu0 %v3152
    %3861 = vmatpush.bf16.msra.mxu0 %v3149
    %3862 = vmatpush.bf16.msra.mxu0 %v3146
    %3863 = vmatpush.bf16.msra.mxu0 %v3143
    %3864 = vmatpush.bf16.msra.mxu0 %v3140
    %3865 = vmatpush.bf16.msra.mxu0 %v3137
    %3866 = vmatpush.bf16.msra.mxu0 %v3134
    %3867 = vmatmul.bf16.gmra.mxu0 %v3845
    %v3868 = vpop.f32.mrf.mxu0
    %v3869 = vadd.f32 %v213, %v3868
    %v3870 = vpop.f32.mrf.mxu0
    %3871 = vdwg.mxu0
    %3872 = vmatpush.bf16.msra.mxu0 %v3156
    %3873 = vmatpush.bf16.msra.mxu0 %v3153
    %3874 = vmatpush.bf16.msra.mxu0 %v3150
    %3875 = vmatpush.bf16.msra.mxu0 %v3147
    %3876 = vmatpush.bf16.msra.mxu0 %v3144
    %3877 = vmatpush.bf16.msra.mxu0 %v3141
    %3878 = vmatpush.bf16.msra.mxu0 %v3138
    %3879 = vmatpush.bf16.msra.mxu0 %v3135
    %3880 = vmatmul.bf16.gmra.mxu0 %v3845
    %v3881 = vpop.f32.mrf.mxu0
    %v3882 = vadd.f32 %v214, %v3881
    %v3883 = vpop.f32.mrf.mxu0
    %3884 = vdwg.mxu0
    %3885 = vmatpush.bf16.msra.mxu0 %v3354
    %3886 = vmatpush.bf16.msra.mxu0 %v3351
    %3887 = vmatpush.bf16.msra.mxu0 %v3348
    %3888 = vmatpush.bf16.msra.mxu0 %v3345
    %3889 = vmatpush.bf16.msra.mxu0 %v3342
    %3890 = vmatpush.bf16.msra.mxu0 %v3339
    %3891 = vmatpush.bf16.msra.mxu0 %v3336
    %3892 = vmatpush.bf16.msra.mxu0 %v3333
    %3893 = vmatmul.bf16.gmra.mxu0 %v3719
    %v3894 = vpop.f32.mrf.mxu0
    %v3895 = vadd.f32 %v228, %v3894
    %v3896 = vpop.f32.mrf.mxu0
    %3897 = vdwg.mxu0
    %3898 = vmatpush.bf16.msra.mxu0 %v3355
    %3899 = vmatpush.bf16.msra.mxu0 %v3352
    %3900 = vmatpush.bf16.msra.mxu0 %v3349
    %3901 = vmatpush.bf16.msra.mxu0 %v3346
    %3902 = vmatpush.bf16.msra.mxu0 %v3343
    %3903 = vmatpush.bf16.msra.mxu0 %v3340
    %3904 = vmatpush.bf16.msra.mxu0 %v3337
    %3905 = vmatpush.bf16.msra.mxu0 %v3334
    %3906 = vmatmul.bf16.gmra.mxu0 %v3719
    %v3907 = vpop.f32.mrf.mxu0
    %v3908 = vadd.f32 %v229, %v3907
    %v3909 = vpop.f32.mrf.mxu0
    %3910 = vdwg.mxu0
    %3911 = vmatpush.bf16.msra.mxu0 %v3356
    %3912 = vmatpush.bf16.msra.mxu0 %v3353
    %3913 = vmatpush.bf16.msra.mxu0 %v3350
    %3914 = vmatpush.bf16.msra.mxu0 %v3347
    %3915 = vmatpush.bf16.msra.mxu0 %v3344
    %3916 = vmatpush.bf16.msra.mxu0 %v3341
    %3917 = vmatpush.bf16.msra.mxu0 %v3338
    %3918 = vmatpush.bf16.msra.mxu0 %v3335
    %3919 = vmatmul.bf16.gmra.mxu0 %v3719
    %v3920 = vpop.f32.mrf.mxu0
    %v3921 = vadd.f32 %v230, %v3920
    %v3922 = vpop.f32.mrf.mxu0
    %3923 = vdwg.mxu0
    %v3924 = vadd.f32 %v3856, %v3895
    %v3925 = vadd.f32 %v3869, %v3908
    %v3926 = vxor.u32 %v3924, 2147483648
    %v3927 = vxor.u32 %v3925, 2147483648
    %v3928 = vmul.f32 %v3926, 1.442695
    %v3929 = vpow.pop %v3928
    %v3930 = vmul.f32 %v3927, 1.442695
    %v3931 = vpow.pop %v3930
    %v3932 = vadd.f32 %v3929, 1.0
    %v3933 = vadd.f32 %v3931, 1.0
    %v3934 = vrcp.pop %v3932
    %v3935 = vmul.f32 %v3932, %v3934
    %v3936 = vsub.f32 1.0, %v3935
    %v3937 = vmul.f32 %v3934, %v3936
    %v3938 = vadd.f32 %v3934, %v3937
    %vm3939 = vweird.f32 %v3932
    %vm3940 = vweird.f32 %v3934
    %vm3941 = vmor %vm3939, %vm3940
    %v3942 = vsel %vm3941, %v3934, %v3938
    %v3943 = vand.u32 2147483647, %v3932
    %vm3944 = vcmp.eq.f32.partialorder %v3943, 8.507059e+37
    %v3945 = vand.u32 %v3932, 2147483648
    %v3946 = vor.u32 1.1754944e-38, %v3945
    %v3947 = vsel %vm3944, %v3946, %v3942
    %v3948 = vmul.f32 1.0, %v3947
    %v3949 = vrcp.pop %v3933
    %v3950 = vmul.f32 %v3933, %v3949
    %v3951 = vsub.f32 1.0, %v3950
    %v3952 = vmul.f32 %v3949, %v3951
    %v3953 = vadd.f32 %v3949, %v3952
    %vm3954 = vweird.f32 %v3933
    %vm3955 = vweird.f32 %v3949
    %vm3956 = vmor %vm3954, %vm3955
    %v3957 = vsel %vm3956, %v3949, %v3953
    %v3958 = vand.u32 2147483647, %v3933
    %vm3959 = vcmp.eq.f32.partialorder %v3958, 8.507059e+37
    %v3960 = vand.u32 %v3933, 2147483648
    %v3961 = vor.u32 1.1754944e-38, %v3960
    %v3962 = vsel %vm3959, %v3961, %v3957
    %v3963 = vmul.f32 1.0, %v3962
    %v3964 = vmul.f32 %v3948, %v3921
    %v3965 = vadd.f32 %v3882, %v3964
    %v3966 = vtanh.pop %v3965
    %v3967 = vsub.f32 1.0, %v3963
    %v3968 = vmul.f32 %v3967, %v3966
    %v3969 = vmul.f32 %v3963, %v3718
    %v3970 = vadd.f32 %v3968, %v3969
    %v3971 = vpack.c.bf16 %v3970, %v3970
    %3972 = vmatpush.bf16.msra.mxu0 %v2708
    %3973 = vmatpush.bf16.msra.mxu0 %v2705
    %3974 = vmatpush.bf16.msra.mxu0 %v2702
    %3975 = vmatpush.bf16.msra.mxu0 %v2699
    %3976 = vmatpush.bf16.msra.mxu0 %v2696
    %3977 = vmatpush.bf16.msra.mxu0 %v2693
    %3978 = vmatpush.bf16.msra.mxu0 %v2690
    %3979 = vmatpush.bf16.msra.mxu0 %v2687
    %3980 = vmatmul.bf16.gmra.mxu0 %v3971
    %v3981 = vpop.f32.mrf.mxu0
    %v3982 = vadd.f32 %v204, %v3981
    %v3983 = vpop.f32.mrf.mxu0
    %3984 = vdwg.mxu0
    %3985 = vmatpush.bf16.msra.mxu0 %v2709
    %3986 = vmatpush.bf16.msra.mxu0 %v2706
    %3987 = vmatpush.bf16.msra.mxu0 %v2703
    %3988 = vmatpush.bf16.msra.mxu0 %v2700
    %3989 = vmatpush.bf16.msra.mxu0 %v2697
    %3990 = vmatpush.bf16.msra.mxu0 %v2694
    %3991 = vmatpush.bf16.msra.mxu0 %v2691
    %3992 = vmatpush.bf16.msra.mxu0 %v2688
    %3993 = vmatmul.bf16.gmra.mxu0 %v3971
    %v3994 = vpop.f32.mrf.mxu0
    %v3995 = vadd.f32 %v205, %v3994
    %v3996 = vpop.f32.mrf.mxu0
    %3997 = vdwg.mxu0
    %3998 = vmatpush.bf16.msra.mxu0 %v2710
    %3999 = vmatpush.bf16.msra.mxu0 %v2707
    %4000 = vmatpush.bf16.msra.mxu0 %v2704
    %4001 = vmatpush.bf16.msra.mxu0 %v2701
    %4002 = vmatpush.bf16.msra.mxu0 %v2698
    %4003 = vmatpush.bf16.msra.mxu0 %v2695
    %4004 = vmatpush.bf16.msra.mxu0 %v2692
    %4005 = vmatpush.bf16.msra.mxu0 %v2689
    %4006 = vmatmul.bf16.gmra.mxu0 %v3971
    %v4007 = vpop.f32.mrf.mxu0
    %v4008 = vadd.f32 %v206, %v4007
    %v4009 = vpop.f32.mrf.mxu0
    %4010 = vdwg.mxu0
    %4011 = vmatpush.bf16.msra.mxu0 %v2907
    %4012 = vmatpush.bf16.msra.mxu0 %v2904
    %4013 = vmatpush.bf16.msra.mxu0 %v2901
    %4014 = vmatpush.bf16.msra.mxu0 %v2898
    %4015 = vmatpush.bf16.msra.mxu0 %v2895
    %4016 = vmatpush.bf16.msra.mxu0 %v2892
    %4017 = vmatpush.bf16.msra.mxu0 %v2889
    %4018 = vmatpush.bf16.msra.mxu0 %v2886
    %4019 = vmatmul.bf16.gmra.mxu0 %v3845
    %v4020 = vpop.f32.mrf.mxu0
    %v4021 = vadd.f32 %v220, %v4020
    %v4022 = vpop.f32.mrf.mxu0
    %4023 = vdwg.mxu0
    %4024 = vmatpush.bf16.msra.mxu0 %v2908
    %4025 = vmatpush.bf16.msra.mxu0 %v2905
    %4026 = vmatpush.bf16.msra.mxu0 %v2902
    %4027 = vmatpush.bf16.msra.mxu0 %v2899
    %4028 = vmatpush.bf16.msra.mxu0 %v2896
    %4029 = vmatpush.bf16.msra.mxu0 %v2893
    %4030 = vmatpush.bf16.msra.mxu0 %v2890
    %4031 = vmatpush.bf16.msra.mxu0 %v2887
    %4032 = vmatmul.bf16.gmra.mxu0 %v3845
    %v4033 = vpop.f32.mrf.mxu0
    %v4034 = vadd.f32 %v221, %v4033
    %v4035 = vpop.f32.mrf.mxu0
    %4036 = vdwg.mxu0
    %4037 = vmatpush.bf16.msra.mxu0 %v2909
    %4038 = vmatpush.bf16.msra.mxu0 %v2906
    %4039 = vmatpush.bf16.msra.mxu0 %v2903
    %4040 = vmatpush.bf16.msra.mxu0 %v2900
    %4041 = vmatpush.bf16.msra.mxu0 %v2897
    %4042 = vmatpush.bf16.msra.mxu0 %v2894
    %4043 = vmatpush.bf16.msra.mxu0 %v2891
    %4044 = vmatpush.bf16.msra.mxu0 %v2888
    %4045 = vmatmul.bf16.gmra.mxu0 %v3845
    %v4046 = vpop.f32.mrf.mxu0
    %v4047 = vadd.f32 %v222, %v4046
    %v4048 = vpop.f32.mrf.mxu0
    %4049 = vdwg.mxu0
    %v4050 = vadd.f32 %v3982, %v4021
    %v4051 = vadd.f32 %v3995, %v4034
    %v4052 = vxor.u32 %v4050, 2147483648
    %v4053 = vxor.u32 %v4051, 2147483648
    %v4054 = vmul.f32 %v4052, 1.442695
    %v4055 = vpow.pop %v4054
    %v4056 = vmul.f32 %v4053, 1.442695
    %v4057 = vpow.pop %v4056
    %v4058 = vadd.f32 %v4055, 1.0
    %v4059 = vadd.f32 %v4057, 1.0
    %v4060 = vrcp.pop %v4058
    %v4061 = vmul.f32 %v4058, %v4060
    %v4062 = vsub.f32 1.0, %v4061
    %v4063 = vmul.f32 %v4060, %v4062
    %v4064 = vadd.f32 %v4060, %v4063
    %vm4065 = vweird.f32 %v4058
    %vm4066 = vweird.f32 %v4060
    %vm4067 = vmor %vm4065, %vm4066
    %v4068 = vsel %vm4067, %v4060, %v4064
    %v4069 = vand.u32 2147483647, %v4058
    %vm4070 = vcmp.eq.f32.partialorder %v4069, 8.507059e+37
    %v4071 = vand.u32 %v4058, 2147483648
    %v4072 = vor.u32 1.1754944e-38, %v4071
    %v4073 = vsel %vm4070, %v4072, %v4068
    %v4074 = vmul.f32 1.0, %v4073
    %v4075 = vrcp.pop %v4059
    %v4076 = vmul.f32 %v4059, %v4075
    %v4077 = vsub.f32 1.0, %v4076
    %v4078 = vmul.f32 %v4075, %v4077
    %v4079 = vadd.f32 %v4075, %v4078
    %vm4080 = vweird.f32 %v4059
    %vm4081 = vweird.f32 %v4075
    %vm4082 = vmor %vm4080, %vm4081
    %v4083 = vsel %vm4082, %v4075, %v4079
    %v4084 = vand.u32 2147483647, %v4059
    %vm4085 = vcmp.eq.f32.partialorder %v4084, 8.507059e+37
    %v4086 = vand.u32 %v4059, 2147483648
    %v4087 = vor.u32 1.1754944e-38, %v4086
    %v4088 = vsel %vm4085, %v4087, %v4083
    %v4089 = vmul.f32 1.0, %v4088
    %v4090 = vmul.f32 %v4074, %v4047
    %v4091 = vadd.f32 %v4008, %v4090
    %v4092 = vtanh.pop %v4091
    %v4093 = vsub.f32 1.0, %v4089
    %v4094 = vmul.f32 %v4093, %v4092
    %v4095 = vmul.f32 %v4089, %v3844
    %v4096 = vadd.f32 %v4094, %v4095
    %v4097 = vpack.c.bf16 %v4096, %v4096
    %4098 = vmatpush.bf16.msra.mxu0 %v3154
    %4099 = vmatpush.bf16.msra.mxu0 %v3151
    %4100 = vmatpush.bf16.msra.mxu0 %v3148
    %4101 = vmatpush.bf16.msra.mxu0 %v3145
    %4102 = vmatpush.bf16.msra.mxu0 %v3142
    %4103 = vmatpush.bf16.msra.mxu0 %v3139
    %4104 = vmatpush.bf16.msra.mxu0 %v3136
    %4105 = vmatpush.bf16.msra.mxu0 %v3133
    %4106 = vmatmul.bf16.gmra.mxu0 %v4097
    %v4107 = vpop.f32.mrf.mxu0
    %v4108 = vadd.f32 %v212, %v4107
    %v4109 = vpop.f32.mrf.mxu0
    %4110 = vdwg.mxu0
    %4111 = vmatpush.bf16.msra.mxu0 %v3155
    %4112 = vmatpush.bf16.msra.mxu0 %v3152
    %4113 = vmatpush.bf16.msra.mxu0 %v3149
    %4114 = vmatpush.bf16.msra.mxu0 %v3146
    %4115 = vmatpush.bf16.msra.mxu0 %v3143
    %4116 = vmatpush.bf16.msra.mxu0 %v3140
    %4117 = vmatpush.bf16.msra.mxu0 %v3137
    %4118 = vmatpush.bf16.msra.mxu0 %v3134
    %4119 = vmatmul.bf16.gmra.mxu0 %v4097
    %v4120 = vpop.f32.mrf.mxu0
    %v4121 = vadd.f32 %v213, %v4120
    %v4122 = vpop.f32.mrf.mxu0
    %4123 = vdwg.mxu0
    %4124 = vmatpush.bf16.msra.mxu0 %v3156
    %4125 = vmatpush.bf16.msra.mxu0 %v3153
    %4126 = vmatpush.bf16.msra.mxu0 %v3150
    %4127 = vmatpush.bf16.msra.mxu0 %v3147
    %4128 = vmatpush.bf16.msra.mxu0 %v3144
    %4129 = vmatpush.bf16.msra.mxu0 %v3141
    %4130 = vmatpush.bf16.msra.mxu0 %v3138
    %4131 = vmatpush.bf16.msra.mxu0 %v3135
    %4132 = vmatmul.bf16.gmra.mxu0 %v4097
    %v4133 = vpop.f32.mrf.mxu0
    %v4134 = vadd.f32 %v214, %v4133
    %v4135 = vpop.f32.mrf.mxu0
    %4136 = vdwg.mxu0
    %4137 = vmatpush.bf16.msra.mxu0 %v3354
    %4138 = vmatpush.bf16.msra.mxu0 %v3351
    %4139 = vmatpush.bf16.msra.mxu0 %v3348
    %4140 = vmatpush.bf16.msra.mxu0 %v3345
    %4141 = vmatpush.bf16.msra.mxu0 %v3342
    %4142 = vmatpush.bf16.msra.mxu0 %v3339
    %4143 = vmatpush.bf16.msra.mxu0 %v3336
    %4144 = vmatpush.bf16.msra.mxu0 %v3333
    %4145 = vmatmul.bf16.gmra.mxu0 %v3971
    %v4146 = vpop.f32.mrf.mxu0
    %v4147 = vadd.f32 %v228, %v4146
    %v4148 = vpop.f32.mrf.mxu0
    %4149 = vdwg.mxu0
    %4150 = vmatpush.bf16.msra.mxu0 %v3355
    %4151 = vmatpush.bf16.msra.mxu0 %v3352
    %4152 = vmatpush.bf16.msra.mxu0 %v3349
    %4153 = vmatpush.bf16.msra.mxu0 %v3346
    %4154 = vmatpush.bf16.msra.mxu0 %v3343
    %4155 = vmatpush.bf16.msra.mxu0 %v3340
    %4156 = vmatpush.bf16.msra.mxu0 %v3337
    %4157 = vmatpush.bf16.msra.mxu0 %v3334
    %4158 = vmatmul.bf16.gmra.mxu0 %v3971
    %v4159 = vpop.f32.mrf.mxu0
    %v4160 = vadd.f32 %v229, %v4159
    %v4161 = vpop.f32.mrf.mxu0
    %4162 = vdwg.mxu0
    %4163 = vmatpush.bf16.msra.mxu0 %v3356
    %4164 = vmatpush.bf16.msra.mxu0 %v3353
    %4165 = vmatpush.bf16.msra.mxu0 %v3350
    %4166 = vmatpush.bf16.msra.mxu0 %v3347
    %4167 = vmatpush.bf16.msra.mxu0 %v3344
    %4168 = vmatpush.bf16.msra.mxu0 %v3341
    %4169 = vmatpush.bf16.msra.mxu0 %v3338
    %4170 = vmatpush.bf16.msra.mxu0 %v3335
    %4171 = vmatmul.bf16.gmra.mxu0 %v3971
    %v4172 = vpop.f32.mrf.mxu0
    %v4173 = vadd.f32 %v230, %v4172
    %v4174 = vpop.f32.mrf.mxu0
    %4175 = vdwg.mxu0
    %v4176 = vadd.f32 %v4108, %v4147
    %v4177 = vadd.f32 %v4121, %v4160
    %v4178 = vxor.u32 %v4176, 2147483648
    %v4179 = vxor.u32 %v4177, 2147483648
    %v4180 = vmul.f32 %v4178, 1.442695
    %v4181 = vpow.pop %v4180
    %v4182 = vmul.f32 %v4179, 1.442695
    %v4183 = vpow.pop %v4182
    %v4184 = vadd.f32 %v4181, 1.0
    %v4185 = vadd.f32 %v4183, 1.0
    %v4186 = vrcp.pop %v4184
    %v4187 = vmul.f32 %v4184, %v4186
    %v4188 = vsub.f32 1.0, %v4187
    %v4189 = vmul.f32 %v4186, %v4188
    %v4190 = vadd.f32 %v4186, %v4189
    %vm4191 = vweird.f32 %v4184
    %vm4192 = vweird.f32 %v4186
    %vm4193 = vmor %vm4191, %vm4192
    %v4194 = vsel %vm4193, %v4186, %v4190
    %v4195 = vand.u32 2147483647, %v4184
    %vm4196 = vcmp.eq.f32.partialorder %v4195, 8.507059e+37
    %v4197 = vand.u32 %v4184, 2147483648
    %v4198 = vor.u32 1.1754944e-38, %v4197
    %v4199 = vsel %vm4196, %v4198, %v4194
    %v4200 = vmul.f32 1.0, %v4199
    %v4201 = vrcp.pop %v4185
    %v4202 = vmul.f32 %v4185, %v4201
    %v4203 = vsub.f32 1.0, %v4202
    %v4204 = vmul.f32 %v4201, %v4203
    %v4205 = vadd.f32 %v4201, %v4204
    %vm4206 = vweird.f32 %v4185
    %vm4207 = vweird.f32 %v4201
    %vm4208 = vmor %vm4206, %vm4207
    %v4209 = vsel %vm4208, %v4201, %v4205
    %v4210 = vand.u32 2147483647, %v4185
    %vm4211 = vcmp.eq.f32.partialorder %v4210, 8.507059e+37
    %v4212 = vand.u32 %v4185, 2147483648
    %v4213 = vor.u32 1.1754944e-38, %v4212
    %v4214 = vsel %vm4211, %v4213, %v4209
    %v4215 = vmul.f32 1.0, %v4214
    %v4216 = vmul.f32 %v4200, %v4173
    %v4217 = vadd.f32 %v4134, %v4216
    %v4218 = vtanh.pop %v4217
    %v4219 = vsub.f32 1.0, %v4215
    %v4220 = vmul.f32 %v4219, %v4218
    %v4221 = vmul.f32 %v4215, %v3970
    %v4222 = vadd.f32 %v4220, %v4221
    %v4223 = vpack.c.bf16 %v4222, %v4222
    %4224 = vmatpush.bf16.msra.mxu0 %v2708
    %4225 = vmatpush.bf16.msra.mxu0 %v2705
    %4226 = vmatpush.bf16.msra.mxu0 %v2702
    %4227 = vmatpush.bf16.msra.mxu0 %v2699
    %4228 = vmatpush.bf16.msra.mxu0 %v2696
    %4229 = vmatpush.bf16.msra.mxu0 %v2693
    %4230 = vmatpush.bf16.msra.mxu0 %v2690
    %4231 = vmatpush.bf16.msra.mxu0 %v2687
    %4232 = vmatmul.bf16.gmra.mxu0 %v4223
    %v4233 = vpop.f32.mrf.mxu0
    %v4234 = vadd.f32 %v204, %v4233
    %v4235 = vpop.f32.mrf.mxu0
    %4236 = vdwg.mxu0
    %4237 = vmatpush.bf16.msra.mxu0 %v2709
    %4238 = vmatpush.bf16.msra.mxu0 %v2706
    %4239 = vmatpush.bf16.msra.mxu0 %v2703
    %4240 = vmatpush.bf16.msra.mxu0 %v2700
    %4241 = vmatpush.bf16.msra.mxu0 %v2697
    %4242 = vmatpush.bf16.msra.mxu0 %v2694
    %4243 = vmatpush.bf16.msra.mxu0 %v2691
    %4244 = vmatpush.bf16.msra.mxu0 %v2688
    %4245 = vmatmul.bf16.gmra.mxu0 %v4223
    %v4246 = vpop.f32.mrf.mxu0
    %v4247 = vadd.f32 %v205, %v4246
    %v4248 = vpop.f32.mrf.mxu0
    %4249 = vdwg.mxu0
    %4250 = vmatpush.bf16.msra.mxu0 %v2710
    %4251 = vmatpush.bf16.msra.mxu0 %v2707
    %4252 = vmatpush.bf16.msra.mxu0 %v2704
    %4253 = vmatpush.bf16.msra.mxu0 %v2701
    %4254 = vmatpush.bf16.msra.mxu0 %v2698
    %4255 = vmatpush.bf16.msra.mxu0 %v2695
    %4256 = vmatpush.bf16.msra.mxu0 %v2692
    %4257 = vmatpush.bf16.msra.mxu0 %v2689
    %4258 = vmatmul.bf16.gmra.mxu0 %v4223
    %v4259 = vpop.f32.mrf.mxu0
    %v4260 = vadd.f32 %v206, %v4259
    %v4261 = vpop.f32.mrf.mxu0
    %4262 = vdwg.mxu0
    %4263 = vmatpush.bf16.msra.mxu0 %v2907
    %4264 = vmatpush.bf16.msra.mxu0 %v2904
    %4265 = vmatpush.bf16.msra.mxu0 %v2901
    %4266 = vmatpush.bf16.msra.mxu0 %v2898
    %4267 = vmatpush.bf16.msra.mxu0 %v2895
    %4268 = vmatpush.bf16.msra.mxu0 %v2892
    %4269 = vmatpush.bf16.msra.mxu0 %v2889
    %4270 = vmatpush.bf16.msra.mxu0 %v2886
    %4271 = vmatmul.bf16.gmra.mxu0 %v4097
    %v4272 = vpop.f32.mrf.mxu0
    %v4273 = vadd.f32 %v220, %v4272
    %v4274 = vpop.f32.mrf.mxu0
    %4275 = vdwg.mxu0
    %4276 = vmatpush.bf16.msra.mxu0 %v2908
    %4277 = vmatpush.bf16.msra.mxu0 %v2905
    %4278 = vmatpush.bf16.msra.mxu0 %v2902
    %4279 = vmatpush.bf16.msra.mxu0 %v2899
    %4280 = vmatpush.bf16.msra.mxu0 %v2896
    %4281 = vmatpush.bf16.msra.mxu0 %v2893
    %4282 = vmatpush.bf16.msra.mxu0 %v2890
    %4283 = vmatpush.bf16.msra.mxu0 %v2887
    %4284 = vmatmul.bf16.gmra.mxu0 %v4097
    %v4285 = vpop.f32.mrf.mxu0
    %v4286 = vadd.f32 %v221, %v4285
    %v4287 = vpop.f32.mrf.mxu0
    %4288 = vdwg.mxu0
    %4289 = vmatpush.bf16.msra.mxu0 %v2909
    %4290 = vmatpush.bf16.msra.mxu0 %v2906
    %4291 = vmatpush.bf16.msra.mxu0 %v2903
    %4292 = vmatpush.bf16.msra.mxu0 %v2900
    %4293 = vmatpush.bf16.msra.mxu0 %v2897
    %4294 = vmatpush.bf16.msra.mxu0 %v2894
    %4295 = vmatpush.bf16.msra.mxu0 %v2891
    %4296 = vmatpush.bf16.msra.mxu0 %v2888
    %4297 = vmatmul.bf16.gmra.mxu0 %v4097
    %v4298 = vpop.f32.mrf.mxu0
    %v4299 = vadd.f32 %v222, %v4298
    %v4300 = vpop.f32.mrf.mxu0
    %4301 = vdwg.mxu0
    %v4302 = vadd.f32 %v4234, %v4273
    %v4303 = vadd.f32 %v4247, %v4286
    %v4304 = vxor.u32 %v4302, 2147483648
    %v4305 = vxor.u32 %v4303, 2147483648
    %v4306 = vmul.f32 %v4304, 1.442695
    %v4307 = vpow.pop %v4306
    %v4308 = vmul.f32 %v4305, 1.442695
    %v4309 = vpow.pop %v4308
    %v4310 = vadd.f32 %v4307, 1.0
    %v4311 = vadd.f32 %v4309, 1.0
    %v4312 = vrcp.pop %v4310
    %v4313 = vmul.f32 %v4310, %v4312
    %v4314 = vsub.f32 1.0, %v4313
    %v4315 = vmul.f32 %v4312, %v4314
    %v4316 = vadd.f32 %v4312, %v4315
    %vm4317 = vweird.f32 %v4310
    %vm4318 = vweird.f32 %v4312
    %vm4319 = vmor %vm4317, %vm4318
    %v4320 = vsel %vm4319, %v4312, %v4316
    %v4321 = vand.u32 2147483647, %v4310
    %vm4322 = vcmp.eq.f32.partialorder %v4321, 8.507059e+37
    %v4323 = vand.u32 %v4310, 2147483648
    %v4324 = vor.u32 1.1754944e-38, %v4323
    %v4325 = vsel %vm4322, %v4324, %v4320
    %v4326 = vmul.f32 1.0, %v4325
    %v4327 = vrcp.pop %v4311
    %v4328 = vmul.f32 %v4311, %v4327
    %v4329 = vsub.f32 1.0, %v4328
    %v4330 = vmul.f32 %v4327, %v4329
    %v4331 = vadd.f32 %v4327, %v4330
    %vm4332 = vweird.f32 %v4311
    %vm4333 = vweird.f32 %v4327
    %vm4334 = vmor %vm4332, %vm4333
    %v4335 = vsel %vm4334, %v4327, %v4331
    %v4336 = vand.u32 2147483647, %v4311
    %vm4337 = vcmp.eq.f32.partialorder %v4336, 8.507059e+37
    %v4338 = vand.u32 %v4311, 2147483648
    %v4339 = vor.u32 1.1754944e-38, %v4338
    %v4340 = vsel %vm4337, %v4339, %v4335
    %v4341 = vmul.f32 1.0, %v4340
    %v4342 = vmul.f32 %v4326, %v4299
    %v4343 = vadd.f32 %v4260, %v4342
    %v4344 = vtanh.pop %v4343
    %v4345 = vsub.f32 1.0, %v4341
    %v4346 = vmul.f32 %v4345, %v4344
    %v4347 = vmul.f32 %v4341, %v4096
    %v4348 = vadd.f32 %v4346, %v4347
    %v4349 = vpack.c.bf16 %v4348, %v4348
    %4350 = vmatpush.bf16.msra.mxu0 %v3154
    %4351 = vmatpush.bf16.msra.mxu0 %v3151
    %4352 = vmatpush.bf16.msra.mxu0 %v3148
    %4353 = vmatpush.bf16.msra.mxu0 %v3145
    %4354 = vmatpush.bf16.msra.mxu0 %v3142
    %4355 = vmatpush.bf16.msra.mxu0 %v3139
    %4356 = vmatpush.bf16.msra.mxu0 %v3136
    %4357 = vmatpush.bf16.msra.mxu0 %v3133
    %4358 = vmatmul.bf16.gmra.mxu0 %v4349
    %v4359 = vpop.f32.mrf.mxu0
    %v4360 = vadd.f32 %v212, %v4359
    %v4361 = vpop.f32.mrf.mxu0
    %4362 = vdwg.mxu0
    %4363 = vmatpush.bf16.msra.mxu0 %v3155
    %4364 = vmatpush.bf16.msra.mxu0 %v3152
    %4365 = vmatpush.bf16.msra.mxu0 %v3149
    %4366 = vmatpush.bf16.msra.mxu0 %v3146
    %4367 = vmatpush.bf16.msra.mxu0 %v3143
    %4368 = vmatpush.bf16.msra.mxu0 %v3140
    %4369 = vmatpush.bf16.msra.mxu0 %v3137
    %4370 = vmatpush.bf16.msra.mxu0 %v3134
    %4371 = vmatmul.bf16.gmra.mxu0 %v4349
    %v4372 = vpop.f32.mrf.mxu0
    %v4373 = vadd.f32 %v213, %v4372
    %v4374 = vpop.f32.mrf.mxu0
    %4375 = vdwg.mxu0
    %4376 = vmatpush.bf16.msra.mxu0 %v3156
    %4377 = vmatpush.bf16.msra.mxu0 %v3153
    %4378 = vmatpush.bf16.msra.mxu0 %v3150
    %4379 = vmatpush.bf16.msra.mxu0 %v3147
    %4380 = vmatpush.bf16.msra.mxu0 %v3144
    %4381 = vmatpush.bf16.msra.mxu0 %v3141
    %4382 = vmatpush.bf16.msra.mxu0 %v3138
    %4383 = vmatpush.bf16.msra.mxu0 %v3135
    %4384 = vmatmul.bf16.gmra.mxu0 %v4349
    %v4385 = vpop.f32.mrf.mxu0
    %v4386 = vadd.f32 %v214, %v4385
    %v4387 = vpop.f32.mrf.mxu0
    %4388 = vdwg.mxu0
    %4389 = vmatpush.bf16.msra.mxu0 %v3354
    %4390 = vmatpush.bf16.msra.mxu0 %v3351
    %4391 = vmatpush.bf16.msra.mxu0 %v3348
    %4392 = vmatpush.bf16.msra.mxu0 %v3345
    %4393 = vmatpush.bf16.msra.mxu0 %v3342
    %4394 = vmatpush.bf16.msra.mxu0 %v3339
    %4395 = vmatpush.bf16.msra.mxu0 %v3336
    %4396 = vmatpush.bf16.msra.mxu0 %v3333
    %4397 = vmatmul.bf16.gmra.mxu0 %v4223
    %v4398 = vpop.f32.mrf.mxu0
    %v4399 = vadd.f32 %v228, %v4398
    %v4400 = vpop.f32.mrf.mxu0
    %4401 = vdwg.mxu0
    %4402 = vmatpush.bf16.msra.mxu0 %v3355
    %4403 = vmatpush.bf16.msra.mxu0 %v3352
    %4404 = vmatpush.bf16.msra.mxu0 %v3349
    %4405 = vmatpush.bf16.msra.mxu0 %v3346
    %4406 = vmatpush.bf16.msra.mxu0 %v3343
    %4407 = vmatpush.bf16.msra.mxu0 %v3340
    %4408 = vmatpush.bf16.msra.mxu0 %v3337
    %4409 = vmatpush.bf16.msra.mxu0 %v3334
    %4410 = vmatmul.bf16.gmra.mxu0 %v4223
    %v4411 = vpop.f32.mrf.mxu0
    %v4412 = vadd.f32 %v229, %v4411
    %v4413 = vpop.f32.mrf.mxu0
    %4414 = vdwg.mxu0
    %4415 = vmatpush.bf16.msra.mxu0 %v3356
    %4416 = vmatpush.bf16.msra.mxu0 %v3353
    %4417 = vmatpush.bf16.msra.mxu0 %v3350
    %4418 = vmatpush.bf16.msra.mxu0 %v3347
    %4419 = vmatpush.bf16.msra.mxu0 %v3344
    %4420 = vmatpush.bf16.msra.mxu0 %v3341
    %4421 = vmatpush.bf16.msra.mxu0 %v3338
    %4422 = vmatpush.bf16.msra.mxu0 %v3335
    %4423 = vmatmul.bf16.gmra.mxu0 %v4223
    %v4424 = vpop.f32.mrf.mxu0
    %v4425 = vadd.f32 %v230, %v4424
    %v4426 = vpop.f32.mrf.mxu0
    %4427 = vdwg.mxu0
    %v4428 = vadd.f32 %v4360, %v4399
    %v4429 = vadd.f32 %v4373, %v4412
    %v4430 = vxor.u32 %v4428, 2147483648
    %v4431 = vxor.u32 %v4429, 2147483648
    %v4432 = vmul.f32 %v4430, 1.442695
    %v4433 = vpow.pop %v4432
    %v4434 = vmul.f32 %v4431, 1.442695
    %v4435 = vpow.pop %v4434
    %v4436 = vadd.f32 %v4433, 1.0
    %v4437 = vadd.f32 %v4435, 1.0
    %v4438 = vrcp.pop %v4436
    %v4439 = vmul.f32 %v4436, %v4438
    %v4440 = vsub.f32 1.0, %v4439
    %v4441 = vmul.f32 %v4438, %v4440
    %v4442 = vadd.f32 %v4438, %v4441
    %vm4443 = vweird.f32 %v4436
    %vm4444 = vweird.f32 %v4438
    %vm4445 = vmor %vm4443, %vm4444
    %v4446 = vsel %vm4445, %v4438, %v4442
    %v4447 = vand.u32 2147483647, %v4436
    %vm4448 = vcmp.eq.f32.partialorder %v4447, 8.507059e+37
    %v4449 = vand.u32 %v4436, 2147483648
    %v4450 = vor.u32 1.1754944e-38, %v4449
    %v4451 = vsel %vm4448, %v4450, %v4446
    %v4452 = vmul.f32 1.0, %v4451
    %v4453 = vrcp.pop %v4437
    %v4454 = vmul.f32 %v4437, %v4453
    %v4455 = vsub.f32 1.0, %v4454
    %v4456 = vmul.f32 %v4453, %v4455
    %v4457 = vadd.f32 %v4453, %v4456
    %vm4458 = vweird.f32 %v4437
    %vm4459 = vweird.f32 %v4453
    %vm4460 = vmor %vm4458, %vm4459
    %v4461 = vsel %vm4460, %v4453, %v4457
    %v4462 = vand.u32 2147483647, %v4437
    %vm4463 = vcmp.eq.f32.partialorder %v4462, 8.507059e+37
    %v4464 = vand.u32 %v4437, 2147483648
    %v4465 = vor.u32 1.1754944e-38, %v4464
    %v4466 = vsel %vm4463, %v4465, %v4461
    %v4467 = vmul.f32 1.0, %v4466
    %v4468 = vmul.f32 %v4452, %v4425
    %v4469 = vadd.f32 %v4386, %v4468
    %v4470 = vtanh.pop %v4469
    %v4471 = vsub.f32 1.0, %v4467
    %v4472 = vmul.f32 %v4471, %v4470
    %v4473 = vmul.f32 %v4467, %v4222
    %v4474 = vadd.f32 %v4472, %v4473
    %v4475 = vpack.c.bf16 %v4474, %v4474
    %4476 = vmatpush.bf16.msra.mxu0 %v2708
    %4477 = vmatpush.bf16.msra.mxu0 %v2705
    %4478 = vmatpush.bf16.msra.mxu0 %v2702
    %4479 = vmatpush.bf16.msra.mxu0 %v2699
    %4480 = vmatpush.bf16.msra.mxu0 %v2696
    %4481 = vmatpush.bf16.msra.mxu0 %v2693
    %4482 = vmatpush.bf16.msra.mxu0 %v2690
    %4483 = vmatpush.bf16.msra.mxu0 %v2687
    %4484 = vmatmul.bf16.gmra.mxu0 %v4475
    %v4485 = vpop.f32.mrf.mxu0
    %v4486 = vadd.f32 %v204, %v4485
    %v4487 = vpop.f32.mrf.mxu0
    %4488 = vdwg.mxu0
    %4489 = vmatpush.bf16.msra.mxu0 %v2709
    %4490 = vmatpush.bf16.msra.mxu0 %v2706
    %4491 = vmatpush.bf16.msra.mxu0 %v2703
    %4492 = vmatpush.bf16.msra.mxu0 %v2700
    %4493 = vmatpush.bf16.msra.mxu0 %v2697
    %4494 = vmatpush.bf16.msra.mxu0 %v2694
    %4495 = vmatpush.bf16.msra.mxu0 %v2691
    %4496 = vmatpush.bf16.msra.mxu0 %v2688
    %4497 = vmatmul.bf16.gmra.mxu0 %v4475
    %v4498 = vpop.f32.mrf.mxu0
    %v4499 = vadd.f32 %v205, %v4498
    %v4500 = vpop.f32.mrf.mxu0
    %4501 = vdwg.mxu0
    %4502 = vmatpush.bf16.msra.mxu0 %v2710
    %4503 = vmatpush.bf16.msra.mxu0 %v2707
    %4504 = vmatpush.bf16.msra.mxu0 %v2704
    %4505 = vmatpush.bf16.msra.mxu0 %v2701
    %4506 = vmatpush.bf16.msra.mxu0 %v2698
    %4507 = vmatpush.bf16.msra.mxu0 %v2695
    %4508 = vmatpush.bf16.msra.mxu0 %v2692
    %4509 = vmatpush.bf16.msra.mxu0 %v2689
    %4510 = vmatmul.bf16.gmra.mxu0 %v4475
    %v4511 = vpop.f32.mrf.mxu0
    %v4512 = vadd.f32 %v206, %v4511
    %v4513 = vpop.f32.mrf.mxu0
    %4514 = vdwg.mxu0
    %4515 = vmatpush.bf16.msra.mxu0 %v2907
    %4516 = vmatpush.bf16.msra.mxu0 %v2904
    %4517 = vmatpush.bf16.msra.mxu0 %v2901
    %4518 = vmatpush.bf16.msra.mxu0 %v2898
    %4519 = vmatpush.bf16.msra.mxu0 %v2895
    %4520 = vmatpush.bf16.msra.mxu0 %v2892
    %4521 = vmatpush.bf16.msra.mxu0 %v2889
    %4522 = vmatpush.bf16.msra.mxu0 %v2886
    %4523 = vmatmul.bf16.gmra.mxu0 %v4349
    %v4524 = vpop.f32.mrf.mxu0
    %v4525 = vadd.f32 %v220, %v4524
    %v4526 = vpop.f32.mrf.mxu0
    %4527 = vdwg.mxu0
    %4528 = vmatpush.bf16.msra.mxu0 %v2908
    %4529 = vmatpush.bf16.msra.mxu0 %v2905
    %4530 = vmatpush.bf16.msra.mxu0 %v2902
    %4531 = vmatpush.bf16.msra.mxu0 %v2899
    %4532 = vmatpush.bf16.msra.mxu0 %v2896
    %4533 = vmatpush.bf16.msra.mxu0 %v2893
    %4534 = vmatpush.bf16.msra.mxu0 %v2890
    %4535 = vmatpush.bf16.msra.mxu0 %v2887
    %4536 = vmatmul.bf16.gmra.mxu0 %v4349
    %v4537 = vpop.f32.mrf.mxu0
    %v4538 = vadd.f32 %v221, %v4537
    %v4539 = vpop.f32.mrf.mxu0
    %4540 = vdwg.mxu0
    %4541 = vmatpush.bf16.msra.mxu0 %v2909
    %4542 = vmatpush.bf16.msra.mxu0 %v2906
    %4543 = vmatpush.bf16.msra.mxu0 %v2903
    %4544 = vmatpush.bf16.msra.mxu0 %v2900
    %4545 = vmatpush.bf16.msra.mxu0 %v2897
    %4546 = vmatpush.bf16.msra.mxu0 %v2894
    %4547 = vmatpush.bf16.msra.mxu0 %v2891
    %4548 = vmatpush.bf16.msra.mxu0 %v2888
    %4549 = vmatmul.bf16.gmra.mxu0 %v4349
    %v4550 = vpop.f32.mrf.mxu0
    %v4551 = vadd.f32 %v222, %v4550
    %v4552 = vpop.f32.mrf.mxu0
    %4553 = vdwg.mxu0
    %v4554 = vadd.f32 %v4486, %v4525
    %v4555 = vadd.f32 %v4499, %v4538
    %v4556 = vxor.u32 %v4554, 2147483648
    %v4557 = vxor.u32 %v4555, 2147483648
    %v4558 = vmul.f32 %v4556, 1.442695
    %v4559 = vpow.pop %v4558
    %v4560 = vmul.f32 %v4557, 1.442695
    %v4561 = vpow.pop %v4560
    %v4562 = vadd.f32 %v4559, 1.0
    %v4563 = vadd.f32 %v4561, 1.0
    %v4564 = vrcp.pop %v4562
    %v4565 = vmul.f32 %v4562, %v4564
    %v4566 = vsub.f32 1.0, %v4565
    %v4567 = vmul.f32 %v4564, %v4566
    %v4568 = vadd.f32 %v4564, %v4567
    %vm4569 = vweird.f32 %v4562
    %vm4570 = vweird.f32 %v4564
    %vm4571 = vmor %vm4569, %vm4570
    %v4572 = vsel %vm4571, %v4564, %v4568
    %v4573 = vand.u32 2147483647, %v4562
    %vm4574 = vcmp.eq.f32.partialorder %v4573, 8.507059e+37
    %v4575 = vand.u32 %v4562, 2147483648
    %v4576 = vor.u32 1.1754944e-38, %v4575
    %v4577 = vsel %vm4574, %v4576, %v4572
    %v4578 = vmul.f32 1.0, %v4577
    %v4579 = vrcp.pop %v4563
    %v4580 = vmul.f32 %v4563, %v4579
    %v4581 = vsub.f32 1.0, %v4580
    %v4582 = vmul.f32 %v4579, %v4581
    %v4583 = vadd.f32 %v4579, %v4582
    %vm4584 = vweird.f32 %v4563
    %vm4585 = vweird.f32 %v4579
    %vm4586 = vmor %vm4584, %vm4585
    %v4587 = vsel %vm4586, %v4579, %v4583
    %v4588 = vand.u32 2147483647, %v4563
    %vm4589 = vcmp.eq.f32.partialorder %v4588, 8.507059e+37
    %v4590 = vand.u32 %v4563, 2147483648
    %v4591 = vor.u32 1.1754944e-38, %v4590
    %v4592 = vsel %vm4589, %v4591, %v4587
    %v4593 = vmul.f32 1.0, %v4592
    %v4594 = vmul.f32 %v4578, %v4551
    %v4595 = vadd.f32 %v4512, %v4594
    %v4596 = vtanh.pop %v4595
    %v4597 = vsub.f32 1.0, %v4593
    %v4598 = vmul.f32 %v4597, %v4596
    %v4599 = vmul.f32 %v4593, %v4348
    %v4600 = vadd.f32 %v4598, %v4599
    %v4601 = vpack.c.bf16 %v4600, %v4600
    %4602 = vmatpush.bf16.msra.mxu0 %v3154
    %4603 = vmatpush.bf16.msra.mxu0 %v3151
    %4604 = vmatpush.bf16.msra.mxu0 %v3148
    %4605 = vmatpush.bf16.msra.mxu0 %v3145
    %4606 = vmatpush.bf16.msra.mxu0 %v3142
    %4607 = vmatpush.bf16.msra.mxu0 %v3139
    %4608 = vmatpush.bf16.msra.mxu0 %v3136
    %4609 = vmatpush.bf16.msra.mxu0 %v3133
    %4610 = vmatmul.bf16.gmra.mxu0 %v4601
    %v4611 = vpop.f32.mrf.mxu0
    %v4612 = vadd.f32 %v212, %v4611
    %v4613 = vpop.f32.mrf.mxu0
    %4614 = vdwg.mxu0
    %4615 = vmatpush.bf16.msra.mxu0 %v3155
    %4616 = vmatpush.bf16.msra.mxu0 %v3152
    %4617 = vmatpush.bf16.msra.mxu0 %v3149
    %4618 = vmatpush.bf16.msra.mxu0 %v3146
    %4619 = vmatpush.bf16.msra.mxu0 %v3143
    %4620 = vmatpush.bf16.msra.mxu0 %v3140
    %4621 = vmatpush.bf16.msra.mxu0 %v3137
    %4622 = vmatpush.bf16.msra.mxu0 %v3134
    %4623 = vmatmul.bf16.gmra.mxu0 %v4601
    %v4624 = vpop.f32.mrf.mxu0
    %v4625 = vadd.f32 %v213, %v4624
    %v4626 = vpop.f32.mrf.mxu0
    %4627 = vdwg.mxu0
    %4628 = vmatpush.bf16.msra.mxu0 %v3156
    %4629 = vmatpush.bf16.msra.mxu0 %v3153
    %4630 = vmatpush.bf16.msra.mxu0 %v3150
    %4631 = vmatpush.bf16.msra.mxu0 %v3147
    %4632 = vmatpush.bf16.msra.mxu0 %v3144
    %4633 = vmatpush.bf16.msra.mxu0 %v3141
    %4634 = vmatpush.bf16.msra.mxu0 %v3138
    %4635 = vmatpush.bf16.msra.mxu0 %v3135
    %4636 = vmatmul.bf16.gmra.mxu0 %v4601
    %v4637 = vpop.f32.mrf.mxu0
    %v4638 = vadd.f32 %v214, %v4637
    %v4639 = vpop.f32.mrf.mxu0
    %4640 = vdwg.mxu0
    %4641 = vmatpush.bf16.msra.mxu0 %v3354
    %4642 = vmatpush.bf16.msra.mxu0 %v3351
    %4643 = vmatpush.bf16.msra.mxu0 %v3348
    %4644 = vmatpush.bf16.msra.mxu0 %v3345
    %4645 = vmatpush.bf16.msra.mxu0 %v3342
    %4646 = vmatpush.bf16.msra.mxu0 %v3339
    %4647 = vmatpush.bf16.msra.mxu0 %v3336
    %4648 = vmatpush.bf16.msra.mxu0 %v3333
    %4649 = vmatmul.bf16.gmra.mxu0 %v4475
    %v4650 = vpop.f32.mrf.mxu0
    %v4651 = vadd.f32 %v228, %v4650
    %v4652 = vpop.f32.mrf.mxu0
    %4653 = vdwg.mxu0
    %4654 = vmatpush.bf16.msra.mxu0 %v3355
    %4655 = vmatpush.bf16.msra.mxu0 %v3352
    %4656 = vmatpush.bf16.msra.mxu0 %v3349
    %4657 = vmatpush.bf16.msra.mxu0 %v3346
    %4658 = vmatpush.bf16.msra.mxu0 %v3343
    %4659 = vmatpush.bf16.msra.mxu0 %v3340
    %4660 = vmatpush.bf16.msra.mxu0 %v3337
    %4661 = vmatpush.bf16.msra.mxu0 %v3334
    %4662 = vmatmul.bf16.gmra.mxu0 %v4475
    %v4663 = vpop.f32.mrf.mxu0
    %v4664 = vadd.f32 %v229, %v4663
    %v4665 = vpop.f32.mrf.mxu0
    %4666 = vdwg.mxu0
    %4667 = vmatpush.bf16.msra.mxu0 %v3356
    %4668 = vmatpush.bf16.msra.mxu0 %v3353
    %4669 = vmatpush.bf16.msra.mxu0 %v3350
    %4670 = vmatpush.bf16.msra.mxu0 %v3347
    %4671 = vmatpush.bf16.msra.mxu0 %v3344
    %4672 = vmatpush.bf16.msra.mxu0 %v3341
    %4673 = vmatpush.bf16.msra.mxu0 %v3338
    %4674 = vmatpush.bf16.msra.mxu0 %v3335
    %4675 = vmatmul.bf16.gmra.mxu0 %v4475
    %v4676 = vpop.f32.mrf.mxu0
    %v4677 = vadd.f32 %v230, %v4676
    %v4678 = vpop.f32.mrf.mxu0
    %4679 = vdwg.mxu0
    %v4680 = vadd.f32 %v4612, %v4651
    %v4681 = vadd.f32 %v4625, %v4664
    %v4682 = vxor.u32 %v4680, 2147483648
    %v4683 = vxor.u32 %v4681, 2147483648
    %v4684 = vmul.f32 %v4682, 1.442695
    %v4685 = vpow.pop %v4684
    %v4686 = vmul.f32 %v4683, 1.442695
    %v4687 = vpow.pop %v4686
    %v4688 = vadd.f32 %v4685, 1.0
    %v4689 = vadd.f32 %v4687, 1.0
    %v4690 = vrcp.pop %v4688
    %v4691 = vmul.f32 %v4688, %v4690
    %v4692 = vsub.f32 1.0, %v4691
    %v4693 = vmul.f32 %v4690, %v4692
    %v4694 = vadd.f32 %v4690, %v4693
    %vm4695 = vweird.f32 %v4688
    %vm4696 = vweird.f32 %v4690
    %vm4697 = vmor %vm4695, %vm4696
    %v4698 = vsel %vm4697, %v4690, %v4694
    %v4699 = vand.u32 2147483647, %v4688
    %vm4700 = vcmp.eq.f32.partialorder %v4699, 8.507059e+37
    %v4701 = vand.u32 %v4688, 2147483648
    %v4702 = vor.u32 1.1754944e-38, %v4701
    %v4703 = vsel %vm4700, %v4702, %v4698
    %v4704 = vmul.f32 1.0, %v4703
    %v4705 = vrcp.pop %v4689
    %v4706 = vmul.f32 %v4689, %v4705
    %v4707 = vsub.f32 1.0, %v4706
    %v4708 = vmul.f32 %v4705, %v4707
    %v4709 = vadd.f32 %v4705, %v4708
    %vm4710 = vweird.f32 %v4689
    %vm4711 = vweird.f32 %v4705
    %vm4712 = vmor %vm4710, %vm4711
    %v4713 = vsel %vm4712, %v4705, %v4709
    %v4714 = vand.u32 2147483647, %v4689
    %vm4715 = vcmp.eq.f32.partialorder %v4714, 8.507059e+37
    %v4716 = vand.u32 %v4689, 2147483648
    %v4717 = vor.u32 1.1754944e-38, %v4716
    %v4718 = vsel %vm4715, %v4717, %v4713
    %v4719 = vmul.f32 1.0, %v4718
    %v4720 = vmul.f32 %v4704, %v4677
    %v4721 = vadd.f32 %v4638, %v4720
    %v4722 = vtanh.pop %v4721
    %v4723 = vsub.f32 1.0, %v4719
    %v4724 = vmul.f32 %v4723, %v4722
    %v4725 = vmul.f32 %v4719, %v4474
    %v4726 = vadd.f32 %v4724, %v4725
    %v4727 = vpack.c.bf16 %v4726, %v4726
    %4728 = vmatpush.bf16.msra.mxu0 %v2708
    %4729 = vmatpush.bf16.msra.mxu0 %v2705
    %4730 = vmatpush.bf16.msra.mxu0 %v2702
    %4731 = vmatpush.bf16.msra.mxu0 %v2699
    %4732 = vmatpush.bf16.msra.mxu0 %v2696
    %4733 = vmatpush.bf16.msra.mxu0 %v2693
    %4734 = vmatpush.bf16.msra.mxu0 %v2690
    %4735 = vmatpush.bf16.msra.mxu0 %v2687
    %4736 = vmatmul.bf16.gmra.mxu0 %v4727
    %v4737 = vpop.f32.mrf.mxu0
    %v4738 = vadd.f32 %v204, %v4737
    %v4739 = vpop.f32.mrf.mxu0
    %4740 = vdwg.mxu0
    %4741 = vmatpush.bf16.msra.mxu0 %v2709
    %4742 = vmatpush.bf16.msra.mxu0 %v2706
    %4743 = vmatpush.bf16.msra.mxu0 %v2703
    %4744 = vmatpush.bf16.msra.mxu0 %v2700
    %4745 = vmatpush.bf16.msra.mxu0 %v2697
    %4746 = vmatpush.bf16.msra.mxu0 %v2694
    %4747 = vmatpush.bf16.msra.mxu0 %v2691
    %4748 = vmatpush.bf16.msra.mxu0 %v2688
    %4749 = vmatmul.bf16.gmra.mxu0 %v4727
    %v4750 = vpop.f32.mrf.mxu0
    %v4751 = vadd.f32 %v205, %v4750
    %v4752 = vpop.f32.mrf.mxu0
    %4753 = vdwg.mxu0
    %4754 = vmatpush.bf16.msra.mxu0 %v2710
    %4755 = vmatpush.bf16.msra.mxu0 %v2707
    %4756 = vmatpush.bf16.msra.mxu0 %v2704
    %4757 = vmatpush.bf16.msra.mxu0 %v2701
    %4758 = vmatpush.bf16.msra.mxu0 %v2698
    %4759 = vmatpush.bf16.msra.mxu0 %v2695
    %4760 = vmatpush.bf16.msra.mxu0 %v2692
    %4761 = vmatpush.bf16.msra.mxu0 %v2689
    %4762 = vmatmul.bf16.gmra.mxu0 %v4727
    %v4763 = vpop.f32.mrf.mxu0
    %v4764 = vadd.f32 %v206, %v4763
    %v4765 = vpop.f32.mrf.mxu0
    %4766 = vdwg.mxu0
    %4767 = vmatpush.bf16.msra.mxu0 %v2907
    %4768 = vmatpush.bf16.msra.mxu0 %v2904
    %4769 = vmatpush.bf16.msra.mxu0 %v2901
    %4770 = vmatpush.bf16.msra.mxu0 %v2898
    %4771 = vmatpush.bf16.msra.mxu0 %v2895
    %4772 = vmatpush.bf16.msra.mxu0 %v2892
    %4773 = vmatpush.bf16.msra.mxu0 %v2889
    %4774 = vmatpush.bf16.msra.mxu0 %v2886
    %4775 = vmatmul.bf16.gmra.mxu0 %v4601
    %v4776 = vpop.f32.mrf.mxu0
    %v4777 = vadd.f32 %v220, %v4776
    %v4778 = vpop.f32.mrf.mxu0
    %4779 = vdwg.mxu0
    %4780 = vmatpush.bf16.msra.mxu0 %v2908
    %4781 = vmatpush.bf16.msra.mxu0 %v2905
    %4782 = vmatpush.bf16.msra.mxu0 %v2902
    %4783 = vmatpush.bf16.msra.mxu0 %v2899
    %4784 = vmatpush.bf16.msra.mxu0 %v2896
    %4785 = vmatpush.bf16.msra.mxu0 %v2893
    %4786 = vmatpush.bf16.msra.mxu0 %v2890
    %4787 = vmatpush.bf16.msra.mxu0 %v2887
    %4788 = vmatmul.bf16.gmra.mxu0 %v4601
    %v4789 = vpop.f32.mrf.mxu0
    %v4790 = vadd.f32 %v221, %v4789
    %v4791 = vpop.f32.mrf.mxu0
    %4792 = vdwg.mxu0
    %4793 = vmatpush.bf16.msra.mxu0 %v2909
    %4794 = vmatpush.bf16.msra.mxu0 %v2906
    %4795 = vmatpush.bf16.msra.mxu0 %v2903
    %4796 = vmatpush.bf16.msra.mxu0 %v2900
    %4797 = vmatpush.bf16.msra.mxu0 %v2897
    %4798 = vmatpush.bf16.msra.mxu0 %v2894
    %4799 = vmatpush.bf16.msra.mxu0 %v2891
    %4800 = vmatpush.bf16.msra.mxu0 %v2888
    %4801 = vmatmul.bf16.gmra.mxu0 %v4601
    %v4802 = vpop.f32.mrf.mxu0
    %v4803 = vadd.f32 %v222, %v4802
    %v4804 = vpop.f32.mrf.mxu0
    %4805 = vdwg.mxu0
    %v4806 = vadd.f32 %v4738, %v4777
    %v4807 = vadd.f32 %v4751, %v4790
    %v4808 = vxor.u32 %v4806, 2147483648
    %v4809 = vxor.u32 %v4807, 2147483648
    %v4810 = vmul.f32 %v4808, 1.442695
    %v4811 = vpow.pop %v4810
    %v4812 = vmul.f32 %v4809, 1.442695
    %v4813 = vpow.pop %v4812
    %v4814 = vadd.f32 %v4811, 1.0
    %v4815 = vadd.f32 %v4813, 1.0
    %v4816 = vrcp.pop %v4814
    %v4817 = vmul.f32 %v4814, %v4816
    %v4818 = vsub.f32 1.0, %v4817
    %v4819 = vmul.f32 %v4816, %v4818
    %v4820 = vadd.f32 %v4816, %v4819
    %vm4821 = vweird.f32 %v4814
    %vm4822 = vweird.f32 %v4816
    %vm4823 = vmor %vm4821, %vm4822
    %v4824 = vsel %vm4823, %v4816, %v4820
    %v4825 = vand.u32 2147483647, %v4814
    %vm4826 = vcmp.eq.f32.partialorder %v4825, 8.507059e+37
    %v4827 = vand.u32 %v4814, 2147483648
    %v4828 = vor.u32 1.1754944e-38, %v4827
    %v4829 = vsel %vm4826, %v4828, %v4824
    %v4830 = vmul.f32 1.0, %v4829
    %v4831 = vrcp.pop %v4815
    %v4832 = vmul.f32 %v4815, %v4831
    %v4833 = vsub.f32 1.0, %v4832
    %v4834 = vmul.f32 %v4831, %v4833
    %v4835 = vadd.f32 %v4831, %v4834
    %vm4836 = vweird.f32 %v4815
    %vm4837 = vweird.f32 %v4831
    %vm4838 = vmor %vm4836, %vm4837
    %v4839 = vsel %vm4838, %v4831, %v4835
    %v4840 = vand.u32 2147483647, %v4815
    %vm4841 = vcmp.eq.f32.partialorder %v4840, 8.507059e+37
    %v4842 = vand.u32 %v4815, 2147483648
    %v4843 = vor.u32 1.1754944e-38, %v4842
    %v4844 = vsel %vm4841, %v4843, %v4839
    %v4845 = vmul.f32 1.0, %v4844
    %v4846 = vmul.f32 %v4830, %v4803
    %v4847 = vadd.f32 %v4764, %v4846
    %v4848 = vtanh.pop %v4847
    %v4849 = vsub.f32 1.0, %v4845
    %v4850 = vmul.f32 %v4849, %v4848
    %v4851 = vmul.f32 %v4845, %v4600
    %v4852 = vadd.f32 %v4850, %v4851
    %v4853 = vpack.c.bf16 %v4852, %v4852
    %4854 = vmatpush.bf16.msra.mxu0 %v3154
    %4855 = vmatpush.bf16.msra.mxu0 %v3151
    %4856 = vmatpush.bf16.msra.mxu0 %v3148
    %4857 = vmatpush.bf16.msra.mxu0 %v3145
    %4858 = vmatpush.bf16.msra.mxu0 %v3142
    %4859 = vmatpush.bf16.msra.mxu0 %v3139
    %4860 = vmatpush.bf16.msra.mxu0 %v3136
    %4861 = vmatpush.bf16.msra.mxu0 %v3133
    %4862 = vmatmul.bf16.gmra.mxu0 %v4853
    %v4863 = vpop.f32.mrf.mxu0
    %v4864 = vadd.f32 %v212, %v4863
    %v4865 = vpop.f32.mrf.mxu0
    %4866 = vdwg.mxu0
    %4867 = vmatpush.bf16.msra.mxu0 %v3155
    %4868 = vmatpush.bf16.msra.mxu0 %v3152
    %4869 = vmatpush.bf16.msra.mxu0 %v3149
    %4870 = vmatpush.bf16.msra.mxu0 %v3146
    %4871 = vmatpush.bf16.msra.mxu0 %v3143
    %4872 = vmatpush.bf16.msra.mxu0 %v3140
    %4873 = vmatpush.bf16.msra.mxu0 %v3137
    %4874 = vmatpush.bf16.msra.mxu0 %v3134
    %4875 = vmatmul.bf16.gmra.mxu0 %v4853
    %v4876 = vpop.f32.mrf.mxu0
    %v4877 = vadd.f32 %v213, %v4876
    %v4878 = vpop.f32.mrf.mxu0
    %4879 = vdwg.mxu0
    %4880 = vmatpush.bf16.msra.mxu0 %v3156
    %4881 = vmatpush.bf16.msra.mxu0 %v3153
    %4882 = vmatpush.bf16.msra.mxu0 %v3150
    %4883 = vmatpush.bf16.msra.mxu0 %v3147
    %4884 = vmatpush.bf16.msra.mxu0 %v3144
    %4885 = vmatpush.bf16.msra.mxu0 %v3141
    %4886 = vmatpush.bf16.msra.mxu0 %v3138
    %4887 = vmatpush.bf16.msra.mxu0 %v3135
    %4888 = vmatmul.bf16.gmra.mxu0 %v4853
    %v4889 = vpop.f32.mrf.mxu0
    %v4890 = vadd.f32 %v214, %v4889
    %v4891 = vpop.f32.mrf.mxu0
    %4892 = vdwg.mxu0
    %4893 = vmatpush.bf16.msra.mxu0 %v3354
    %4894 = vmatpush.bf16.msra.mxu0 %v3351
    %4895 = vmatpush.bf16.msra.mxu0 %v3348
    %4896 = vmatpush.bf16.msra.mxu0 %v3345
    %4897 = vmatpush.bf16.msra.mxu0 %v3342
    %4898 = vmatpush.bf16.msra.mxu0 %v3339
    %4899 = vmatpush.bf16.msra.mxu0 %v3336
    %4900 = vmatpush.bf16.msra.mxu0 %v3333
    %4901 = vmatmul.bf16.gmra.mxu0 %v4727
    %v4902 = vpop.f32.mrf.mxu0
    %v4903 = vadd.f32 %v228, %v4902
    %v4904 = vpop.f32.mrf.mxu0
    %4905 = vdwg.mxu0
    %4906 = vmatpush.bf16.msra.mxu0 %v3355
    %4907 = vmatpush.bf16.msra.mxu0 %v3352
    %4908 = vmatpush.bf16.msra.mxu0 %v3349
    %4909 = vmatpush.bf16.msra.mxu0 %v3346
    %4910 = vmatpush.bf16.msra.mxu0 %v3343
    %4911 = vmatpush.bf16.msra.mxu0 %v3340
    %4912 = vmatpush.bf16.msra.mxu0 %v3337
    %4913 = vmatpush.bf16.msra.mxu0 %v3334
    %4914 = vmatmul.bf16.gmra.mxu0 %v4727
    %v4915 = vpop.f32.mrf.mxu0
    %v4916 = vadd.f32 %v229, %v4915
    %v4917 = vpop.f32.mrf.mxu0
    %4918 = vdwg.mxu0
    %4919 = vmatpush.bf16.msra.mxu0 %v3356
    %4920 = vmatpush.bf16.msra.mxu0 %v3353
    %4921 = vmatpush.bf16.msra.mxu0 %v3350
    %4922 = vmatpush.bf16.msra.mxu0 %v3347
    %4923 = vmatpush.bf16.msra.mxu0 %v3344
    %4924 = vmatpush.bf16.msra.mxu0 %v3341
    %4925 = vmatpush.bf16.msra.mxu0 %v3338
    %4926 = vmatpush.bf16.msra.mxu0 %v3335
    %4927 = vmatmul.bf16.gmra.mxu0 %v4727
    %v4928 = vpop.f32.mrf.mxu0
    %v4929 = vadd.f32 %v230, %v4928
    %v4930 = vpop.f32.mrf.mxu0
    %4931 = vdwg.mxu0
    %v4932 = vadd.f32 %v4864, %v4903
    %v4933 = vadd.f32 %v4877, %v4916
    %v4934 = vxor.u32 %v4932, 2147483648
    %v4935 = vxor.u32 %v4933, 2147483648
    %v4936 = vmul.f32 %v4934, 1.442695
    %v4937 = vpow.pop %v4936
    %v4938 = vmul.f32 %v4935, 1.442695
    %v4939 = vpow.pop %v4938
    %v4940 = vadd.f32 %v4937, 1.0
    %v4941 = vadd.f32 %v4939, 1.0
    %v4942 = vrcp.pop %v4940
    %v4943 = vmul.f32 %v4940, %v4942
    %v4944 = vsub.f32 1.0, %v4943
    %v4945 = vmul.f32 %v4942, %v4944
    %v4946 = vadd.f32 %v4942, %v4945
    %vm4947 = vweird.f32 %v4940
    %vm4948 = vweird.f32 %v4942
    %vm4949 = vmor %vm4947, %vm4948
    %v4950 = vsel %vm4949, %v4942, %v4946
    %v4951 = vand.u32 2147483647, %v4940
    %vm4952 = vcmp.eq.f32.partialorder %v4951, 8.507059e+37
    %v4953 = vand.u32 %v4940, 2147483648
    %v4954 = vor.u32 1.1754944e-38, %v4953
    %v4955 = vsel %vm4952, %v4954, %v4950
    %v4956 = vmul.f32 1.0, %v4955
    %v4957 = vrcp.pop %v4941
    %v4958 = vmul.f32 %v4941, %v4957
    %v4959 = vsub.f32 1.0, %v4958
    %v4960 = vmul.f32 %v4957, %v4959
    %v4961 = vadd.f32 %v4957, %v4960
    %vm4962 = vweird.f32 %v4941
    %vm4963 = vweird.f32 %v4957
    %vm4964 = vmor %vm4962, %vm4963
    %v4965 = vsel %vm4964, %v4957, %v4961
    %v4966 = vand.u32 2147483647, %v4941
    %vm4967 = vcmp.eq.f32.partialorder %v4966, 8.507059e+37
    %v4968 = vand.u32 %v4941, 2147483648
    %v4969 = vor.u32 1.1754944e-38, %v4968
    %v4970 = vsel %vm4967, %v4969, %v4965
    %v4971 = vmul.f32 1.0, %v4970
    %v4972 = vmul.f32 %v4956, %v4929
    %v4973 = vadd.f32 %v4890, %v4972
    %v4974 = vtanh.pop %v4973
    %v4975 = vsub.f32 1.0, %v4971
    %v4976 = vmul.f32 %v4975, %v4974
    %v4977 = vmul.f32 %v4971, %v4726
    %v4978 = vadd.f32 %v4976, %v4977
    %v4979 = vpack.c.bf16 %v4978, %v4978
    %4980 = vmatpush.bf16.msra.mxu0 %v2708
    %4981 = vmatpush.bf16.msra.mxu0 %v2705
    %4982 = vmatpush.bf16.msra.mxu0 %v2702
    %4983 = vmatpush.bf16.msra.mxu0 %v2699
    %4984 = vmatpush.bf16.msra.mxu0 %v2696
    %4985 = vmatpush.bf16.msra.mxu0 %v2693
    %4986 = vmatpush.bf16.msra.mxu0 %v2690
    %4987 = vmatpush.bf16.msra.mxu0 %v2687
    %4988 = vmatmul.bf16.gmra.mxu0 %v4979
    %v4989 = vpop.f32.mrf.mxu0
    %v4990 = vadd.f32 %v204, %v4989
    %v4991 = vpop.f32.mrf.mxu0
    %4992 = vdwg.mxu0
    %4993 = vmatpush.bf16.msra.mxu0 %v2709
    %4994 = vmatpush.bf16.msra.mxu0 %v2706
    %4995 = vmatpush.bf16.msra.mxu0 %v2703
    %4996 = vmatpush.bf16.msra.mxu0 %v2700
    %4997 = vmatpush.bf16.msra.mxu0 %v2697
    %4998 = vmatpush.bf16.msra.mxu0 %v2694
    %4999 = vmatpush.bf16.msra.mxu0 %v2691
    %5000 = vmatpush.bf16.msra.mxu0 %v2688
    %5001 = vmatmul.bf16.gmra.mxu0 %v4979
    %v5002 = vpop.f32.mrf.mxu0
    %v5003 = vadd.f32 %v205, %v5002
    %v5004 = vpop.f32.mrf.mxu0
    %5005 = vdwg.mxu0
    %5006 = vmatpush.bf16.msra.mxu0 %v2710
    %5007 = vmatpush.bf16.msra.mxu0 %v2707
    %5008 = vmatpush.bf16.msra.mxu0 %v2704
    %5009 = vmatpush.bf16.msra.mxu0 %v2701
    %5010 = vmatpush.bf16.msra.mxu0 %v2698
    %5011 = vmatpush.bf16.msra.mxu0 %v2695
    %5012 = vmatpush.bf16.msra.mxu0 %v2692
    %5013 = vmatpush.bf16.msra.mxu0 %v2689
    %5014 = vmatmul.bf16.gmra.mxu0 %v4979
    %v5015 = vpop.f32.mrf.mxu0
    %v5016 = vadd.f32 %v206, %v5015
    %v5017 = vpop.f32.mrf.mxu0
    %5018 = vdwg.mxu0
    %5019 = vmatpush.bf16.msra.mxu0 %v2907
    %5020 = vmatpush.bf16.msra.mxu0 %v2904
    %5021 = vmatpush.bf16.msra.mxu0 %v2901
    %5022 = vmatpush.bf16.msra.mxu0 %v2898
    %5023 = vmatpush.bf16.msra.mxu0 %v2895
    %5024 = vmatpush.bf16.msra.mxu0 %v2892
    %5025 = vmatpush.bf16.msra.mxu0 %v2889
    %5026 = vmatpush.bf16.msra.mxu0 %v2886
    %5027 = vmatmul.bf16.gmra.mxu0 %v4853
    %v5028 = vpop.f32.mrf.mxu0
    %v5029 = vadd.f32 %v220, %v5028
    %v5030 = vpop.f32.mrf.mxu0
    %5031 = vdwg.mxu0
    %5032 = vmatpush.bf16.msra.mxu0 %v2908
    %5033 = vmatpush.bf16.msra.mxu0 %v2905
    %5034 = vmatpush.bf16.msra.mxu0 %v2902
    %5035 = vmatpush.bf16.msra.mxu0 %v2899
    %5036 = vmatpush.bf16.msra.mxu0 %v2896
    %5037 = vmatpush.bf16.msra.mxu0 %v2893
    %5038 = vmatpush.bf16.msra.mxu0 %v2890
    %5039 = vmatpush.bf16.msra.mxu0 %v2887
    %5040 = vmatmul.bf16.gmra.mxu0 %v4853
    %v5041 = vpop.f32.mrf.mxu0
    %v5042 = vadd.f32 %v221, %v5041
    %v5043 = vpop.f32.mrf.mxu0
    %5044 = vdwg.mxu0
    %5045 = vmatpush.bf16.msra.mxu0 %v2909
    %5046 = vmatpush.bf16.msra.mxu0 %v2906
    %5047 = vmatpush.bf16.msra.mxu0 %v2903
    %5048 = vmatpush.bf16.msra.mxu0 %v2900
    %5049 = vmatpush.bf16.msra.mxu0 %v2897
    %5050 = vmatpush.bf16.msra.mxu0 %v2894
    %5051 = vmatpush.bf16.msra.mxu0 %v2891
    %5052 = vmatpush.bf16.msra.mxu0 %v2888
    %5053 = vmatmul.bf16.gmra.mxu0 %v4853
    %v5054 = vpop.f32.mrf.mxu0
    %v5055 = vadd.f32 %v222, %v5054
    %v5056 = vpop.f32.mrf.mxu0
    %5057 = vdwg.mxu0
    %v5058 = vadd.f32 %v4990, %v5029
    %v5059 = vadd.f32 %v5003, %v5042
    %v5060 = vxor.u32 %v5058, 2147483648
    %v5061 = vxor.u32 %v5059, 2147483648
    %v5062 = vmul.f32 %v5060, 1.442695
    %v5063 = vpow.pop %v5062
    %v5064 = vmul.f32 %v5061, 1.442695
    %v5065 = vpow.pop %v5064
    %v5066 = vadd.f32 %v5063, 1.0
    %v5067 = vadd.f32 %v5065, 1.0
    %v5068 = vrcp.pop %v5066
    %v5069 = vmul.f32 %v5066, %v5068
    %v5070 = vsub.f32 1.0, %v5069
    %v5071 = vmul.f32 %v5068, %v5070
    %v5072 = vadd.f32 %v5068, %v5071
    %vm5073 = vweird.f32 %v5066
    %vm5074 = vweird.f32 %v5068
    %vm5075 = vmor %vm5073, %vm5074
    %v5076 = vsel %vm5075, %v5068, %v5072
    %v5077 = vand.u32 2147483647, %v5066
    %vm5078 = vcmp.eq.f32.partialorder %v5077, 8.507059e+37
    %v5079 = vand.u32 %v5066, 2147483648
    %v5080 = vor.u32 1.1754944e-38, %v5079
    %v5081 = vsel %vm5078, %v5080, %v5076
    %v5082 = vmul.f32 1.0, %v5081
    %v5083 = vrcp.pop %v5067
    %v5084 = vmul.f32 %v5067, %v5083
    %v5085 = vsub.f32 1.0, %v5084
    %v5086 = vmul.f32 %v5083, %v5085
    %v5087 = vadd.f32 %v5083, %v5086
    %vm5088 = vweird.f32 %v5067
    %vm5089 = vweird.f32 %v5083
    %vm5090 = vmor %vm5088, %vm5089
    %v5091 = vsel %vm5090, %v5083, %v5087
    %v5092 = vand.u32 2147483647, %v5067
    %vm5093 = vcmp.eq.f32.partialorder %v5092, 8.507059e+37
    %v5094 = vand.u32 %v5067, 2147483648
    %v5095 = vor.u32 1.1754944e-38, %v5094
    %v5096 = vsel %vm5093, %v5095, %v5091
    %v5097 = vmul.f32 1.0, %v5096
    %v5098 = vmul.f32 %v5082, %v5055
    %v5099 = vadd.f32 %v5016, %v5098
    %v5100 = vtanh.pop %v5099
    %v5101 = vsub.f32 1.0, %v5097
    %v5102 = vmul.f32 %v5101, %v5100
    %v5103 = vmul.f32 %v5097, %v4852
    %v5104 = vadd.f32 %v5102, %v5103
    %v5105 = vpack.c.bf16 %v5104, %v5104
    %5106 = vmatpush.bf16.msra.mxu0 %v3154
    %5107 = vmatpush.bf16.msra.mxu0 %v3151
    %5108 = vmatpush.bf16.msra.mxu0 %v3148
    %5109 = vmatpush.bf16.msra.mxu0 %v3145
    %5110 = vmatpush.bf16.msra.mxu0 %v3142
    %5111 = vmatpush.bf16.msra.mxu0 %v3139
    %5112 = vmatpush.bf16.msra.mxu0 %v3136
    %5113 = vmatpush.bf16.msra.mxu0 %v3133
    %5114 = vmatmul.bf16.gmra.mxu0 %v5105
    %v5115 = vpop.f32.mrf.mxu0
    %v5116 = vadd.f32 %v212, %v5115
    %v5117 = vpop.f32.mrf.mxu0
    %5118 = vdwg.mxu0
    %5119 = vmatpush.bf16.msra.mxu0 %v3155
    %5120 = vmatpush.bf16.msra.mxu0 %v3152
    %5121 = vmatpush.bf16.msra.mxu0 %v3149
    %5122 = vmatpush.bf16.msra.mxu0 %v3146
    %5123 = vmatpush.bf16.msra.mxu0 %v3143
    %5124 = vmatpush.bf16.msra.mxu0 %v3140
    %5125 = vmatpush.bf16.msra.mxu0 %v3137
    %5126 = vmatpush.bf16.msra.mxu0 %v3134
    %5127 = vmatmul.bf16.gmra.mxu0 %v5105
    %v5128 = vpop.f32.mrf.mxu0
    %v5129 = vadd.f32 %v213, %v5128
    %v5130 = vpop.f32.mrf.mxu0
    %5131 = vdwg.mxu0
    %5132 = vmatpush.bf16.msra.mxu0 %v3156
    %5133 = vmatpush.bf16.msra.mxu0 %v3153
    %5134 = vmatpush.bf16.msra.mxu0 %v3150
    %5135 = vmatpush.bf16.msra.mxu0 %v3147
    %5136 = vmatpush.bf16.msra.mxu0 %v3144
    %5137 = vmatpush.bf16.msra.mxu0 %v3141
    %5138 = vmatpush.bf16.msra.mxu0 %v3138
    %5139 = vmatpush.bf16.msra.mxu0 %v3135
    %5140 = vmatmul.bf16.gmra.mxu0 %v5105
    %v5141 = vpop.f32.mrf.mxu0
    %v5142 = vadd.f32 %v214, %v5141
    %v5143 = vpop.f32.mrf.mxu0
    %5144 = vdwg.mxu0
    %5145 = vmatpush.bf16.msra.mxu0 %v3354
    %5146 = vmatpush.bf16.msra.mxu0 %v3351
    %5147 = vmatpush.bf16.msra.mxu0 %v3348
    %5148 = vmatpush.bf16.msra.mxu0 %v3345
    %5149 = vmatpush.bf16.msra.mxu0 %v3342
    %5150 = vmatpush.bf16.msra.mxu0 %v3339
    %5151 = vmatpush.bf16.msra.mxu0 %v3336
    %5152 = vmatpush.bf16.msra.mxu0 %v3333
    %5153 = vmatmul.bf16.gmra.mxu0 %v4979
    %v5154 = vpop.f32.mrf.mxu0
    %v5155 = vadd.f32 %v228, %v5154
    %v5156 = vpop.f32.mrf.mxu0
    %5157 = vdwg.mxu0
    %5158 = vmatpush.bf16.msra.mxu0 %v3355
    %5159 = vmatpush.bf16.msra.mxu0 %v3352
    %5160 = vmatpush.bf16.msra.mxu0 %v3349
    %5161 = vmatpush.bf16.msra.mxu0 %v3346
    %5162 = vmatpush.bf16.msra.mxu0 %v3343
    %5163 = vmatpush.bf16.msra.mxu0 %v3340
    %5164 = vmatpush.bf16.msra.mxu0 %v3337
    %5165 = vmatpush.bf16.msra.mxu0 %v3334
    %5166 = vmatmul.bf16.gmra.mxu0 %v4979
    %v5167 = vpop.f32.mrf.mxu0
    %v5168 = vadd.f32 %v229, %v5167
    %v5169 = vpop.f32.mrf.mxu0
    %5170 = vdwg.mxu0
    %5171 = vmatpush.bf16.msra.mxu0 %v3356
    %5172 = vmatpush.bf16.msra.mxu0 %v3353
    %5173 = vmatpush.bf16.msra.mxu0 %v3350
    %5174 = vmatpush.bf16.msra.mxu0 %v3347
    %5175 = vmatpush.bf16.msra.mxu0 %v3344
    %5176 = vmatpush.bf16.msra.mxu0 %v3341
    %5177 = vmatpush.bf16.msra.mxu0 %v3338
    %5178 = vmatpush.bf16.msra.mxu0 %v3335
    %5179 = vmatmul.bf16.gmra.mxu0 %v4979
    %v5180 = vpop.f32.mrf.mxu0
    %v5181 = vadd.f32 %v230, %v5180
    %v5182 = vpop.f32.mrf.mxu0
    %5183 = vdwg.mxu0
    %v5184 = vadd.f32 %v5116, %v5155
    %v5185 = vadd.f32 %v5129, %v5168
    %v5186 = vxor.u32 %v5184, 2147483648
    %v5187 = vxor.u32 %v5185, 2147483648
    %v5188 = vmul.f32 %v5186, 1.442695
    %v5189 = vpow.pop %v5188
    %v5190 = vmul.f32 %v5187, 1.442695
    %v5191 = vpow.pop %v5190
    %v5192 = vadd.f32 %v5189, 1.0
    %v5193 = vadd.f32 %v5191, 1.0
    %v5194 = vrcp.pop %v5192
    %v5195 = vmul.f32 %v5192, %v5194
    %v5196 = vsub.f32 1.0, %v5195
    %v5197 = vmul.f32 %v5194, %v5196
    %v5198 = vadd.f32 %v5194, %v5197
    %vm5199 = vweird.f32 %v5192
    %vm5200 = vweird.f32 %v5194
    %vm5201 = vmor %vm5199, %vm5200
    %v5202 = vsel %vm5201, %v5194, %v5198
    %v5203 = vand.u32 2147483647, %v5192
    %vm5204 = vcmp.eq.f32.partialorder %v5203, 8.507059e+37
    %v5205 = vand.u32 %v5192, 2147483648
    %v5206 = vor.u32 1.1754944e-38, %v5205
    %v5207 = vsel %vm5204, %v5206, %v5202
    %v5208 = vmul.f32 1.0, %v5207
    %v5209 = vrcp.pop %v5193
    %v5210 = vmul.f32 %v5193, %v5209
    %v5211 = vsub.f32 1.0, %v5210
    %v5212 = vmul.f32 %v5209, %v5211
    %v5213 = vadd.f32 %v5209, %v5212
    %vm5214 = vweird.f32 %v5193
    %vm5215 = vweird.f32 %v5209
    %vm5216 = vmor %vm5214, %vm5215
    %v5217 = vsel %vm5216, %v5209, %v5213
    %v5218 = vand.u32 2147483647, %v5193
    %vm5219 = vcmp.eq.f32.partialorder %v5218, 8.507059e+37
    %v5220 = vand.u32 %v5193, 2147483648
    %v5221 = vor.u32 1.1754944e-38, %v5220
    %v5222 = vsel %vm5219, %v5221, %v5217
    %v5223 = vmul.f32 1.0, %v5222
    %v5224 = vmul.f32 %v5208, %v5181
    %v5225 = vadd.f32 %v5142, %v5224
    %v5226 = vtanh.pop %v5225
    %v5227 = vsub.f32 1.0, %v5223
    %v5228 = vmul.f32 %v5227, %v5226
    %v5229 = vmul.f32 %v5223, %v4978
    %v5230 = vadd.f32 %v5228, %v5229
    %v5231 = vpack.c.bf16 %v3718, %v3466
    %v5232 = vpack.c.bf16 %v4222, %v3970
    %v5233 = vpack.c.bf16 %v4726, %v4474
    %v5234 = vpack.c.bf16 %v5230, %v4978
    %v5235 = vld [vmem:[%s17] sm:$0xf]
    %v5236 = vld [vmem:[%s17 + $0x4] sm:$0xf]
    %v5237 = vld [vmem:[%s17 + $0x8] sm:$0xf]
    %v5238 = vld [vmem:[%s17 + $0xc] sm:$0xf]
    %v5239 = vld [vmem:[%s17 + $0x10] sm:$0xf]
    %v5240 = vld [vmem:[%s17 + $0x14] sm:$0xf]
    %v5241 = vld [vmem:[%s17 + $0x18] sm:$0xf]
    %v5242 = vld [vmem:[%s17 + $0x1c] sm:$0xf]
    %v5243 = vld [vmem:[%s17 + $0x20] sm:$0xf]
    %v5244 = vld [vmem:[%s17 + $0x24] sm:$0xf]
    %v5245 = vld [vmem:[%s17 + $0x28] sm:$0xf]
    %v5246 = vld [vmem:[%s17 + $0x2c] sm:$0xf]
    %v5247 = vld [vmem:[%s17 + $0x30] sm:$0xf]
    %v5248 = vld [vmem:[%s17 + $0x34] sm:$0xf]
    %v5249 = vld [vmem:[%s17 + $0x38] sm:$0xf]
    %v5250 = vld [vmem:[%s17 + $0x3c] sm:$0xf]
    %v5251 = vld [vmem:[%s18] sm:$0x1]
    %v5253 = vperm.slane %v5251, 0
    %v5271 = vunpack.c.l.b16 %v5235
    %v5272 = vunpack.c.l.b16 %v5236
    %v5273 = vunpack.c.l.b16 %v5237
    %v5274 = vunpack.c.l.b16 %v5238
    %v5275 = vunpack.c.l.b16 %v5239
    %v5276 = vunpack.c.l.b16 %v5240
    %v5277 = vunpack.c.l.b16 %v5241
    %v5278 = vunpack.c.l.b16 %v5242
    %v5279 = vunpack.c.l.b16 %v5243
    %v5280 = vunpack.c.l.b16 %v5244
    %v5281 = vunpack.c.l.b16 %v5245
    %v5282 = vunpack.c.l.b16 %v5246
    %v5283 = vunpack.c.l.b16 %v5247
    %v5284 = vunpack.c.l.b16 %v5248
    %v5285 = vunpack.c.l.b16 %v5249
    %v5286 = vunpack.c.l.b16 %v5250
    %v5287 = vpack.c.b16 %v5272, %v5271
    %v5288 = vpack.c.b16 %v5274, %v5273
    %v5289 = vpack.c.b16 %v5276, %v5275
    %v5290 = vpack.c.b16 %v5278, %v5277
    %v5291 = vpack.c.b16 %v5280, %v5279
    %v5292 = vpack.c.b16 %v5282, %v5281
    %v5293 = vpack.c.b16 %v5284, %v5283
    %v5294 = vpack.c.b16 %v5286, %v5285
    %5303 = vmatpush.bf16.msra.mxu0 %v5294
    %5304 = vmatpush.bf16.msra.mxu0 %v5293
    %5305 = vmatpush.bf16.msra.mxu0 %v5292
    %5306 = vmatpush.bf16.msra.mxu0 %v5291
    %5307 = vmatpush.bf16.msra.mxu0 %v5290
    %5308 = vmatpush.bf16.msra.mxu0 %v5289
    %5309 = vmatpush.bf16.msra.mxu0 %v5288
    %5310 = vmatpush.bf16.msra.mxu0 %v5287
    %5311 = vmatmul.bf16.gmra.mxu0 %v5231
    %v5312 = vpop.f32.mrf.mxu0
    %v5313 = vadd.f32 %v5253, %v5312
    %v5314 = vpop.f32.mrf.mxu0
    %v5315 = vadd.f32 %v5253, %v5314
    %5316 = vmatmul.bf16.gmra.mxu0 %v5232
    %v5317 = vpop.f32.mrf.mxu0
    %v5318 = vadd.f32 %v5253, %v5317
    %v5319 = vpop.f32.mrf.mxu0
    %v5320 = vadd.f32 %v5253, %v5319
    %5321 = vmatmul.bf16.gmra.mxu0 %v5233
    %v5322 = vpop.f32.mrf.mxu0
    %v5323 = vadd.f32 %v5253, %v5322
    %v5324 = vpop.f32.mrf.mxu0
    %v5325 = vadd.f32 %v5253, %v5324
    %5326 = vmatmul.bf16.gmra.mxu0 %v5234
    %v5327 = vpop.f32.mrf.mxu0
    %v5328 = vadd.f32 %v5253, %v5327
    %v5329 = vpop.f32.mrf.mxu0
    %v5330 = vadd.f32 %v5253, %v5329
    %5331 = vdwg.mxu0
    %vm5332 = vcmp.ge.f32.partialorder %v5313, 0.0
    %vm5333 = vcmp.ge.f32.partialorder %v5315, 0.0
    %vm5334 = vcmp.ge.f32.partialorder %v5318, 0.0
    %vm5335 = vcmp.ge.f32.partialorder %v5320, 0.0
    %vm5336 = vcmp.ge.f32.partialorder %v5323, 0.0
    %vm5337 = vcmp.ge.f32.partialorder %v5325, 0.0
    %vm5338 = vcmp.ge.f32.partialorder %v5328, 0.0
    %vm5339 = vcmp.ge.f32.partialorder %v5330, 0.0
    %v5340 = vmul.f32 %v5313, 0.01
    %v5341 = vmul.f32 %v5315, 0.01
    %v5342 = vmul.f32 %v5318, 0.01
    %v5343 = vmul.f32 %v5320, 0.01
    %v5344 = vmul.f32 %v5323, 0.01
    %v5345 = vmul.f32 %v5325, 0.01
    %v5346 = vmul.f32 %v5328, 0.01
    %v5347 = vmul.f32 %v5330, 0.01
    %v5348 = vsel %vm5332, %v5313, %v5340
    %v5349 = vsel %vm5333, %v5315, %v5341
    %v5350 = vsel %vm5334, %v5318, %v5342
    %v5351 = vsel %vm5335, %v5320, %v5343
    %v5352 = vsel %vm5336, %v5323, %v5344
    %v5353 = vsel %vm5337, %v5325, %v5345
    %v5354 = vsel %vm5338, %v5328, %v5346
    %v5355 = vsel %vm5339, %v5330, %v5347
    %v5356 = vpack.c.bf16 %v5349, %v5348
    %v5357 = vpack.c.bf16 %v5351, %v5350
    %v5358 = vpack.c.bf16 %v5353, %v5352
    %v5359 = vpack.c.bf16 %v5355, %v5354
    %v5360 = vld [vmem:[%s19] sm:$0xf]
    %v5361 = vld [vmem:[%s19 + $0x4] sm:$0xf]
    %v5362 = vld [vmem:[%s20] sm:$0x1]
    %v5364 = vperm.slane %v5362, 0
    %v5368 = vunpack.c.l.b16 %v5360
    %v5369 = vunpack.c.l.b16 %v5361
    %v5370 = vpack.c.b16 %v5369, %v5368
    %vm5372 = vcmask 130048
    %v5374 = vsel %vm5372, %v5356, 0
    %v5377 = vsel %vm5372, %v5357, 0
    %v5380 = vsel %vm5372, %v5358, 0
    %v5383 = vsel %vm5372, %v5359, 0
    %5385 = vmatpush.bf16.msra.mxu0 0
    %5386 = vmatpush.bf16.msra.mxu0 0
    %5387 = vmatpush.bf16.msra.mxu0 0
    %5388 = vmatpush.bf16.msra.mxu0 0
    %5389 = vmatpush.bf16.msra.mxu0 0
    %5390 = vmatpush.bf16.msra.mxu0 0
    %5391 = vmatpush.bf16.msra.mxu0 0
    %5392 = vmatpush.bf16.msra.mxu0 %v5370
    %5393 = vmatmul.bf16.gmra.mxu0 %v5374
    %v5394 = vpop.f32.mrf.mxu0
    %v5395 = vadd.f32 %v5364, %v5394
    %v5396 = vpop.f32.mrf.mxu0
    %v5397 = vadd.f32 %v5364, %v5396
    %5398 = vmatmul.bf16.gmra.mxu0 %v5377
    %v5399 = vpop.f32.mrf.mxu0
    %v5400 = vadd.f32 %v5364, %v5399
    %v5401 = vpop.f32.mrf.mxu0
    %v5402 = vadd.f32 %v5364, %v5401
    %5403 = vmatmul.bf16.gmra.mxu0 %v5380
    %v5404 = vpop.f32.mrf.mxu0
    %v5405 = vadd.f32 %v5364, %v5404
    %v5406 = vpop.f32.mrf.mxu0
    %v5407 = vadd.f32 %v5364, %v5406
    %5408 = vmatmul.bf16.gmra.mxu0 %v5383
    %v5409 = vpop.f32.mrf.mxu0
    %v5410 = vadd.f32 %v5364, %v5409
    %v5411 = vpop.f32.mrf.mxu0
    %v5412 = vadd.f32 %v5364, %v5411
    %5413 = vdwg.mxu0
    %v5414 = vlaneseq
    %v5415 = vand.u32 %v5414, 127
    %vm5416 = vcmp.eq.s32.totalorder %v5415, 0
    %v5417 = vtanh.pop %v5395
    %v5418 = vtanh.pop %v5397
    %v5419 = vtanh.pop %v5400
    %v5420 = vtanh.pop %v5402
    %v5421 = vtanh.pop %v5405
    %v5422 = vtanh.pop %v5407
    %v5423 = vtanh.pop %v5410
    %v5424 = vtanh.pop %v5412
    %v5425 = vxor.u32 %v5395, 2147483648
    %v5426 = vxor.u32 %v5397, 2147483648
    %v5427 = vxor.u32 %v5400, 2147483648
    %v5428 = vxor.u32 %v5402, 2147483648
    %v5429 = vxor.u32 %v5405, 2147483648
    %v5430 = vxor.u32 %v5407, 2147483648
    %v5431 = vxor.u32 %v5410, 2147483648
    %v5432 = vxor.u32 %v5412, 2147483648
    %v5433 = vmul.f32 %v5425, 1.442695
    %v5434 = vpow.pop %v5433
    %v5435 = vmul.f32 %v5426, 1.442695
    %v5436 = vpow.pop %v5435
    %v5437 = vmul.f32 %v5427, 1.442695
    %v5438 = vpow.pop %v5437
    %v5439 = vmul.f32 %v5428, 1.442695
    %v5440 = vpow.pop %v5439
    %v5441 = vmul.f32 %v5429, 1.442695
    %v5442 = vpow.pop %v5441
    %v5443 = vmul.f32 %v5430, 1.442695
    %v5444 = vpow.pop %v5443
    %v5445 = vmul.f32 %v5431, 1.442695
    %v5446 = vpow.pop %v5445
    %v5447 = vmul.f32 %v5432, 1.442695
    %v5448 = vpow.pop %v5447
    %v5449 = vadd.f32 %v5434, 1.0
    %v5450 = vadd.f32 %v5436, 1.0
    %v5451 = vadd.f32 %v5438, 1.0
    %v5452 = vadd.f32 %v5440, 1.0
    %v5453 = vadd.f32 %v5442, 1.0
    %v5454 = vadd.f32 %v5444, 1.0
    %v5455 = vadd.f32 %v5446, 1.0
    %v5456 = vadd.f32 %v5448, 1.0
    %v5457 = vrcp.pop %v5449
    %v5458 = vmul.f32 %v5449, %v5457
    %v5459 = vsub.f32 1.0, %v5458
    %v5460 = vmul.f32 %v5457, %v5459
    %v5461 = vadd.f32 %v5457, %v5460
    %vm5462 = vweird.f32 %v5449
    %vm5463 = vweird.f32 %v5457
    %vm5464 = vmor %vm5462, %vm5463
    %v5465 = vsel %vm5464, %v5457, %v5461
    %v5466 = vand.u32 2147483647, %v5449
    %vm5467 = vcmp.eq.f32.partialorder %v5466, 8.507059e+37
    %v5468 = vand.u32 %v5449, 2147483648
    %v5469 = vor.u32 1.1754944e-38, %v5468
    %v5470 = vsel %vm5467, %v5469, %v5465
    %v5471 = vmul.f32 1.0, %v5470
    %v5472 = vrcp.pop %v5450
    %v5473 = vmul.f32 %v5450, %v5472
    %v5474 = vsub.f32 1.0, %v5473
    %v5475 = vmul.f32 %v5472, %v5474
    %v5476 = vadd.f32 %v5472, %v5475
    %vm5477 = vweird.f32 %v5450
    %vm5478 = vweird.f32 %v5472
    %vm5479 = vmor %vm5477, %vm5478
    %v5480 = vsel %vm5479, %v5472, %v5476
    %v5481 = vand.u32 2147483647, %v5450
    %vm5482 = vcmp.eq.f32.partialorder %v5481, 8.507059e+37
    %v5483 = vand.u32 %v5450, 2147483648
    %v5484 = vor.u32 1.1754944e-38, %v5483
    %v5485 = vsel %vm5482, %v5484, %v5480
    %v5486 = vmul.f32 1.0, %v5485
    %v5487 = vrcp.pop %v5451
    %v5488 = vmul.f32 %v5451, %v5487
    %v5489 = vsub.f32 1.0, %v5488
    %v5490 = vmul.f32 %v5487, %v5489
    %v5491 = vadd.f32 %v5487, %v5490
    %vm5492 = vweird.f32 %v5451
    %vm5493 = vweird.f32 %v5487
    %vm5494 = vmor %vm5492, %vm5493
    %v5495 = vsel %vm5494, %v5487, %v5491
    %v5496 = vand.u32 2147483647, %v5451
    %vm5497 = vcmp.eq.f32.partialorder %v5496, 8.507059e+37
    %v5498 = vand.u32 %v5451, 2147483648
    %v5499 = vor.u32 1.1754944e-38, %v5498
    %v5500 = vsel %vm5497, %v5499, %v5495
    %v5501 = vmul.f32 1.0, %v5500
    %v5502 = vrcp.pop %v5452
    %v5503 = vmul.f32 %v5452, %v5502
    %v5504 = vsub.f32 1.0, %v5503
    %v5505 = vmul.f32 %v5502, %v5504
    %v5506 = vadd.f32 %v5502, %v5505
    %vm5507 = vweird.f32 %v5452
    %vm5508 = vweird.f32 %v5502
    %vm5509 = vmor %vm5507, %vm5508
    %v5510 = vsel %vm5509, %v5502, %v5506
    %v5511 = vand.u32 2147483647, %v5452
    %vm5512 = vcmp.eq.f32.partialorder %v5511, 8.507059e+37
    %v5513 = vand.u32 %v5452, 2147483648
    %v5514 = vor.u32 1.1754944e-38, %v5513
    %v5515 = vsel %vm5512, %v5514, %v5510
    %v5516 = vmul.f32 1.0, %v5515
    %v5517 = vrcp.pop %v5453
    %v5518 = vmul.f32 %v5453, %v5517
    %v5519 = vsub.f32 1.0, %v5518
    %v5520 = vmul.f32 %v5517, %v5519
    %v5521 = vadd.f32 %v5517, %v5520
    %vm5522 = vweird.f32 %v5453
    %vm5523 = vweird.f32 %v5517
    %vm5524 = vmor %vm5522, %vm5523
    %v5525 = vsel %vm5524, %v5517, %v5521
    %v5526 = vand.u32 2147483647, %v5453
    %vm5527 = vcmp.eq.f32.partialorder %v5526, 8.507059e+37
    %v5528 = vand.u32 %v5453, 2147483648
    %v5529 = vor.u32 1.1754944e-38, %v5528
    %v5530 = vsel %vm5527, %v5529, %v5525
    %v5531 = vmul.f32 1.0, %v5530
    %v5532 = vrcp.pop %v5454
    %v5533 = vmul.f32 %v5454, %v5532
    %v5534 = vsub.f32 1.0, %v5533
    %v5535 = vmul.f32 %v5532, %v5534
    %v5536 = vadd.f32 %v5532, %v5535
    %vm5537 = vweird.f32 %v5454
    %vm5538 = vweird.f32 %v5532
    %vm5539 = vmor %vm5537, %vm5538
    %v5540 = vsel %vm5539, %v5532, %v5536
    %v5541 = vand.u32 2147483647, %v5454
    %vm5542 = vcmp.eq.f32.partialorder %v5541, 8.507059e+37
    %v5543 = vand.u32 %v5454, 2147483648
    %v5544 = vor.u32 1.1754944e-38, %v5543
    %v5545 = vsel %vm5542, %v5544, %v5540
    %v5546 = vmul.f32 1.0, %v5545
    %v5547 = vrcp.pop %v5455
    %v5548 = vmul.f32 %v5455, %v5547
    %v5549 = vsub.f32 1.0, %v5548
    %v5550 = vmul.f32 %v5547, %v5549
    %v5551 = vadd.f32 %v5547, %v5550
    %vm5552 = vweird.f32 %v5455
    %vm5553 = vweird.f32 %v5547
    %vm5554 = vmor %vm5552, %vm5553
    %v5555 = vsel %vm5554, %v5547, %v5551
    %v5556 = vand.u32 2147483647, %v5455
    %vm5557 = vcmp.eq.f32.partialorder %v5556, 8.507059e+37
    %v5558 = vand.u32 %v5455, 2147483648
    %v5559 = vor.u32 1.1754944e-38, %v5558
    %v5560 = vsel %vm5557, %v5559, %v5555
    %v5561 = vmul.f32 1.0, %v5560
    %v5562 = vrcp.pop %v5456
    %v5563 = vmul.f32 %v5456, %v5562
    %v5564 = vsub.f32 1.0, %v5563
    %v5565 = vmul.f32 %v5562, %v5564
    %v5566 = vadd.f32 %v5562, %v5565
    %vm5567 = vweird.f32 %v5456
    %vm5568 = vweird.f32 %v5562
    %vm5569 = vmor %vm5567, %vm5568
    %v5570 = vsel %vm5569, %v5562, %v5566
    %v5571 = vand.u32 2147483647, %v5456
    %vm5572 = vcmp.eq.f32.partialorder %v5571, 8.507059e+37
    %v5573 = vand.u32 %v5456, 2147483648
    %v5574 = vor.u32 1.1754944e-38, %v5573
    %v5575 = vsel %vm5572, %v5574, %v5570
    %v5576 = vmul.f32 1.0, %v5575
    %v5577 = vsel %vm5416, %v5417, %v5471
    %v5578 = vsel %vm5416, %v5418, %v5486
    %v5579 = vsel %vm5416, %v5419, %v5501
    %v5580 = vsel %vm5416, %v5420, %v5516
    %v5581 = vsel %vm5416, %v5421, %v5531
    %v5582 = vsel %vm5416, %v5422, %v5546
    %v5583 = vsel %vm5416, %v5423, %v5561
    %v5584 = vsel %vm5416, %v5424, %v5576
    %vm5585 = vcmask 15360
    %5586 = vst.msk [vmem:[%s21] sm:$0xff] %vm5585, %v5577
    %5587 = vst.msk [vmem:[%s21 + $0x8] sm:$0xff] %vm5585, %v5578
    %5588 = vst.msk [vmem:[%s21 + $0x10] sm:$0xff] %vm5585, %v5579
    %5589 = vst.msk [vmem:[%s21 + $0x18] sm:$0xff] %vm5585, %v5580
    %5590 = vst.msk [vmem:[%s21 + $0x20] sm:$0xff] %vm5585, %v5581
    %5591 = vst.msk [vmem:[%s21 + $0x28] sm:$0xff] %vm5585, %v5582
    %5592 = vst.msk [vmem:[%s21 + $0x30] sm:$0xff] %vm5585, %v5583
    %5593 = vst.msk [vmem:[%s21 + $0x38] sm:$0xff] %vm5585, %v5584
    // Predicated region
    $region114: #{tpu_custom_call.1} parent=1 // pred_check
      _
    $region115: #{tpu_custom_call.1} parent=1 // pred_check_branch
      %5595 = sbr.rel (0) target = $region117
    $region116: #{tpu_custom_call.1} parent=1 // pred_region
      _
    $region117: #{tpu_custom_call.1} parent=1 // pred_fallthru
      _
    // Predicated region
    $region118: #{tpu_custom_call.1} parent=1 // pred_check
      _
    $region119: #{tpu_custom_call.1} parent=1 // pred_check_branch
      %5597 = sbr.rel (0) target = $region121
    $region120: #{tpu_custom_call.1} parent=1 // pred_region
      _
    $region121: #{tpu_custom_call.1} parent=1 // pred_fallthru
      _
    %5598 = vsyncpa [#allocation3], 1
    %5599 = vsyncpa [#allocation5], 1
    %5600 = vsyncpa [#allocation8], 1
    %5601 = vsyncpa [#allocation11], 1

</llo_original>
